<compile_context>
chip_gen: v7x
topology: tpu7x:2x2x1
jax: 0.10.0
libtpu: 0.0.40
codegen_flags: <defaults>
</compile_context>

<pallas_src>
import functools

import jax
import jax.numpy as jnp
from jax.experimental import pallas as pl
from jax.experimental.pallas import tpu as pltpu

LRELU_A = 0.1                 # lrelu_a passed explicitly by SignalEncoder
BN_EPS = 1e-5                 # nn.BatchNorm2d default eps
CP = 128                      # channel padding -> full vreg lane width (dense accesses)
MATMUL_DTYPE = jnp.bfloat16   # MXU operand dtype (f32 accumulation)


def _round_up(x, m):
    return ((x + m - 1) // m) * m


def _pick_tiles(B, P):
    """Pick (TB samples per grid step, SC samples per conv-matmul row chunk)."""
    if B >= 2:
        # >= 2 grid steps so v7x's two TensorCores split the batch; cap VMEM growth.
        TB = max(1, min(B // 2, 32))
    else:
        TB = 1
    # chunk rows to ~128 (full v5e MXU row fill, ~40 live vregs -> no spills)
    SC = max(1, min(TB, 128 // P)) if P <= 128 else 1
    while TB % SC:
        SC -= 1
    return TB, SC


def _encoder_kernel(x_ref, w_ref, b_ref, s_ref, t_ref, wfc_ref, bfc_ref,
                    out_ref, pad_ref, fcin_ref, *, H, W, F, TB, SC, nb_layers):
    """Fused SignalEncoder forward for TB samples (one grid step).

    x_ref   : (1, P, TB)          f32   input samples, spatial-major (P = H*W)
    w_ref   : (L, 9, CP, CP)      bf16  conv taps, [layer, 3*di+dj, cin, cout] (zero padded)
    b_ref   : (L, 1, CP)          f32   conv bias (zero padded)
    s_ref   : (L, 1, CP)          f32   BN scale gamma/sqrt(var+eps)  (last layer: unused)
    t_ref   : (L, 1, CP)          f32   BN shift beta - mean*scale    (last layer: unused)
    wfc_ref : (F*P, ZP)           bf16  FC weight, rows ordered c*P + p (NCHW flatten),
                                        last-layer BN folded in
    bfc_ref : (1, ZP)             f32   FC bias (BN fold included, zero padded)
    out_ref : (1, TB, ZP)         f32   latent vectors (padded to ZP lanes)
    pad_ref : (TB, H+2, W+2, CP)  f32   zero-halo padded activation scratch
    fcin_ref: (TB, F*P)           bf16  staged FC input (channel-major flatten)
    """
    P = H * W
    MC = SC * P                       # conv matmul rows per chunk (~128)
    n_groups = TB // SC

    # --- zero only the 1-px halo; the interior is fully overwritten every layer ---
    pad_ref[:, 0:1, :, :] = jnp.zeros((TB, 1, W + 2, CP), jnp.float32)
    pad_ref[:, H + 1:H + 2, :, :] = jnp.zeros((TB, 1, W + 2, CP), jnp.float32)
    pad_ref[:, :, 0:1, :] = jnp.zeros((TB, H + 2, 1, CP), jnp.float32)
    pad_ref[:, :, W + 1:W + 2, :] = jnp.zeros((TB, H + 2, 1, CP), jnp.float32)

    # --- layer-0 input: lane-broadcast the single input channel across all CP lanes
    #     (layer-0 packed weights are zero for cin >= 1, so duplicates contribute 0) ---
    xT = x_ref[0]                                              # (P, TB)
    for tb in range(TB):
        col = jnp.broadcast_to(xT[:, tb:tb + 1], (P, CP))      # (P, CP)
        pad_ref[tb:tb + 1, 1:H + 1, 1:W + 1, :] = col.reshape(1, H, W, CP)

    # --- conv stack: per layer, per sample-group chunk, 9 direct tap matmuls ---
    for layer in range(nb_layers):
        last = layer == nb_layers - 1
        for g in range(n_groups):
            s0 = g * SC
            acc = None
            for di in range(3):
                for dj in range(3):
                    patch = pad_ref[s0:s0 + SC, di:di + H, dj:dj + W, :]
                    patch = patch.reshape(MC, CP).astype(MATMUL_DTYPE)
                    r = jnp.dot(patch, w_ref[layer, 3 * di + dj],
                                preferred_element_type=jnp.float32)
                    acc = r if acc is None else acc + r
            acc = acc + b_ref[layer]
            acc = jnp.maximum(acc, LRELU_A * acc)              # LeakyReLU(0.1)
            if not last:
                acc = acc * s_ref[layer] + t_ref[layer]        # eval-mode BatchNorm
                pad_ref[s0:s0 + SC, 1:H + 1, 1:W + 1, :] = acc.reshape(SC, H, W, CP)
            else:
                # Stage PyTorch's NCHW channel-major flatten: fcin[tb, c*P+p] = act[c, p].
                # (last layer's BN is folded into wfc/bfc at init)
                accT = acc.T                                   # (CP, MC)
                for s in range(SC):
                    tb = s0 + s
                    for c in range(F):
                        fcin_ref[tb:tb + 1, c * P:(c + 1) * P] = (
                            accT[c:c + 1, s * P:(s + 1) * P].astype(MATMUL_DTYPE))

    # --- fused FC: ONE dot for the whole batch tile, compact K = F*P ---
    fc = jnp.dot(fcin_ref[...], wfc_ref[...], preferred_element_type=jnp.float32)
    out_ref[0] = fc + bfc_ref[...]


def signal_encoder_forward(x, params, *, z_dim, nb_layers, nb_filters, downsampling=0):
    """x: (B, 1, H, W) float32 (NCHW, as in PyTorch).  Returns (B, z_dim)."""
    assert nb_layers >= 1
    B = x.shape[0]

    # Glue: F.avg_pool2d(x, d, d) -- exact for divisible spatial sizes.
    if downsampling:
        d = downsampling
        _, C, Hh, Ww = x.shape
        # TODO(synk): PyTorch floors the remainder; we require divisibility.
        assert Hh % d == 0 and Ww % d == 0
        x = x.reshape(B, C, Hh // d, d, Ww // d, d).mean(axis=(3, 5))

    H, W = int(x.shape[2]), int(x.shape[3])
    F = nb_filters
    P = H * W
    ZP = _round_up(z_dim, 128)
    assert F <= CP and z_dim <= ZP

    TB, SC = _pick_tiles(B, P)
    G = -(-B // TB)                         # grid steps
    Bp = G * TB                             # padded batch (padded samples discarded)

    x_flat = x.reshape(B, P).astype(jnp.float32)
    if Bp != B:
        x_flat = jnp.pad(x_flat, ((0, Bp - B), (0, 0)))
    # (G, P, TB): one contiguous HBM chunk per grid step; spatial-major so the kernel
    # can column-slice + lane-broadcast without any in-kernel transpose of the input.
    x_in = jnp.transpose(x_flat.reshape(G, TB, P), (0, 2, 1))

    kernel = functools.partial(_encoder_kernel, H=H, W=W, F=F, TB=TB, SC=SC,
                               nb_layers=nb_layers)

    out = pl.pallas_call(
        kernel,
        out_shape=jax.ShapeDtypeStruct((G, TB, ZP), jnp.float32),
        grid=(G,),
        in_specs=[
            pl.BlockSpec((1, P, TB), lambda b: (b, 0, 0)),
            pl.BlockSpec(params["conv_w"].shape, lambda b: (0, 0, 0, 0)),
            pl.BlockSpec(params["conv_b"].shape, lambda b: (0, 0, 0)),
            pl.BlockSpec(params["bn_s"].shape, lambda b: (0, 0, 0)),
            pl.BlockSpec(params["bn_t"].shape, lambda b: (0, 0, 0)),
            pl.BlockSpec(params["fc_w"].shape, lambda b: (0, 0)),
            pl.BlockSpec(params["fc_b"].shape, lambda b: (0, 0)),
        ],
        out_specs=pl.BlockSpec((1, TB, ZP), lambda b: (b, 0, 0)),
        scratch_shapes=[
            pltpu.VMEM((TB, H + 2, W + 2, CP), jnp.float32),   # padded activations
            pltpu.VMEM((TB, F * P), MATMUL_DTYPE),             # staged FC input
        ],
        compiler_params=pltpu.CompilerParams(
            dimension_semantics=("parallel",)),                 # v7x: 2 TCs split the grid
    )(x_in, params["conv_w"], params["conv_b"], params["bn_s"],
      params["bn_t"], params["fc_w"], params["fc_b"])

    return out.reshape(Bp, ZP)[:B, :z_dim]


def init_raw_params(key, *, nb_layers, nb_filters, H, W, z_dim):
    """Deterministic synthetic PyTorch-shaped parameters (eval-mode BN stats)."""
    F = nb_filters
    raw = {}
    cin = 1
    for l in range(nb_layers):
        key, k1, k2, k3, k4, k5 = jax.random.split(key, 6)
        raw[f"conv{l}_w"] = 0.1 * jax.random.normal(k1, (F, cin, 3, 3), jnp.float32)
        raw[f"conv{l}_b"] = 0.05 * jax.random.normal(k2, (F,), jnp.float32)
        raw[f"bn{l}_gamma"] = 1.0 + 0.1 * jax.random.normal(k3, (F,), jnp.float32)
        raw[f"bn{l}_beta"] = 0.05 * jax.random.normal(k4, (F,), jnp.float32)
        raw[f"bn{l}_mean"] = 0.1 * jax.random.normal(k5, (F,), jnp.float32)
        raw[f"bn{l}_var"] = jnp.ones((F,), jnp.float32)
        cin = F
    key, k6, k7 = jax.random.split(key, 3)
    raw["fc_w"] = 0.05 * jax.random.normal(k6, (z_dim, F * H * W), jnp.float32)
    raw["fc_b"] = 0.05 * jax.random.normal(k7, (z_dim,), jnp.float32)
    return raw


def pack_params(raw, *, nb_layers, nb_filters, H, W, z_dim):
    """Pack PyTorch-shaped params into the lane-dense layouts the kernel expects."""
    assert nb_layers >= 1
    F = nb_filters
    P = H * W
    ZP = _round_up(z_dim, 128)

    conv_w, conv_b, bn_s, bn_t = [], [], [], []
    s_last = t_last = None
    for l in range(nb_layers):
        cin = 1 if l == 0 else F
        w_pt = raw[f"conv{l}_w"]                                   # (F, cin, 3, 3) OIHW
        w_hwio = jnp.transpose(w_pt, (2, 3, 1, 0))                 # (3, 3, cin, F)
        w_pad = jnp.zeros((3, 3, CP, CP), jnp.float32).at[:, :, :cin, :F].set(w_hwio)
        conv_w.append(w_pad.reshape(9, CP, CP))
        conv_b.append(jnp.zeros((CP,), jnp.float32).at[:F].set(raw[f"conv{l}_b"]))

        scale = raw[f"bn{l}_gamma"] / jnp.sqrt(raw[f"bn{l}_var"] + BN_EPS)
        shift = raw[f"bn{l}_beta"] - raw[f"bn{l}_mean"] * scale
        if l == nb_layers - 1:
            s_last, t_last = scale, shift                          # folded into the FC
            bn_s.append(jnp.zeros((CP,), jnp.float32))
            bn_t.append(jnp.zeros((CP,), jnp.float32))
        else:
            bn_s.append(jnp.zeros((CP,), jnp.float32).at[:F].set(scale))
            bn_t.append(jnp.zeros((CP,), jnp.float32).at[:F].set(shift))

    # Fold the last layer's eval-mode BN (a -> s*a + t, per channel) into the FC:
    #   fc(BN(a)) = (W * s_c) @ a_flat + (b + sum_{c,p} W[z, c*P + p] * t[c])
    w3 = raw["fc_w"].reshape(z_dim, F, P)                          # [z, c, p]
    wfc = (w3 * s_last[None, :, None]).reshape(z_dim, F * P).T     # (F*P, z_dim), rows c*P+p
    bfc = raw["fc_b"] + jnp.einsum("zcp,c->z", w3, t_last)
    wfc = jnp.pad(wfc, ((0, 0), (0, ZP - z_dim)))
    bfc = jnp.pad(bfc, (0, ZP - z_dim)).reshape(1, ZP)

    return {
        "conv_w": jnp.stack(conv_w).astype(MATMUL_DTYPE),          # (L, 9, CP, CP) bf16
        "conv_b": jnp.stack(conv_b)[:, None, :],                   # (L, 1, CP) f32
        "bn_s": jnp.stack(bn_s)[:, None, :],                       # (L, 1, CP) f32
        "bn_t": jnp.stack(bn_t)[:, None, :],                       # (L, 1, CP) f32
        "fc_w": wfc.astype(MATMUL_DTYPE),                          # (F*P, ZP) bf16
        "fc_b": bfc,                                               # (1, ZP) f32
    }


def reference_forward(x, raw, *, z_dim, nb_layers, nb_filters, downsampling=0):
    """Pure-JAX f32 reference of SignalEncoder.forward (eval-mode BN)."""
    B = x.shape[0]
    if downsampling:
        d = downsampling
        _, C, Hh, Ww = x.shape
        x = x.reshape(B, C, Hh // d, d, Ww // d, d).mean(axis=(3, 5))
    a = x.astype(jnp.float32)
    for l in range(nb_layers):
        a = jax.lax.conv_general_dilated(
            a, raw[f"conv{l}_w"], window_strides=(1, 1), padding=((1, 1), (1, 1)),
            dimension_numbers=("NCHW", "OIHW", "NCHW"))
        a = a + raw[f"conv{l}_b"][None, :, None, None]
        a = jnp.where(a >= 0, a, LRELU_A * a)
        s = raw[f"bn{l}_gamma"] / jnp.sqrt(raw[f"bn{l}_var"] + BN_EPS)
        t = raw[f"bn{l}_beta"] - raw[f"bn{l}_mean"] * s
        a = a * s[None, :, None, None] + t[None, :, None, None]
    feat = a.reshape(B, -1)                                        # NCHW channel-major flatten
    return feat @ raw["fc_w"].T + raw["fc_b"]


if __name__ == "__main__":
    # SignalEncoder(signal_dim=(16, 16), z_dim=32, nb_layers=2, nb_filters=8,
    #               batch_norm=True, downsampling=2)  -- the encode() path of SignalED.
    signal_dim = (16, 16)
    z_dim = 32
    nb_layers = 2
    nb_filters = 8
    downsampling = 2
    B = 8                                  # -> TB=4 per grid step, 2 grid steps

    Hd = signal_dim[0] // downsampling
    Wd = signal_dim[1] // downsampling

    key = jax.random.PRNGKey(0)
    key, xk = jax.random.split(key)
    x = jax.random.normal(xk, (B, 1) + signal_dim, jnp.float32)    # NCHW, like PyTorch
    raw = init_raw_params(key, nb_layers=nb_layers, nb_filters=nb_filters,
                          H=Hd, W=Wd, z_dim=z_dim)
    params = pack_params(raw, nb_layers=nb_layers, nb_filters=nb_filters,
                         H=Hd, W=Wd, z_dim=z_dim)

    fwd = jax.jit(functools.partial(signal_encoder_forward, z_dim=z_dim,
                                    nb_layers=nb_layers, nb_filters=nb_filters,
                                    downsampling=downsampling))
    out = jax.block_until_ready(fwd(x, params))

    assert out.shape == (B, z_dim) and out.dtype == jnp.float32
    assert bool(jnp.all(jnp.isfinite(out)))

    # bf16 MXU operands -> compare against the f32 reference with a loose tolerance.
    ref = reference_forward(x, raw, z_dim=z_dim, nb_layers=nb_layers,
                            nb_filters=nb_filters, downsampling=downsampling)
    err = float(jnp.max(jnp.abs(out - ref)))
    assert err < 5e-2, f"max abs error vs f32 reference: {err}"
    print("KERNEL_OK")
</pallas_src>

<mosaic_0001>
module attributes {stable_mosaic.version = 11 : i64} {
  func.func @_encoder_kernel(%arg0: i32, %arg1: memref<1x64x4xf32, #tpu.memory_space<vmem>>, %arg2: memref<2x9x128x128xbf16, #tpu.memory_space<vmem>>, %arg3: memref<2x1x128xf32, #tpu.memory_space<vmem>>, %arg4: memref<2x1x128xf32, #tpu.memory_space<vmem>>, %arg5: memref<2x1x128xf32, #tpu.memory_space<vmem>>, %arg6: memref<512x128xbf16, #tpu.memory_space<vmem>>, %arg7: memref<1x128xf32, #tpu.memory_space<vmem>>, %arg8: memref<1x4x128xf32, #tpu.memory_space<vmem>>, %arg9: memref<4x10x10x128xf32, #tpu.memory_space<vmem>>, %arg10: memref<4x512xbf16, #tpu.memory_space<vmem>>) attributes {dimension_semantics = [#tpu.dimension_semantics<parallel>], iteration_bounds = array<i64: 2>, scalar_prefetch = 0 : i64, scratch_operands = 2 : i64, tpu.core_type = #tpu.core_type<tc>, window_params = [{transform_indices = @transform_0, window_bounds = array<i64: 1, 64, 4>}, {pipeline_mode = #tpu.pipeline_mode<synchronous>, transform_indices = @transform_1, window_bounds = array<i64: 2, 9, 128, 128>}, {pipeline_mode = #tpu.pipeline_mode<synchronous>, transform_indices = @transform_2, window_bounds = array<i64: 2, 1, 128>}, {pipeline_mode = #tpu.pipeline_mode<synchronous>, transform_indices = @transform_3, window_bounds = array<i64: 2, 1, 128>}, {pipeline_mode = #tpu.pipeline_mode<synchronous>, transform_indices = @transform_4, window_bounds = array<i64: 2, 1, 128>}, {pipeline_mode = #tpu.pipeline_mode<synchronous>, transform_indices = @transform_5, window_bounds = array<i64: 512, 128>}, {pipeline_mode = #tpu.pipeline_mode<synchronous>, transform_indices = @transform_6, window_bounds = array<i64: 1, 128>}, {transform_indices = @transform_7, window_bounds = array<i64: 1, 4, 128>}]} {
    %cst = arith.constant 0.000000e+00 : f32
    %0 = vector.broadcast %cst : f32 to vector<4x1x10x128xf32>
    %c0 = arith.constant 0 : index
    %c0_0 = arith.constant 0 : index
    %c0_1 = arith.constant 0 : index
    %c0_2 = arith.constant 0 : index
    %1 = vector.load %arg9[%c0, %c0_0, %c0_1, %c0_2] : memref<4x10x10x128xf32, #tpu.memory_space<vmem>>, vector<4x1x10x128xf32>
    tpu.vector_store %arg9[%c0, %c0_0, %c0_1, %c0_2], %0 {strides = array<i32>} : memref<4x10x10x128xf32, #tpu.memory_space<vmem>>, vector<4x1x10x128xf32>,
    %cst_3 = arith.constant 0.000000e+00 : f32
    %2 = vector.broadcast %cst_3 : f32 to vector<4x1x10x128xf32>
    %c0_4 = arith.constant 0 : index
    %c9 = arith.constant 9 : index
    %c0_5 = arith.constant 0 : index
    %c0_6 = arith.constant 0 : index
    %3 = vector.load %arg9[%c0_4, %c9, %c0_5, %c0_6] : memref<4x10x10x128xf32, #tpu.memory_space<vmem>>, vector<4x1x10x128xf32>
    tpu.vector_store %arg9[%c0_4, %c9, %c0_5, %c0_6], %2 {strides = array<i32>} : memref<4x10x10x128xf32, #tpu.memory_space<vmem>>, vector<4x1x10x128xf32>,
    %cst_7 = arith.constant 0.000000e+00 : f32
    %4 = vector.broadcast %cst_7 : f32 to vector<4x10x1x128xf32>
    %c0_8 = arith.constant 0 : index
    %c0_9 = arith.constant 0 : index
    %c0_10 = arith.constant 0 : index
    %c0_11 = arith.constant 0 : index
    %5 = vector.load %arg9[%c0_8, %c0_9, %c0_10, %c0_11] : memref<4x10x10x128xf32, #tpu.memory_space<vmem>>, vector<4x10x1x128xf32>
    tpu.vector_store %arg9[%c0_8, %c0_9, %c0_10, %c0_11], %4 {strides = array<i32>} : memref<4x10x10x128xf32, #tpu.memory_space<vmem>>, vector<4x10x1x128xf32>,
    %cst_12 = arith.constant 0.000000e+00 : f32
    %6 = vector.broadcast %cst_12 : f32 to vector<4x10x1x128xf32>
    %c0_13 = arith.constant 0 : index
    %c0_14 = arith.constant 0 : index
    %c9_15 = arith.constant 9 : index
    %c0_16 = arith.constant 0 : index
    %7 = vector.load %arg9[%c0_13, %c0_14, %c9_15, %c0_16] : memref<4x10x10x128xf32, #tpu.memory_space<vmem>>, vector<4x10x1x128xf32>
    tpu.vector_store %arg9[%c0_13, %c0_14, %c9_15, %c0_16], %6 {strides = array<i32>} : memref<4x10x10x128xf32, #tpu.memory_space<vmem>>, vector<4x10x1x128xf32>,
    %c0_17 = arith.constant 0 : index
    %c0_18 = arith.constant 0 : index
    %c0_19 = arith.constant 0 : index
    %8 = vector.load %arg1[%c0_17, %c0_18, %c0_19] : memref<1x64x4xf32, #tpu.memory_space<vmem>>, vector<1x64x4xf32>
    %9 = vector.shape_cast %8 : vector<1x64x4xf32> to vector<64x4xf32>
    %10 = vector.extract_strided_slice %9 {offsets = [0, 0], sizes = [64, 1], strides = [1, 1]} : vector<64x4xf32> to vector<64x1xf32>
    %11 = vector.shape_cast %10 : vector<64x1xf32> to vector<64x1xf32>
    %12 = vector.broadcast %11 : vector<64x1xf32> to vector<64x128xf32>
    %13 = vector.shape_cast %12 : vector<64x128xf32> to vector<1x8x8x128xf32>
    %c0_20 = arith.constant 0 : index
    %c1 = arith.constant 1 : index
    %c1_21 = arith.constant 1 : index
    %c0_22 = arith.constant 0 : index
    %14 = vector.load %arg9[%c0_20, %c1, %c1_21, %c0_22] : memref<4x10x10x128xf32, #tpu.memory_space<vmem>>, vector<1x8x8x128xf32>
    tpu.vector_store %arg9[%c0_20, %c1, %c1_21, %c0_22], %13 {strides = array<i32>} : memref<4x10x10x128xf32, #tpu.memory_space<vmem>>, vector<1x8x8x128xf32>,
    %15 = vector.extract_strided_slice %9 {offsets = [0, 1], sizes = [64, 1], strides = [1, 1]} : vector<64x4xf32> to vector<64x1xf32>
    %16 = vector.shape_cast %15 : vector<64x1xf32> to vector<64x1xf32>
    %17 = vector.broadcast %16 : vector<64x1xf32> to vector<64x128xf32>
    %18 = vector.shape_cast %17 : vector<64x128xf32> to vector<1x8x8x128xf32>
    %c1_23 = arith.constant 1 : index
    %c1_24 = arith.constant 1 : index
    %c1_25 = arith.constant 1 : index
    %c0_26 = arith.constant 0 : index
    %19 = vector.load %arg9[%c1_23, %c1_24, %c1_25, %c0_26] : memref<4x10x10x128xf32, #tpu.memory_space<vmem>>, vector<1x8x8x128xf32>
    tpu.vector_store %arg9[%c1_23, %c1_24, %c1_25, %c0_26], %18 {strides = array<i32>} : memref<4x10x10x128xf32, #tpu.memory_space<vmem>>, vector<1x8x8x128xf32>,
    %20 = vector.extract_strided_slice %9 {offsets = [0, 2], sizes = [64, 1], strides = [1, 1]} : vector<64x4xf32> to vector<64x1xf32>
    %21 = vector.shape_cast %20 : vector<64x1xf32> to vector<64x1xf32>
    %22 = vector.broadcast %21 : vector<64x1xf32> to vector<64x128xf32>
    %23 = vector.shape_cast %22 : vector<64x128xf32> to vector<1x8x8x128xf32>
    %c2 = arith.constant 2 : index
    %c1_27 = arith.constant 1 : index
    %c1_28 = arith.constant 1 : index
    %c0_29 = arith.constant 0 : index
    %24 = vector.load %arg9[%c2, %c1_27, %c1_28, %c0_29] : memref<4x10x10x128xf32, #tpu.memory_space<vmem>>, vector<1x8x8x128xf32>
    tpu.vector_store %arg9[%c2, %c1_27, %c1_28, %c0_29], %23 {strides = array<i32>} : memref<4x10x10x128xf32, #tpu.memory_space<vmem>>, vector<1x8x8x128xf32>,
    %25 = vector.extract_strided_slice %9 {offsets = [0, 3], sizes = [64, 1], strides = [1, 1]} : vector<64x4xf32> to vector<64x1xf32>
    %26 = vector.shape_cast %25 : vector<64x1xf32> to vector<64x1xf32>
    %27 = vector.broadcast %26 : vector<64x1xf32> to vector<64x128xf32>
    %28 = vector.shape_cast %27 : vector<64x128xf32> to vector<1x8x8x128xf32>
    %c3 = arith.constant 3 : index
    %c1_30 = arith.constant 1 : index
    %c1_31 = arith.constant 1 : index
    %c0_32 = arith.constant 0 : index
    %29 = vector.load %arg9[%c3, %c1_30, %c1_31, %c0_32] : memref<4x10x10x128xf32, #tpu.memory_space<vmem>>, vector<1x8x8x128xf32>
    tpu.vector_store %arg9[%c3, %c1_30, %c1_31, %c0_32], %28 {strides = array<i32>} : memref<4x10x10x128xf32, #tpu.memory_space<vmem>>, vector<1x8x8x128xf32>,
    %c0_33 = arith.constant 0 : index
    %c0_34 = arith.constant 0 : index
    %c0_35 = arith.constant 0 : index
    %c0_36 = arith.constant 0 : index
    %30 = vector.load %arg9[%c0_33, %c0_34, %c0_35, %c0_36] : memref<4x10x10x128xf32, #tpu.memory_space<vmem>>, vector<2x8x8x128xf32>
    %31 = vector.shape_cast %30 : vector<2x8x8x128xf32> to vector<128x128xf32>
    %32 = arith.truncf %31 : vector<128x128xf32> to vector<128x128xbf16>
    %c0_37 = arith.constant 0 : index
    %c0_38 = arith.constant 0 : index
    %c0_39 = arith.constant 0 : index
    %c0_40 = arith.constant 0 : index
    %33 = vector.load %arg2[%c0_37, %c0_38, %c0_39, %c0_40] : memref<2x9x128x128xbf16, #tpu.memory_space<vmem>>, vector<1x1x128x128xbf16>
    %34 = vector.shape_cast %33 : vector<1x1x128x128xbf16> to vector<128x128xbf16>
    %cst_41 = arith.constant dense<0.000000e+00> : vector<128x128xf32>
    %35 = tpu.matmul %32, %34, %cst_41 {dimension_numbers = #tpu.dot_dimension_numbers<[1], [0], [0], [1], [0, 0, 1, 1], [], []>} : vector<128x128xbf16>, vector<128x128xbf16>, vector<128x128xf32> -> vector<128x128xf32>
    %c0_42 = arith.constant 0 : index
    %c0_43 = arith.constant 0 : index
    %c1_44 = arith.constant 1 : index
    %c0_45 = arith.constant 0 : index
    %36 = vector.load %arg9[%c0_42, %c0_43, %c1_44, %c0_45] : memref<4x10x10x128xf32, #tpu.memory_space<vmem>>, vector<2x8x8x128xf32>
    %37 = vector.shape_cast %36 : vector<2x8x8x128xf32> to vector<128x128xf32>
    %38 = arith.truncf %37 : vector<128x128xf32> to vector<128x128xbf16>
    %c0_46 = arith.constant 0 : index
    %c1_47 = arith.constant 1 : index
    %c0_48 = arith.constant 0 : index
    %c0_49 = arith.constant 0 : index
    %39 = vector.load %arg2[%c0_46, %c1_47, %c0_48, %c0_49] : memref<2x9x128x128xbf16, #tpu.memory_space<vmem>>, vector<1x1x128x128xbf16>
    %40 = vector.shape_cast %39 : vector<1x1x128x128xbf16> to vector<128x128xbf16>
    %cst_50 = arith.constant dense<0.000000e+00> : vector<128x128xf32>
    %41 = tpu.matmul %38, %40, %cst_50 {dimension_numbers = #tpu.dot_dimension_numbers<[1], [0], [0], [1], [0, 0, 1, 1], [], []>} : vector<128x128xbf16>, vector<128x128xbf16>, vector<128x128xf32> -> vector<128x128xf32>
    %42 = arith.addf %35, %41 : vector<128x128xf32>
    %c0_51 = arith.constant 0 : index
    %c0_52 = arith.constant 0 : index
    %c2_53 = arith.constant 2 : index
    %c0_54 = arith.constant 0 : index
    %43 = vector.load %arg9[%c0_51, %c0_52, %c2_53, %c0_54] : memref<4x10x10x128xf32, #tpu.memory_space<vmem>>, vector<2x8x8x128xf32>
    %44 = vector.shape_cast %43 : vector<2x8x8x128xf32> to vector<128x128xf32>
    %45 = arith.truncf %44 : vector<128x128xf32> to vector<128x128xbf16>
    %c0_55 = arith.constant 0 : index
    %c2_56 = arith.constant 2 : index
    %c0_57 = arith.constant 0 : index
    %c0_58 = arith.constant 0 : index
    %46 = vector.load %arg2[%c0_55, %c2_56, %c0_57, %c0_58] : memref<2x9x128x128xbf16, #tpu.memory_space<vmem>>, vector<1x1x128x128xbf16>
    %47 = vector.shape_cast %46 : vector<1x1x128x128xbf16> to vector<128x128xbf16>
    %cst_59 = arith.constant dense<0.000000e+00> : vector<128x128xf32>
    %48 = tpu.matmul %45, %47, %cst_59 {dimension_numbers = #tpu.dot_dimension_numbers<[1], [0], [0], [1], [0, 0, 1, 1], [], []>} : vector<128x128xbf16>, vector<128x128xbf16>, vector<128x128xf32> -> vector<128x128xf32>
    %49 = arith.addf %42, %48 : vector<128x128xf32>
    %c0_60 = arith.constant 0 : index
    %c1_61 = arith.constant 1 : index
    %c0_62 = arith.constant 0 : index
    %c0_63 = arith.constant 0 : index
    %50 = vector.load %arg9[%c0_60, %c1_61, %c0_62, %c0_63] : memref<4x10x10x128xf32, #tpu.memory_space<vmem>>, vector<2x8x8x128xf32>
    %51 = vector.shape_cast %50 : vector<2x8x8x128xf32> to vector<128x128xf32>
    %52 = arith.truncf %51 : vector<128x128xf32> to vector<128x128xbf16>
    %c0_64 = arith.constant 0 : index
    %c3_65 = arith.constant 3 : index
    %c0_66 = arith.constant 0 : index
    %c0_67 = arith.constant 0 : index
    %53 = vector.load %arg2[%c0_64, %c3_65, %c0_66, %c0_67] : memref<2x9x128x128xbf16, #tpu.memory_space<vmem>>, vector<1x1x128x128xbf16>
    %54 = vector.shape_cast %53 : vector<1x1x128x128xbf16> to vector<128x128xbf16>
    %cst_68 = arith.constant dense<0.000000e+00> : vector<128x128xf32>
    %55 = tpu.matmul %52, %54, %cst_68 {dimension_numbers = #tpu.dot_dimension_numbers<[1], [0], [0], [1], [0, 0, 1, 1], [], []>} : vector<128x128xbf16>, vector<128x128xbf16>, vector<128x128xf32> -> vector<128x128xf32>
    %56 = arith.addf %49, %55 : vector<128x128xf32>
    %c0_69 = arith.constant 0 : index
    %c1_70 = arith.constant 1 : index
    %c1_71 = arith.constant 1 : index
    %c0_72 = arith.constant 0 : index
    %57 = vector.load %arg9[%c0_69, %c1_70, %c1_71, %c0_72] : memref<4x10x10x128xf32, #tpu.memory_space<vmem>>, vector<2x8x8x128xf32>
    %58 = vector.shape_cast %57 : vector<2x8x8x128xf32> to vector<128x128xf32>
    %59 = arith.truncf %58 : vector<128x128xf32> to vector<128x128xbf16>
    %c0_73 = arith.constant 0 : index
    %c4 = arith.constant 4 : index
    %c0_74 = arith.constant 0 : index
    %c0_75 = arith.constant 0 : index
    %60 = vector.load %arg2[%c0_73, %c4, %c0_74, %c0_75] : memref<2x9x128x128xbf16, #tpu.memory_space<vmem>>, vector<1x1x128x128xbf16>
    %61 = vector.shape_cast %60 : vector<1x1x128x128xbf16> to vector<128x128xbf16>
    %cst_76 = arith.constant dense<0.000000e+00> : vector<128x128xf32>
    %62 = tpu.matmul %59, %61, %cst_76 {dimension_numbers = #tpu.dot_dimension_numbers<[1], [0], [0], [1], [0, 0, 1, 1], [], []>} : vector<128x128xbf16>, vector<128x128xbf16>, vector<128x128xf32> -> vector<128x128xf32>
    %63 = arith.addf %56, %62 : vector<128x128xf32>
    %c0_77 = arith.constant 0 : index
    %c1_78 = arith.constant 1 : index
    %c2_79 = arith.constant 2 : index
    %c0_80 = arith.constant 0 : index
    %64 = vector.load %arg9[%c0_77, %c1_78, %c2_79, %c0_80] : memref<4x10x10x128xf32, #tpu.memory_space<vmem>>, vector<2x8x8x128xf32>
    %65 = vector.shape_cast %64 : vector<2x8x8x128xf32> to vector<128x128xf32>
    %66 = arith.truncf %65 : vector<128x128xf32> to vector<128x128xbf16>
    %c0_81 = arith.constant 0 : index
    %c5 = arith.constant 5 : index
    %c0_82 = arith.constant 0 : index
    %c0_83 = arith.constant 0 : index
    %67 = vector.load %arg2[%c0_81, %c5, %c0_82, %c0_83] : memref<2x9x128x128xbf16, #tpu.memory_space<vmem>>, vector<1x1x128x128xbf16>
    %68 = vector.shape_cast %67 : vector<1x1x128x128xbf16> to vector<128x128xbf16>
    %cst_84 = arith.constant dense<0.000000e+00> : vector<128x128xf32>
    %69 = tpu.matmul %66, %68, %cst_84 {dimension_numbers = #tpu.dot_dimension_numbers<[1], [0], [0], [1], [0, 0, 1, 1], [], []>} : vector<128x128xbf16>, vector<128x128xbf16>, vector<128x128xf32> -> vector<128x128xf32>
    %70 = arith.addf %63, %69 : vector<128x128xf32>
    %c0_85 = arith.constant 0 : index
    %c2_86 = arith.constant 2 : index
    %c0_87 = arith.constant 0 : index
    %c0_88 = arith.constant 0 : index
    %71 = vector.load %arg9[%c0_85, %c2_86, %c0_87, %c0_88] : memref<4x10x10x128xf32, #tpu.memory_space<vmem>>, vector<2x8x8x128xf32>
    %72 = vector.shape_cast %71 : vector<2x8x8x128xf32> to vector<128x128xf32>
    %73 = arith.truncf %72 : vector<128x128xf32> to vector<128x128xbf16>
    %c0_89 = arith.constant 0 : index
    %c6 = arith.constant 6 : index
    %c0_90 = arith.constant 0 : index
    %c0_91 = arith.constant 0 : index
    %74 = vector.load %arg2[%c0_89, %c6, %c0_90, %c0_91] : memref<2x9x128x128xbf16, #tpu.memory_space<vmem>>, vector<1x1x128x128xbf16>
    %75 = vector.shape_cast %74 : vector<1x1x128x128xbf16> to vector<128x128xbf16>
    %cst_92 = arith.constant dense<0.000000e+00> : vector<128x128xf32>
    %76 = tpu.matmul %73, %75, %cst_92 {dimension_numbers = #tpu.dot_dimension_numbers<[1], [0], [0], [1], [0, 0, 1, 1], [], []>} : vector<128x128xbf16>, vector<128x128xbf16>, vector<128x128xf32> -> vector<128x128xf32>
    %77 = arith.addf %70, %76 : vector<128x128xf32>
    %c0_93 = arith.constant 0 : index
    %c2_94 = arith.constant 2 : index
    %c1_95 = arith.constant 1 : index
    %c0_96 = arith.constant 0 : index
    %78 = vector.load %arg9[%c0_93, %c2_94, %c1_95, %c0_96] : memref<4x10x10x128xf32, #tpu.memory_space<vmem>>, vector<2x8x8x128xf32>
    %79 = vector.shape_cast %78 : vector<2x8x8x128xf32> to vector<128x128xf32>
    %80 = arith.truncf %79 : vector<128x128xf32> to vector<128x128xbf16>
    %c0_97 = arith.constant 0 : index
    %c7 = arith.constant 7 : index
    %c0_98 = arith.constant 0 : index
    %c0_99 = arith.constant 0 : index
    %81 = vector.load %arg2[%c0_97, %c7, %c0_98, %c0_99] : memref<2x9x128x128xbf16, #tpu.memory_space<vmem>>, vector<1x1x128x128xbf16>
    %82 = vector.shape_cast %81 : vector<1x1x128x128xbf16> to vector<128x128xbf16>
    %cst_100 = arith.constant dense<0.000000e+00> : vector<128x128xf32>
    %83 = tpu.matmul %80, %82, %cst_100 {dimension_numbers = #tpu.dot_dimension_numbers<[1], [0], [0], [1], [0, 0, 1, 1], [], []>} : vector<128x128xbf16>, vector<128x128xbf16>, vector<128x128xf32> -> vector<128x128xf32>
    %84 = arith.addf %77, %83 : vector<128x128xf32>
    %c0_101 = arith.constant 0 : index
    %c2_102 = arith.constant 2 : index
    %c2_103 = arith.constant 2 : index
    %c0_104 = arith.constant 0 : index
    %85 = vector.load %arg9[%c0_101, %c2_102, %c2_103, %c0_104] : memref<4x10x10x128xf32, #tpu.memory_space<vmem>>, vector<2x8x8x128xf32>
    %86 = vector.shape_cast %85 : vector<2x8x8x128xf32> to vector<128x128xf32>
    %87 = arith.truncf %86 : vector<128x128xf32> to vector<128x128xbf16>
    %c0_105 = arith.constant 0 : index
    %c8 = arith.constant 8 : index
    %c0_106 = arith.constant 0 : index
    %c0_107 = arith.constant 0 : index
    %88 = vector.load %arg2[%c0_105, %c8, %c0_106, %c0_107] : memref<2x9x128x128xbf16, #tpu.memory_space<vmem>>, vector<1x1x128x128xbf16>
    %89 = vector.shape_cast %88 : vector<1x1x128x128xbf16> to vector<128x128xbf16>
    %cst_108 = arith.constant dense<0.000000e+00> : vector<128x128xf32>
    %90 = tpu.matmul %87, %89, %cst_108 {dimension_numbers = #tpu.dot_dimension_numbers<[1], [0], [0], [1], [0, 0, 1, 1], [], []>} : vector<128x128xbf16>, vector<128x128xbf16>, vector<128x128xf32> -> vector<128x128xf32>
    %91 = arith.addf %84, %90 : vector<128x128xf32>
    %c0_109 = arith.constant 0 : index
    %c0_110 = arith.constant 0 : index
    %c0_111 = arith.constant 0 : index
    %92 = vector.load %arg3[%c0_109, %c0_110, %c0_111] : memref<2x1x128xf32, #tpu.memory_space<vmem>>, vector<1x1x128xf32>
    %93 = vector.shape_cast %92 : vector<1x1x128xf32> to vector<1x128xf32>
    %94 = vector.broadcast %93 : vector<1x128xf32> to vector<128x128xf32>
    %95 = arith.addf %91, %94 : vector<128x128xf32>
    %cst_112 = arith.constant 1.000000e-01 : f32
    %96 = vector.broadcast %cst_112 : f32 to vector<128x128xf32>
    %97 = arith.mulf %96, %95 : vector<128x128xf32>
    %98 = arith.maximumf %95, %97 : vector<128x128xf32>
    %c0_113 = arith.constant 0 : index
    %c0_114 = arith.constant 0 : index
    %c0_115 = arith.constant 0 : index
    %99 = vector.load %arg4[%c0_113, %c0_114, %c0_115] : memref<2x1x128xf32, #tpu.memory_space<vmem>>, vector<1x1x128xf32>
    %100 = vector.shape_cast %99 : vector<1x1x128xf32> to vector<1x128xf32>
    %101 = vector.broadcast %100 : vector<1x128xf32> to vector<128x128xf32>
    %102 = arith.mulf %98, %101 : vector<128x128xf32>
    %c0_116 = arith.constant 0 : index
    %c0_117 = arith.constant 0 : index
    %c0_118 = arith.constant 0 : index
    %103 = vector.load %arg5[%c0_116, %c0_117, %c0_118] : memref<2x1x128xf32, #tpu.memory_space<vmem>>, vector<1x1x128xf32>
    %104 = vector.shape_cast %103 : vector<1x1x128xf32> to vector<1x128xf32>
    %105 = vector.broadcast %104 : vector<1x128xf32> to vector<128x128xf32>
    %106 = arith.addf %102, %105 : vector<128x128xf32>
    %107 = vector.shape_cast %106 : vector<128x128xf32> to vector<2x8x8x128xf32>
    %c0_119 = arith.constant 0 : index
    %c1_120 = arith.constant 1 : index
    %c1_121 = arith.constant 1 : index
    %c0_122 = arith.constant 0 : index
    %108 = vector.load %arg9[%c0_119, %c1_120, %c1_121, %c0_122] : memref<4x10x10x128xf32, #tpu.memory_space<vmem>>, vector<2x8x8x128xf32>
    tpu.vector_store %arg9[%c0_119, %c1_120, %c1_121, %c0_122], %107 {strides = array<i32>} : memref<4x10x10x128xf32, #tpu.memory_space<vmem>>, vector<2x8x8x128xf32>,
    %c2_123 = arith.constant 2 : index
    %c0_124 = arith.constant 0 : index
    %c0_125 = arith.constant 0 : index
    %c0_126 = arith.constant 0 : index
    %109 = vector.load %arg9[%c2_123, %c0_124, %c0_125, %c0_126] : memref<4x10x10x128xf32, #tpu.memory_space<vmem>>, vector<2x8x8x128xf32>
    %110 = vector.shape_cast %109 : vector<2x8x8x128xf32> to vector<128x128xf32>
    %111 = arith.truncf %110 : vector<128x128xf32> to vector<128x128xbf16>
    %c0_127 = arith.constant 0 : index
    %c0_128 = arith.constant 0 : index
    %c0_129 = arith.constant 0 : index
    %c0_130 = arith.constant 0 : index
    %112 = vector.load %arg2[%c0_127, %c0_128, %c0_129, %c0_130] : memref<2x9x128x128xbf16, #tpu.memory_space<vmem>>, vector<1x1x128x128xbf16>
    %113 = vector.shape_cast %112 : vector<1x1x128x128xbf16> to vector<128x128xbf16>
    %cst_131 = arith.constant dense<0.000000e+00> : vector<128x128xf32>
    %114 = tpu.matmul %111, %113, %cst_131 {dimension_numbers = #tpu.dot_dimension_numbers<[1], [0], [0], [1], [0, 0, 1, 1], [], []>} : vector<128x128xbf16>, vector<128x128xbf16>, vector<128x128xf32> -> vector<128x128xf32>
    %c2_132 = arith.constant 2 : index
    %c0_133 = arith.constant 0 : index
    %c1_134 = arith.constant 1 : index
    %c0_135 = arith.constant 0 : index
    %115 = vector.load %arg9[%c2_132, %c0_133, %c1_134, %c0_135] : memref<4x10x10x128xf32, #tpu.memory_space<vmem>>, vector<2x8x8x128xf32>
    %116 = vector.shape_cast %115 : vector<2x8x8x128xf32> to vector<128x128xf32>
    %117 = arith.truncf %116 : vector<128x128xf32> to vector<128x128xbf16>
    %c0_136 = arith.constant 0 : index
    %c1_137 = arith.constant 1 : index
    %c0_138 = arith.constant 0 : index
    %c0_139 = arith.constant 0 : index
    %118 = vector.load %arg2[%c0_136, %c1_137, %c0_138, %c0_139] : memref<2x9x128x128xbf16, #tpu.memory_space<vmem>>, vector<1x1x128x128xbf16>
    %119 = vector.shape_cast %118 : vector<1x1x128x128xbf16> to vector<128x128xbf16>
    %cst_140 = arith.constant dense<0.000000e+00> : vector<128x128xf32>
    %120 = tpu.matmul %117, %119, %cst_140 {dimension_numbers = #tpu.dot_dimension_numbers<[1], [0], [0], [1], [0, 0, 1, 1], [], []>} : vector<128x128xbf16>, vector<128x128xbf16>, vector<128x128xf32> -> vector<128x128xf32>
    %121 = arith.addf %114, %120 : vector<128x128xf32>
    %c2_141 = arith.constant 2 : index
    %c0_142 = arith.constant 0 : index
    %c2_143 = arith.constant 2 : index
    %c0_144 = arith.constant 0 : index
    %122 = vector.load %arg9[%c2_141, %c0_142, %c2_143, %c0_144] : memref<4x10x10x128xf32, #tpu.memory_space<vmem>>, vector<2x8x8x128xf32>
    %123 = vector.shape_cast %122 : vector<2x8x8x128xf32> to vector<128x128xf32>
    %124 = arith.truncf %123 : vector<128x128xf32> to vector<128x128xbf16>
    %c0_145 = arith.constant 0 : index
    %c2_146 = arith.constant 2 : index
    %c0_147 = arith.constant 0 : index
    %c0_148 = arith.constant 0 : index
    %125 = vector.load %arg2[%c0_145, %c2_146, %c0_147, %c0_148] : memref<2x9x128x128xbf16, #tpu.memory_space<vmem>>, vector<1x1x128x128xbf16>
    %126 = vector.shape_cast %125 : vector<1x1x128x128xbf16> to vector<128x128xbf16>
    %cst_149 = arith.constant dense<0.000000e+00> : vector<128x128xf32>
    %127 = tpu.matmul %124, %126, %cst_149 {dimension_numbers = #tpu.dot_dimension_numbers<[1], [0], [0], [1], [0, 0, 1, 1], [], []>} : vector<128x128xbf16>, vector<128x128xbf16>, vector<128x128xf32> -> vector<128x128xf32>
    %128 = arith.addf %121, %127 : vector<128x128xf32>
    %c2_150 = arith.constant 2 : index
    %c1_151 = arith.constant 1 : index
    %c0_152 = arith.constant 0 : index
    %c0_153 = arith.constant 0 : index
    %129 = vector.load %arg9[%c2_150, %c1_151, %c0_152, %c0_153] : memref<4x10x10x128xf32, #tpu.memory_space<vmem>>, vector<2x8x8x128xf32>
    %130 = vector.shape_cast %129 : vector<2x8x8x128xf32> to vector<128x128xf32>
    %131 = arith.truncf %130 : vector<128x128xf32> to vector<128x128xbf16>
    %c0_154 = arith.constant 0 : index
    %c3_155 = arith.constant 3 : index
    %c0_156 = arith.constant 0 : index
    %c0_157 = arith.constant 0 : index
    %132 = vector.load %arg2[%c0_154, %c3_155, %c0_156, %c0_157] : memref<2x9x128x128xbf16, #tpu.memory_space<vmem>>, vector<1x1x128x128xbf16>
    %133 = vector.shape_cast %132 : vector<1x1x128x128xbf16> to vector<128x128xbf16>
    %cst_158 = arith.constant dense<0.000000e+00> : vector<128x128xf32>
    %134 = tpu.matmul %131, %133, %cst_158 {dimension_numbers = #tpu.dot_dimension_numbers<[1], [0], [0], [1], [0, 0, 1, 1], [], []>} : vector<128x128xbf16>, vector<128x128xbf16>, vector<128x128xf32> -> vector<128x128xf32>
    %135 = arith.addf %128, %134 : vector<128x128xf32>
    %c2_159 = arith.constant 2 : index
    %c1_160 = arith.constant 1 : index
    %c1_161 = arith.constant 1 : index
    %c0_162 = arith.constant 0 : index
    %136 = vector.load %arg9[%c2_159, %c1_160, %c1_161, %c0_162] : memref<4x10x10x128xf32, #tpu.memory_space<vmem>>, vector<2x8x8x128xf32>
    %137 = vector.shape_cast %136 : vector<2x8x8x128xf32> to vector<128x128xf32>
    %138 = arith.truncf %137 : vector<128x128xf32> to vector<128x128xbf16>
    %c0_163 = arith.constant 0 : index
    %c4_164 = arith.constant 4 : index
    %c0_165 = arith.constant 0 : index
    %c0_166 = arith.constant 0 : index
    %139 = vector.load %arg2[%c0_163, %c4_164, %c0_165, %c0_166] : memref<2x9x128x128xbf16, #tpu.memory_space<vmem>>, vector<1x1x128x128xbf16>
    %140 = vector.shape_cast %139 : vector<1x1x128x128xbf16> to vector<128x128xbf16>
    %cst_167 = arith.constant dense<0.000000e+00> : vector<128x128xf32>
    %141 = tpu.matmul %138, %140, %cst_167 {dimension_numbers = #tpu.dot_dimension_numbers<[1], [0], [0], [1], [0, 0, 1, 1], [], []>} : vector<128x128xbf16>, vector<128x128xbf16>, vector<128x128xf32> -> vector<128x128xf32>
    %142 = arith.addf %135, %141 : vector<128x128xf32>
    %c2_168 = arith.constant 2 : index
    %c1_169 = arith.constant 1 : index
    %c2_170 = arith.constant 2 : index
    %c0_171 = arith.constant 0 : index
    %143 = vector.load %arg9[%c2_168, %c1_169, %c2_170, %c0_171] : memref<4x10x10x128xf32, #tpu.memory_space<vmem>>, vector<2x8x8x128xf32>
    %144 = vector.shape_cast %143 : vector<2x8x8x128xf32> to vector<128x128xf32>
    %145 = arith.truncf %144 : vector<128x128xf32> to vector<128x128xbf16>
    %c0_172 = arith.constant 0 : index
    %c5_173 = arith.constant 5 : index
    %c0_174 = arith.constant 0 : index
    %c0_175 = arith.constant 0 : index
    %146 = vector.load %arg2[%c0_172, %c5_173, %c0_174, %c0_175] : memref<2x9x128x128xbf16, #tpu.memory_space<vmem>>, vector<1x1x128x128xbf16>
    %147 = vector.shape_cast %146 : vector<1x1x128x128xbf16> to vector<128x128xbf16>
    %cst_176 = arith.constant dense<0.000000e+00> : vector<128x128xf32>
    %148 = tpu.matmul %145, %147, %cst_176 {dimension_numbers = #tpu.dot_dimension_numbers<[1], [0], [0], [1], [0, 0, 1, 1], [], []>} : vector<128x128xbf16>, vector<128x128xbf16>, vector<128x128xf32> -> vector<128x128xf32>
    %149 = arith.addf %142, %148 : vector<128x128xf32>
    %c2_177 = arith.constant 2 : index
    %c2_178 = arith.constant 2 : index
    %c0_179 = arith.constant 0 : index
    %c0_180 = arith.constant 0 : index
    %150 = vector.load %arg9[%c2_177, %c2_178, %c0_179, %c0_180] : memref<4x10x10x128xf32, #tpu.memory_space<vmem>>, vector<2x8x8x128xf32>
    %151 = vector.shape_cast %150 : vector<2x8x8x128xf32> to vector<128x128xf32>
    %152 = arith.truncf %151 : vector<128x128xf32> to vector<128x128xbf16>
    %c0_181 = arith.constant 0 : index
    %c6_182 = arith.constant 6 : index
    %c0_183 = arith.constant 0 : index
    %c0_184 = arith.constant 0 : index
    %153 = vector.load %arg2[%c0_181, %c6_182, %c0_183, %c0_184] : memref<2x9x128x128xbf16, #tpu.memory_space<vmem>>, vector<1x1x128x128xbf16>
    %154 = vector.shape_cast %153 : vector<1x1x128x128xbf16> to vector<128x128xbf16>
    %cst_185 = arith.constant dense<0.000000e+00> : vector<128x128xf32>
    %155 = tpu.matmul %152, %154, %cst_185 {dimension_numbers = #tpu.dot_dimension_numbers<[1], [0], [0], [1], [0, 0, 1, 1], [], []>} : vector<128x128xbf16>, vector<128x128xbf16>, vector<128x128xf32> -> vector<128x128xf32>
    %156 = arith.addf %149, %155 : vector<128x128xf32>
    %c2_186 = arith.constant 2 : index
    %c2_187 = arith.constant 2 : index
    %c1_188 = arith.constant 1 : index
    %c0_189 = arith.constant 0 : index
    %157 = vector.load %arg9[%c2_186, %c2_187, %c1_188, %c0_189] : memref<4x10x10x128xf32, #tpu.memory_space<vmem>>, vector<2x8x8x128xf32>
    %158 = vector.shape_cast %157 : vector<2x8x8x128xf32> to vector<128x128xf32>
    %159 = arith.truncf %158 : vector<128x128xf32> to vector<128x128xbf16>
    %c0_190 = arith.constant 0 : index
    %c7_191 = arith.constant 7 : index
    %c0_192 = arith.constant 0 : index
    %c0_193 = arith.constant 0 : index
    %160 = vector.load %arg2[%c0_190, %c7_191, %c0_192, %c0_193] : memref<2x9x128x128xbf16, #tpu.memory_space<vmem>>, vector<1x1x128x128xbf16>
    %161 = vector.shape_cast %160 : vector<1x1x128x128xbf16> to vector<128x128xbf16>
    %cst_194 = arith.constant dense<0.000000e+00> : vector<128x128xf32>
    %162 = tpu.matmul %159, %161, %cst_194 {dimension_numbers = #tpu.dot_dimension_numbers<[1], [0], [0], [1], [0, 0, 1, 1], [], []>} : vector<128x128xbf16>, vector<128x128xbf16>, vector<128x128xf32> -> vector<128x128xf32>
    %163 = arith.addf %156, %162 : vector<128x128xf32>
    %c2_195 = arith.constant 2 : index
    %c2_196 = arith.constant 2 : index
    %c2_197 = arith.constant 2 : index
    %c0_198 = arith.constant 0 : index
    %164 = vector.load %arg9[%c2_195, %c2_196, %c2_197, %c0_198] : memref<4x10x10x128xf32, #tpu.memory_space<vmem>>, vector<2x8x8x128xf32>
    %165 = vector.shape_cast %164 : vector<2x8x8x128xf32> to vector<128x128xf32>
    %166 = arith.truncf %165 : vector<128x128xf32> to vector<128x128xbf16>
    %c0_199 = arith.constant 0 : index
    %c8_200 = arith.constant 8 : index
    %c0_201 = arith.constant 0 : index
    %c0_202 = arith.constant 0 : index
    %167 = vector.load %arg2[%c0_199, %c8_200, %c0_201, %c0_202] : memref<2x9x128x128xbf16, #tpu.memory_space<vmem>>, vector<1x1x128x128xbf16>
    %168 = vector.shape_cast %167 : vector<1x1x128x128xbf16> to vector<128x128xbf16>
    %cst_203 = arith.constant dense<0.000000e+00> : vector<128x128xf32>
    %169 = tpu.matmul %166, %168, %cst_203 {dimension_numbers = #tpu.dot_dimension_numbers<[1], [0], [0], [1], [0, 0, 1, 1], [], []>} : vector<128x128xbf16>, vector<128x128xbf16>, vector<128x128xf32> -> vector<128x128xf32>
    %170 = arith.addf %163, %169 : vector<128x128xf32>
    %c0_204 = arith.constant 0 : index
    %c0_205 = arith.constant 0 : index
    %c0_206 = arith.constant 0 : index
    %171 = vector.load %arg3[%c0_204, %c0_205, %c0_206] : memref<2x1x128xf32, #tpu.memory_space<vmem>>, vector<1x1x128xf32>
    %172 = vector.shape_cast %171 : vector<1x1x128xf32> to vector<1x128xf32>
    %173 = vector.broadcast %172 : vector<1x128xf32> to vector<128x128xf32>
    %174 = arith.addf %170, %173 : vector<128x128xf32>
    %cst_207 = arith.constant 1.000000e-01 : f32
    %175 = vector.broadcast %cst_207 : f32 to vector<128x128xf32>
    %176 = arith.mulf %175, %174 : vector<128x128xf32>
    %177 = arith.maximumf %174, %176 : vector<128x128xf32>
    %c0_208 = arith.constant 0 : index
    %c0_209 = arith.constant 0 : index
    %c0_210 = arith.constant 0 : index
    %178 = vector.load %arg4[%c0_208, %c0_209, %c0_210] : memref<2x1x128xf32, #tpu.memory_space<vmem>>, vector<1x1x128xf32>
    %179 = vector.shape_cast %178 : vector<1x1x128xf32> to vector<1x128xf32>
    %180 = vector.broadcast %179 : vector<1x128xf32> to vector<128x128xf32>
    %181 = arith.mulf %177, %180 : vector<128x128xf32>
    %c0_211 = arith.constant 0 : index
    %c0_212 = arith.constant 0 : index
    %c0_213 = arith.constant 0 : index
    %182 = vector.load %arg5[%c0_211, %c0_212, %c0_213] : memref<2x1x128xf32, #tpu.memory_space<vmem>>, vector<1x1x128xf32>
    %183 = vector.shape_cast %182 : vector<1x1x128xf32> to vector<1x128xf32>
    %184 = vector.broadcast %183 : vector<1x128xf32> to vector<128x128xf32>
    %185 = arith.addf %181, %184 : vector<128x128xf32>
    %186 = vector.shape_cast %185 : vector<128x128xf32> to vector<2x8x8x128xf32>
    %c2_214 = arith.constant 2 : index
    %c1_215 = arith.constant 1 : index
    %c1_216 = arith.constant 1 : index
    %c0_217 = arith.constant 0 : index
    %187 = vector.load %arg9[%c2_214, %c1_215, %c1_216, %c0_217] : memref<4x10x10x128xf32, #tpu.memory_space<vmem>>, vector<2x8x8x128xf32>
    tpu.vector_store %arg9[%c2_214, %c1_215, %c1_216, %c0_217], %186 {strides = array<i32>} : memref<4x10x10x128xf32, #tpu.memory_space<vmem>>, vector<2x8x8x128xf32>,
    %c0_218 = arith.constant 0 : index
    %c0_219 = arith.constant 0 : index
    %c0_220 = arith.constant 0 : index
    %c0_221 = arith.constant 0 : index
    %188 = vector.load %arg9[%c0_218, %c0_219, %c0_220, %c0_221] : memref<4x10x10x128xf32, #tpu.memory_space<vmem>>, vector<2x8x8x128xf32>
    %189 = vector.shape_cast %188 : vector<2x8x8x128xf32> to vector<128x128xf32>
    %190 = arith.truncf %189 : vector<128x128xf32> to vector<128x128xbf16>
    %c1_222 = arith.constant 1 : index
    %c0_223 = arith.constant 0 : index
    %c0_224 = arith.constant 0 : index
    %c0_225 = arith.constant 0 : index
    %191 = vector.load %arg2[%c1_222, %c0_223, %c0_224, %c0_225] : memref<2x9x128x128xbf16, #tpu.memory_space<vmem>>, vector<1x1x128x128xbf16>
    %192 = vector.shape_cast %191 : vector<1x1x128x128xbf16> to vector<128x128xbf16>
    %cst_226 = arith.constant dense<0.000000e+00> : vector<128x128xf32>
    %193 = tpu.matmul %190, %192, %cst_226 {dimension_numbers = #tpu.dot_dimension_numbers<[1], [0], [0], [1], [0, 0, 1, 1], [], []>} : vector<128x128xbf16>, vector<128x128xbf16>, vector<128x128xf32> -> vector<128x128xf32>
    %c0_227 = arith.constant 0 : index
    %c0_228 = arith.constant 0 : index
    %c1_229 = arith.constant 1 : index
    %c0_230 = arith.constant 0 : index
    %194 = vector.load %arg9[%c0_227, %c0_228, %c1_229, %c0_230] : memref<4x10x10x128xf32, #tpu.memory_space<vmem>>, vector<2x8x8x128xf32>
    %195 = vector.shape_cast %194 : vector<2x8x8x128xf32> to vector<128x128xf32>
    %196 = arith.truncf %195 : vector<128x128xf32> to vector<128x128xbf16>
    %c1_231 = arith.constant 1 : index
    %c1_232 = arith.constant 1 : index
    %c0_233 = arith.constant 0 : index
    %c0_234 = arith.constant 0 : index
    %197 = vector.load %arg2[%c1_231, %c1_232, %c0_233, %c0_234] : memref<2x9x128x128xbf16, #tpu.memory_space<vmem>>, vector<1x1x128x128xbf16>
    %198 = vector.shape_cast %197 : vector<1x1x128x128xbf16> to vector<128x128xbf16>
    %cst_235 = arith.constant dense<0.000000e+00> : vector<128x128xf32>
    %199 = tpu.matmul %196, %198, %cst_235 {dimension_numbers = #tpu.dot_dimension_numbers<[1], [0], [0], [1], [0, 0, 1, 1], [], []>} : vector<128x128xbf16>, vector<128x128xbf16>, vector<128x128xf32> -> vector<128x128xf32>
    %200 = arith.addf %193, %199 : vector<128x128xf32>
    %c0_236 = arith.constant 0 : index
    %c0_237 = arith.constant 0 : index
    %c2_238 = arith.constant 2 : index
    %c0_239 = arith.constant 0 : index
    %201 = vector.load %arg9[%c0_236, %c0_237, %c2_238, %c0_239] : memref<4x10x10x128xf32, #tpu.memory_space<vmem>>, vector<2x8x8x128xf32>
    %202 = vector.shape_cast %201 : vector<2x8x8x128xf32> to vector<128x128xf32>
    %203 = arith.truncf %202 : vector<128x128xf32> to vector<128x128xbf16>
    %c1_240 = arith.constant 1 : index
    %c2_241 = arith.constant 2 : index
    %c0_242 = arith.constant 0 : index
    %c0_243 = arith.constant 0 : index
    %204 = vector.load %arg2[%c1_240, %c2_241, %c0_242, %c0_243] : memref<2x9x128x128xbf16, #tpu.memory_space<vmem>>, vector<1x1x128x128xbf16>
    %205 = vector.shape_cast %204 : vector<1x1x128x128xbf16> to vector<128x128xbf16>
    %cst_244 = arith.constant dense<0.000000e+00> : vector<128x128xf32>
    %206 = tpu.matmul %203, %205, %cst_244 {dimension_numbers = #tpu.dot_dimension_numbers<[1], [0], [0], [1], [0, 0, 1, 1], [], []>} : vector<128x128xbf16>, vector<128x128xbf16>, vector<128x128xf32> -> vector<128x128xf32>
    %207 = arith.addf %200, %206 : vector<128x128xf32>
    %c0_245 = arith.constant 0 : index
    %c1_246 = arith.constant 1 : index
    %c0_247 = arith.constant 0 : index
    %c0_248 = arith.constant 0 : index
    %208 = vector.load %arg9[%c0_245, %c1_246, %c0_247, %c0_248] : memref<4x10x10x128xf32, #tpu.memory_space<vmem>>, vector<2x8x8x128xf32>
    %209 = vector.shape_cast %208 : vector<2x8x8x128xf32> to vector<128x128xf32>
    %210 = arith.truncf %209 : vector<128x128xf32> to vector<128x128xbf16>
    %c1_249 = arith.constant 1 : index
    %c3_250 = arith.constant 3 : index
    %c0_251 = arith.constant 0 : index
    %c0_252 = arith.constant 0 : index
    %211 = vector.load %arg2[%c1_249, %c3_250, %c0_251, %c0_252] : memref<2x9x128x128xbf16, #tpu.memory_space<vmem>>, vector<1x1x128x128xbf16>
    %212 = vector.shape_cast %211 : vector<1x1x128x128xbf16> to vector<128x128xbf16>
    %cst_253 = arith.constant dense<0.000000e+00> : vector<128x128xf32>
    %213 = tpu.matmul %210, %212, %cst_253 {dimension_numbers = #tpu.dot_dimension_numbers<[1], [0], [0], [1], [0, 0, 1, 1], [], []>} : vector<128x128xbf16>, vector<128x128xbf16>, vector<128x128xf32> -> vector<128x128xf32>
    %214 = arith.addf %207, %213 : vector<128x128xf32>
    %c0_254 = arith.constant 0 : index
    %c1_255 = arith.constant 1 : index
    %c1_256 = arith.constant 1 : index
    %c0_257 = arith.constant 0 : index
    %215 = vector.load %arg9[%c0_254, %c1_255, %c1_256, %c0_257] : memref<4x10x10x128xf32, #tpu.memory_space<vmem>>, vector<2x8x8x128xf32>
    %216 = vector.shape_cast %215 : vector<2x8x8x128xf32> to vector<128x128xf32>
    %217 = arith.truncf %216 : vector<128x128xf32> to vector<128x128xbf16>
    %c1_258 = arith.constant 1 : index
    %c4_259 = arith.constant 4 : index
    %c0_260 = arith.constant 0 : index
    %c0_261 = arith.constant 0 : index
    %218 = vector.load %arg2[%c1_258, %c4_259, %c0_260, %c0_261] : memref<2x9x128x128xbf16, #tpu.memory_space<vmem>>, vector<1x1x128x128xbf16>
    %219 = vector.shape_cast %218 : vector<1x1x128x128xbf16> to vector<128x128xbf16>
    %cst_262 = arith.constant dense<0.000000e+00> : vector<128x128xf32>
    %220 = tpu.matmul %217, %219, %cst_262 {dimension_numbers = #tpu.dot_dimension_numbers<[1], [0], [0], [1], [0, 0, 1, 1], [], []>} : vector<128x128xbf16>, vector<128x128xbf16>, vector<128x128xf32> -> vector<128x128xf32>
    %221 = arith.addf %214, %220 : vector<128x128xf32>
    %c0_263 = arith.constant 0 : index
    %c1_264 = arith.constant 1 : index
    %c2_265 = arith.constant 2 : index
    %c0_266 = arith.constant 0 : index
    %222 = vector.load %arg9[%c0_263, %c1_264, %c2_265, %c0_266] : memref<4x10x10x128xf32, #tpu.memory_space<vmem>>, vector<2x8x8x128xf32>
    %223 = vector.shape_cast %222 : vector<2x8x8x128xf32> to vector<128x128xf32>
    %224 = arith.truncf %223 : vector<128x128xf32> to vector<128x128xbf16>
    %c1_267 = arith.constant 1 : index
    %c5_268 = arith.constant 5 : index
    %c0_269 = arith.constant 0 : index
    %c0_270 = arith.constant 0 : index
    %225 = vector.load %arg2[%c1_267, %c5_268, %c0_269, %c0_270] : memref<2x9x128x128xbf16, #tpu.memory_space<vmem>>, vector<1x1x128x128xbf16>
    %226 = vector.shape_cast %225 : vector<1x1x128x128xbf16> to vector<128x128xbf16>
    %cst_271 = arith.constant dense<0.000000e+00> : vector<128x128xf32>
    %227 = tpu.matmul %224, %226, %cst_271 {dimension_numbers = #tpu.dot_dimension_numbers<[1], [0], [0], [1], [0, 0, 1, 1], [], []>} : vector<128x128xbf16>, vector<128x128xbf16>, vector<128x128xf32> -> vector<128x128xf32>
    %228 = arith.addf %221, %227 : vector<128x128xf32>
    %c0_272 = arith.constant 0 : index
    %c2_273 = arith.constant 2 : index
    %c0_274 = arith.constant 0 : index
    %c0_275 = arith.constant 0 : index
    %229 = vector.load %arg9[%c0_272, %c2_273, %c0_274, %c0_275] : memref<4x10x10x128xf32, #tpu.memory_space<vmem>>, vector<2x8x8x128xf32>
    %230 = vector.shape_cast %229 : vector<2x8x8x128xf32> to vector<128x128xf32>
    %231 = arith.truncf %230 : vector<128x128xf32> to vector<128x128xbf16>
    %c1_276 = arith.constant 1 : index
    %c6_277 = arith.constant 6 : index
    %c0_278 = arith.constant 0 : index
    %c0_279 = arith.constant 0 : index
    %232 = vector.load %arg2[%c1_276, %c6_277, %c0_278, %c0_279] : memref<2x9x128x128xbf16, #tpu.memory_space<vmem>>, vector<1x1x128x128xbf16>
    %233 = vector.shape_cast %232 : vector<1x1x128x128xbf16> to vector<128x128xbf16>
    %cst_280 = arith.constant dense<0.000000e+00> : vector<128x128xf32>
    %234 = tpu.matmul %231, %233, %cst_280 {dimension_numbers = #tpu.dot_dimension_numbers<[1], [0], [0], [1], [0, 0, 1, 1], [], []>} : vector<128x128xbf16>, vector<128x128xbf16>, vector<128x128xf32> -> vector<128x128xf32>
    %235 = arith.addf %228, %234 : vector<128x128xf32>
    %c0_281 = arith.constant 0 : index
    %c2_282 = arith.constant 2 : index
    %c1_283 = arith.constant 1 : index
    %c0_284 = arith.constant 0 : index
    %236 = vector.load %arg9[%c0_281, %c2_282, %c1_283, %c0_284] : memref<4x10x10x128xf32, #tpu.memory_space<vmem>>, vector<2x8x8x128xf32>
    %237 = vector.shape_cast %236 : vector<2x8x8x128xf32> to vector<128x128xf32>
    %238 = arith.truncf %237 : vector<128x128xf32> to vector<128x128xbf16>
    %c1_285 = arith.constant 1 : index
    %c7_286 = arith.constant 7 : index
    %c0_287 = arith.constant 0 : index
    %c0_288 = arith.constant 0 : index
    %239 = vector.load %arg2[%c1_285, %c7_286, %c0_287, %c0_288] : memref<2x9x128x128xbf16, #tpu.memory_space<vmem>>, vector<1x1x128x128xbf16>
    %240 = vector.shape_cast %239 : vector<1x1x128x128xbf16> to vector<128x128xbf16>
    %cst_289 = arith.constant dense<0.000000e+00> : vector<128x128xf32>
    %241 = tpu.matmul %238, %240, %cst_289 {dimension_numbers = #tpu.dot_dimension_numbers<[1], [0], [0], [1], [0, 0, 1, 1], [], []>} : vector<128x128xbf16>, vector<128x128xbf16>, vector<128x128xf32> -> vector<128x128xf32>
    %242 = arith.addf %235, %241 : vector<128x128xf32>
    %c0_290 = arith.constant 0 : index
    %c2_291 = arith.constant 2 : index
    %c2_292 = arith.constant 2 : index
    %c0_293 = arith.constant 0 : index
    %243 = vector.load %arg9[%c0_290, %c2_291, %c2_292, %c0_293] : memref<4x10x10x128xf32, #tpu.memory_space<vmem>>, vector<2x8x8x128xf32>
    %244 = vector.shape_cast %243 : vector<2x8x8x128xf32> to vector<128x128xf32>
    %245 = arith.truncf %244 : vector<128x128xf32> to vector<128x128xbf16>
    %c1_294 = arith.constant 1 : index
    %c8_295 = arith.constant 8 : index
    %c0_296 = arith.constant 0 : index
    %c0_297 = arith.constant 0 : index
    %246 = vector.load %arg2[%c1_294, %c8_295, %c0_296, %c0_297] : memref<2x9x128x128xbf16, #tpu.memory_space<vmem>>, vector<1x1x128x128xbf16>
    %247 = vector.shape_cast %246 : vector<1x1x128x128xbf16> to vector<128x128xbf16>
    %cst_298 = arith.constant dense<0.000000e+00> : vector<128x128xf32>
    %248 = tpu.matmul %245, %247, %cst_298 {dimension_numbers = #tpu.dot_dimension_numbers<[1], [0], [0], [1], [0, 0, 1, 1], [], []>} : vector<128x128xbf16>, vector<128x128xbf16>, vector<128x128xf32> -> vector<128x128xf32>
    %249 = arith.addf %242, %248 : vector<128x128xf32>
    %c1_299 = arith.constant 1 : index
    %c0_300 = arith.constant 0 : index
    %c0_301 = arith.constant 0 : index
    %250 = vector.load %arg3[%c1_299, %c0_300, %c0_301] : memref<2x1x128xf32, #tpu.memory_space<vmem>>, vector<1x1x128xf32>
    %251 = vector.shape_cast %250 : vector<1x1x128xf32> to vector<1x128xf32>
    %252 = vector.broadcast %251 : vector<1x128xf32> to vector<128x128xf32>
    %253 = arith.addf %249, %252 : vector<128x128xf32>
    %cst_302 = arith.constant 1.000000e-01 : f32
    %254 = vector.broadcast %cst_302 : f32 to vector<128x128xf32>
    %255 = arith.mulf %254, %253 : vector<128x128xf32>
    %256 = arith.maximumf %253, %255 : vector<128x128xf32>
    %257 = tpu.transpose %256, [1, 0] : vector<128x128xf32> -> vector<128x128xf32>
    %258 = vector.extract_strided_slice %257 {offsets = [0, 0], sizes = [1, 64], strides = [1, 1]} : vector<128x128xf32> to vector<1x64xf32>
    %259 = arith.truncf %258 : vector<1x64xf32> to vector<1x64xbf16>
    %c0_303 = arith.constant 0 : index
    %c0_304 = arith.constant 0 : index
    %260 = vector.load %arg10[%c0_303, %c0_304] : memref<4x512xbf16, #tpu.memory_space<vmem>>, vector<1x64xbf16>
    tpu.vector_store %arg10[%c0_303, %c0_304], %259 {strides = array<i32>} : memref<4x512xbf16, #tpu.memory_space<vmem>>, vector<1x64xbf16>,
    %261 = vector.extract_strided_slice %257 {offsets = [1, 0], sizes = [1, 64], strides = [1, 1]} : vector<128x128xf32> to vector<1x64xf32>
    %262 = arith.truncf %261 : vector<1x64xf32> to vector<1x64xbf16>
    %c0_305 = arith.constant 0 : index
    %c64 = arith.constant 64 : index
    %263 = vector.load %arg10[%c0_305, %c64] : memref<4x512xbf16, #tpu.memory_space<vmem>>, vector<1x64xbf16>
    tpu.vector_store %arg10[%c0_305, %c64], %262 {strides = array<i32>} : memref<4x512xbf16, #tpu.memory_space<vmem>>, vector<1x64xbf16>,
    %264 = vector.extract_strided_slice %257 {offsets = [2, 0], sizes = [1, 64], strides = [1, 1]} : vector<128x128xf32> to vector<1x64xf32>
    %265 = arith.truncf %264 : vector<1x64xf32> to vector<1x64xbf16>
    %c0_306 = arith.constant 0 : index
    %c128 = arith.constant 128 : index
    %266 = vector.load %arg10[%c0_306, %c128] : memref<4x512xbf16, #tpu.memory_space<vmem>>, vector<1x64xbf16>
    tpu.vector_store %arg10[%c0_306, %c128], %265 {strides = array<i32>} : memref<4x512xbf16, #tpu.memory_space<vmem>>, vector<1x64xbf16>,
    %267 = vector.extract_strided_slice %257 {offsets = [3, 0], sizes = [1, 64], strides = [1, 1]} : vector<128x128xf32> to vector<1x64xf32>
    %268 = arith.truncf %267 : vector<1x64xf32> to vector<1x64xbf16>
    %c0_307 = arith.constant 0 : index
    %c192 = arith.constant 192 : index
    %269 = vector.load %arg10[%c0_307, %c192] : memref<4x512xbf16, #tpu.memory_space<vmem>>, vector<1x64xbf16>
    tpu.vector_store %arg10[%c0_307, %c192], %268 {strides = array<i32>} : memref<4x512xbf16, #tpu.memory_space<vmem>>, vector<1x64xbf16>,
    %270 = vector.extract_strided_slice %257 {offsets = [4, 0], sizes = [1, 64], strides = [1, 1]} : vector<128x128xf32> to vector<1x64xf32>
    %271 = arith.truncf %270 : vector<1x64xf32> to vector<1x64xbf16>
    %c0_308 = arith.constant 0 : index
    %c256 = arith.constant 256 : index
    %272 = vector.load %arg10[%c0_308, %c256] : memref<4x512xbf16, #tpu.memory_space<vmem>>, vector<1x64xbf16>
    tpu.vector_store %arg10[%c0_308, %c256], %271 {strides = array<i32>} : memref<4x512xbf16, #tpu.memory_space<vmem>>, vector<1x64xbf16>,
    %273 = vector.extract_strided_slice %257 {offsets = [5, 0], sizes = [1, 64], strides = [1, 1]} : vector<128x128xf32> to vector<1x64xf32>
    %274 = arith.truncf %273 : vector<1x64xf32> to vector<1x64xbf16>
    %c0_309 = arith.constant 0 : index
    %c320 = arith.constant 320 : index
    %275 = vector.load %arg10[%c0_309, %c320] : memref<4x512xbf16, #tpu.memory_space<vmem>>, vector<1x64xbf16>
    tpu.vector_store %arg10[%c0_309, %c320], %274 {strides = array<i32>} : memref<4x512xbf16, #tpu.memory_space<vmem>>, vector<1x64xbf16>,
    %276 = vector.extract_strided_slice %257 {offsets = [6, 0], sizes = [1, 64], strides = [1, 1]} : vector<128x128xf32> to vector<1x64xf32>
    %277 = arith.truncf %276 : vector<1x64xf32> to vector<1x64xbf16>
    %c0_310 = arith.constant 0 : index
    %c384 = arith.constant 384 : index
    %278 = vector.load %arg10[%c0_310, %c384] : memref<4x512xbf16, #tpu.memory_space<vmem>>, vector<1x64xbf16>
    tpu.vector_store %arg10[%c0_310, %c384], %277 {strides = array<i32>} : memref<4x512xbf16, #tpu.memory_space<vmem>>, vector<1x64xbf16>,
    %279 = vector.extract_strided_slice %257 {offsets = [7, 0], sizes = [1, 64], strides = [1, 1]} : vector<128x128xf32> to vector<1x64xf32>
    %280 = arith.truncf %279 : vector<1x64xf32> to vector<1x64xbf16>
    %c0_311 = arith.constant 0 : index
    %c448 = arith.constant 448 : index
    %281 = vector.load %arg10[%c0_311, %c448] : memref<4x512xbf16, #tpu.memory_space<vmem>>, vector<1x64xbf16>
    tpu.vector_store %arg10[%c0_311, %c448], %280 {strides = array<i32>} : memref<4x512xbf16, #tpu.memory_space<vmem>>, vector<1x64xbf16>,
    %282 = vector.extract_strided_slice %257 {offsets = [0, 64], sizes = [1, 64], strides = [1, 1]} : vector<128x128xf32> to vector<1x64xf32>
    %283 = arith.truncf %282 : vector<1x64xf32> to vector<1x64xbf16>
    %c1_312 = arith.constant 1 : index
    %c0_313 = arith.constant 0 : index
    %284 = vector.load %arg10[%c1_312, %c0_313] : memref<4x512xbf16, #tpu.memory_space<vmem>>, vector<1x64xbf16>
    tpu.vector_store %arg10[%c1_312, %c0_313], %283 {strides = array<i32>} : memref<4x512xbf16, #tpu.memory_space<vmem>>, vector<1x64xbf16>,
    %285 = vector.extract_strided_slice %257 {offsets = [1, 64], sizes = [1, 64], strides = [1, 1]} : vector<128x128xf32> to vector<1x64xf32>
    %286 = arith.truncf %285 : vector<1x64xf32> to vector<1x64xbf16>
    %c1_314 = arith.constant 1 : index
    %c64_315 = arith.constant 64 : index
    %287 = vector.load %arg10[%c1_314, %c64_315] : memref<4x512xbf16, #tpu.memory_space<vmem>>, vector<1x64xbf16>
    tpu.vector_store %arg10[%c1_314, %c64_315], %286 {strides = array<i32>} : memref<4x512xbf16, #tpu.memory_space<vmem>>, vector<1x64xbf16>,
    %288 = vector.extract_strided_slice %257 {offsets = [2, 64], sizes = [1, 64], strides = [1, 1]} : vector<128x128xf32> to vector<1x64xf32>
    %289 = arith.truncf %288 : vector<1x64xf32> to vector<1x64xbf16>
    %c1_316 = arith.constant 1 : index
    %c128_317 = arith.constant 128 : index
    %290 = vector.load %arg10[%c1_316, %c128_317] : memref<4x512xbf16, #tpu.memory_space<vmem>>, vector<1x64xbf16>
    tpu.vector_store %arg10[%c1_316, %c128_317], %289 {strides = array<i32>} : memref<4x512xbf16, #tpu.memory_space<vmem>>, vector<1x64xbf16>,
    %291 = vector.extract_strided_slice %257 {offsets = [3, 64], sizes = [1, 64], strides = [1, 1]} : vector<128x128xf32> to vector<1x64xf32>
    %292 = arith.truncf %291 : vector<1x64xf32> to vector<1x64xbf16>
    %c1_318 = arith.constant 1 : index
    %c192_319 = arith.constant 192 : index
    %293 = vector.load %arg10[%c1_318, %c192_319] : memref<4x512xbf16, #tpu.memory_space<vmem>>, vector<1x64xbf16>
    tpu.vector_store %arg10[%c1_318, %c192_319], %292 {strides = array<i32>} : memref<4x512xbf16, #tpu.memory_space<vmem>>, vector<1x64xbf16>,
    %294 = vector.extract_strided_slice %257 {offsets = [4, 64], sizes = [1, 64], strides = [1, 1]} : vector<128x128xf32> to vector<1x64xf32>
    %295 = arith.truncf %294 : vector<1x64xf32> to vector<1x64xbf16>
    %c1_320 = arith.constant 1 : index
    %c256_321 = arith.constant 256 : index
    %296 = vector.load %arg10[%c1_320, %c256_321] : memref<4x512xbf16, #tpu.memory_space<vmem>>, vector<1x64xbf16>
    tpu.vector_store %arg10[%c1_320, %c256_321], %295 {strides = array<i32>} : memref<4x512xbf16, #tpu.memory_space<vmem>>, vector<1x64xbf16>,
    %297 = vector.extract_strided_slice %257 {offsets = [5, 64], sizes = [1, 64], strides = [1, 1]} : vector<128x128xf32> to vector<1x64xf32>
    %298 = arith.truncf %297 : vector<1x64xf32> to vector<1x64xbf16>
    %c1_322 = arith.constant 1 : index
    %c320_323 = arith.constant 320 : index
    %299 = vector.load %arg10[%c1_322, %c320_323] : memref<4x512xbf16, #tpu.memory_space<vmem>>, vector<1x64xbf16>
    tpu.vector_store %arg10[%c1_322, %c320_323], %298 {strides = array<i32>} : memref<4x512xbf16, #tpu.memory_space<vmem>>, vector<1x64xbf16>,
    %300 = vector.extract_strided_slice %257 {offsets = [6, 64], sizes = [1, 64], strides = [1, 1]} : vector<128x128xf32> to vector<1x64xf32>
    %301 = arith.truncf %300 : vector<1x64xf32> to vector<1x64xbf16>
    %c1_324 = arith.constant 1 : index
    %c384_325 = arith.constant 384 : index
    %302 = vector.load %arg10[%c1_324, %c384_325] : memref<4x512xbf16, #tpu.memory_space<vmem>>, vector<1x64xbf16>
    tpu.vector_store %arg10[%c1_324, %c384_325], %301 {strides = array<i32>} : memref<4x512xbf16, #tpu.memory_space<vmem>>, vector<1x64xbf16>,
    %303 = vector.extract_strided_slice %257 {offsets = [7, 64], sizes = [1, 64], strides = [1, 1]} : vector<128x128xf32> to vector<1x64xf32>
    %304 = arith.truncf %303 : vector<1x64xf32> to vector<1x64xbf16>
    %c1_326 = arith.constant 1 : index
    %c448_327 = arith.constant 448 : index
    %305 = vector.load %arg10[%c1_326, %c448_327] : memref<4x512xbf16, #tpu.memory_space<vmem>>, vector<1x64xbf16>
    tpu.vector_store %arg10[%c1_326, %c448_327], %304 {strides = array<i32>} : memref<4x512xbf16, #tpu.memory_space<vmem>>, vector<1x64xbf16>,
    %c2_328 = arith.constant 2 : index
    %c0_329 = arith.constant 0 : index
    %c0_330 = arith.constant 0 : index
    %c0_331 = arith.constant 0 : index
    %306 = vector.load %arg9[%c2_328, %c0_329, %c0_330, %c0_331] : memref<4x10x10x128xf32, #tpu.memory_space<vmem>>, vector<2x8x8x128xf32>
    %307 = vector.shape_cast %306 : vector<2x8x8x128xf32> to vector<128x128xf32>
    %308 = arith.truncf %307 : vector<128x128xf32> to vector<128x128xbf16>
    %c1_332 = arith.constant 1 : index
    %c0_333 = arith.constant 0 : index
    %c0_334 = arith.constant 0 : index
    %c0_335 = arith.constant 0 : index
    %309 = vector.load %arg2[%c1_332, %c0_333, %c0_334, %c0_335] : memref<2x9x128x128xbf16, #tpu.memory_space<vmem>>, vector<1x1x128x128xbf16>
    %310 = vector.shape_cast %309 : vector<1x1x128x128xbf16> to vector<128x128xbf16>
    %cst_336 = arith.constant dense<0.000000e+00> : vector<128x128xf32>
    %311 = tpu.matmul %308, %310, %cst_336 {dimension_numbers = #tpu.dot_dimension_numbers<[1], [0], [0], [1], [0, 0, 1, 1], [], []>} : vector<128x128xbf16>, vector<128x128xbf16>, vector<128x128xf32> -> vector<128x128xf32>
    %c2_337 = arith.constant 2 : index
    %c0_338 = arith.constant 0 : index
    %c1_339 = arith.constant 1 : index
    %c0_340 = arith.constant 0 : index
    %312 = vector.load %arg9[%c2_337, %c0_338, %c1_339, %c0_340] : memref<4x10x10x128xf32, #tpu.memory_space<vmem>>, vector<2x8x8x128xf32>
    %313 = vector.shape_cast %312 : vector<2x8x8x128xf32> to vector<128x128xf32>
    %314 = arith.truncf %313 : vector<128x128xf32> to vector<128x128xbf16>
    %c1_341 = arith.constant 1 : index
    %c1_342 = arith.constant 1 : index
    %c0_343 = arith.constant 0 : index
    %c0_344 = arith.constant 0 : index
    %315 = vector.load %arg2[%c1_341, %c1_342, %c0_343, %c0_344] : memref<2x9x128x128xbf16, #tpu.memory_space<vmem>>, vector<1x1x128x128xbf16>
    %316 = vector.shape_cast %315 : vector<1x1x128x128xbf16> to vector<128x128xbf16>
    %cst_345 = arith.constant dense<0.000000e+00> : vector<128x128xf32>
    %317 = tpu.matmul %314, %316, %cst_345 {dimension_numbers = #tpu.dot_dimension_numbers<[1], [0], [0], [1], [0, 0, 1, 1], [], []>} : vector<128x128xbf16>, vector<128x128xbf16>, vector<128x128xf32> -> vector<128x128xf32>
    %318 = arith.addf %311, %317 : vector<128x128xf32>
    %c2_346 = arith.constant 2 : index
    %c0_347 = arith.constant 0 : index
    %c2_348 = arith.constant 2 : index
    %c0_349 = arith.constant 0 : index
    %319 = vector.load %arg9[%c2_346, %c0_347, %c2_348, %c0_349] : memref<4x10x10x128xf32, #tpu.memory_space<vmem>>, vector<2x8x8x128xf32>
    %320 = vector.shape_cast %319 : vector<2x8x8x128xf32> to vector<128x128xf32>
    %321 = arith.truncf %320 : vector<128x128xf32> to vector<128x128xbf16>
    %c1_350 = arith.constant 1 : index
    %c2_351 = arith.constant 2 : index
    %c0_352 = arith.constant 0 : index
    %c0_353 = arith.constant 0 : index
    %322 = vector.load %arg2[%c1_350, %c2_351, %c0_352, %c0_353] : memref<2x9x128x128xbf16, #tpu.memory_space<vmem>>, vector<1x1x128x128xbf16>
    %323 = vector.shape_cast %322 : vector<1x1x128x128xbf16> to vector<128x128xbf16>
    %cst_354 = arith.constant dense<0.000000e+00> : vector<128x128xf32>
    %324 = tpu.matmul %321, %323, %cst_354 {dimension_numbers = #tpu.dot_dimension_numbers<[1], [0], [0], [1], [0, 0, 1, 1], [], []>} : vector<128x128xbf16>, vector<128x128xbf16>, vector<128x128xf32> -> vector<128x128xf32>
    %325 = arith.addf %318, %324 : vector<128x128xf32>
    %c2_355 = arith.constant 2 : index
    %c1_356 = arith.constant 1 : index
    %c0_357 = arith.constant 0 : index
    %c0_358 = arith.constant 0 : index
    %326 = vector.load %arg9[%c2_355, %c1_356, %c0_357, %c0_358] : memref<4x10x10x128xf32, #tpu.memory_space<vmem>>, vector<2x8x8x128xf32>
    %327 = vector.shape_cast %326 : vector<2x8x8x128xf32> to vector<128x128xf32>
    %328 = arith.truncf %327 : vector<128x128xf32> to vector<128x128xbf16>
    %c1_359 = arith.constant 1 : index
    %c3_360 = arith.constant 3 : index
    %c0_361 = arith.constant 0 : index
    %c0_362 = arith.constant 0 : index
    %329 = vector.load %arg2[%c1_359, %c3_360, %c0_361, %c0_362] : memref<2x9x128x128xbf16, #tpu.memory_space<vmem>>, vector<1x1x128x128xbf16>
    %330 = vector.shape_cast %329 : vector<1x1x128x128xbf16> to vector<128x128xbf16>
    %cst_363 = arith.constant dense<0.000000e+00> : vector<128x128xf32>
    %331 = tpu.matmul %328, %330, %cst_363 {dimension_numbers = #tpu.dot_dimension_numbers<[1], [0], [0], [1], [0, 0, 1, 1], [], []>} : vector<128x128xbf16>, vector<128x128xbf16>, vector<128x128xf32> -> vector<128x128xf32>
    %332 = arith.addf %325, %331 : vector<128x128xf32>
    %c2_364 = arith.constant 2 : index
    %c1_365 = arith.constant 1 : index
    %c1_366 = arith.constant 1 : index
    %c0_367 = arith.constant 0 : index
    %333 = vector.load %arg9[%c2_364, %c1_365, %c1_366, %c0_367] : memref<4x10x10x128xf32, #tpu.memory_space<vmem>>, vector<2x8x8x128xf32>
    %334 = vector.shape_cast %333 : vector<2x8x8x128xf32> to vector<128x128xf32>
    %335 = arith.truncf %334 : vector<128x128xf32> to vector<128x128xbf16>
    %c1_368 = arith.constant 1 : index
    %c4_369 = arith.constant 4 : index
    %c0_370 = arith.constant 0 : index
    %c0_371 = arith.constant 0 : index
    %336 = vector.load %arg2[%c1_368, %c4_369, %c0_370, %c0_371] : memref<2x9x128x128xbf16, #tpu.memory_space<vmem>>, vector<1x1x128x128xbf16>
    %337 = vector.shape_cast %336 : vector<1x1x128x128xbf16> to vector<128x128xbf16>
    %cst_372 = arith.constant dense<0.000000e+00> : vector<128x128xf32>
    %338 = tpu.matmul %335, %337, %cst_372 {dimension_numbers = #tpu.dot_dimension_numbers<[1], [0], [0], [1], [0, 0, 1, 1], [], []>} : vector<128x128xbf16>, vector<128x128xbf16>, vector<128x128xf32> -> vector<128x128xf32>
    %339 = arith.addf %332, %338 : vector<128x128xf32>
    %c2_373 = arith.constant 2 : index
    %c1_374 = arith.constant 1 : index
    %c2_375 = arith.constant 2 : index
    %c0_376 = arith.constant 0 : index
    %340 = vector.load %arg9[%c2_373, %c1_374, %c2_375, %c0_376] : memref<4x10x10x128xf32, #tpu.memory_space<vmem>>, vector<2x8x8x128xf32>
    %341 = vector.shape_cast %340 : vector<2x8x8x128xf32> to vector<128x128xf32>
    %342 = arith.truncf %341 : vector<128x128xf32> to vector<128x128xbf16>
    %c1_377 = arith.constant 1 : index
    %c5_378 = arith.constant 5 : index
    %c0_379 = arith.constant 0 : index
    %c0_380 = arith.constant 0 : index
    %343 = vector.load %arg2[%c1_377, %c5_378, %c0_379, %c0_380] : memref<2x9x128x128xbf16, #tpu.memory_space<vmem>>, vector<1x1x128x128xbf16>
    %344 = vector.shape_cast %343 : vector<1x1x128x128xbf16> to vector<128x128xbf16>
    %cst_381 = arith.constant dense<0.000000e+00> : vector<128x128xf32>
    %345 = tpu.matmul %342, %344, %cst_381 {dimension_numbers = #tpu.dot_dimension_numbers<[1], [0], [0], [1], [0, 0, 1, 1], [], []>} : vector<128x128xbf16>, vector<128x128xbf16>, vector<128x128xf32> -> vector<128x128xf32>
    %346 = arith.addf %339, %345 : vector<128x128xf32>
    %c2_382 = arith.constant 2 : index
    %c2_383 = arith.constant 2 : index
    %c0_384 = arith.constant 0 : index
    %c0_385 = arith.constant 0 : index
    %347 = vector.load %arg9[%c2_382, %c2_383, %c0_384, %c0_385] : memref<4x10x10x128xf32, #tpu.memory_space<vmem>>, vector<2x8x8x128xf32>
    %348 = vector.shape_cast %347 : vector<2x8x8x128xf32> to vector<128x128xf32>
    %349 = arith.truncf %348 : vector<128x128xf32> to vector<128x128xbf16>
    %c1_386 = arith.constant 1 : index
    %c6_387 = arith.constant 6 : index
    %c0_388 = arith.constant 0 : index
    %c0_389 = arith.constant 0 : index
    %350 = vector.load %arg2[%c1_386, %c6_387, %c0_388, %c0_389] : memref<2x9x128x128xbf16, #tpu.memory_space<vmem>>, vector<1x1x128x128xbf16>
    %351 = vector.shape_cast %350 : vector<1x1x128x128xbf16> to vector<128x128xbf16>
    %cst_390 = arith.constant dense<0.000000e+00> : vector<128x128xf32>
    %352 = tpu.matmul %349, %351, %cst_390 {dimension_numbers = #tpu.dot_dimension_numbers<[1], [0], [0], [1], [0, 0, 1, 1], [], []>} : vector<128x128xbf16>, vector<128x128xbf16>, vector<128x128xf32> -> vector<128x128xf32>
    %353 = arith.addf %346, %352 : vector<128x128xf32>
    %c2_391 = arith.constant 2 : index
    %c2_392 = arith.constant 2 : index
    %c1_393 = arith.constant 1 : index
    %c0_394 = arith.constant 0 : index
    %354 = vector.load %arg9[%c2_391, %c2_392, %c1_393, %c0_394] : memref<4x10x10x128xf32, #tpu.memory_space<vmem>>, vector<2x8x8x128xf32>
    %355 = vector.shape_cast %354 : vector<2x8x8x128xf32> to vector<128x128xf32>
    %356 = arith.truncf %355 : vector<128x128xf32> to vector<128x128xbf16>
    %c1_395 = arith.constant 1 : index
    %c7_396 = arith.constant 7 : index
    %c0_397 = arith.constant 0 : index
    %c0_398 = arith.constant 0 : index
    %357 = vector.load %arg2[%c1_395, %c7_396, %c0_397, %c0_398] : memref<2x9x128x128xbf16, #tpu.memory_space<vmem>>, vector<1x1x128x128xbf16>
    %358 = vector.shape_cast %357 : vector<1x1x128x128xbf16> to vector<128x128xbf16>
    %cst_399 = arith.constant dense<0.000000e+00> : vector<128x128xf32>
    %359 = tpu.matmul %356, %358, %cst_399 {dimension_numbers = #tpu.dot_dimension_numbers<[1], [0], [0], [1], [0, 0, 1, 1], [], []>} : vector<128x128xbf16>, vector<128x128xbf16>, vector<128x128xf32> -> vector<128x128xf32>
    %360 = arith.addf %353, %359 : vector<128x128xf32>
    %c2_400 = arith.constant 2 : index
    %c2_401 = arith.constant 2 : index
    %c2_402 = arith.constant 2 : index
    %c0_403 = arith.constant 0 : index
    %361 = vector.load %arg9[%c2_400, %c2_401, %c2_402, %c0_403] : memref<4x10x10x128xf32, #tpu.memory_space<vmem>>, vector<2x8x8x128xf32>
    %362 = vector.shape_cast %361 : vector<2x8x8x128xf32> to vector<128x128xf32>
    %363 = arith.truncf %362 : vector<128x128xf32> to vector<128x128xbf16>
    %c1_404 = arith.constant 1 : index
    %c8_405 = arith.constant 8 : index
    %c0_406 = arith.constant 0 : index
    %c0_407 = arith.constant 0 : index
    %364 = vector.load %arg2[%c1_404, %c8_405, %c0_406, %c0_407] : memref<2x9x128x128xbf16, #tpu.memory_space<vmem>>, vector<1x1x128x128xbf16>
    %365 = vector.shape_cast %364 : vector<1x1x128x128xbf16> to vector<128x128xbf16>
    %cst_408 = arith.constant dense<0.000000e+00> : vector<128x128xf32>
    %366 = tpu.matmul %363, %365, %cst_408 {dimension_numbers = #tpu.dot_dimension_numbers<[1], [0], [0], [1], [0, 0, 1, 1], [], []>} : vector<128x128xbf16>, vector<128x128xbf16>, vector<128x128xf32> -> vector<128x128xf32>
    %367 = arith.addf %360, %366 : vector<128x128xf32>
    %c1_409 = arith.constant 1 : index
    %c0_410 = arith.constant 0 : index
    %c0_411 = arith.constant 0 : index
    %368 = vector.load %arg3[%c1_409, %c0_410, %c0_411] : memref<2x1x128xf32, #tpu.memory_space<vmem>>, vector<1x1x128xf32>
    %369 = vector.shape_cast %368 : vector<1x1x128xf32> to vector<1x128xf32>
    %370 = vector.broadcast %369 : vector<1x128xf32> to vector<128x128xf32>
    %371 = arith.addf %367, %370 : vector<128x128xf32>
    %cst_412 = arith.constant 1.000000e-01 : f32
    %372 = vector.broadcast %cst_412 : f32 to vector<128x128xf32>
    %373 = arith.mulf %372, %371 : vector<128x128xf32>
    %374 = arith.maximumf %371, %373 : vector<128x128xf32>
    %375 = tpu.transpose %374, [1, 0] : vector<128x128xf32> -> vector<128x128xf32>
    %376 = vector.extract_strided_slice %375 {offsets = [0, 0], sizes = [1, 64], strides = [1, 1]} : vector<128x128xf32> to vector<1x64xf32>
    %377 = arith.truncf %376 : vector<1x64xf32> to vector<1x64xbf16>
    %c2_413 = arith.constant 2 : index
    %c0_414 = arith.constant 0 : index
    %378 = vector.load %arg10[%c2_413, %c0_414] : memref<4x512xbf16, #tpu.memory_space<vmem>>, vector<1x64xbf16>
    tpu.vector_store %arg10[%c2_413, %c0_414], %377 {strides = array<i32>} : memref<4x512xbf16, #tpu.memory_space<vmem>>, vector<1x64xbf16>,
    %379 = vector.extract_strided_slice %375 {offsets = [1, 0], sizes = [1, 64], strides = [1, 1]} : vector<128x128xf32> to vector<1x64xf32>
    %380 = arith.truncf %379 : vector<1x64xf32> to vector<1x64xbf16>
    %c2_415 = arith.constant 2 : index
    %c64_416 = arith.constant 64 : index
    %381 = vector.load %arg10[%c2_415, %c64_416] : memref<4x512xbf16, #tpu.memory_space<vmem>>, vector<1x64xbf16>
    tpu.vector_store %arg10[%c2_415, %c64_416], %380 {strides = array<i32>} : memref<4x512xbf16, #tpu.memory_space<vmem>>, vector<1x64xbf16>,
    %382 = vector.extract_strided_slice %375 {offsets = [2, 0], sizes = [1, 64], strides = [1, 1]} : vector<128x128xf32> to vector<1x64xf32>
    %383 = arith.truncf %382 : vector<1x64xf32> to vector<1x64xbf16>
    %c2_417 = arith.constant 2 : index
    %c128_418 = arith.constant 128 : index
    %384 = vector.load %arg10[%c2_417, %c128_418] : memref<4x512xbf16, #tpu.memory_space<vmem>>, vector<1x64xbf16>
    tpu.vector_store %arg10[%c2_417, %c128_418], %383 {strides = array<i32>} : memref<4x512xbf16, #tpu.memory_space<vmem>>, vector<1x64xbf16>,
    %385 = vector.extract_strided_slice %375 {offsets = [3, 0], sizes = [1, 64], strides = [1, 1]} : vector<128x128xf32> to vector<1x64xf32>
    %386 = arith.truncf %385 : vector<1x64xf32> to vector<1x64xbf16>
    %c2_419 = arith.constant 2 : index
    %c192_420 = arith.constant 192 : index
    %387 = vector.load %arg10[%c2_419, %c192_420] : memref<4x512xbf16, #tpu.memory_space<vmem>>, vector<1x64xbf16>
    tpu.vector_store %arg10[%c2_419, %c192_420], %386 {strides = array<i32>} : memref<4x512xbf16, #tpu.memory_space<vmem>>, vector<1x64xbf16>,
    %388 = vector.extract_strided_slice %375 {offsets = [4, 0], sizes = [1, 64], strides = [1, 1]} : vector<128x128xf32> to vector<1x64xf32>
    %389 = arith.truncf %388 : vector<1x64xf32> to vector<1x64xbf16>
    %c2_421 = arith.constant 2 : index
    %c256_422 = arith.constant 256 : index
    %390 = vector.load %arg10[%c2_421, %c256_422] : memref<4x512xbf16, #tpu.memory_space<vmem>>, vector<1x64xbf16>
    tpu.vector_store %arg10[%c2_421, %c256_422], %389 {strides = array<i32>} : memref<4x512xbf16, #tpu.memory_space<vmem>>, vector<1x64xbf16>,
    %391 = vector.extract_strided_slice %375 {offsets = [5, 0], sizes = [1, 64], strides = [1, 1]} : vector<128x128xf32> to vector<1x64xf32>
    %392 = arith.truncf %391 : vector<1x64xf32> to vector<1x64xbf16>
    %c2_423 = arith.constant 2 : index
    %c320_424 = arith.constant 320 : index
    %393 = vector.load %arg10[%c2_423, %c320_424] : memref<4x512xbf16, #tpu.memory_space<vmem>>, vector<1x64xbf16>
    tpu.vector_store %arg10[%c2_423, %c320_424], %392 {strides = array<i32>} : memref<4x512xbf16, #tpu.memory_space<vmem>>, vector<1x64xbf16>,
    %394 = vector.extract_strided_slice %375 {offsets = [6, 0], sizes = [1, 64], strides = [1, 1]} : vector<128x128xf32> to vector<1x64xf32>
    %395 = arith.truncf %394 : vector<1x64xf32> to vector<1x64xbf16>
    %c2_425 = arith.constant 2 : index
    %c384_426 = arith.constant 384 : index
    %396 = vector.load %arg10[%c2_425, %c384_426] : memref<4x512xbf16, #tpu.memory_space<vmem>>, vector<1x64xbf16>
    tpu.vector_store %arg10[%c2_425, %c384_426], %395 {strides = array<i32>} : memref<4x512xbf16, #tpu.memory_space<vmem>>, vector<1x64xbf16>,
    %397 = vector.extract_strided_slice %375 {offsets = [7, 0], sizes = [1, 64], strides = [1, 1]} : vector<128x128xf32> to vector<1x64xf32>
    %398 = arith.truncf %397 : vector<1x64xf32> to vector<1x64xbf16>
    %c2_427 = arith.constant 2 : index
    %c448_428 = arith.constant 448 : index
    %399 = vector.load %arg10[%c2_427, %c448_428] : memref<4x512xbf16, #tpu.memory_space<vmem>>, vector<1x64xbf16>
    tpu.vector_store %arg10[%c2_427, %c448_428], %398 {strides = array<i32>} : memref<4x512xbf16, #tpu.memory_space<vmem>>, vector<1x64xbf16>,
    %400 = vector.extract_strided_slice %375 {offsets = [0, 64], sizes = [1, 64], strides = [1, 1]} : vector<128x128xf32> to vector<1x64xf32>
    %401 = arith.truncf %400 : vector<1x64xf32> to vector<1x64xbf16>
    %c3_429 = arith.constant 3 : index
    %c0_430 = arith.constant 0 : index
    %402 = vector.load %arg10[%c3_429, %c0_430] : memref<4x512xbf16, #tpu.memory_space<vmem>>, vector<1x64xbf16>
    tpu.vector_store %arg10[%c3_429, %c0_430], %401 {strides = array<i32>} : memref<4x512xbf16, #tpu.memory_space<vmem>>, vector<1x64xbf16>,
    %403 = vector.extract_strided_slice %375 {offsets = [1, 64], sizes = [1, 64], strides = [1, 1]} : vector<128x128xf32> to vector<1x64xf32>
    %404 = arith.truncf %403 : vector<1x64xf32> to vector<1x64xbf16>
    %c3_431 = arith.constant 3 : index
    %c64_432 = arith.constant 64 : index
    %405 = vector.load %arg10[%c3_431, %c64_432] : memref<4x512xbf16, #tpu.memory_space<vmem>>, vector<1x64xbf16>
    tpu.vector_store %arg10[%c3_431, %c64_432], %404 {strides = array<i32>} : memref<4x512xbf16, #tpu.memory_space<vmem>>, vector<1x64xbf16>,
    %406 = vector.extract_strided_slice %375 {offsets = [2, 64], sizes = [1, 64], strides = [1, 1]} : vector<128x128xf32> to vector<1x64xf32>
    %407 = arith.truncf %406 : vector<1x64xf32> to vector<1x64xbf16>
    %c3_433 = arith.constant 3 : index
    %c128_434 = arith.constant 128 : index
    %408 = vector.load %arg10[%c3_433, %c128_434] : memref<4x512xbf16, #tpu.memory_space<vmem>>, vector<1x64xbf16>
    tpu.vector_store %arg10[%c3_433, %c128_434], %407 {strides = array<i32>} : memref<4x512xbf16, #tpu.memory_space<vmem>>, vector<1x64xbf16>,
    %409 = vector.extract_strided_slice %375 {offsets = [3, 64], sizes = [1, 64], strides = [1, 1]} : vector<128x128xf32> to vector<1x64xf32>
    %410 = arith.truncf %409 : vector<1x64xf32> to vector<1x64xbf16>
    %c3_435 = arith.constant 3 : index
    %c192_436 = arith.constant 192 : index
    %411 = vector.load %arg10[%c3_435, %c192_436] : memref<4x512xbf16, #tpu.memory_space<vmem>>, vector<1x64xbf16>
    tpu.vector_store %arg10[%c3_435, %c192_436], %410 {strides = array<i32>} : memref<4x512xbf16, #tpu.memory_space<vmem>>, vector<1x64xbf16>,
    %412 = vector.extract_strided_slice %375 {offsets = [4, 64], sizes = [1, 64], strides = [1, 1]} : vector<128x128xf32> to vector<1x64xf32>
    %413 = arith.truncf %412 : vector<1x64xf32> to vector<1x64xbf16>
    %c3_437 = arith.constant 3 : index
    %c256_438 = arith.constant 256 : index
    %414 = vector.load %arg10[%c3_437, %c256_438] : memref<4x512xbf16, #tpu.memory_space<vmem>>, vector<1x64xbf16>
    tpu.vector_store %arg10[%c3_437, %c256_438], %413 {strides = array<i32>} : memref<4x512xbf16, #tpu.memory_space<vmem>>, vector<1x64xbf16>,
    %415 = vector.extract_strided_slice %375 {offsets = [5, 64], sizes = [1, 64], strides = [1, 1]} : vector<128x128xf32> to vector<1x64xf32>
    %416 = arith.truncf %415 : vector<1x64xf32> to vector<1x64xbf16>
    %c3_439 = arith.constant 3 : index
    %c320_440 = arith.constant 320 : index
    %417 = vector.load %arg10[%c3_439, %c320_440] : memref<4x512xbf16, #tpu.memory_space<vmem>>, vector<1x64xbf16>
    tpu.vector_store %arg10[%c3_439, %c320_440], %416 {strides = array<i32>} : memref<4x512xbf16, #tpu.memory_space<vmem>>, vector<1x64xbf16>,
    %418 = vector.extract_strided_slice %375 {offsets = [6, 64], sizes = [1, 64], strides = [1, 1]} : vector<128x128xf32> to vector<1x64xf32>
    %419 = arith.truncf %418 : vector<1x64xf32> to vector<1x64xbf16>
    %c3_441 = arith.constant 3 : index
    %c384_442 = arith.constant 384 : index
    %420 = vector.load %arg10[%c3_441, %c384_442] : memref<4x512xbf16, #tpu.memory_space<vmem>>, vector<1x64xbf16>
    tpu.vector_store %arg10[%c3_441, %c384_442], %419 {strides = array<i32>} : memref<4x512xbf16, #tpu.memory_space<vmem>>, vector<1x64xbf16>,
    %421 = vector.extract_strided_slice %375 {offsets = [7, 64], sizes = [1, 64], strides = [1, 1]} : vector<128x128xf32> to vector<1x64xf32>
    %422 = arith.truncf %421 : vector<1x64xf32> to vector<1x64xbf16>
    %c3_443 = arith.constant 3 : index
    %c448_444 = arith.constant 448 : index
    %423 = vector.load %arg10[%c3_443, %c448_444] : memref<4x512xbf16, #tpu.memory_space<vmem>>, vector<1x64xbf16>
    tpu.vector_store %arg10[%c3_443, %c448_444], %422 {strides = array<i32>} : memref<4x512xbf16, #tpu.memory_space<vmem>>, vector<1x64xbf16>,
    %c0_445 = arith.constant 0 : index
    %c0_446 = arith.constant 0 : index
    %424 = vector.load %arg10[%c0_445, %c0_446] : memref<4x512xbf16, #tpu.memory_space<vmem>>, vector<4x512xbf16>
    %c0_447 = arith.constant 0 : index
    %c0_448 = arith.constant 0 : index
    %425 = vector.load %arg6[%c0_447, %c0_448] : memref<512x128xbf16, #tpu.memory_space<vmem>>, vector<512x128xbf16>
    %cst_449 = arith.constant dense<0.000000e+00> : vector<4x128xf32>
    %426 = tpu.matmul %424, %425, %cst_449 {dimension_numbers = #tpu.dot_dimension_numbers<[1], [0], [0], [1], [0, 0, 1, 1], [], []>} : vector<4x512xbf16>, vector<512x128xbf16>, vector<4x128xf32> -> vector<4x128xf32>
    %c0_450 = arith.constant 0 : index
    %c0_451 = arith.constant 0 : index
    %427 = vector.load %arg7[%c0_450, %c0_451] : memref<1x128xf32, #tpu.memory_space<vmem>>, vector<1x128xf32>
    %428 = vector.broadcast %427 : vector<1x128xf32> to vector<4x128xf32>
    %429 = arith.addf %426, %428 : vector<4x128xf32>
    %c0_452 = arith.constant 0 : index
    %c0_453 = arith.constant 0 : index
    %c0_454 = arith.constant 0 : index
    %430 = vector.load %arg8[%c0_452, %c0_453, %c0_454] : memref<1x4x128xf32, #tpu.memory_space<vmem>>, vector<1x4x128xf32>
    %431 = vector.shape_cast %430 : vector<1x4x128xf32> to vector<4x128xf32>
    %432 = vector.shape_cast %429 : vector<4x128xf32> to vector<1x4x128xf32>
    tpu.vector_store %arg8[%c0_452, %c0_453, %c0_454], %432 {strides = array<i32>} : memref<1x4x128xf32, #tpu.memory_space<vmem>>, vector<1x4x128xf32>,
    return
  }
  func.func @transform_0(%arg0: i32) -> (i32, i32, i32) {
    %c0_i32 = arith.constant 0 : i32
    %c0_i32_0 = arith.constant 0 : i32
    %c0_i32_1 = arith.constant 0 : i32
    return %arg0, %c0_i32, %c0_i32_0 : i32, i32, i32
  }
  func.func @transform_1(%arg0: i32) -> (i32, i32, i32, i32) {
    %c0_i32 = arith.constant 0 : i32
    %c0_i32_0 = arith.constant 0 : i32
    %c0_i32_1 = arith.constant 0 : i32
    %c0_i32_2 = arith.constant 0 : i32
    %c0_i32_3 = arith.constant 0 : i32
    return %c0_i32, %c0_i32_0, %c0_i32_1, %c0_i32_2 : i32, i32, i32, i32
  }
  func.func @transform_2(%arg0: i32) -> (i32, i32, i32) {
    %c0_i32 = arith.constant 0 : i32
    %c0_i32_0 = arith.constant 0 : i32
    %c0_i32_1 = arith.constant 0 : i32
    %c0_i32_2 = arith.constant 0 : i32
    return %c0_i32, %c0_i32_0, %c0_i32_1 : i32, i32, i32
  }
  func.func @transform_3(%arg0: i32) -> (i32, i32, i32) {
    %c0_i32 = arith.constant 0 : i32
    %c0_i32_0 = arith.constant 0 : i32
    %c0_i32_1 = arith.constant 0 : i32
    %c0_i32_2 = arith.constant 0 : i32
    return %c0_i32, %c0_i32_0, %c0_i32_1 : i32, i32, i32
  }
  func.func @transform_4(%arg0: i32) -> (i32, i32, i32) {
    %c0_i32 = arith.constant 0 : i32
    %c0_i32_0 = arith.constant 0 : i32
    %c0_i32_1 = arith.constant 0 : i32
    %c0_i32_2 = arith.constant 0 : i32
    return %c0_i32, %c0_i32_0, %c0_i32_1 : i32, i32, i32
  }
  func.func @transform_5(%arg0: i32) -> (i32, i32) {
    %c0_i32 = arith.constant 0 : i32
    %c0_i32_0 = arith.constant 0 : i32
    %c0_i32_1 = arith.constant 0 : i32
    return %c0_i32, %c0_i32_0 : i32, i32
  }
  func.func @transform_6(%arg0: i32) -> (i32, i32) {
    %c0_i32 = arith.constant 0 : i32
    %c0_i32_0 = arith.constant 0 : i32
    %c0_i32_1 = arith.constant 0 : i32
    return %c0_i32, %c0_i32_0 : i32, i32
  }
  func.func @transform_7(%arg0: i32) -> (i32, i32, i32) {
    %c0_i32 = arith.constant 0 : i32
    %c0_i32_0 = arith.constant 0 : i32
    %c0_i32_1 = arith.constant 0 : i32
    return %arg0, %c0_i32, %c0_i32_0 : i32, i32, i32
  }
}

</mosaic_0001>

<llo_original>
// kernel: signal_encoder_forward.1
$region0: #{signal_encoder_forward.1}
  #allocation0 [shape = 'u32[]', space=smem, size = 0x4, offset = 0x4, fixed_abs, tag = 'smem constant byte address 0x4 - core index']
  #allocation1 [shape = 'u32[144,128]{1,0:T(1,128)}', space=vmem, size = 0x12000, scoped, tag = 'internal scratch']
  #allocation2 [shape = 'f32[4,10,10,128]{3,2,1,0:T(8,128)}', space=vmem, size = 0x50000, scoped, tag = 'scratch operand']
  #allocation3 [shape = 'bf16[4,512]{1,0:T(4,128)(2,1)}', space=vmem, size = 0x1000, scoped, tag = 'scratch operand']
  %s0 = inlined_call_operand.vmem [shape: f32[2,64,4], index: 0, kind: input, shape index: {}]
  %s1 = inlined_call_operand.vmem [shape: bf16[2,9,128,128], index: 1, kind: input, shape index: {}]
  %s2 = inlined_call_operand.vmem [shape: f32[2,1,128], index: 2, kind: input, shape index: {}]
  %s3 = inlined_call_operand.vmem [shape: f32[2,1,128], index: 3, kind: input, shape index: {}]
  %s4 = inlined_call_operand.vmem [shape: f32[2,1,128], index: 4, kind: input, shape index: {}]
  %s5 = inlined_call_operand.hbm [shape: bf16[512,128], index: 5, kind: input, shape index: {}]
  %s6 = inlined_call_operand.vmem [shape: f32[1,128], index: 6, kind: input, shape index: {}]
  %s7 = inlined_call_operand.hbm [shape: f32[2,4,128], index: 7, kind: output, shape index: {}]
  %s8 = sld [smem:[#allocation0]]
  $region65: #{signal_encoder_forward.1} parent=0
    _
  %s10 = ssub.s32 1, %s8
  %s11 = scalar_select 0, %s10, %s8
  $region1: #{signal_encoder_forward.1} parent=0
    #allocation4 [shape = 'u8[131072]{0}', space=vmem, size = 0x20000, scoped, tag = 'input window, operand 5, single buffered']
    #allocation5 [shape = 's32[2]{0}', space=sflag, size = 0x8, scoped, tag = 'scoped memory for signal_encoder_forward.1']
    #allocation6 [shape = 's32[2]{0}', space=sflag, size = 0x8, scoped, tag = 'scoped memory for signal_encoder_forward.1']
    #allocation7 [shape = 'u8[4096]{0}', space=vmem, size = 0x1000, scoped, tag = 'output window, operand 0']
    %12 = vsyncpa [#allocation5], 0
    %13 = vsyncpa [#allocation6], 0
    %s14 = scalar_lea.sflag [#allocation6], 1
    %15 = vsyncpa %s14, 0
    loop: start=0, step=1, limit=4
    $region2: #{signal_encoder_forward.1} parent=1 // loop_pre_header
      _
    $region3: #{signal_encoder_forward.1} parent=1 // loop_header
      %s17 = sphi 0, %s21
      %p18 = scmp.ge.s32.totalorder %s17, 4
      %s27 = sphi 0, %s29
      %s30 = sphi 0, %s27
      %s31 = sphi 0, %s30
      %s47 = sphi 0, %s31
      %s51 = sphi 0, %s51
      %s53 = sphi 0, %s51
      %s54 = sphi 0, %s53
      %s68 = sphi 0, %s54
      %s72 = sphi 0, %s72
      %s74 = sphi 0, %s72
      %s75 = sphi 0, %s74
      %s89 = sphi 0, %s75
      %s93 = sphi 0, %s93
      %s95 = sphi 0, %s93
      %s96 = sphi 0, %s95
      %s110 = sphi 0, %s96
      %s114 = sphi 0, %s114
      %s116 = sphi 0, %s114
      %s117 = sphi 0, %s116
      %s131 = sphi 0, %s117
      %s135 = sphi 0, %s135
      %s137 = sphi 0, %s135
      %s138 = sphi 0, %s137
      %s152 = sphi 0, %s138
      %s156 = sphi 0, %s156
      %s158 = sphi 0, %s156
      %s159 = sphi 0, %s158
      %s173 = sphi 0, %s159
      %s179 = sphi 0, %s181
      %s182 = sphi 0, %s179
      %s183 = sphi 0, %s182
      %s199 = sphi 0, %s183
    $region4: #{signal_encoder_forward.1} parent=1 // loop_header_branch
      %20 = sbr.rel (%p18) target = $region8
    $region5: #{signal_encoder_forward.1} parent=1 // loop_body
      %s22 = ssub.s32 %s17, 1
      %s23 = ssub.s32 %s17, 2
      %s24 = sadd.s32 %s17, 1
      %s25 = ssub.s32 %s17, %s24
      %p26 = scmp.eq.s32.totalorder %s25, 0
      %s28 = sadd.s32 %s27, 1
      %s29 = scalar_select %p26, %s27, %s28
      %p32 = pneg %p26
      %p33 = scmp.eq.s32.totalorder %s17, 1
      %p34 = por %p32, %p33
      %p35 = scmp.ne.s32.totalorder %s27, %s30
      %p36 = scmp.eq.s32.totalorder %s17, 0
      %p37 = por %p35, %p36
      %p38 = scmp.ne.s32.totalorder %s27, %s30
      %p39 = scmp.eq.s32.totalorder %s22, 1
      %p40 = por %p38, %p39
      %p41 = scmp.ne.s32.totalorder %s30, %s31
      %p42 = scmp.eq.s32.totalorder %s22, 0
      %p43 = por %p41, %p42
      %p44 = scmp.ne.s32.totalorder %s30, %s31
      %p45 = scmp.eq.s32.totalorder %s23, 1
      %p46 = por %p44, %p45
      %p48 = scmp.ne.s32.totalorder %s31, %s47
      %p49 = scmp.eq.s32.totalorder %s23, 0
      %p50 = por %p48, %p49
      %s52 = sadd.s32 %s51, 1
      %p55 = scmp.eq.s32.totalorder %s17, 1
      %p56 = scmp.ne.s32.totalorder %s51, %s53
      %p57 = scmp.eq.s32.totalorder %s17, 0
      %p58 = por %p56, %p57
      %p59 = scmp.ne.s32.totalorder %s51, %s53
      %p60 = scmp.eq.s32.totalorder %s22, 1
      %p61 = por %p59, %p60
      %p62 = scmp.ne.s32.totalorder %s53, %s54
      %p63 = scmp.eq.s32.totalorder %s22, 0
      %p64 = por %p62, %p63
      %p65 = scmp.ne.s32.totalorder %s53, %s54
      %p66 = scmp.eq.s32.totalorder %s23, 1
      %p67 = por %p65, %p66
      %p69 = scmp.ne.s32.totalorder %s54, %s68
      %p70 = scmp.eq.s32.totalorder %s23, 0
      %p71 = por %p69, %p70
      %s73 = sadd.s32 %s72, 1
      %p76 = scmp.eq.s32.totalorder %s17, 1
      %p77 = scmp.ne.s32.totalorder %s72, %s74
      %p78 = scmp.eq.s32.totalorder %s17, 0
      %p79 = por %p77, %p78
      %p80 = scmp.ne.s32.totalorder %s72, %s74
      %p81 = scmp.eq.s32.totalorder %s22, 1
      %p82 = por %p80, %p81
      %p83 = scmp.ne.s32.totalorder %s74, %s75
      %p84 = scmp.eq.s32.totalorder %s22, 0
      %p85 = por %p83, %p84
      %p86 = scmp.ne.s32.totalorder %s74, %s75
      %p87 = scmp.eq.s32.totalorder %s23, 1
      %p88 = por %p86, %p87
      %p90 = scmp.ne.s32.totalorder %s75, %s89
      %p91 = scmp.eq.s32.totalorder %s23, 0
      %p92 = por %p90, %p91
      %s94 = sadd.s32 %s93, 1
      %p97 = scmp.eq.s32.totalorder %s17, 1
      %p98 = scmp.ne.s32.totalorder %s93, %s95
      %p99 = scmp.eq.s32.totalorder %s17, 0
      %p100 = por %p98, %p99
      %p101 = scmp.ne.s32.totalorder %s93, %s95
      %p102 = scmp.eq.s32.totalorder %s22, 1
      %p103 = por %p101, %p102
      %p104 = scmp.ne.s32.totalorder %s95, %s96
      %p105 = scmp.eq.s32.totalorder %s22, 0
      %p106 = por %p104, %p105
      %p107 = scmp.ne.s32.totalorder %s95, %s96
      %p108 = scmp.eq.s32.totalorder %s23, 1
      %p109 = por %p107, %p108
      %p111 = scmp.ne.s32.totalorder %s96, %s110
      %p112 = scmp.eq.s32.totalorder %s23, 0
      %p113 = por %p111, %p112
      %s115 = sadd.s32 %s114, 1
      %p118 = scmp.eq.s32.totalorder %s17, 1
      %p119 = scmp.ne.s32.totalorder %s114, %s116
      %p120 = scmp.eq.s32.totalorder %s17, 0
      %p121 = por %p119, %p120
      %p122 = scmp.ne.s32.totalorder %s114, %s116
      %p123 = scmp.eq.s32.totalorder %s22, 1
      %p124 = por %p122, %p123
      %p125 = scmp.ne.s32.totalorder %s116, %s117
      %p126 = scmp.eq.s32.totalorder %s22, 0
      %p127 = por %p125, %p126
      %p128 = scmp.ne.s32.totalorder %s116, %s117
      %p129 = scmp.eq.s32.totalorder %s23, 1
      %p130 = por %p128, %p129
      %p132 = scmp.ne.s32.totalorder %s117, %s131
      %p133 = scmp.eq.s32.totalorder %s23, 0
      %p134 = por %p132, %p133
      %s136 = sadd.s32 %s135, 1
      %p139 = scmp.eq.s32.totalorder %s17, 1
      %p140 = scmp.ne.s32.totalorder %s135, %s137
      %p141 = scmp.eq.s32.totalorder %s17, 0
      %p142 = por %p140, %p141
      %p143 = scmp.ne.s32.totalorder %s135, %s137
      %p144 = scmp.eq.s32.totalorder %s22, 1
      %p145 = por %p143, %p144
      %p146 = scmp.ne.s32.totalorder %s137, %s138
      %p147 = scmp.eq.s32.totalorder %s22, 0
      %p148 = por %p146, %p147
      %p149 = scmp.ne.s32.totalorder %s137, %s138
      %p150 = scmp.eq.s32.totalorder %s23, 1
      %p151 = por %p149, %p150
      %p153 = scmp.ne.s32.totalorder %s138, %s152
      %p154 = scmp.eq.s32.totalorder %s23, 0
      %p155 = por %p153, %p154
      %s157 = sadd.s32 %s156, 1
      %p160 = scmp.eq.s32.totalorder %s17, 1
      %p161 = scmp.ne.s32.totalorder %s156, %s158
      %p162 = scmp.eq.s32.totalorder %s17, 0
      %p163 = por %p161, %p162
      %p164 = scmp.ne.s32.totalorder %s156, %s158
      %p165 = scmp.eq.s32.totalorder %s22, 1
      %p166 = por %p164, %p165
      %p167 = scmp.ne.s32.totalorder %s158, %s159
      %p168 = scmp.eq.s32.totalorder %s22, 0
      %p169 = por %p167, %p168
      %p170 = scmp.ne.s32.totalorder %s158, %s159
      %p171 = scmp.eq.s32.totalorder %s23, 1
      %p172 = por %p170, %p171
      %p174 = scmp.ne.s32.totalorder %s159, %s173
      %p175 = scmp.eq.s32.totalorder %s23, 0
      %p176 = por %p174, %p175
      %s177 = ssub.s32 %s17, %s24
      %p178 = scmp.eq.s32.totalorder %s177, 0
      %s180 = sadd.s32 %s179, 1
      %s181 = scalar_select %p178, %s179, %s180
      %p184 = pneg %p178
      %p185 = scmp.eq.s32.totalorder %s17, 1
      %p186 = por %p184, %p185
      %p187 = scmp.ne.s32.totalorder %s179, %s182
      %p188 = scmp.eq.s32.totalorder %s17, 0
      %p189 = por %p187, %p188
      %p190 = scmp.ne.s32.totalorder %s179, %s182
      %p191 = scmp.eq.s32.totalorder %s22, 1
      %p192 = por %p190, %p191
      %p193 = scmp.ne.s32.totalorder %s182, %s183
      %p194 = scmp.eq.s32.totalorder %s22, 0
      %p195 = por %p193, %p194
      %p196 = scmp.ne.s32.totalorder %s182, %s183
      %p197 = scmp.eq.s32.totalorder %s23, 1
      %p198 = por %p196, %p197
      %p200 = scmp.ne.s32.totalorder %s183, %s199
      %p201 = scmp.eq.s32.totalorder %s23, 0
      %p202 = por %p200, %p201
      %p203 = scmp.le.s32.totalorder 1, %s17
      %p204 = scmp.lt.s32.totalorder %s17, 3
      %p205 = pnand %p203, %p204
      %p206 = pneg %p205
      // Predicated region
      $region9: #{signal_encoder_forward.1} parent=5 // pred_check
        _
      $region10: #{signal_encoder_forward.1} parent=5 // pred_check_branch
        %208 = sbr.rel (%p205) target = $region12
      $region11: #{signal_encoder_forward.1} parent=5 // pred_region
        %s209 = ssub.s32 %s17, 1
        // Predicated region
        $region13: #{signal_encoder_forward.1} parent=11 // pred_check
          %p210 = pneg %p64
        $region14: #{signal_encoder_forward.1} parent=11 // pred_check_branch
          %212 = sbr.rel (%p210) target = $region16
        $region15: #{signal_encoder_forward.1} parent=11 // pred_region
          _
        $region16: #{signal_encoder_forward.1} parent=11 // pred_fallthru
          _
        // Predicated region
        $region17: #{signal_encoder_forward.1} parent=11 // pred_check
          %p213 = pneg %p85
        $region18: #{signal_encoder_forward.1} parent=11 // pred_check_branch
          %215 = sbr.rel (%p213) target = $region20
        $region19: #{signal_encoder_forward.1} parent=11 // pred_region
          _
        $region20: #{signal_encoder_forward.1} parent=11 // pred_fallthru
          _
        // Predicated region
        $region21: #{signal_encoder_forward.1} parent=11 // pred_check
          %p216 = pneg %p106
        $region22: #{signal_encoder_forward.1} parent=11 // pred_check_branch
          %218 = sbr.rel (%p216) target = $region24
        $region23: #{signal_encoder_forward.1} parent=11 // pred_region
          _
        $region24: #{signal_encoder_forward.1} parent=11 // pred_fallthru
          _
        // Predicated region
        $region25: #{signal_encoder_forward.1} parent=11 // pred_check
          %p219 = pneg %p127
        $region26: #{signal_encoder_forward.1} parent=11 // pred_check_branch
          %221 = sbr.rel (%p219) target = $region28
        $region27: #{signal_encoder_forward.1} parent=11 // pred_region
          _
        $region28: #{signal_encoder_forward.1} parent=11 // pred_fallthru
          _
        // Predicated region
        $region29: #{signal_encoder_forward.1} parent=11 // pred_check
          %p222 = pneg %p148
        $region30: #{signal_encoder_forward.1} parent=11 // pred_check_branch
          %224 = sbr.rel (%p222) target = $region32
        $region31: #{signal_encoder_forward.1} parent=11 // pred_region
          %s226 = ssub.s32 4096, 4096
          %227 = vsyncadd [#allocation5], %s226
          %s228 = sshll.u32 [#allocation4], 4
          %s229 = int_to_ptr.vmem [resolvable:$true] %s228
          %234 = dma.hbm_to_vmem [thread:$0]  %s5, 4096, %s229, [#allocation5], 64, 64, 4
        $region32: #{signal_encoder_forward.1} parent=11 // pred_fallthru
          _
        // Predicated region
        $region33: #{signal_encoder_forward.1} parent=11 // pred_check
          %p235 = pneg %p169
        $region34: #{signal_encoder_forward.1} parent=11 // pred_check_branch
          %237 = sbr.rel (%p235) target = $region36
        $region35: #{signal_encoder_forward.1} parent=11 // pred_region
          _
        $region36: #{signal_encoder_forward.1} parent=11 // pred_fallthru
          _
      $region12: #{signal_encoder_forward.1} parent=5 // pred_fallthru
        _
      %p238 = scmp.lt.s32.totalorder %s17, 2
      // Predicated region
      $region37: #{signal_encoder_forward.1} parent=5 // pred_check
        %p239 = pneg %p238
      $region38: #{signal_encoder_forward.1} parent=5 // pred_check_branch
        %241 = sbr.rel (%p239) target = $region40
      $region39: #{signal_encoder_forward.1} parent=5 // pred_region
        // Predicated region
        $region41: #{signal_encoder_forward.1} parent=39 // pred_check
          %p242 = pneg %p37
        $region42: #{signal_encoder_forward.1} parent=39 // pred_check_branch
          %244 = sbr.rel (%p242) target = $region44
        $region43: #{signal_encoder_forward.1} parent=39 // pred_region
          %p245 = scmp.lt.s32.totalorder %s17, 1
          %s246 = scalar_select %p245, %s17, 1
          %s247 = smul.addr %s246, 8
          %s248 = smul.addr %s247, 8
          %s249 = scalar_lea.vmem %s0, %s248
        $region44: #{signal_encoder_forward.1} parent=39 // pred_fallthru
          _
      $region40: #{signal_encoder_forward.1} parent=5 // pred_fallthru
        _
      %p250 = scmp.le.s32.totalorder 1, %s17
      %p251 = scmp.lt.s32.totalorder %s17, 3
      %p252 = pnand %p250, %p251
      %p253 = pneg %p252
      // Predicated region
      $region45: #{signal_encoder_forward.1} parent=5 // pred_check
        _
      $region46: #{signal_encoder_forward.1} parent=5 // pred_check_branch
        %255 = sbr.rel (%p252) target = $region48
      $region47: #{signal_encoder_forward.1} parent=5 // pred_region
        %s256 = ssub.s32 %s17, 1
        // Predicated region
        $region49: #{signal_encoder_forward.1} parent=47 // pred_check
          %p257 = pneg %p148
        $region50: #{signal_encoder_forward.1} parent=47 // pred_check_branch
          %259 = sbr.rel (%p257) target = $region52
        $region51: #{signal_encoder_forward.1} parent=47 // pred_region
          %260 = dma.done [#allocation5], 4096
        $region52: #{signal_encoder_forward.1} parent=47 // pred_fallthru
          _
        %p261 = scmp.lt.s32.totalorder %s22, 1
        %s262 = scalar_select %p261, %s22, 1
        %s263 = smul.addr %s262, 8
        %s264 = smul.addr %s263, 8
        %s265 = scalar_lea.vmem %s0, %s264
        %p266 = pneg %p43
        %p267 = pneg %p40
        %p268 = pneg %p64
        %p269 = pneg %p61
        %p270 = pneg %p85
        %p271 = pneg %p82
        %p272 = pneg %p106
        %p273 = pneg %p103
        %p274 = pneg %p127
        %p275 = pneg %p124
        %p276 = pneg %p148
        %p277 = pneg %p145
        %p278 = pneg %p169
        %p279 = pneg %p166
        %p280 = pneg %p195
        %p281 = pneg %p192
        %s282 = sand.u32 %s182, 1
        %s283 = scalar_lea.sflag [#allocation6], %s282
        %s284 = sand.u32 %s182, 1
        %s285 = smul.addr %s284, 4
        %s286 = scalar_lea.vmem [#allocation7], %s285
        %p287 = scmp.lt.s32.totalorder %s22, 1
        %s288 = scalar_select %p287, %s22, 1
        %s289 = smul.addr %s288, 8
        %s290 = smul.addr %s289, 8
        %s291 = scalar_lea.vmem %s0, %s290
        %293 = vst [vmem:[#allocation2] sm:$0xff] 0.0
        %294 = vst [vmem:[#allocation2 + $0x8] sm:$0x3] 0.0
        %295 = vst [vmem:[#allocation2 + $0xa0] sm:$0xff] 0.0
        %296 = vst [vmem:[#allocation2 + $0xa8] sm:$0x3] 0.0
        %297 = vst [vmem:[#allocation2 + $0x140] sm:$0xff] 0.0
        %298 = vst [vmem:[#allocation2 + $0x148] sm:$0x3] 0.0
        %299 = vst [vmem:[#allocation2 + $0x1e0] sm:$0xff] 0.0
        %300 = vst [vmem:[#allocation2 + $0x1e8] sm:$0x3] 0.0
        %s301 = scalar_lea.vmem [#allocation2], 144
        %302 = vst [vmem:[%s301] sm:$0xff] 0.0
        %303 = vst [vmem:[%s301 + $0x8] sm:$0x3] 0.0
        %304 = vst [vmem:[%s301 + $0xa0] sm:$0xff] 0.0
        %305 = vst [vmem:[%s301 + $0xa8] sm:$0x3] 0.0
        %306 = vst [vmem:[%s301 + $0x140] sm:$0xff] 0.0
        %307 = vst [vmem:[%s301 + $0x148] sm:$0x3] 0.0
        %308 = vst [vmem:[%s301 + $0x1e0] sm:$0xff] 0.0
        %309 = vst [vmem:[%s301 + $0x1e8] sm:$0x3] 0.0
        %310 = vst [vmem:[#allocation2] sm:$0x1] 0.0
        %311 = vst [vmem:[#allocation2 + $0x10] sm:$0x1] 0.0
        %312 = vst [vmem:[#allocation2 + $0x20] sm:$0x1] 0.0
        %313 = vst [vmem:[#allocation2 + $0x30] sm:$0x1] 0.0
        %314 = vst [vmem:[#allocation2 + $0x40] sm:$0x1] 0.0
        %315 = vst [vmem:[#allocation2 + $0x50] sm:$0x1] 0.0
        %316 = vst [vmem:[#allocation2 + $0x60] sm:$0x1] 0.0
        %317 = vst [vmem:[#allocation2 + $0x70] sm:$0x1] 0.0
        %318 = vst [vmem:[#allocation2 + $0x80] sm:$0x1] 0.0
        %319 = vst [vmem:[#allocation2 + $0x90] sm:$0x1] 0.0
        %320 = vst [vmem:[#allocation2 + $0xa0] sm:$0x1] 0.0
        %321 = vst [vmem:[#allocation2 + $0xb0] sm:$0x1] 0.0
        %322 = vst [vmem:[#allocation2 + $0xc0] sm:$0x1] 0.0
        %323 = vst [vmem:[#allocation2 + $0xd0] sm:$0x1] 0.0
        %324 = vst [vmem:[#allocation2 + $0xe0] sm:$0x1] 0.0
        %325 = vst [vmem:[#allocation2 + $0xf0] sm:$0x1] 0.0
        %326 = vst [vmem:[#allocation2 + $0x100] sm:$0x1] 0.0
        %327 = vst [vmem:[#allocation2 + $0x110] sm:$0x1] 0.0
        %328 = vst [vmem:[#allocation2 + $0x120] sm:$0x1] 0.0
        %329 = vst [vmem:[#allocation2 + $0x130] sm:$0x1] 0.0
        %330 = vst [vmem:[#allocation2 + $0x140] sm:$0x1] 0.0
        %331 = vst [vmem:[#allocation2 + $0x150] sm:$0x1] 0.0
        %332 = vst [vmem:[#allocation2 + $0x160] sm:$0x1] 0.0
        %333 = vst [vmem:[#allocation2 + $0x170] sm:$0x1] 0.0
        %334 = vst [vmem:[#allocation2 + $0x180] sm:$0x1] 0.0
        %335 = vst [vmem:[#allocation2 + $0x190] sm:$0x1] 0.0
        %336 = vst [vmem:[#allocation2 + $0x1a0] sm:$0x1] 0.0
        %337 = vst [vmem:[#allocation2 + $0x1b0] sm:$0x1] 0.0
        %338 = vst [vmem:[#allocation2 + $0x1c0] sm:$0x1] 0.0
        %339 = vst [vmem:[#allocation2 + $0x1d0] sm:$0x1] 0.0
        %340 = vst [vmem:[#allocation2 + $0x1e0] sm:$0x1] 0.0
        %341 = vst [vmem:[#allocation2 + $0x1f0] sm:$0x1] 0.0
        %342 = vst [vmem:[#allocation2 + $0x200] sm:$0x1] 0.0
        %343 = vst [vmem:[#allocation2 + $0x210] sm:$0x1] 0.0
        %344 = vst [vmem:[#allocation2 + $0x220] sm:$0x1] 0.0
        %345 = vst [vmem:[#allocation2 + $0x230] sm:$0x1] 0.0
        %346 = vst [vmem:[#allocation2 + $0x240] sm:$0x1] 0.0
        %347 = vst [vmem:[#allocation2 + $0x250] sm:$0x1] 0.0
        %348 = vst [vmem:[#allocation2 + $0x260] sm:$0x1] 0.0
        %349 = vst [vmem:[#allocation2 + $0x270] sm:$0x1] 0.0
        %350 = vst [vmem:[#allocation2 + $0x9] sm:$0x1] 0.0
        %351 = vst [vmem:[#allocation2 + $0x19] sm:$0x1] 0.0
        %352 = vst [vmem:[#allocation2 + $0x29] sm:$0x1] 0.0
        %353 = vst [vmem:[#allocation2 + $0x39] sm:$0x1] 0.0
        %354 = vst [vmem:[#allocation2 + $0x49] sm:$0x1] 0.0
        %355 = vst [vmem:[#allocation2 + $0x59] sm:$0x1] 0.0
        %356 = vst [vmem:[#allocation2 + $0x69] sm:$0x1] 0.0
        %357 = vst [vmem:[#allocation2 + $0x79] sm:$0x1] 0.0
        %358 = vst [vmem:[#allocation2 + $0x89] sm:$0x1] 0.0
        %359 = vst [vmem:[#allocation2 + $0x99] sm:$0x1] 0.0
        %360 = vst [vmem:[#allocation2 + $0xa9] sm:$0x1] 0.0
        %361 = vst [vmem:[#allocation2 + $0xb9] sm:$0x1] 0.0
        %362 = vst [vmem:[#allocation2 + $0xc9] sm:$0x1] 0.0
        %363 = vst [vmem:[#allocation2 + $0xd9] sm:$0x1] 0.0
        %364 = vst [vmem:[#allocation2 + $0xe9] sm:$0x1] 0.0
        %365 = vst [vmem:[#allocation2 + $0xf9] sm:$0x1] 0.0
        %366 = vst [vmem:[#allocation2 + $0x109] sm:$0x1] 0.0
        %367 = vst [vmem:[#allocation2 + $0x119] sm:$0x1] 0.0
        %368 = vst [vmem:[#allocation2 + $0x129] sm:$0x1] 0.0
        %369 = vst [vmem:[#allocation2 + $0x139] sm:$0x1] 0.0
        %370 = vst [vmem:[#allocation2 + $0x149] sm:$0x1] 0.0
        %371 = vst [vmem:[#allocation2 + $0x159] sm:$0x1] 0.0
        %372 = vst [vmem:[#allocation2 + $0x169] sm:$0x1] 0.0
        %373 = vst [vmem:[#allocation2 + $0x179] sm:$0x1] 0.0
        %374 = vst [vmem:[#allocation2 + $0x189] sm:$0x1] 0.0
        %375 = vst [vmem:[#allocation2 + $0x199] sm:$0x1] 0.0
        %376 = vst [vmem:[#allocation2 + $0x1a9] sm:$0x1] 0.0
        %377 = vst [vmem:[#allocation2 + $0x1b9] sm:$0x1] 0.0
        %378 = vst [vmem:[#allocation2 + $0x1c9] sm:$0x1] 0.0
        %379 = vst [vmem:[#allocation2 + $0x1d9] sm:$0x1] 0.0
        %380 = vst [vmem:[#allocation2 + $0x1e9] sm:$0x1] 0.0
        %381 = vst [vmem:[#allocation2 + $0x1f9] sm:$0x1] 0.0
        %382 = vst [vmem:[#allocation2 + $0x209] sm:$0x1] 0.0
        %383 = vst [vmem:[#allocation2 + $0x219] sm:$0x1] 0.0
        %384 = vst [vmem:[#allocation2 + $0x229] sm:$0x1] 0.0
        %385 = vst [vmem:[#allocation2 + $0x239] sm:$0x1] 0.0
        %386 = vst [vmem:[#allocation2 + $0x249] sm:$0x1] 0.0
        %387 = vst [vmem:[#allocation2 + $0x259] sm:$0x1] 0.0
        %388 = vst [vmem:[#allocation2 + $0x269] sm:$0x1] 0.0
        %389 = vst [vmem:[#allocation2 + $0x279] sm:$0x1] 0.0
        %v390 = vld [vmem:[%s291] sm:$0xff]
        %v391 = vld [vmem:[%s291 + $0x8] sm:$0xff]
        %v392 = vld [vmem:[%s291 + $0x10] sm:$0xff]
        %v393 = vld [vmem:[%s291 + $0x18] sm:$0xff]
        %v394 = vld [vmem:[%s291 + $0x20] sm:$0xff]
        %v395 = vld [vmem:[%s291 + $0x28] sm:$0xff]
        %v396 = vld [vmem:[%s291 + $0x30] sm:$0xff]
        %v397 = vld [vmem:[%s291 + $0x38] sm:$0xff]
        %399 = vset.pattern.permute.xlu0 0
        %400 = vperm.xlu0 %399, %v390
        %v401 = vpop.permute.xlu0 %400
        %404 = vset.pattern.permute.xlu0 0
        %405 = vperm.xlu0 %404, %v391
        %v406 = vpop.permute.xlu0 %405
        %409 = vset.pattern.permute.xlu0 0
        %410 = vperm.xlu0 %409, %v392
        %v411 = vpop.permute.xlu0 %410
        %414 = vset.pattern.permute.xlu0 0
        %415 = vperm.xlu0 %414, %v393
        %v416 = vpop.permute.xlu0 %415
        %419 = vset.pattern.permute.xlu0 0
        %420 = vperm.xlu0 %419, %v394
        %v421 = vpop.permute.xlu0 %420
        %424 = vset.pattern.permute.xlu0 0
        %425 = vperm.xlu0 %424, %v395
        %v426 = vpop.permute.xlu0 %425
        %429 = vset.pattern.permute.xlu0 0
        %430 = vperm.xlu0 %429, %v396
        %v431 = vpop.permute.xlu0 %430
        %434 = vset.pattern.permute.xlu0 0
        %435 = vperm.xlu0 %434, %v397
        %v436 = vpop.permute.xlu0 %435
        %s438 = scalar_lea.vmem [#allocation2], 16
        %439 = vst [vmem:[%s438 + $0x1] sm:$0xff] %v401
        %440 = vst [vmem:[%s438 + $0x11] sm:$0xff] %v406
        %441 = vst [vmem:[%s438 + $0x21] sm:$0xff] %v411
        %442 = vst [vmem:[%s438 + $0x31] sm:$0xff] %v416
        %443 = vst [vmem:[%s438 + $0x41] sm:$0xff] %v421
        %444 = vst [vmem:[%s438 + $0x51] sm:$0xff] %v426
        %445 = vst [vmem:[%s438 + $0x61] sm:$0xff] %v431
        %446 = vst [vmem:[%s438 + $0x71] sm:$0xff] %v436
        %447 = vset.pattern.permute.xlu0 1
        %448 = vperm.xlu0 %447, %v390
        %v449 = vpop.permute.xlu0 %448
        %451 = vset.pattern.permute.xlu0 1
        %452 = vperm.xlu0 %451, %v391
        %v453 = vpop.permute.xlu0 %452
        %455 = vset.pattern.permute.xlu0 1
        %456 = vperm.xlu0 %455, %v392
        %v457 = vpop.permute.xlu0 %456
        %459 = vset.pattern.permute.xlu0 1
        %460 = vperm.xlu0 %459, %v393
        %v461 = vpop.permute.xlu0 %460
        %463 = vset.pattern.permute.xlu0 1
        %464 = vperm.xlu0 %463, %v394
        %v465 = vpop.permute.xlu0 %464
        %467 = vset.pattern.permute.xlu0 1
        %468 = vperm.xlu0 %467, %v395
        %v469 = vpop.permute.xlu0 %468
        %471 = vset.pattern.permute.xlu0 1
        %472 = vperm.xlu0 %471, %v396
        %v473 = vpop.permute.xlu0 %472
        %475 = vset.pattern.permute.xlu0 1
        %476 = vperm.xlu0 %475, %v397
        %v477 = vpop.permute.xlu0 %476
        %s479 = scalar_lea.vmem [#allocation2], 176
        %480 = vst [vmem:[%s479 + $0x1] sm:$0xff] %v449
        %481 = vst [vmem:[%s479 + $0x11] sm:$0xff] %v453
        %482 = vst [vmem:[%s479 + $0x21] sm:$0xff] %v457
        %483 = vst [vmem:[%s479 + $0x31] sm:$0xff] %v461
        %484 = vst [vmem:[%s479 + $0x41] sm:$0xff] %v465
        %485 = vst [vmem:[%s479 + $0x51] sm:$0xff] %v469
        %486 = vst [vmem:[%s479 + $0x61] sm:$0xff] %v473
        %487 = vst [vmem:[%s479 + $0x71] sm:$0xff] %v477
        %488 = vset.pattern.permute.xlu0 2
        %489 = vperm.xlu0 %488, %v390
        %v490 = vpop.permute.xlu0 %489
        %492 = vset.pattern.permute.xlu0 2
        %493 = vperm.xlu0 %492, %v391
        %v494 = vpop.permute.xlu0 %493
        %496 = vset.pattern.permute.xlu0 2
        %497 = vperm.xlu0 %496, %v392
        %v498 = vpop.permute.xlu0 %497
        %500 = vset.pattern.permute.xlu0 2
        %501 = vperm.xlu0 %500, %v393
        %v502 = vpop.permute.xlu0 %501
        %504 = vset.pattern.permute.xlu0 2
        %505 = vperm.xlu0 %504, %v394
        %v506 = vpop.permute.xlu0 %505
        %508 = vset.pattern.permute.xlu0 2
        %509 = vperm.xlu0 %508, %v395
        %v510 = vpop.permute.xlu0 %509
        %512 = vset.pattern.permute.xlu0 2
        %513 = vperm.xlu0 %512, %v396
        %v514 = vpop.permute.xlu0 %513
        %516 = vset.pattern.permute.xlu0 2
        %517 = vperm.xlu0 %516, %v397
        %v518 = vpop.permute.xlu0 %517
        %s520 = scalar_lea.vmem [#allocation2], 336
        %521 = vst [vmem:[%s520 + $0x1] sm:$0xff] %v490
        %522 = vst [vmem:[%s520 + $0x11] sm:$0xff] %v494
        %523 = vst [vmem:[%s520 + $0x21] sm:$0xff] %v498
        %524 = vst [vmem:[%s520 + $0x31] sm:$0xff] %v502
        %525 = vst [vmem:[%s520 + $0x41] sm:$0xff] %v506
        %526 = vst [vmem:[%s520 + $0x51] sm:$0xff] %v510
        %527 = vst [vmem:[%s520 + $0x61] sm:$0xff] %v514
        %528 = vst [vmem:[%s520 + $0x71] sm:$0xff] %v518
        %529 = vset.pattern.permute.xlu0 3
        %530 = vperm.xlu0 %529, %v390
        %v531 = vpop.permute.xlu0 %530
        %533 = vset.pattern.permute.xlu0 3
        %534 = vperm.xlu0 %533, %v391
        %v535 = vpop.permute.xlu0 %534
        %537 = vset.pattern.permute.xlu0 3
        %538 = vperm.xlu0 %537, %v392
        %v539 = vpop.permute.xlu0 %538
        %541 = vset.pattern.permute.xlu0 3
        %542 = vperm.xlu0 %541, %v393
        %v543 = vpop.permute.xlu0 %542
        %545 = vset.pattern.permute.xlu0 3
        %546 = vperm.xlu0 %545, %v394
        %v547 = vpop.permute.xlu0 %546
        %549 = vset.pattern.permute.xlu0 3
        %550 = vperm.xlu0 %549, %v395
        %v551 = vpop.permute.xlu0 %550
        %553 = vset.pattern.permute.xlu0 3
        %554 = vperm.xlu0 %553, %v396
        %v555 = vpop.permute.xlu0 %554
        %557 = vset.pattern.permute.xlu0 3
        %558 = vperm.xlu0 %557, %v397
        %v559 = vpop.permute.xlu0 %558
        %s561 = scalar_lea.vmem [#allocation2], 496
        %562 = vst [vmem:[%s561 + $0x1] sm:$0xff] %v531
        %563 = vst [vmem:[%s561 + $0x11] sm:$0xff] %v535
        %564 = vst [vmem:[%s561 + $0x21] sm:$0xff] %v539
        %565 = vst [vmem:[%s561 + $0x31] sm:$0xff] %v543
        %566 = vst [vmem:[%s561 + $0x41] sm:$0xff] %v547
        %567 = vst [vmem:[%s561 + $0x51] sm:$0xff] %v551
        %568 = vst [vmem:[%s561 + $0x61] sm:$0xff] %v555
        %569 = vst [vmem:[%s561 + $0x71] sm:$0xff] %v559
        %v570 = vld [vmem:[#allocation2] sm:$0xff]
        %v571 = vld [vmem:[#allocation2 + $0x10] sm:$0xff]
        %v572 = vld [vmem:[#allocation2 + $0x20] sm:$0xff]
        %v573 = vld [vmem:[#allocation2 + $0x30] sm:$0xff]
        %v574 = vld [vmem:[#allocation2 + $0x40] sm:$0xff]
        %v575 = vld [vmem:[#allocation2 + $0x50] sm:$0xff]
        %v576 = vld [vmem:[#allocation2 + $0x60] sm:$0xff]
        %v577 = vld [vmem:[#allocation2 + $0x70] sm:$0xff]
        %v578 = vld [vmem:[#allocation2 + $0xa0] sm:$0xff]
        %v579 = vld [vmem:[#allocation2 + $0xb0] sm:$0xff]
        %v580 = vld [vmem:[#allocation2 + $0xc0] sm:$0xff]
        %v581 = vld [vmem:[#allocation2 + $0xd0] sm:$0xff]
        %v582 = vld [vmem:[#allocation2 + $0xe0] sm:$0xff]
        %v583 = vld [vmem:[#allocation2 + $0xf0] sm:$0xff]
        %v584 = vld [vmem:[#allocation2 + $0x100] sm:$0xff]
        %v585 = vld [vmem:[#allocation2 + $0x110] sm:$0xff]
        %v586 = vpack.c.bf16 %v571, %v570
        %v587 = vpack.c.bf16 %v573, %v572
        %v588 = vpack.c.bf16 %v575, %v574
        %v589 = vpack.c.bf16 %v577, %v576
        %v590 = vpack.c.bf16 %v579, %v578
        %v591 = vpack.c.bf16 %v581, %v580
        %v592 = vpack.c.bf16 %v583, %v582
        %v593 = vpack.c.bf16 %v585, %v584
        %v594 = vld [vmem:[%s1] sm:$0xf]
        %v595 = vld [vmem:[%s1 + $0x4] sm:$0xf]
        %v596 = vld [vmem:[%s1 + $0x8] sm:$0xf]
        %v597 = vld [vmem:[%s1 + $0xc] sm:$0xf]
        %v598 = vld [vmem:[%s1 + $0x10] sm:$0xf]
        %v599 = vld [vmem:[%s1 + $0x14] sm:$0xf]
        %v600 = vld [vmem:[%s1 + $0x18] sm:$0xf]
        %v601 = vld [vmem:[%s1 + $0x1c] sm:$0xf]
        %v602 = vld [vmem:[%s1 + $0x20] sm:$0xf]
        %v603 = vld [vmem:[%s1 + $0x24] sm:$0xf]
        %v604 = vld [vmem:[%s1 + $0x28] sm:$0xf]
        %v605 = vld [vmem:[%s1 + $0x2c] sm:$0xf]
        %v606 = vld [vmem:[%s1 + $0x30] sm:$0xf]
        %v607 = vld [vmem:[%s1 + $0x34] sm:$0xf]
        %v608 = vld [vmem:[%s1 + $0x38] sm:$0xf]
        %v609 = vld [vmem:[%s1 + $0x3c] sm:$0xf]
        %v610 = vld [vmem:[#allocation2 + $0x1] sm:$0xff]
        %v611 = vld [vmem:[#allocation2 + $0x11] sm:$0xff]
        %v612 = vld [vmem:[#allocation2 + $0x21] sm:$0xff]
        %v613 = vld [vmem:[#allocation2 + $0x31] sm:$0xff]
        %v614 = vld [vmem:[#allocation2 + $0x41] sm:$0xff]
        %v615 = vld [vmem:[#allocation2 + $0x51] sm:$0xff]
        %v616 = vld [vmem:[#allocation2 + $0x61] sm:$0xff]
        %v617 = vld [vmem:[#allocation2 + $0x71] sm:$0xff]
        %v618 = vld [vmem:[#allocation2 + $0xa1] sm:$0xff]
        %v619 = vld [vmem:[#allocation2 + $0xb1] sm:$0xff]
        %v620 = vld [vmem:[#allocation2 + $0xc1] sm:$0xff]
        %v621 = vld [vmem:[#allocation2 + $0xd1] sm:$0xff]
        %v622 = vld [vmem:[#allocation2 + $0xe1] sm:$0xff]
        %v623 = vld [vmem:[#allocation2 + $0xf1] sm:$0xff]
        %v624 = vld [vmem:[#allocation2 + $0x101] sm:$0xff]
        %v625 = vld [vmem:[#allocation2 + $0x111] sm:$0xff]
        %v626 = vpack.c.bf16 %v611, %v610
        %v627 = vpack.c.bf16 %v613, %v612
        %v628 = vpack.c.bf16 %v615, %v614
        %v629 = vpack.c.bf16 %v617, %v616
        %v630 = vpack.c.bf16 %v619, %v618
        %v631 = vpack.c.bf16 %v621, %v620
        %v632 = vpack.c.bf16 %v623, %v622
        %v633 = vpack.c.bf16 %v625, %v624
        %s634 = scalar_lea.vmem %s1, 64
        %v635 = vld [vmem:[%s634] sm:$0xf]
        %v636 = vld [vmem:[%s634 + $0x4] sm:$0xf]
        %v637 = vld [vmem:[%s634 + $0x8] sm:$0xf]
        %v638 = vld [vmem:[%s634 + $0xc] sm:$0xf]
        %v639 = vld [vmem:[%s634 + $0x10] sm:$0xf]
        %v640 = vld [vmem:[%s634 + $0x14] sm:$0xf]
        %v641 = vld [vmem:[%s634 + $0x18] sm:$0xf]
        %v642 = vld [vmem:[%s634 + $0x1c] sm:$0xf]
        %v643 = vld [vmem:[%s634 + $0x20] sm:$0xf]
        %v644 = vld [vmem:[%s634 + $0x24] sm:$0xf]
        %v645 = vld [vmem:[%s634 + $0x28] sm:$0xf]
        %v646 = vld [vmem:[%s634 + $0x2c] sm:$0xf]
        %v647 = vld [vmem:[%s634 + $0x30] sm:$0xf]
        %v648 = vld [vmem:[%s634 + $0x34] sm:$0xf]
        %v649 = vld [vmem:[%s634 + $0x38] sm:$0xf]
        %v650 = vld [vmem:[%s634 + $0x3c] sm:$0xf]
        %v667 = vunpack.c.l.b16 %v635
        %v668 = vunpack.c.l.b16 %v636
        %v669 = vunpack.c.l.b16 %v637
        %v670 = vunpack.c.l.b16 %v638
        %v671 = vunpack.c.l.b16 %v639
        %v672 = vunpack.c.l.b16 %v640
        %v673 = vunpack.c.l.b16 %v641
        %v674 = vunpack.c.l.b16 %v642
        %v675 = vunpack.c.l.b16 %v643
        %v676 = vunpack.c.l.b16 %v644
        %v677 = vunpack.c.l.b16 %v645
        %v678 = vunpack.c.l.b16 %v646
        %v679 = vunpack.c.l.b16 %v647
        %v680 = vunpack.c.l.b16 %v648
        %v681 = vunpack.c.l.b16 %v649
        %v682 = vunpack.c.l.b16 %v650
        %v683 = vpack.c.b16 %v668, %v667
        %v684 = vpack.c.b16 %v670, %v669
        %v685 = vpack.c.b16 %v672, %v671
        %v686 = vpack.c.b16 %v674, %v673
        %v687 = vpack.c.b16 %v676, %v675
        %v688 = vpack.c.b16 %v678, %v677
        %v689 = vpack.c.b16 %v680, %v679
        %v690 = vpack.c.b16 %v682, %v681
        %699 = vmatprep.subr.bf16.mxu0 0
        %700 = vmatpush1.bf16.msra.mxu0 %v683
        %701 = vmatprep.subr.bf16.mxu0 0
        %702 = vmatpush1.bf16.msra.mxu0 %v684
        %703 = vmatprep.subr.bf16.mxu0 0
        %704 = vmatpush1.bf16.msra.mxu0 %v685
        %705 = vmatprep.subr.bf16.mxu0 0
        %706 = vmatpush1.bf16.msra.mxu0 %v686
        %707 = vmatprep.subr.bf16.mxu0 0
        %708 = vmatpush1.bf16.msra.mxu0 %v687
        %709 = vmatprep.subr.bf16.mxu0 0
        %710 = vmatpush1.bf16.msra.mxu0 %v688
        %711 = vmatprep.subr.bf16.mxu0 0
        %712 = vmatpush1.bf16.msra.mxu0 %v689
        %713 = vmatprep.subr.bf16.mxu0 0
        %714 = vmatpush1.bf16.msra.mxu0 %v690
        %715 = vmatprep.subr.bf16.mxu0 0
        %716 = vmatpush1.bf16.msra.mxu0 0
        %717 = vmatprep.subr.bf16.mxu0 0
        %718 = vmatpush1.bf16.msra.mxu0 0
        %719 = vmatprep.subr.bf16.mxu0 0
        %720 = vmatpush1.bf16.msra.mxu0 0
        %721 = vmatprep.subr.bf16.mxu0 0
        %722 = vmatpush1.bf16.msra.mxu0 0
        %723 = vmatprep.subr.bf16.mxu0 0
        %724 = vmatpush1.bf16.msra.mxu0 0
        %725 = vmatprep.subr.bf16.mxu0 0
        %726 = vmatpush1.bf16.msra.mxu0 0
        %727 = vmatprep.subr.bf16.mxu0 0
        %728 = vmatpush1.bf16.msra.mxu0 0
        %729 = vmatprep.subr.bf16.mxu0 0
        %730 = vmatpush1.bf16.msra.mxu0 0
        %731 = vmatprep.mubr.bf16.mxu0 0
        %732 = vmatmul.mubr.bf16.gmra.mrb[0].mxu0 %v626
        %v733 = vpop.f32.mrb[0].mxu0
        %v734 = vadd.f32 0.0, %v733
        %v735 = vpop.f32.mrb[0].mxu0
        %v736 = vpop.f32.mrb[0].mxu0
        %v737 = vadd.f32 0.0, %v736
        %v738 = vpop.f32.mrb[0].mxu0
        %739 = vmatprep.mubr.bf16.mxu0 0
        %740 = vmatmul.mubr.bf16.gmra.mrb[0].mxu0 %v627
        %v741 = vpop.f32.mrb[0].mxu0
        %v742 = vadd.f32 0.0, %v741
        %v743 = vpop.f32.mrb[0].mxu0
        %v744 = vpop.f32.mrb[0].mxu0
        %v745 = vadd.f32 0.0, %v744
        %v746 = vpop.f32.mrb[0].mxu0
        %747 = vmatprep.mubr.bf16.mxu0 0
        %748 = vmatmul.mubr.bf16.gmra.mrb[0].mxu0 %v628
        %v749 = vpop.f32.mrb[0].mxu0
        %v750 = vadd.f32 0.0, %v749
        %v751 = vpop.f32.mrb[0].mxu0
        %v752 = vpop.f32.mrb[0].mxu0
        %v753 = vadd.f32 0.0, %v752
        %v754 = vpop.f32.mrb[0].mxu0
        %755 = vmatprep.mubr.bf16.mxu0 0
        %756 = vmatmul.mubr.bf16.gmra.mrb[0].mxu0 %v629
        %v757 = vpop.f32.mrb[0].mxu0
        %v758 = vadd.f32 0.0, %v757
        %v759 = vpop.f32.mrb[0].mxu0
        %v760 = vpop.f32.mrb[0].mxu0
        %v761 = vadd.f32 0.0, %v760
        %v762 = vpop.f32.mrb[0].mxu0
        %763 = vmatprep.mubr.bf16.mxu0 0
        %764 = vmatmul.mubr.bf16.gmra.mrb[0].mxu0 %v630
        %v765 = vpop.f32.mrb[0].mxu0
        %v766 = vadd.f32 0.0, %v765
        %v767 = vpop.f32.mrb[0].mxu0
        %v768 = vpop.f32.mrb[0].mxu0
        %v769 = vadd.f32 0.0, %v768
        %v770 = vpop.f32.mrb[0].mxu0
        %771 = vmatprep.mubr.bf16.mxu0 0
        %772 = vmatmul.mubr.bf16.gmra.mrb[0].mxu0 %v631
        %v773 = vpop.f32.mrb[0].mxu0
        %v774 = vadd.f32 0.0, %v773
        %v775 = vpop.f32.mrb[0].mxu0
        %v776 = vpop.f32.mrb[0].mxu0
        %v777 = vadd.f32 0.0, %v776
        %v778 = vpop.f32.mrb[0].mxu0
        %779 = vmatprep.mubr.bf16.mxu0 0
        %780 = vmatmul.mubr.bf16.gmra.mrb[0].mxu0 %v632
        %v781 = vpop.f32.mrb[0].mxu0
        %v782 = vadd.f32 0.0, %v781
        %v783 = vpop.f32.mrb[0].mxu0
        %v784 = vpop.f32.mrb[0].mxu0
        %v785 = vadd.f32 0.0, %v784
        %v786 = vpop.f32.mrb[0].mxu0
        %787 = vmatprep.mubr.bf16.mxu0 0
        %788 = vmatmul.mubr.bf16.gmra.mrb[0].mxu0 %v633
        %v789 = vpop.f32.mrb[0].mxu0
        %v790 = vadd.f32 0.0, %v789
        %v791 = vpop.f32.mrb[0].mxu0
        %v792 = vpop.f32.mrb[0].mxu0
        %v793 = vadd.f32 0.0, %v792
        %v794 = vpop.f32.mrb[0].mxu0
        %795 = vdwg.mxu0
        %v812 = vunpack.c.l.b16 %v594
        %v813 = vunpack.c.l.b16 %v595
        %v814 = vunpack.c.l.b16 %v596
        %v815 = vunpack.c.l.b16 %v597
        %v816 = vunpack.c.l.b16 %v598
        %v817 = vunpack.c.l.b16 %v599
        %v818 = vunpack.c.l.b16 %v600
        %v819 = vunpack.c.l.b16 %v601
        %v820 = vunpack.c.l.b16 %v602
        %v821 = vunpack.c.l.b16 %v603
        %v822 = vunpack.c.l.b16 %v604
        %v823 = vunpack.c.l.b16 %v605
        %v824 = vunpack.c.l.b16 %v606
        %v825 = vunpack.c.l.b16 %v607
        %v826 = vunpack.c.l.b16 %v608
        %v827 = vunpack.c.l.b16 %v609
        %v828 = vpack.c.b16 %v813, %v812
        %v829 = vpack.c.b16 %v815, %v814
        %v830 = vpack.c.b16 %v817, %v816
        %v831 = vpack.c.b16 %v819, %v818
        %v832 = vpack.c.b16 %v821, %v820
        %v833 = vpack.c.b16 %v823, %v822
        %v834 = vpack.c.b16 %v825, %v824
        %v835 = vpack.c.b16 %v827, %v826
        %844 = vmatprep.subr.bf16.mxu0 0
        %845 = vmatpush1.bf16.msra.mxu0 %v828
        %846 = vmatprep.subr.bf16.mxu0 0
        %847 = vmatpush1.bf16.msra.mxu0 %v829
        %848 = vmatprep.subr.bf16.mxu0 0
        %849 = vmatpush1.bf16.msra.mxu0 %v830
        %850 = vmatprep.subr.bf16.mxu0 0
        %851 = vmatpush1.bf16.msra.mxu0 %v831
        %852 = vmatprep.subr.bf16.mxu0 0
        %853 = vmatpush1.bf16.msra.mxu0 %v832
        %854 = vmatprep.subr.bf16.mxu0 0
        %855 = vmatpush1.bf16.msra.mxu0 %v833
        %856 = vmatprep.subr.bf16.mxu0 0
        %857 = vmatpush1.bf16.msra.mxu0 %v834
        %858 = vmatprep.subr.bf16.mxu0 0
        %859 = vmatpush1.bf16.msra.mxu0 %v835
        %860 = vmatprep.subr.bf16.mxu0 0
        %861 = vmatpush1.bf16.msra.mxu0 0
        %862 = vmatprep.subr.bf16.mxu0 0
        %863 = vmatpush1.bf16.msra.mxu0 0
        %864 = vmatprep.subr.bf16.mxu0 0
        %865 = vmatpush1.bf16.msra.mxu0 0
        %866 = vmatprep.subr.bf16.mxu0 0
        %867 = vmatpush1.bf16.msra.mxu0 0
        %868 = vmatprep.subr.bf16.mxu0 0
        %869 = vmatpush1.bf16.msra.mxu0 0
        %870 = vmatprep.subr.bf16.mxu0 0
        %871 = vmatpush1.bf16.msra.mxu0 0
        %872 = vmatprep.subr.bf16.mxu0 0
        %873 = vmatpush1.bf16.msra.mxu0 0
        %874 = vmatprep.subr.bf16.mxu0 0
        %875 = vmatpush1.bf16.msra.mxu0 0
        %876 = vmatprep.mubr.bf16.mxu0 0
        %877 = vmatmul.mubr.bf16.gmra.mrb[0].mxu0 %v586
        %v878 = vpop.f32.mrb[0].mxu0
        %v879 = vadd.f32 %v734, %v878
        %v880 = vpop.f32.mrb[0].mxu0
        %v881 = vpop.f32.mrb[0].mxu0
        %v882 = vadd.f32 %v737, %v881
        %v883 = vpop.f32.mrb[0].mxu0
        %884 = vmatprep.mubr.bf16.mxu0 0
        %885 = vmatmul.mubr.bf16.gmra.mrb[0].mxu0 %v587
        %v886 = vpop.f32.mrb[0].mxu0
        %v887 = vadd.f32 %v742, %v886
        %v888 = vpop.f32.mrb[0].mxu0
        %v889 = vpop.f32.mrb[0].mxu0
        %v890 = vadd.f32 %v745, %v889
        %v891 = vpop.f32.mrb[0].mxu0
        %892 = vmatprep.mubr.bf16.mxu0 0
        %893 = vmatmul.mubr.bf16.gmra.mrb[0].mxu0 %v588
        %v894 = vpop.f32.mrb[0].mxu0
        %v895 = vadd.f32 %v750, %v894
        %v896 = vpop.f32.mrb[0].mxu0
        %v897 = vpop.f32.mrb[0].mxu0
        %v898 = vadd.f32 %v753, %v897
        %v899 = vpop.f32.mrb[0].mxu0
        %900 = vmatprep.mubr.bf16.mxu0 0
        %901 = vmatmul.mubr.bf16.gmra.mrb[0].mxu0 %v589
        %v902 = vpop.f32.mrb[0].mxu0
        %v903 = vadd.f32 %v758, %v902
        %v904 = vpop.f32.mrb[0].mxu0
        %v905 = vpop.f32.mrb[0].mxu0
        %v906 = vadd.f32 %v761, %v905
        %v907 = vpop.f32.mrb[0].mxu0
        %908 = vmatprep.mubr.bf16.mxu0 0
        %909 = vmatmul.mubr.bf16.gmra.mrb[0].mxu0 %v590
        %v910 = vpop.f32.mrb[0].mxu0
        %v911 = vadd.f32 %v766, %v910
        %v912 = vpop.f32.mrb[0].mxu0
        %v913 = vpop.f32.mrb[0].mxu0
        %v914 = vadd.f32 %v769, %v913
        %v915 = vpop.f32.mrb[0].mxu0
        %916 = vmatprep.mubr.bf16.mxu0 0
        %917 = vmatmul.mubr.bf16.gmra.mrb[0].mxu0 %v591
        %v918 = vpop.f32.mrb[0].mxu0
        %v919 = vadd.f32 %v774, %v918
        %v920 = vpop.f32.mrb[0].mxu0
        %v921 = vpop.f32.mrb[0].mxu0
        %v922 = vadd.f32 %v777, %v921
        %v923 = vpop.f32.mrb[0].mxu0
        %924 = vmatprep.mubr.bf16.mxu0 0
        %925 = vmatmul.mubr.bf16.gmra.mrb[0].mxu0 %v592
        %v926 = vpop.f32.mrb[0].mxu0
        %v927 = vadd.f32 %v782, %v926
        %v928 = vpop.f32.mrb[0].mxu0
        %v929 = vpop.f32.mrb[0].mxu0
        %v930 = vadd.f32 %v785, %v929
        %v931 = vpop.f32.mrb[0].mxu0
        %932 = vmatprep.mubr.bf16.mxu0 0
        %933 = vmatmul.mubr.bf16.gmra.mrb[0].mxu0 %v593
        %v934 = vpop.f32.mrb[0].mxu0
        %v935 = vadd.f32 %v790, %v934
        %v936 = vpop.f32.mrb[0].mxu0
        %v937 = vpop.f32.mrb[0].mxu0
        %v938 = vadd.f32 %v793, %v937
        %v939 = vpop.f32.mrb[0].mxu0
        %940 = vdwg.mxu0
        %v941 = vld [vmem:[#allocation2 + $0x2] sm:$0xff]
        %v942 = vld [vmem:[#allocation2 + $0x12] sm:$0xff]
        %v943 = vld [vmem:[#allocation2 + $0x22] sm:$0xff]
        %v944 = vld [vmem:[#allocation2 + $0x32] sm:$0xff]
        %v945 = vld [vmem:[#allocation2 + $0x42] sm:$0xff]
        %v946 = vld [vmem:[#allocation2 + $0x52] sm:$0xff]
        %v947 = vld [vmem:[#allocation2 + $0x62] sm:$0xff]
        %v948 = vld [vmem:[#allocation2 + $0x72] sm:$0xff]
        %v949 = vld [vmem:[#allocation2 + $0xa2] sm:$0xff]
        %v950 = vld [vmem:[#allocation2 + $0xb2] sm:$0xff]
        %v951 = vld [vmem:[#allocation2 + $0xc2] sm:$0xff]
        %v952 = vld [vmem:[#allocation2 + $0xd2] sm:$0xff]
        %v953 = vld [vmem:[#allocation2 + $0xe2] sm:$0xff]
        %v954 = vld [vmem:[#allocation2 + $0xf2] sm:$0xff]
        %v955 = vld [vmem:[#allocation2 + $0x102] sm:$0xff]
        %v956 = vld [vmem:[#allocation2 + $0x112] sm:$0xff]
        %v957 = vpack.c.bf16 %v942, %v941
        %v958 = vpack.c.bf16 %v944, %v943
        %v959 = vpack.c.bf16 %v946, %v945
        %v960 = vpack.c.bf16 %v948, %v947
        %v961 = vpack.c.bf16 %v950, %v949
        %v962 = vpack.c.bf16 %v952, %v951
        %v963 = vpack.c.bf16 %v954, %v953
        %v964 = vpack.c.bf16 %v956, %v955
        %s965 = scalar_lea.vmem %s1, 128
        %v966 = vld [vmem:[%s965] sm:$0xf]
        %v967 = vld [vmem:[%s965 + $0x4] sm:$0xf]
        %v968 = vld [vmem:[%s965 + $0x8] sm:$0xf]
        %v969 = vld [vmem:[%s965 + $0xc] sm:$0xf]
        %v970 = vld [vmem:[%s965 + $0x10] sm:$0xf]
        %v971 = vld [vmem:[%s965 + $0x14] sm:$0xf]
        %v972 = vld [vmem:[%s965 + $0x18] sm:$0xf]
        %v973 = vld [vmem:[%s965 + $0x1c] sm:$0xf]
        %v974 = vld [vmem:[%s965 + $0x20] sm:$0xf]
        %v975 = vld [vmem:[%s965 + $0x24] sm:$0xf]
        %v976 = vld [vmem:[%s965 + $0x28] sm:$0xf]
        %v977 = vld [vmem:[%s965 + $0x2c] sm:$0xf]
        %v978 = vld [vmem:[%s965 + $0x30] sm:$0xf]
        %v979 = vld [vmem:[%s965 + $0x34] sm:$0xf]
        %v980 = vld [vmem:[%s965 + $0x38] sm:$0xf]
        %v981 = vld [vmem:[%s965 + $0x3c] sm:$0xf]
        %v998 = vunpack.c.l.b16 %v966
        %v999 = vunpack.c.l.b16 %v967
        %v1000 = vunpack.c.l.b16 %v968
        %v1001 = vunpack.c.l.b16 %v969
        %v1002 = vunpack.c.l.b16 %v970
        %v1003 = vunpack.c.l.b16 %v971
        %v1004 = vunpack.c.l.b16 %v972
        %v1005 = vunpack.c.l.b16 %v973
        %v1006 = vunpack.c.l.b16 %v974
        %v1007 = vunpack.c.l.b16 %v975
        %v1008 = vunpack.c.l.b16 %v976
        %v1009 = vunpack.c.l.b16 %v977
        %v1010 = vunpack.c.l.b16 %v978
        %v1011 = vunpack.c.l.b16 %v979
        %v1012 = vunpack.c.l.b16 %v980
        %v1013 = vunpack.c.l.b16 %v981
        %v1014 = vpack.c.b16 %v999, %v998
        %v1015 = vpack.c.b16 %v1001, %v1000
        %v1016 = vpack.c.b16 %v1003, %v1002
        %v1017 = vpack.c.b16 %v1005, %v1004
        %v1018 = vpack.c.b16 %v1007, %v1006
        %v1019 = vpack.c.b16 %v1009, %v1008
        %v1020 = vpack.c.b16 %v1011, %v1010
        %v1021 = vpack.c.b16 %v1013, %v1012
        %1030 = vmatprep.subr.bf16.mxu0 0
        %1031 = vmatpush1.bf16.msra.mxu0 %v1014
        %1032 = vmatprep.subr.bf16.mxu0 0
        %1033 = vmatpush1.bf16.msra.mxu0 %v1015
        %1034 = vmatprep.subr.bf16.mxu0 0
        %1035 = vmatpush1.bf16.msra.mxu0 %v1016
        %1036 = vmatprep.subr.bf16.mxu0 0
        %1037 = vmatpush1.bf16.msra.mxu0 %v1017
        %1038 = vmatprep.subr.bf16.mxu0 0
        %1039 = vmatpush1.bf16.msra.mxu0 %v1018
        %1040 = vmatprep.subr.bf16.mxu0 0
        %1041 = vmatpush1.bf16.msra.mxu0 %v1019
        %1042 = vmatprep.subr.bf16.mxu0 0
        %1043 = vmatpush1.bf16.msra.mxu0 %v1020
        %1044 = vmatprep.subr.bf16.mxu0 0
        %1045 = vmatpush1.bf16.msra.mxu0 %v1021
        %1046 = vmatprep.subr.bf16.mxu0 0
        %1047 = vmatpush1.bf16.msra.mxu0 0
        %1048 = vmatprep.subr.bf16.mxu0 0
        %1049 = vmatpush1.bf16.msra.mxu0 0
        %1050 = vmatprep.subr.bf16.mxu0 0
        %1051 = vmatpush1.bf16.msra.mxu0 0
        %1052 = vmatprep.subr.bf16.mxu0 0
        %1053 = vmatpush1.bf16.msra.mxu0 0
        %1054 = vmatprep.subr.bf16.mxu0 0
        %1055 = vmatpush1.bf16.msra.mxu0 0
        %1056 = vmatprep.subr.bf16.mxu0 0
        %1057 = vmatpush1.bf16.msra.mxu0 0
        %1058 = vmatprep.subr.bf16.mxu0 0
        %1059 = vmatpush1.bf16.msra.mxu0 0
        %1060 = vmatprep.subr.bf16.mxu0 0
        %1061 = vmatpush1.bf16.msra.mxu0 0
        %1062 = vmatprep.mubr.bf16.mxu0 0
        %1063 = vmatmul.mubr.bf16.gmra.mrb[0].mxu0 %v957
        %v1064 = vpop.f32.mrb[0].mxu0
        %v1065 = vadd.f32 0.0, %v1064
        %v1066 = vpop.f32.mrb[0].mxu0
        %v1067 = vpop.f32.mrb[0].mxu0
        %v1068 = vadd.f32 0.0, %v1067
        %v1069 = vpop.f32.mrb[0].mxu0
        %1070 = vmatprep.mubr.bf16.mxu0 0
        %1071 = vmatmul.mubr.bf16.gmra.mrb[0].mxu0 %v958
        %v1072 = vpop.f32.mrb[0].mxu0
        %v1073 = vadd.f32 0.0, %v1072
        %v1074 = vpop.f32.mrb[0].mxu0
        %v1075 = vpop.f32.mrb[0].mxu0
        %v1076 = vadd.f32 0.0, %v1075
        %v1077 = vpop.f32.mrb[0].mxu0
        %1078 = vmatprep.mubr.bf16.mxu0 0
        %1079 = vmatmul.mubr.bf16.gmra.mrb[0].mxu0 %v959
        %v1080 = vpop.f32.mrb[0].mxu0
        %v1081 = vadd.f32 0.0, %v1080
        %v1082 = vpop.f32.mrb[0].mxu0
        %v1083 = vpop.f32.mrb[0].mxu0
        %v1084 = vadd.f32 0.0, %v1083
        %v1085 = vpop.f32.mrb[0].mxu0
        %1086 = vmatprep.mubr.bf16.mxu0 0
        %1087 = vmatmul.mubr.bf16.gmra.mrb[0].mxu0 %v960
        %v1088 = vpop.f32.mrb[0].mxu0
        %v1089 = vadd.f32 0.0, %v1088
        %v1090 = vpop.f32.mrb[0].mxu0
        %v1091 = vpop.f32.mrb[0].mxu0
        %v1092 = vadd.f32 0.0, %v1091
        %v1093 = vpop.f32.mrb[0].mxu0
        %1094 = vmatprep.mubr.bf16.mxu0 0
        %1095 = vmatmul.mubr.bf16.gmra.mrb[0].mxu0 %v961
        %v1096 = vpop.f32.mrb[0].mxu0
        %v1097 = vadd.f32 0.0, %v1096
        %v1098 = vpop.f32.mrb[0].mxu0
        %v1099 = vpop.f32.mrb[0].mxu0
        %v1100 = vadd.f32 0.0, %v1099
        %v1101 = vpop.f32.mrb[0].mxu0
        %1102 = vmatprep.mubr.bf16.mxu0 0
        %1103 = vmatmul.mubr.bf16.gmra.mrb[0].mxu0 %v962
        %v1104 = vpop.f32.mrb[0].mxu0
        %v1105 = vadd.f32 0.0, %v1104
        %v1106 = vpop.f32.mrb[0].mxu0
        %v1107 = vpop.f32.mrb[0].mxu0
        %v1108 = vadd.f32 0.0, %v1107
        %v1109 = vpop.f32.mrb[0].mxu0
        %1110 = vmatprep.mubr.bf16.mxu0 0
        %1111 = vmatmul.mubr.bf16.gmra.mrb[0].mxu0 %v963
        %v1112 = vpop.f32.mrb[0].mxu0
        %v1113 = vadd.f32 0.0, %v1112
        %v1114 = vpop.f32.mrb[0].mxu0
        %v1115 = vpop.f32.mrb[0].mxu0
        %v1116 = vadd.f32 0.0, %v1115
        %v1117 = vpop.f32.mrb[0].mxu0
        %1118 = vmatprep.mubr.bf16.mxu0 0
        %1119 = vmatmul.mubr.bf16.gmra.mrb[0].mxu0 %v964
        %v1120 = vpop.f32.mrb[0].mxu0
        %v1121 = vadd.f32 0.0, %v1120
        %v1122 = vpop.f32.mrb[0].mxu0
        %v1123 = vpop.f32.mrb[0].mxu0
        %v1124 = vadd.f32 0.0, %v1123
        %v1125 = vpop.f32.mrb[0].mxu0
        %1126 = vdwg.mxu0
        %v1127 = vadd.f32 %v879, %v1065
        %v1128 = vadd.f32 %v882, %v1068
        %v1129 = vadd.f32 %v887, %v1073
        %v1130 = vadd.f32 %v890, %v1076
        %v1131 = vadd.f32 %v895, %v1081
        %v1132 = vadd.f32 %v898, %v1084
        %v1133 = vadd.f32 %v903, %v1089
        %v1134 = vadd.f32 %v906, %v1092
        %v1135 = vadd.f32 %v911, %v1097
        %v1136 = vadd.f32 %v914, %v1100
        %v1137 = vadd.f32 %v919, %v1105
        %v1138 = vadd.f32 %v922, %v1108
        %v1139 = vadd.f32 %v927, %v1113
        %v1140 = vadd.f32 %v930, %v1116
        %v1141 = vadd.f32 %v935, %v1121
        %v1142 = vadd.f32 %v938, %v1124
        %v1143 = vld [vmem:[%s438] sm:$0xff]
        %v1144 = vld [vmem:[%s438 + $0x10] sm:$0xff]
        %v1145 = vld [vmem:[%s438 + $0x20] sm:$0xff]
        %v1146 = vld [vmem:[%s438 + $0x30] sm:$0xff]
        %v1147 = vld [vmem:[%s438 + $0x40] sm:$0xff]
        %v1148 = vld [vmem:[%s438 + $0x50] sm:$0xff]
        %v1149 = vld [vmem:[%s438 + $0x60] sm:$0xff]
        %v1150 = vld [vmem:[%s438 + $0x70] sm:$0xff]
        %v1151 = vld [vmem:[%s438 + $0xa0] sm:$0xff]
        %v1152 = vld [vmem:[%s438 + $0xb0] sm:$0xff]
        %v1153 = vld [vmem:[%s438 + $0xc0] sm:$0xff]
        %v1154 = vld [vmem:[%s438 + $0xd0] sm:$0xff]
        %v1155 = vld [vmem:[%s438 + $0xe0] sm:$0xff]
        %v1156 = vld [vmem:[%s438 + $0xf0] sm:$0xff]
        %v1157 = vld [vmem:[%s438 + $0x100] sm:$0xff]
        %v1158 = vld [vmem:[%s438 + $0x110] sm:$0xff]
        %v1159 = vpack.c.bf16 %v1144, %v1143
        %v1160 = vpack.c.bf16 %v1146, %v1145
        %v1161 = vpack.c.bf16 %v1148, %v1147
        %v1162 = vpack.c.bf16 %v1150, %v1149
        %v1163 = vpack.c.bf16 %v1152, %v1151
        %v1164 = vpack.c.bf16 %v1154, %v1153
        %v1165 = vpack.c.bf16 %v1156, %v1155
        %v1166 = vpack.c.bf16 %v1158, %v1157
        %s1167 = scalar_lea.vmem %s1, 192
        %v1168 = vld [vmem:[%s1167] sm:$0xf]
        %v1169 = vld [vmem:[%s1167 + $0x4] sm:$0xf]
        %v1170 = vld [vmem:[%s1167 + $0x8] sm:$0xf]
        %v1171 = vld [vmem:[%s1167 + $0xc] sm:$0xf]
        %v1172 = vld [vmem:[%s1167 + $0x10] sm:$0xf]
        %v1173 = vld [vmem:[%s1167 + $0x14] sm:$0xf]
        %v1174 = vld [vmem:[%s1167 + $0x18] sm:$0xf]
        %v1175 = vld [vmem:[%s1167 + $0x1c] sm:$0xf]
        %v1176 = vld [vmem:[%s1167 + $0x20] sm:$0xf]
        %v1177 = vld [vmem:[%s1167 + $0x24] sm:$0xf]
        %v1178 = vld [vmem:[%s1167 + $0x28] sm:$0xf]
        %v1179 = vld [vmem:[%s1167 + $0x2c] sm:$0xf]
        %v1180 = vld [vmem:[%s1167 + $0x30] sm:$0xf]
        %v1181 = vld [vmem:[%s1167 + $0x34] sm:$0xf]
        %v1182 = vld [vmem:[%s1167 + $0x38] sm:$0xf]
        %v1183 = vld [vmem:[%s1167 + $0x3c] sm:$0xf]
        %v1200 = vunpack.c.l.b16 %v1168
        %v1201 = vunpack.c.l.b16 %v1169
        %v1202 = vunpack.c.l.b16 %v1170
        %v1203 = vunpack.c.l.b16 %v1171
        %v1204 = vunpack.c.l.b16 %v1172
        %v1205 = vunpack.c.l.b16 %v1173
        %v1206 = vunpack.c.l.b16 %v1174
        %v1207 = vunpack.c.l.b16 %v1175
        %v1208 = vunpack.c.l.b16 %v1176
        %v1209 = vunpack.c.l.b16 %v1177
        %v1210 = vunpack.c.l.b16 %v1178
        %v1211 = vunpack.c.l.b16 %v1179
        %v1212 = vunpack.c.l.b16 %v1180
        %v1213 = vunpack.c.l.b16 %v1181
        %v1214 = vunpack.c.l.b16 %v1182
        %v1215 = vunpack.c.l.b16 %v1183
        %v1216 = vpack.c.b16 %v1201, %v1200
        %v1217 = vpack.c.b16 %v1203, %v1202
        %v1218 = vpack.c.b16 %v1205, %v1204
        %v1219 = vpack.c.b16 %v1207, %v1206
        %v1220 = vpack.c.b16 %v1209, %v1208
        %v1221 = vpack.c.b16 %v1211, %v1210
        %v1222 = vpack.c.b16 %v1213, %v1212
        %v1223 = vpack.c.b16 %v1215, %v1214
        %1232 = vmatprep.subr.bf16.mxu0 0
        %1233 = vmatpush1.bf16.msra.mxu0 %v1216
        %1234 = vmatprep.subr.bf16.mxu0 0
        %1235 = vmatpush1.bf16.msra.mxu0 %v1217
        %1236 = vmatprep.subr.bf16.mxu0 0
        %1237 = vmatpush1.bf16.msra.mxu0 %v1218
        %1238 = vmatprep.subr.bf16.mxu0 0
        %1239 = vmatpush1.bf16.msra.mxu0 %v1219
        %1240 = vmatprep.subr.bf16.mxu0 0
        %1241 = vmatpush1.bf16.msra.mxu0 %v1220
        %1242 = vmatprep.subr.bf16.mxu0 0
        %1243 = vmatpush1.bf16.msra.mxu0 %v1221
        %1244 = vmatprep.subr.bf16.mxu0 0
        %1245 = vmatpush1.bf16.msra.mxu0 %v1222
        %1246 = vmatprep.subr.bf16.mxu0 0
        %1247 = vmatpush1.bf16.msra.mxu0 %v1223
        %1248 = vmatprep.subr.bf16.mxu0 0
        %1249 = vmatpush1.bf16.msra.mxu0 0
        %1250 = vmatprep.subr.bf16.mxu0 0
        %1251 = vmatpush1.bf16.msra.mxu0 0
        %1252 = vmatprep.subr.bf16.mxu0 0
        %1253 = vmatpush1.bf16.msra.mxu0 0
        %1254 = vmatprep.subr.bf16.mxu0 0
        %1255 = vmatpush1.bf16.msra.mxu0 0
        %1256 = vmatprep.subr.bf16.mxu0 0
        %1257 = vmatpush1.bf16.msra.mxu0 0
        %1258 = vmatprep.subr.bf16.mxu0 0
        %1259 = vmatpush1.bf16.msra.mxu0 0
        %1260 = vmatprep.subr.bf16.mxu0 0
        %1261 = vmatpush1.bf16.msra.mxu0 0
        %1262 = vmatprep.subr.bf16.mxu0 0
        %1263 = vmatpush1.bf16.msra.mxu0 0
        %1264 = vmatprep.mubr.bf16.mxu0 0
        %1265 = vmatmul.mubr.bf16.gmra.mrb[0].mxu0 %v1159
        %v1266 = vpop.f32.mrb[0].mxu0
        %v1267 = vadd.f32 0.0, %v1266
        %v1268 = vpop.f32.mrb[0].mxu0
        %v1269 = vpop.f32.mrb[0].mxu0
        %v1270 = vadd.f32 0.0, %v1269
        %v1271 = vpop.f32.mrb[0].mxu0
        %1272 = vmatprep.mubr.bf16.mxu0 0
        %1273 = vmatmul.mubr.bf16.gmra.mrb[0].mxu0 %v1160
        %v1274 = vpop.f32.mrb[0].mxu0
        %v1275 = vadd.f32 0.0, %v1274
        %v1276 = vpop.f32.mrb[0].mxu0
        %v1277 = vpop.f32.mrb[0].mxu0
        %v1278 = vadd.f32 0.0, %v1277
        %v1279 = vpop.f32.mrb[0].mxu0
        %1280 = vmatprep.mubr.bf16.mxu0 0
        %1281 = vmatmul.mubr.bf16.gmra.mrb[0].mxu0 %v1161
        %v1282 = vpop.f32.mrb[0].mxu0
        %v1283 = vadd.f32 0.0, %v1282
        %v1284 = vpop.f32.mrb[0].mxu0
        %v1285 = vpop.f32.mrb[0].mxu0
        %v1286 = vadd.f32 0.0, %v1285
        %v1287 = vpop.f32.mrb[0].mxu0
        %1288 = vmatprep.mubr.bf16.mxu0 0
        %1289 = vmatmul.mubr.bf16.gmra.mrb[0].mxu0 %v1162
        %v1290 = vpop.f32.mrb[0].mxu0
        %v1291 = vadd.f32 0.0, %v1290
        %v1292 = vpop.f32.mrb[0].mxu0
        %v1293 = vpop.f32.mrb[0].mxu0
        %v1294 = vadd.f32 0.0, %v1293
        %v1295 = vpop.f32.mrb[0].mxu0
        %1296 = vmatprep.mubr.bf16.mxu0 0
        %1297 = vmatmul.mubr.bf16.gmra.mrb[0].mxu0 %v1163
        %v1298 = vpop.f32.mrb[0].mxu0
        %v1299 = vadd.f32 0.0, %v1298
        %v1300 = vpop.f32.mrb[0].mxu0
        %v1301 = vpop.f32.mrb[0].mxu0
        %v1302 = vadd.f32 0.0, %v1301
        %v1303 = vpop.f32.mrb[0].mxu0
        %1304 = vmatprep.mubr.bf16.mxu0 0
        %1305 = vmatmul.mubr.bf16.gmra.mrb[0].mxu0 %v1164
        %v1306 = vpop.f32.mrb[0].mxu0
        %v1307 = vadd.f32 0.0, %v1306
        %v1308 = vpop.f32.mrb[0].mxu0
        %v1309 = vpop.f32.mrb[0].mxu0
        %v1310 = vadd.f32 0.0, %v1309
        %v1311 = vpop.f32.mrb[0].mxu0
        %1312 = vmatprep.mubr.bf16.mxu0 0
        %1313 = vmatmul.mubr.bf16.gmra.mrb[0].mxu0 %v1165
        %v1314 = vpop.f32.mrb[0].mxu0
        %v1315 = vadd.f32 0.0, %v1314
        %v1316 = vpop.f32.mrb[0].mxu0
        %v1317 = vpop.f32.mrb[0].mxu0
        %v1318 = vadd.f32 0.0, %v1317
        %v1319 = vpop.f32.mrb[0].mxu0
        %1320 = vmatprep.mubr.bf16.mxu0 0
        %1321 = vmatmul.mubr.bf16.gmra.mrb[0].mxu0 %v1166
        %v1322 = vpop.f32.mrb[0].mxu0
        %v1323 = vadd.f32 0.0, %v1322
        %v1324 = vpop.f32.mrb[0].mxu0
        %v1325 = vpop.f32.mrb[0].mxu0
        %v1326 = vadd.f32 0.0, %v1325
        %v1327 = vpop.f32.mrb[0].mxu0
        %1328 = vdwg.mxu0
        %v1329 = vadd.f32 %v1127, %v1267
        %v1330 = vadd.f32 %v1128, %v1270
        %v1331 = vadd.f32 %v1129, %v1275
        %v1332 = vadd.f32 %v1130, %v1278
        %v1333 = vadd.f32 %v1131, %v1283
        %v1334 = vadd.f32 %v1132, %v1286
        %v1335 = vadd.f32 %v1133, %v1291
        %v1336 = vadd.f32 %v1134, %v1294
        %v1337 = vadd.f32 %v1135, %v1299
        %v1338 = vadd.f32 %v1136, %v1302
        %v1339 = vadd.f32 %v1137, %v1307
        %v1340 = vadd.f32 %v1138, %v1310
        %v1341 = vadd.f32 %v1139, %v1315
        %v1342 = vadd.f32 %v1140, %v1318
        %v1343 = vadd.f32 %v1141, %v1323
        %v1344 = vadd.f32 %v1142, %v1326
        %v1345 = vld [vmem:[%s438 + $0x1] sm:$0xff]
        %v1346 = vld [vmem:[%s438 + $0x11] sm:$0xff]
        %v1347 = vld [vmem:[%s438 + $0x21] sm:$0xff]
        %v1348 = vld [vmem:[%s438 + $0x31] sm:$0xff]
        %v1349 = vld [vmem:[%s438 + $0x41] sm:$0xff]
        %v1350 = vld [vmem:[%s438 + $0x51] sm:$0xff]
        %v1351 = vld [vmem:[%s438 + $0x61] sm:$0xff]
        %v1352 = vld [vmem:[%s438 + $0x71] sm:$0xff]
        %v1353 = vld [vmem:[%s438 + $0xa1] sm:$0xff]
        %v1354 = vld [vmem:[%s438 + $0xb1] sm:$0xff]
        %v1355 = vld [vmem:[%s438 + $0xc1] sm:$0xff]
        %v1356 = vld [vmem:[%s438 + $0xd1] sm:$0xff]
        %v1357 = vld [vmem:[%s438 + $0xe1] sm:$0xff]
        %v1358 = vld [vmem:[%s438 + $0xf1] sm:$0xff]
        %v1359 = vld [vmem:[%s438 + $0x101] sm:$0xff]
        %v1360 = vld [vmem:[%s438 + $0x111] sm:$0xff]
        %v1361 = vpack.c.bf16 %v1346, %v1345
        %v1362 = vpack.c.bf16 %v1348, %v1347
        %v1363 = vpack.c.bf16 %v1350, %v1349
        %v1364 = vpack.c.bf16 %v1352, %v1351
        %v1365 = vpack.c.bf16 %v1354, %v1353
        %v1366 = vpack.c.bf16 %v1356, %v1355
        %v1367 = vpack.c.bf16 %v1358, %v1357
        %v1368 = vpack.c.bf16 %v1360, %v1359
        %s1369 = scalar_lea.vmem %s1, 256
        %v1370 = vld [vmem:[%s1369] sm:$0xf]
        %v1371 = vld [vmem:[%s1369 + $0x4] sm:$0xf]
        %v1372 = vld [vmem:[%s1369 + $0x8] sm:$0xf]
        %v1373 = vld [vmem:[%s1369 + $0xc] sm:$0xf]
        %v1374 = vld [vmem:[%s1369 + $0x10] sm:$0xf]
        %v1375 = vld [vmem:[%s1369 + $0x14] sm:$0xf]
        %v1376 = vld [vmem:[%s1369 + $0x18] sm:$0xf]
        %v1377 = vld [vmem:[%s1369 + $0x1c] sm:$0xf]
        %v1378 = vld [vmem:[%s1369 + $0x20] sm:$0xf]
        %v1379 = vld [vmem:[%s1369 + $0x24] sm:$0xf]
        %v1380 = vld [vmem:[%s1369 + $0x28] sm:$0xf]
        %v1381 = vld [vmem:[%s1369 + $0x2c] sm:$0xf]
        %v1382 = vld [vmem:[%s1369 + $0x30] sm:$0xf]
        %v1383 = vld [vmem:[%s1369 + $0x34] sm:$0xf]
        %v1384 = vld [vmem:[%s1369 + $0x38] sm:$0xf]
        %v1385 = vld [vmem:[%s1369 + $0x3c] sm:$0xf]
        %v1402 = vunpack.c.l.b16 %v1370
        %v1403 = vunpack.c.l.b16 %v1371
        %v1404 = vunpack.c.l.b16 %v1372
        %v1405 = vunpack.c.l.b16 %v1373
        %v1406 = vunpack.c.l.b16 %v1374
        %v1407 = vunpack.c.l.b16 %v1375
        %v1408 = vunpack.c.l.b16 %v1376
        %v1409 = vunpack.c.l.b16 %v1377
        %v1410 = vunpack.c.l.b16 %v1378
        %v1411 = vunpack.c.l.b16 %v1379
        %v1412 = vunpack.c.l.b16 %v1380
        %v1413 = vunpack.c.l.b16 %v1381
        %v1414 = vunpack.c.l.b16 %v1382
        %v1415 = vunpack.c.l.b16 %v1383
        %v1416 = vunpack.c.l.b16 %v1384
        %v1417 = vunpack.c.l.b16 %v1385
        %v1418 = vpack.c.b16 %v1403, %v1402
        %v1419 = vpack.c.b16 %v1405, %v1404
        %v1420 = vpack.c.b16 %v1407, %v1406
        %v1421 = vpack.c.b16 %v1409, %v1408
        %v1422 = vpack.c.b16 %v1411, %v1410
        %v1423 = vpack.c.b16 %v1413, %v1412
        %v1424 = vpack.c.b16 %v1415, %v1414
        %v1425 = vpack.c.b16 %v1417, %v1416
        %1434 = vmatprep.subr.bf16.mxu0 0
        %1435 = vmatpush1.bf16.msra.mxu0 %v1418
        %1436 = vmatprep.subr.bf16.mxu0 0
        %1437 = vmatpush1.bf16.msra.mxu0 %v1419
        %1438 = vmatprep.subr.bf16.mxu0 0
        %1439 = vmatpush1.bf16.msra.mxu0 %v1420
        %1440 = vmatprep.subr.bf16.mxu0 0
        %1441 = vmatpush1.bf16.msra.mxu0 %v1421
        %1442 = vmatprep.subr.bf16.mxu0 0
        %1443 = vmatpush1.bf16.msra.mxu0 %v1422
        %1444 = vmatprep.subr.bf16.mxu0 0
        %1445 = vmatpush1.bf16.msra.mxu0 %v1423
        %1446 = vmatprep.subr.bf16.mxu0 0
        %1447 = vmatpush1.bf16.msra.mxu0 %v1424
        %1448 = vmatprep.subr.bf16.mxu0 0
        %1449 = vmatpush1.bf16.msra.mxu0 %v1425
        %1450 = vmatprep.subr.bf16.mxu0 0
        %1451 = vmatpush1.bf16.msra.mxu0 0
        %1452 = vmatprep.subr.bf16.mxu0 0
        %1453 = vmatpush1.bf16.msra.mxu0 0
        %1454 = vmatprep.subr.bf16.mxu0 0
        %1455 = vmatpush1.bf16.msra.mxu0 0
        %1456 = vmatprep.subr.bf16.mxu0 0
        %1457 = vmatpush1.bf16.msra.mxu0 0
        %1458 = vmatprep.subr.bf16.mxu0 0
        %1459 = vmatpush1.bf16.msra.mxu0 0
        %1460 = vmatprep.subr.bf16.mxu0 0
        %1461 = vmatpush1.bf16.msra.mxu0 0
        %1462 = vmatprep.subr.bf16.mxu0 0
        %1463 = vmatpush1.bf16.msra.mxu0 0
        %1464 = vmatprep.subr.bf16.mxu0 0
        %1465 = vmatpush1.bf16.msra.mxu0 0
        %1466 = vmatprep.mubr.bf16.mxu0 0
        %1467 = vmatmul.mubr.bf16.gmra.mrb[0].mxu0 %v1361
        %v1468 = vpop.f32.mrb[0].mxu0
        %v1469 = vadd.f32 0.0, %v1468
        %v1470 = vpop.f32.mrb[0].mxu0
        %v1471 = vpop.f32.mrb[0].mxu0
        %v1472 = vadd.f32 0.0, %v1471
        %v1473 = vpop.f32.mrb[0].mxu0
        %1474 = vmatprep.mubr.bf16.mxu0 0
        %1475 = vmatmul.mubr.bf16.gmra.mrb[0].mxu0 %v1362
        %v1476 = vpop.f32.mrb[0].mxu0
        %v1477 = vadd.f32 0.0, %v1476
        %v1478 = vpop.f32.mrb[0].mxu0
        %v1479 = vpop.f32.mrb[0].mxu0
        %v1480 = vadd.f32 0.0, %v1479
        %v1481 = vpop.f32.mrb[0].mxu0
        %1482 = vmatprep.mubr.bf16.mxu0 0
        %1483 = vmatmul.mubr.bf16.gmra.mrb[0].mxu0 %v1363
        %v1484 = vpop.f32.mrb[0].mxu0
        %v1485 = vadd.f32 0.0, %v1484
        %v1486 = vpop.f32.mrb[0].mxu0
        %v1487 = vpop.f32.mrb[0].mxu0
        %v1488 = vadd.f32 0.0, %v1487
        %v1489 = vpop.f32.mrb[0].mxu0
        %1490 = vmatprep.mubr.bf16.mxu0 0
        %1491 = vmatmul.mubr.bf16.gmra.mrb[0].mxu0 %v1364
        %v1492 = vpop.f32.mrb[0].mxu0
        %v1493 = vadd.f32 0.0, %v1492
        %v1494 = vpop.f32.mrb[0].mxu0
        %v1495 = vpop.f32.mrb[0].mxu0
        %v1496 = vadd.f32 0.0, %v1495
        %v1497 = vpop.f32.mrb[0].mxu0
        %1498 = vmatprep.mubr.bf16.mxu0 0
        %1499 = vmatmul.mubr.bf16.gmra.mrb[0].mxu0 %v1365
        %v1500 = vpop.f32.mrb[0].mxu0
        %v1501 = vadd.f32 0.0, %v1500
        %v1502 = vpop.f32.mrb[0].mxu0
        %v1503 = vpop.f32.mrb[0].mxu0
        %v1504 = vadd.f32 0.0, %v1503
        %v1505 = vpop.f32.mrb[0].mxu0
        %1506 = vmatprep.mubr.bf16.mxu0 0
        %1507 = vmatmul.mubr.bf16.gmra.mrb[0].mxu0 %v1366
        %v1508 = vpop.f32.mrb[0].mxu0
        %v1509 = vadd.f32 0.0, %v1508
        %v1510 = vpop.f32.mrb[0].mxu0
        %v1511 = vpop.f32.mrb[0].mxu0
        %v1512 = vadd.f32 0.0, %v1511
        %v1513 = vpop.f32.mrb[0].mxu0
        %1514 = vmatprep.mubr.bf16.mxu0 0
        %1515 = vmatmul.mubr.bf16.gmra.mrb[0].mxu0 %v1367
        %v1516 = vpop.f32.mrb[0].mxu0
        %v1517 = vadd.f32 0.0, %v1516
        %v1518 = vpop.f32.mrb[0].mxu0
        %v1519 = vpop.f32.mrb[0].mxu0
        %v1520 = vadd.f32 0.0, %v1519
        %v1521 = vpop.f32.mrb[0].mxu0
        %1522 = vmatprep.mubr.bf16.mxu0 0
        %1523 = vmatmul.mubr.bf16.gmra.mrb[0].mxu0 %v1368
        %v1524 = vpop.f32.mrb[0].mxu0
        %v1525 = vadd.f32 0.0, %v1524
        %v1526 = vpop.f32.mrb[0].mxu0
        %v1527 = vpop.f32.mrb[0].mxu0
        %v1528 = vadd.f32 0.0, %v1527
        %v1529 = vpop.f32.mrb[0].mxu0
        %1530 = vdwg.mxu0
        %v1531 = vadd.f32 %v1329, %v1469
        %v1532 = vadd.f32 %v1330, %v1472
        %v1533 = vadd.f32 %v1331, %v1477
        %v1534 = vadd.f32 %v1332, %v1480
        %v1535 = vadd.f32 %v1333, %v1485
        %v1536 = vadd.f32 %v1334, %v1488
        %v1537 = vadd.f32 %v1335, %v1493
        %v1538 = vadd.f32 %v1336, %v1496
        %v1539 = vadd.f32 %v1337, %v1501
        %v1540 = vadd.f32 %v1338, %v1504
        %v1541 = vadd.f32 %v1339, %v1509
        %v1542 = vadd.f32 %v1340, %v1512
        %v1543 = vadd.f32 %v1341, %v1517
        %v1544 = vadd.f32 %v1342, %v1520
        %v1545 = vadd.f32 %v1343, %v1525
        %v1546 = vadd.f32 %v1344, %v1528
        %v1547 = vld [vmem:[%s438 + $0x2] sm:$0xff]
        %v1548 = vld [vmem:[%s438 + $0x12] sm:$0xff]
        %v1549 = vld [vmem:[%s438 + $0x22] sm:$0xff]
        %v1550 = vld [vmem:[%s438 + $0x32] sm:$0xff]
        %v1551 = vld [vmem:[%s438 + $0x42] sm:$0xff]
        %v1552 = vld [vmem:[%s438 + $0x52] sm:$0xff]
        %v1553 = vld [vmem:[%s438 + $0x62] sm:$0xff]
        %v1554 = vld [vmem:[%s438 + $0x72] sm:$0xff]
        %v1555 = vld [vmem:[%s438 + $0xa2] sm:$0xff]
        %v1556 = vld [vmem:[%s438 + $0xb2] sm:$0xff]
        %v1557 = vld [vmem:[%s438 + $0xc2] sm:$0xff]
        %v1558 = vld [vmem:[%s438 + $0xd2] sm:$0xff]
        %v1559 = vld [vmem:[%s438 + $0xe2] sm:$0xff]
        %v1560 = vld [vmem:[%s438 + $0xf2] sm:$0xff]
        %v1561 = vld [vmem:[%s438 + $0x102] sm:$0xff]
        %v1562 = vld [vmem:[%s438 + $0x112] sm:$0xff]
        %v1563 = vpack.c.bf16 %v1548, %v1547
        %v1564 = vpack.c.bf16 %v1550, %v1549
        %v1565 = vpack.c.bf16 %v1552, %v1551
        %v1566 = vpack.c.bf16 %v1554, %v1553
        %v1567 = vpack.c.bf16 %v1556, %v1555
        %v1568 = vpack.c.bf16 %v1558, %v1557
        %v1569 = vpack.c.bf16 %v1560, %v1559
        %v1570 = vpack.c.bf16 %v1562, %v1561
        %s1571 = scalar_lea.vmem %s1, 320
        %v1572 = vld [vmem:[%s1571] sm:$0xf]
        %v1573 = vld [vmem:[%s1571 + $0x4] sm:$0xf]
        %v1574 = vld [vmem:[%s1571 + $0x8] sm:$0xf]
        %v1575 = vld [vmem:[%s1571 + $0xc] sm:$0xf]
        %v1576 = vld [vmem:[%s1571 + $0x10] sm:$0xf]
        %v1577 = vld [vmem:[%s1571 + $0x14] sm:$0xf]
        %v1578 = vld [vmem:[%s1571 + $0x18] sm:$0xf]
        %v1579 = vld [vmem:[%s1571 + $0x1c] sm:$0xf]
        %v1580 = vld [vmem:[%s1571 + $0x20] sm:$0xf]
        %v1581 = vld [vmem:[%s1571 + $0x24] sm:$0xf]
        %v1582 = vld [vmem:[%s1571 + $0x28] sm:$0xf]
        %v1583 = vld [vmem:[%s1571 + $0x2c] sm:$0xf]
        %v1584 = vld [vmem:[%s1571 + $0x30] sm:$0xf]
        %v1585 = vld [vmem:[%s1571 + $0x34] sm:$0xf]
        %v1586 = vld [vmem:[%s1571 + $0x38] sm:$0xf]
        %v1587 = vld [vmem:[%s1571 + $0x3c] sm:$0xf]
        %v1604 = vunpack.c.l.b16 %v1572
        %v1605 = vunpack.c.l.b16 %v1573
        %v1606 = vunpack.c.l.b16 %v1574
        %v1607 = vunpack.c.l.b16 %v1575
        %v1608 = vunpack.c.l.b16 %v1576
        %v1609 = vunpack.c.l.b16 %v1577
        %v1610 = vunpack.c.l.b16 %v1578
        %v1611 = vunpack.c.l.b16 %v1579
        %v1612 = vunpack.c.l.b16 %v1580
        %v1613 = vunpack.c.l.b16 %v1581
        %v1614 = vunpack.c.l.b16 %v1582
        %v1615 = vunpack.c.l.b16 %v1583
        %v1616 = vunpack.c.l.b16 %v1584
        %v1617 = vunpack.c.l.b16 %v1585
        %v1618 = vunpack.c.l.b16 %v1586
        %v1619 = vunpack.c.l.b16 %v1587
        %v1620 = vpack.c.b16 %v1605, %v1604
        %v1621 = vpack.c.b16 %v1607, %v1606
        %v1622 = vpack.c.b16 %v1609, %v1608
        %v1623 = vpack.c.b16 %v1611, %v1610
        %v1624 = vpack.c.b16 %v1613, %v1612
        %v1625 = vpack.c.b16 %v1615, %v1614
        %v1626 = vpack.c.b16 %v1617, %v1616
        %v1627 = vpack.c.b16 %v1619, %v1618
        %1636 = vmatprep.subr.bf16.mxu0 0
        %1637 = vmatpush1.bf16.msra.mxu0 %v1620
        %1638 = vmatprep.subr.bf16.mxu0 0
        %1639 = vmatpush1.bf16.msra.mxu0 %v1621
        %1640 = vmatprep.subr.bf16.mxu0 0
        %1641 = vmatpush1.bf16.msra.mxu0 %v1622
        %1642 = vmatprep.subr.bf16.mxu0 0
        %1643 = vmatpush1.bf16.msra.mxu0 %v1623
        %1644 = vmatprep.subr.bf16.mxu0 0
        %1645 = vmatpush1.bf16.msra.mxu0 %v1624
        %1646 = vmatprep.subr.bf16.mxu0 0
        %1647 = vmatpush1.bf16.msra.mxu0 %v1625
        %1648 = vmatprep.subr.bf16.mxu0 0
        %1649 = vmatpush1.bf16.msra.mxu0 %v1626
        %1650 = vmatprep.subr.bf16.mxu0 0
        %1651 = vmatpush1.bf16.msra.mxu0 %v1627
        %1652 = vmatprep.subr.bf16.mxu0 0
        %1653 = vmatpush1.bf16.msra.mxu0 0
        %1654 = vmatprep.subr.bf16.mxu0 0
        %1655 = vmatpush1.bf16.msra.mxu0 0
        %1656 = vmatprep.subr.bf16.mxu0 0
        %1657 = vmatpush1.bf16.msra.mxu0 0
        %1658 = vmatprep.subr.bf16.mxu0 0
        %1659 = vmatpush1.bf16.msra.mxu0 0
        %1660 = vmatprep.subr.bf16.mxu0 0
        %1661 = vmatpush1.bf16.msra.mxu0 0
        %1662 = vmatprep.subr.bf16.mxu0 0
        %1663 = vmatpush1.bf16.msra.mxu0 0
        %1664 = vmatprep.subr.bf16.mxu0 0
        %1665 = vmatpush1.bf16.msra.mxu0 0
        %1666 = vmatprep.subr.bf16.mxu0 0
        %1667 = vmatpush1.bf16.msra.mxu0 0
        %1668 = vmatprep.mubr.bf16.mxu0 0
        %1669 = vmatmul.mubr.bf16.gmra.mrb[0].mxu0 %v1563
        %v1670 = vpop.f32.mrb[0].mxu0
        %v1671 = vadd.f32 0.0, %v1670
        %v1672 = vpop.f32.mrb[0].mxu0
        %v1673 = vpop.f32.mrb[0].mxu0
        %v1674 = vadd.f32 0.0, %v1673
        %v1675 = vpop.f32.mrb[0].mxu0
        %1676 = vmatprep.mubr.bf16.mxu0 0
        %1677 = vmatmul.mubr.bf16.gmra.mrb[0].mxu0 %v1564
        %v1678 = vpop.f32.mrb[0].mxu0
        %v1679 = vadd.f32 0.0, %v1678
        %v1680 = vpop.f32.mrb[0].mxu0
        %v1681 = vpop.f32.mrb[0].mxu0
        %v1682 = vadd.f32 0.0, %v1681
        %v1683 = vpop.f32.mrb[0].mxu0
        %1684 = vmatprep.mubr.bf16.mxu0 0
        %1685 = vmatmul.mubr.bf16.gmra.mrb[0].mxu0 %v1565
        %v1686 = vpop.f32.mrb[0].mxu0
        %v1687 = vadd.f32 0.0, %v1686
        %v1688 = vpop.f32.mrb[0].mxu0
        %v1689 = vpop.f32.mrb[0].mxu0
        %v1690 = vadd.f32 0.0, %v1689
        %v1691 = vpop.f32.mrb[0].mxu0
        %1692 = vmatprep.mubr.bf16.mxu0 0
        %1693 = vmatmul.mubr.bf16.gmra.mrb[0].mxu0 %v1566
        %v1694 = vpop.f32.mrb[0].mxu0
        %v1695 = vadd.f32 0.0, %v1694
        %v1696 = vpop.f32.mrb[0].mxu0
        %v1697 = vpop.f32.mrb[0].mxu0
        %v1698 = vadd.f32 0.0, %v1697
        %v1699 = vpop.f32.mrb[0].mxu0
        %1700 = vmatprep.mubr.bf16.mxu0 0
        %1701 = vmatmul.mubr.bf16.gmra.mrb[0].mxu0 %v1567
        %v1702 = vpop.f32.mrb[0].mxu0
        %v1703 = vadd.f32 0.0, %v1702
        %v1704 = vpop.f32.mrb[0].mxu0
        %v1705 = vpop.f32.mrb[0].mxu0
        %v1706 = vadd.f32 0.0, %v1705
        %v1707 = vpop.f32.mrb[0].mxu0
        %1708 = vmatprep.mubr.bf16.mxu0 0
        %1709 = vmatmul.mubr.bf16.gmra.mrb[0].mxu0 %v1568
        %v1710 = vpop.f32.mrb[0].mxu0
        %v1711 = vadd.f32 0.0, %v1710
        %v1712 = vpop.f32.mrb[0].mxu0
        %v1713 = vpop.f32.mrb[0].mxu0
        %v1714 = vadd.f32 0.0, %v1713
        %v1715 = vpop.f32.mrb[0].mxu0
        %1716 = vmatprep.mubr.bf16.mxu0 0
        %1717 = vmatmul.mubr.bf16.gmra.mrb[0].mxu0 %v1569
        %v1718 = vpop.f32.mrb[0].mxu0
        %v1719 = vadd.f32 0.0, %v1718
        %v1720 = vpop.f32.mrb[0].mxu0
        %v1721 = vpop.f32.mrb[0].mxu0
        %v1722 = vadd.f32 0.0, %v1721
        %v1723 = vpop.f32.mrb[0].mxu0
        %1724 = vmatprep.mubr.bf16.mxu0 0
        %1725 = vmatmul.mubr.bf16.gmra.mrb[0].mxu0 %v1570
        %v1726 = vpop.f32.mrb[0].mxu0
        %v1727 = vadd.f32 0.0, %v1726
        %v1728 = vpop.f32.mrb[0].mxu0
        %v1729 = vpop.f32.mrb[0].mxu0
        %v1730 = vadd.f32 0.0, %v1729
        %v1731 = vpop.f32.mrb[0].mxu0
        %1732 = vdwg.mxu0
        %v1733 = vadd.f32 %v1531, %v1671
        %v1734 = vadd.f32 %v1532, %v1674
        %v1735 = vadd.f32 %v1533, %v1679
        %v1736 = vadd.f32 %v1534, %v1682
        %v1737 = vadd.f32 %v1535, %v1687
        %v1738 = vadd.f32 %v1536, %v1690
        %v1739 = vadd.f32 %v1537, %v1695
        %v1740 = vadd.f32 %v1538, %v1698
        %v1741 = vadd.f32 %v1539, %v1703
        %v1742 = vadd.f32 %v1540, %v1706
        %v1743 = vadd.f32 %v1541, %v1711
        %v1744 = vadd.f32 %v1542, %v1714
        %v1745 = vadd.f32 %v1543, %v1719
        %v1746 = vadd.f32 %v1544, %v1722
        %v1747 = vadd.f32 %v1545, %v1727
        %v1748 = vadd.f32 %v1546, %v1730
        %s1749 = scalar_lea.vmem [#allocation2], 32
        %v1750 = vld [vmem:[%s1749] sm:$0xff]
        %v1751 = vld [vmem:[%s1749 + $0x10] sm:$0xff]
        %v1752 = vld [vmem:[%s1749 + $0x20] sm:$0xff]
        %v1753 = vld [vmem:[%s1749 + $0x30] sm:$0xff]
        %v1754 = vld [vmem:[%s1749 + $0x40] sm:$0xff]
        %v1755 = vld [vmem:[%s1749 + $0x50] sm:$0xff]
        %v1756 = vld [vmem:[%s1749 + $0x60] sm:$0xff]
        %v1757 = vld [vmem:[%s1749 + $0x70] sm:$0xff]
        %v1758 = vld [vmem:[%s1749 + $0xa0] sm:$0xff]
        %v1759 = vld [vmem:[%s1749 + $0xb0] sm:$0xff]
        %v1760 = vld [vmem:[%s1749 + $0xc0] sm:$0xff]
        %v1761 = vld [vmem:[%s1749 + $0xd0] sm:$0xff]
        %v1762 = vld [vmem:[%s1749 + $0xe0] sm:$0xff]
        %v1763 = vld [vmem:[%s1749 + $0xf0] sm:$0xff]
        %v1764 = vld [vmem:[%s1749 + $0x100] sm:$0xff]
        %v1765 = vld [vmem:[%s1749 + $0x110] sm:$0xff]
        %v1766 = vpack.c.bf16 %v1751, %v1750
        %v1767 = vpack.c.bf16 %v1753, %v1752
        %v1768 = vpack.c.bf16 %v1755, %v1754
        %v1769 = vpack.c.bf16 %v1757, %v1756
        %v1770 = vpack.c.bf16 %v1759, %v1758
        %v1771 = vpack.c.bf16 %v1761, %v1760
        %v1772 = vpack.c.bf16 %v1763, %v1762
        %v1773 = vpack.c.bf16 %v1765, %v1764
        %s1774 = scalar_lea.vmem %s1, 384
        %v1775 = vld [vmem:[%s1774] sm:$0xf]
        %v1776 = vld [vmem:[%s1774 + $0x4] sm:$0xf]
        %v1777 = vld [vmem:[%s1774 + $0x8] sm:$0xf]
        %v1778 = vld [vmem:[%s1774 + $0xc] sm:$0xf]
        %v1779 = vld [vmem:[%s1774 + $0x10] sm:$0xf]
        %v1780 = vld [vmem:[%s1774 + $0x14] sm:$0xf]
        %v1781 = vld [vmem:[%s1774 + $0x18] sm:$0xf]
        %v1782 = vld [vmem:[%s1774 + $0x1c] sm:$0xf]
        %v1783 = vld [vmem:[%s1774 + $0x20] sm:$0xf]
        %v1784 = vld [vmem:[%s1774 + $0x24] sm:$0xf]
        %v1785 = vld [vmem:[%s1774 + $0x28] sm:$0xf]
        %v1786 = vld [vmem:[%s1774 + $0x2c] sm:$0xf]
        %v1787 = vld [vmem:[%s1774 + $0x30] sm:$0xf]
        %v1788 = vld [vmem:[%s1774 + $0x34] sm:$0xf]
        %v1789 = vld [vmem:[%s1774 + $0x38] sm:$0xf]
        %v1790 = vld [vmem:[%s1774 + $0x3c] sm:$0xf]
        %v1807 = vunpack.c.l.b16 %v1775
        %v1808 = vunpack.c.l.b16 %v1776
        %v1809 = vunpack.c.l.b16 %v1777
        %v1810 = vunpack.c.l.b16 %v1778
        %v1811 = vunpack.c.l.b16 %v1779
        %v1812 = vunpack.c.l.b16 %v1780
        %v1813 = vunpack.c.l.b16 %v1781
        %v1814 = vunpack.c.l.b16 %v1782
        %v1815 = vunpack.c.l.b16 %v1783
        %v1816 = vunpack.c.l.b16 %v1784
        %v1817 = vunpack.c.l.b16 %v1785
        %v1818 = vunpack.c.l.b16 %v1786
        %v1819 = vunpack.c.l.b16 %v1787
        %v1820 = vunpack.c.l.b16 %v1788
        %v1821 = vunpack.c.l.b16 %v1789
        %v1822 = vunpack.c.l.b16 %v1790
        %v1823 = vpack.c.b16 %v1808, %v1807
        %v1824 = vpack.c.b16 %v1810, %v1809
        %v1825 = vpack.c.b16 %v1812, %v1811
        %v1826 = vpack.c.b16 %v1814, %v1813
        %v1827 = vpack.c.b16 %v1816, %v1815
        %v1828 = vpack.c.b16 %v1818, %v1817
        %v1829 = vpack.c.b16 %v1820, %v1819
        %v1830 = vpack.c.b16 %v1822, %v1821
        %1839 = vmatprep.subr.bf16.mxu0 0
        %1840 = vmatpush1.bf16.msra.mxu0 %v1823
        %1841 = vmatprep.subr.bf16.mxu0 0
        %1842 = vmatpush1.bf16.msra.mxu0 %v1824
        %1843 = vmatprep.subr.bf16.mxu0 0
        %1844 = vmatpush1.bf16.msra.mxu0 %v1825
        %1845 = vmatprep.subr.bf16.mxu0 0
        %1846 = vmatpush1.bf16.msra.mxu0 %v1826
        %1847 = vmatprep.subr.bf16.mxu0 0
        %1848 = vmatpush1.bf16.msra.mxu0 %v1827
        %1849 = vmatprep.subr.bf16.mxu0 0
        %1850 = vmatpush1.bf16.msra.mxu0 %v1828
        %1851 = vmatprep.subr.bf16.mxu0 0
        %1852 = vmatpush1.bf16.msra.mxu0 %v1829
        %1853 = vmatprep.subr.bf16.mxu0 0
        %1854 = vmatpush1.bf16.msra.mxu0 %v1830
        %1855 = vmatprep.subr.bf16.mxu0 0
        %1856 = vmatpush1.bf16.msra.mxu0 0
        %1857 = vmatprep.subr.bf16.mxu0 0
        %1858 = vmatpush1.bf16.msra.mxu0 0
        %1859 = vmatprep.subr.bf16.mxu0 0
        %1860 = vmatpush1.bf16.msra.mxu0 0
        %1861 = vmatprep.subr.bf16.mxu0 0
        %1862 = vmatpush1.bf16.msra.mxu0 0
        %1863 = vmatprep.subr.bf16.mxu0 0
        %1864 = vmatpush1.bf16.msra.mxu0 0
        %1865 = vmatprep.subr.bf16.mxu0 0
        %1866 = vmatpush1.bf16.msra.mxu0 0
        %1867 = vmatprep.subr.bf16.mxu0 0
        %1868 = vmatpush1.bf16.msra.mxu0 0
        %1869 = vmatprep.subr.bf16.mxu0 0
        %1870 = vmatpush1.bf16.msra.mxu0 0
        %1871 = vmatprep.mubr.bf16.mxu0 0
        %1872 = vmatmul.mubr.bf16.gmra.mrb[0].mxu0 %v1766
        %v1873 = vpop.f32.mrb[0].mxu0
        %v1874 = vadd.f32 0.0, %v1873
        %v1875 = vpop.f32.mrb[0].mxu0
        %v1876 = vpop.f32.mrb[0].mxu0
        %v1877 = vadd.f32 0.0, %v1876
        %v1878 = vpop.f32.mrb[0].mxu0
        %1879 = vmatprep.mubr.bf16.mxu0 0
        %1880 = vmatmul.mubr.bf16.gmra.mrb[0].mxu0 %v1767
        %v1881 = vpop.f32.mrb[0].mxu0
        %v1882 = vadd.f32 0.0, %v1881
        %v1883 = vpop.f32.mrb[0].mxu0
        %v1884 = vpop.f32.mrb[0].mxu0
        %v1885 = vadd.f32 0.0, %v1884
        %v1886 = vpop.f32.mrb[0].mxu0
        %1887 = vmatprep.mubr.bf16.mxu0 0
        %1888 = vmatmul.mubr.bf16.gmra.mrb[0].mxu0 %v1768
        %v1889 = vpop.f32.mrb[0].mxu0
        %v1890 = vadd.f32 0.0, %v1889
        %v1891 = vpop.f32.mrb[0].mxu0
        %v1892 = vpop.f32.mrb[0].mxu0
        %v1893 = vadd.f32 0.0, %v1892
        %v1894 = vpop.f32.mrb[0].mxu0
        %1895 = vmatprep.mubr.bf16.mxu0 0
        %1896 = vmatmul.mubr.bf16.gmra.mrb[0].mxu0 %v1769
        %v1897 = vpop.f32.mrb[0].mxu0
        %v1898 = vadd.f32 0.0, %v1897
        %v1899 = vpop.f32.mrb[0].mxu0
        %v1900 = vpop.f32.mrb[0].mxu0
        %v1901 = vadd.f32 0.0, %v1900
        %v1902 = vpop.f32.mrb[0].mxu0
        %1903 = vmatprep.mubr.bf16.mxu0 0
        %1904 = vmatmul.mubr.bf16.gmra.mrb[0].mxu0 %v1770
        %v1905 = vpop.f32.mrb[0].mxu0
        %v1906 = vadd.f32 0.0, %v1905
        %v1907 = vpop.f32.mrb[0].mxu0
        %v1908 = vpop.f32.mrb[0].mxu0
        %v1909 = vadd.f32 0.0, %v1908
        %v1910 = vpop.f32.mrb[0].mxu0
        %1911 = vmatprep.mubr.bf16.mxu0 0
        %1912 = vmatmul.mubr.bf16.gmra.mrb[0].mxu0 %v1771
        %v1913 = vpop.f32.mrb[0].mxu0
        %v1914 = vadd.f32 0.0, %v1913
        %v1915 = vpop.f32.mrb[0].mxu0
        %v1916 = vpop.f32.mrb[0].mxu0
        %v1917 = vadd.f32 0.0, %v1916
        %v1918 = vpop.f32.mrb[0].mxu0
        %1919 = vmatprep.mubr.bf16.mxu0 0
        %1920 = vmatmul.mubr.bf16.gmra.mrb[0].mxu0 %v1772
        %v1921 = vpop.f32.mrb[0].mxu0
        %v1922 = vadd.f32 0.0, %v1921
        %v1923 = vpop.f32.mrb[0].mxu0
        %v1924 = vpop.f32.mrb[0].mxu0
        %v1925 = vadd.f32 0.0, %v1924
        %v1926 = vpop.f32.mrb[0].mxu0
        %1927 = vmatprep.mubr.bf16.mxu0 0
        %1928 = vmatmul.mubr.bf16.gmra.mrb[0].mxu0 %v1773
        %v1929 = vpop.f32.mrb[0].mxu0
        %v1930 = vadd.f32 0.0, %v1929
        %v1931 = vpop.f32.mrb[0].mxu0
        %v1932 = vpop.f32.mrb[0].mxu0
        %v1933 = vadd.f32 0.0, %v1932
        %v1934 = vpop.f32.mrb[0].mxu0
        %1935 = vdwg.mxu0
        %v1936 = vadd.f32 %v1733, %v1874
        %v1937 = vadd.f32 %v1734, %v1877
        %v1938 = vadd.f32 %v1735, %v1882
        %v1939 = vadd.f32 %v1736, %v1885
        %v1940 = vadd.f32 %v1737, %v1890
        %v1941 = vadd.f32 %v1738, %v1893
        %v1942 = vadd.f32 %v1739, %v1898
        %v1943 = vadd.f32 %v1740, %v1901
        %v1944 = vadd.f32 %v1741, %v1906
        %v1945 = vadd.f32 %v1742, %v1909
        %v1946 = vadd.f32 %v1743, %v1914
        %v1947 = vadd.f32 %v1744, %v1917
        %v1948 = vadd.f32 %v1745, %v1922
        %v1949 = vadd.f32 %v1746, %v1925
        %v1950 = vadd.f32 %v1747, %v1930
        %v1951 = vadd.f32 %v1748, %v1933
        %v1952 = vld [vmem:[%s1749 + $0x1] sm:$0xff]
        %v1953 = vld [vmem:[%s1749 + $0x11] sm:$0xff]
        %v1954 = vld [vmem:[%s1749 + $0x21] sm:$0xff]
        %v1955 = vld [vmem:[%s1749 + $0x31] sm:$0xff]
        %v1956 = vld [vmem:[%s1749 + $0x41] sm:$0xff]
        %v1957 = vld [vmem:[%s1749 + $0x51] sm:$0xff]
        %v1958 = vld [vmem:[%s1749 + $0x61] sm:$0xff]
        %v1959 = vld [vmem:[%s1749 + $0x71] sm:$0xff]
        %v1960 = vld [vmem:[%s1749 + $0xa1] sm:$0xff]
        %v1961 = vld [vmem:[%s1749 + $0xb1] sm:$0xff]
        %v1962 = vld [vmem:[%s1749 + $0xc1] sm:$0xff]
        %v1963 = vld [vmem:[%s1749 + $0xd1] sm:$0xff]
        %v1964 = vld [vmem:[%s1749 + $0xe1] sm:$0xff]
        %v1965 = vld [vmem:[%s1749 + $0xf1] sm:$0xff]
        %v1966 = vld [vmem:[%s1749 + $0x101] sm:$0xff]
        %v1967 = vld [vmem:[%s1749 + $0x111] sm:$0xff]
        %v1968 = vpack.c.bf16 %v1953, %v1952
        %v1969 = vpack.c.bf16 %v1955, %v1954
        %v1970 = vpack.c.bf16 %v1957, %v1956
        %v1971 = vpack.c.bf16 %v1959, %v1958
        %v1972 = vpack.c.bf16 %v1961, %v1960
        %v1973 = vpack.c.bf16 %v1963, %v1962
        %v1974 = vpack.c.bf16 %v1965, %v1964
        %v1975 = vpack.c.bf16 %v1967, %v1966
        %s1976 = scalar_lea.vmem %s1, 448
        %v1977 = vld [vmem:[%s1976] sm:$0xf]
        %v1978 = vld [vmem:[%s1976 + $0x4] sm:$0xf]
        %v1979 = vld [vmem:[%s1976 + $0x8] sm:$0xf]
        %v1980 = vld [vmem:[%s1976 + $0xc] sm:$0xf]
        %v1981 = vld [vmem:[%s1976 + $0x10] sm:$0xf]
        %v1982 = vld [vmem:[%s1976 + $0x14] sm:$0xf]
        %v1983 = vld [vmem:[%s1976 + $0x18] sm:$0xf]
        %v1984 = vld [vmem:[%s1976 + $0x1c] sm:$0xf]
        %v1985 = vld [vmem:[%s1976 + $0x20] sm:$0xf]
        %v1986 = vld [vmem:[%s1976 + $0x24] sm:$0xf]
        %v1987 = vld [vmem:[%s1976 + $0x28] sm:$0xf]
        %v1988 = vld [vmem:[%s1976 + $0x2c] sm:$0xf]
        %v1989 = vld [vmem:[%s1976 + $0x30] sm:$0xf]
        %v1990 = vld [vmem:[%s1976 + $0x34] sm:$0xf]
        %v1991 = vld [vmem:[%s1976 + $0x38] sm:$0xf]
        %v1992 = vld [vmem:[%s1976 + $0x3c] sm:$0xf]
        %v2009 = vunpack.c.l.b16 %v1977
        %v2010 = vunpack.c.l.b16 %v1978
        %v2011 = vunpack.c.l.b16 %v1979
        %v2012 = vunpack.c.l.b16 %v1980
        %v2013 = vunpack.c.l.b16 %v1981
        %v2014 = vunpack.c.l.b16 %v1982
        %v2015 = vunpack.c.l.b16 %v1983
        %v2016 = vunpack.c.l.b16 %v1984
        %v2017 = vunpack.c.l.b16 %v1985
        %v2018 = vunpack.c.l.b16 %v1986
        %v2019 = vunpack.c.l.b16 %v1987
        %v2020 = vunpack.c.l.b16 %v1988
        %v2021 = vunpack.c.l.b16 %v1989
        %v2022 = vunpack.c.l.b16 %v1990
        %v2023 = vunpack.c.l.b16 %v1991
        %v2024 = vunpack.c.l.b16 %v1992
        %v2025 = vpack.c.b16 %v2010, %v2009
        %v2026 = vpack.c.b16 %v2012, %v2011
        %v2027 = vpack.c.b16 %v2014, %v2013
        %v2028 = vpack.c.b16 %v2016, %v2015
        %v2029 = vpack.c.b16 %v2018, %v2017
        %v2030 = vpack.c.b16 %v2020, %v2019
        %v2031 = vpack.c.b16 %v2022, %v2021
        %v2032 = vpack.c.b16 %v2024, %v2023
        %2041 = vmatprep.subr.bf16.mxu0 0
        %2042 = vmatpush1.bf16.msra.mxu0 %v2025
        %2043 = vmatprep.subr.bf16.mxu0 0
        %2044 = vmatpush1.bf16.msra.mxu0 %v2026
        %2045 = vmatprep.subr.bf16.mxu0 0
        %2046 = vmatpush1.bf16.msra.mxu0 %v2027
        %2047 = vmatprep.subr.bf16.mxu0 0
        %2048 = vmatpush1.bf16.msra.mxu0 %v2028
        %2049 = vmatprep.subr.bf16.mxu0 0
        %2050 = vmatpush1.bf16.msra.mxu0 %v2029
        %2051 = vmatprep.subr.bf16.mxu0 0
        %2052 = vmatpush1.bf16.msra.mxu0 %v2030
        %2053 = vmatprep.subr.bf16.mxu0 0
        %2054 = vmatpush1.bf16.msra.mxu0 %v2031
        %2055 = vmatprep.subr.bf16.mxu0 0
        %2056 = vmatpush1.bf16.msra.mxu0 %v2032
        %2057 = vmatprep.subr.bf16.mxu0 0
        %2058 = vmatpush1.bf16.msra.mxu0 0
        %2059 = vmatprep.subr.bf16.mxu0 0
        %2060 = vmatpush1.bf16.msra.mxu0 0
        %2061 = vmatprep.subr.bf16.mxu0 0
        %2062 = vmatpush1.bf16.msra.mxu0 0
        %2063 = vmatprep.subr.bf16.mxu0 0
        %2064 = vmatpush1.bf16.msra.mxu0 0
        %2065 = vmatprep.subr.bf16.mxu0 0
        %2066 = vmatpush1.bf16.msra.mxu0 0
        %2067 = vmatprep.subr.bf16.mxu0 0
        %2068 = vmatpush1.bf16.msra.mxu0 0
        %2069 = vmatprep.subr.bf16.mxu0 0
        %2070 = vmatpush1.bf16.msra.mxu0 0
        %2071 = vmatprep.subr.bf16.mxu0 0
        %2072 = vmatpush1.bf16.msra.mxu0 0
        %2073 = vmatprep.mubr.bf16.mxu0 0
        %2074 = vmatmul.mubr.bf16.gmra.mrb[0].mxu0 %v1968
        %v2075 = vpop.f32.mrb[0].mxu0
        %v2076 = vadd.f32 0.0, %v2075
        %v2077 = vpop.f32.mrb[0].mxu0
        %v2078 = vpop.f32.mrb[0].mxu0
        %v2079 = vadd.f32 0.0, %v2078
        %v2080 = vpop.f32.mrb[0].mxu0
        %2081 = vmatprep.mubr.bf16.mxu0 0
        %2082 = vmatmul.mubr.bf16.gmra.mrb[0].mxu0 %v1969
        %v2083 = vpop.f32.mrb[0].mxu0
        %v2084 = vadd.f32 0.0, %v2083
        %v2085 = vpop.f32.mrb[0].mxu0
        %v2086 = vpop.f32.mrb[0].mxu0
        %v2087 = vadd.f32 0.0, %v2086
        %v2088 = vpop.f32.mrb[0].mxu0
        %2089 = vmatprep.mubr.bf16.mxu0 0
        %2090 = vmatmul.mubr.bf16.gmra.mrb[0].mxu0 %v1970
        %v2091 = vpop.f32.mrb[0].mxu0
        %v2092 = vadd.f32 0.0, %v2091
        %v2093 = vpop.f32.mrb[0].mxu0
        %v2094 = vpop.f32.mrb[0].mxu0
        %v2095 = vadd.f32 0.0, %v2094
        %v2096 = vpop.f32.mrb[0].mxu0
        %2097 = vmatprep.mubr.bf16.mxu0 0
        %2098 = vmatmul.mubr.bf16.gmra.mrb[0].mxu0 %v1971
        %v2099 = vpop.f32.mrb[0].mxu0
        %v2100 = vadd.f32 0.0, %v2099
        %v2101 = vpop.f32.mrb[0].mxu0
        %v2102 = vpop.f32.mrb[0].mxu0
        %v2103 = vadd.f32 0.0, %v2102
        %v2104 = vpop.f32.mrb[0].mxu0
        %2105 = vmatprep.mubr.bf16.mxu0 0
        %2106 = vmatmul.mubr.bf16.gmra.mrb[0].mxu0 %v1972
        %v2107 = vpop.f32.mrb[0].mxu0
        %v2108 = vadd.f32 0.0, %v2107
        %v2109 = vpop.f32.mrb[0].mxu0
        %v2110 = vpop.f32.mrb[0].mxu0
        %v2111 = vadd.f32 0.0, %v2110
        %v2112 = vpop.f32.mrb[0].mxu0
        %2113 = vmatprep.mubr.bf16.mxu0 0
        %2114 = vmatmul.mubr.bf16.gmra.mrb[0].mxu0 %v1973
        %v2115 = vpop.f32.mrb[0].mxu0
        %v2116 = vadd.f32 0.0, %v2115
        %v2117 = vpop.f32.mrb[0].mxu0
        %v2118 = vpop.f32.mrb[0].mxu0
        %v2119 = vadd.f32 0.0, %v2118
        %v2120 = vpop.f32.mrb[0].mxu0
        %2121 = vmatprep.mubr.bf16.mxu0 0
        %2122 = vmatmul.mubr.bf16.gmra.mrb[0].mxu0 %v1974
        %v2123 = vpop.f32.mrb[0].mxu0
        %v2124 = vadd.f32 0.0, %v2123
        %v2125 = vpop.f32.mrb[0].mxu0
        %v2126 = vpop.f32.mrb[0].mxu0
        %v2127 = vadd.f32 0.0, %v2126
        %v2128 = vpop.f32.mrb[0].mxu0
        %2129 = vmatprep.mubr.bf16.mxu0 0
        %2130 = vmatmul.mubr.bf16.gmra.mrb[0].mxu0 %v1975
        %v2131 = vpop.f32.mrb[0].mxu0
        %v2132 = vadd.f32 0.0, %v2131
        %v2133 = vpop.f32.mrb[0].mxu0
        %v2134 = vpop.f32.mrb[0].mxu0
        %v2135 = vadd.f32 0.0, %v2134
        %v2136 = vpop.f32.mrb[0].mxu0
        %2137 = vdwg.mxu0
        %v2138 = vadd.f32 %v1936, %v2076
        %v2139 = vadd.f32 %v1937, %v2079
        %v2140 = vadd.f32 %v1938, %v2084
        %v2141 = vadd.f32 %v1939, %v2087
        %v2142 = vadd.f32 %v1940, %v2092
        %v2143 = vadd.f32 %v1941, %v2095
        %v2144 = vadd.f32 %v1942, %v2100
        %v2145 = vadd.f32 %v1943, %v2103
        %v2146 = vadd.f32 %v1944, %v2108
        %v2147 = vadd.f32 %v1945, %v2111
        %v2148 = vadd.f32 %v1946, %v2116
        %v2149 = vadd.f32 %v1947, %v2119
        %v2150 = vadd.f32 %v1948, %v2124
        %v2151 = vadd.f32 %v1949, %v2127
        %v2152 = vadd.f32 %v1950, %v2132
        %v2153 = vadd.f32 %v1951, %v2135
        %v2154 = vld [vmem:[%s1749 + $0x2] sm:$0xff]
        %v2155 = vld [vmem:[%s1749 + $0x12] sm:$0xff]
        %v2156 = vld [vmem:[%s1749 + $0x22] sm:$0xff]
        %v2157 = vld [vmem:[%s1749 + $0x32] sm:$0xff]
        %v2158 = vld [vmem:[%s1749 + $0x42] sm:$0xff]
        %v2159 = vld [vmem:[%s1749 + $0x52] sm:$0xff]
        %v2160 = vld [vmem:[%s1749 + $0x62] sm:$0xff]
        %v2161 = vld [vmem:[%s1749 + $0x72] sm:$0xff]
        %v2162 = vld [vmem:[%s1749 + $0xa2] sm:$0xff]
        %v2163 = vld [vmem:[%s1749 + $0xb2] sm:$0xff]
        %v2164 = vld [vmem:[%s1749 + $0xc2] sm:$0xff]
        %v2165 = vld [vmem:[%s1749 + $0xd2] sm:$0xff]
        %v2166 = vld [vmem:[%s1749 + $0xe2] sm:$0xff]
        %v2167 = vld [vmem:[%s1749 + $0xf2] sm:$0xff]
        %v2168 = vld [vmem:[%s1749 + $0x102] sm:$0xff]
        %v2169 = vld [vmem:[%s1749 + $0x112] sm:$0xff]
        %v2170 = vpack.c.bf16 %v2155, %v2154
        %v2171 = vpack.c.bf16 %v2157, %v2156
        %v2172 = vpack.c.bf16 %v2159, %v2158
        %v2173 = vpack.c.bf16 %v2161, %v2160
        %v2174 = vpack.c.bf16 %v2163, %v2162
        %v2175 = vpack.c.bf16 %v2165, %v2164
        %v2176 = vpack.c.bf16 %v2167, %v2166
        %v2177 = vpack.c.bf16 %v2169, %v2168
        %s2178 = scalar_lea.vmem %s1, 512
        %v2179 = vld [vmem:[%s2178] sm:$0xf]
        %v2180 = vld [vmem:[%s2178 + $0x4] sm:$0xf]
        %v2181 = vld [vmem:[%s2178 + $0x8] sm:$0xf]
        %v2182 = vld [vmem:[%s2178 + $0xc] sm:$0xf]
        %v2183 = vld [vmem:[%s2178 + $0x10] sm:$0xf]
        %v2184 = vld [vmem:[%s2178 + $0x14] sm:$0xf]
        %v2185 = vld [vmem:[%s2178 + $0x18] sm:$0xf]
        %v2186 = vld [vmem:[%s2178 + $0x1c] sm:$0xf]
        %v2187 = vld [vmem:[%s2178 + $0x20] sm:$0xf]
        %v2188 = vld [vmem:[%s2178 + $0x24] sm:$0xf]
        %v2189 = vld [vmem:[%s2178 + $0x28] sm:$0xf]
        %v2190 = vld [vmem:[%s2178 + $0x2c] sm:$0xf]
        %v2191 = vld [vmem:[%s2178 + $0x30] sm:$0xf]
        %v2192 = vld [vmem:[%s2178 + $0x34] sm:$0xf]
        %v2193 = vld [vmem:[%s2178 + $0x38] sm:$0xf]
        %v2194 = vld [vmem:[%s2178 + $0x3c] sm:$0xf]
        %v2211 = vunpack.c.l.b16 %v2179
        %v2212 = vunpack.c.l.b16 %v2180
        %v2213 = vunpack.c.l.b16 %v2181
        %v2214 = vunpack.c.l.b16 %v2182
        %v2215 = vunpack.c.l.b16 %v2183
        %v2216 = vunpack.c.l.b16 %v2184
        %v2217 = vunpack.c.l.b16 %v2185
        %v2218 = vunpack.c.l.b16 %v2186
        %v2219 = vunpack.c.l.b16 %v2187
        %v2220 = vunpack.c.l.b16 %v2188
        %v2221 = vunpack.c.l.b16 %v2189
        %v2222 = vunpack.c.l.b16 %v2190
        %v2223 = vunpack.c.l.b16 %v2191
        %v2224 = vunpack.c.l.b16 %v2192
        %v2225 = vunpack.c.l.b16 %v2193
        %v2226 = vunpack.c.l.b16 %v2194
        %v2227 = vpack.c.b16 %v2212, %v2211
        %v2228 = vpack.c.b16 %v2214, %v2213
        %v2229 = vpack.c.b16 %v2216, %v2215
        %v2230 = vpack.c.b16 %v2218, %v2217
        %v2231 = vpack.c.b16 %v2220, %v2219
        %v2232 = vpack.c.b16 %v2222, %v2221
        %v2233 = vpack.c.b16 %v2224, %v2223
        %v2234 = vpack.c.b16 %v2226, %v2225
        %2243 = vmatprep.subr.bf16.mxu0 0
        %2244 = vmatpush1.bf16.msra.mxu0 %v2227
        %2245 = vmatprep.subr.bf16.mxu0 0
        %2246 = vmatpush1.bf16.msra.mxu0 %v2228
        %2247 = vmatprep.subr.bf16.mxu0 0
        %2248 = vmatpush1.bf16.msra.mxu0 %v2229
        %2249 = vmatprep.subr.bf16.mxu0 0
        %2250 = vmatpush1.bf16.msra.mxu0 %v2230
        %2251 = vmatprep.subr.bf16.mxu0 0
        %2252 = vmatpush1.bf16.msra.mxu0 %v2231
        %2253 = vmatprep.subr.bf16.mxu0 0
        %2254 = vmatpush1.bf16.msra.mxu0 %v2232
        %2255 = vmatprep.subr.bf16.mxu0 0
        %2256 = vmatpush1.bf16.msra.mxu0 %v2233
        %2257 = vmatprep.subr.bf16.mxu0 0
        %2258 = vmatpush1.bf16.msra.mxu0 %v2234
        %2259 = vmatprep.subr.bf16.mxu0 0
        %2260 = vmatpush1.bf16.msra.mxu0 0
        %2261 = vmatprep.subr.bf16.mxu0 0
        %2262 = vmatpush1.bf16.msra.mxu0 0
        %2263 = vmatprep.subr.bf16.mxu0 0
        %2264 = vmatpush1.bf16.msra.mxu0 0
        %2265 = vmatprep.subr.bf16.mxu0 0
        %2266 = vmatpush1.bf16.msra.mxu0 0
        %2267 = vmatprep.subr.bf16.mxu0 0
        %2268 = vmatpush1.bf16.msra.mxu0 0
        %2269 = vmatprep.subr.bf16.mxu0 0
        %2270 = vmatpush1.bf16.msra.mxu0 0
        %2271 = vmatprep.subr.bf16.mxu0 0
        %2272 = vmatpush1.bf16.msra.mxu0 0
        %2273 = vmatprep.subr.bf16.mxu0 0
        %2274 = vmatpush1.bf16.msra.mxu0 0
        %2275 = vmatprep.mubr.bf16.mxu0 0
        %2276 = vmatmul.mubr.bf16.gmra.mrb[0].mxu0 %v2170
        %v2277 = vpop.f32.mrb[0].mxu0
        %v2278 = vadd.f32 0.0, %v2277
        %v2279 = vpop.f32.mrb[0].mxu0
        %v2280 = vpop.f32.mrb[0].mxu0
        %v2281 = vadd.f32 0.0, %v2280
        %v2282 = vpop.f32.mrb[0].mxu0
        %2283 = vmatprep.mubr.bf16.mxu0 0
        %2284 = vmatmul.mubr.bf16.gmra.mrb[0].mxu0 %v2171
        %v2285 = vpop.f32.mrb[0].mxu0
        %v2286 = vadd.f32 0.0, %v2285
        %v2287 = vpop.f32.mrb[0].mxu0
        %v2288 = vpop.f32.mrb[0].mxu0
        %v2289 = vadd.f32 0.0, %v2288
        %v2290 = vpop.f32.mrb[0].mxu0
        %2291 = vmatprep.mubr.bf16.mxu0 0
        %2292 = vmatmul.mubr.bf16.gmra.mrb[0].mxu0 %v2172
        %v2293 = vpop.f32.mrb[0].mxu0
        %v2294 = vadd.f32 0.0, %v2293
        %v2295 = vpop.f32.mrb[0].mxu0
        %v2296 = vpop.f32.mrb[0].mxu0
        %v2297 = vadd.f32 0.0, %v2296
        %v2298 = vpop.f32.mrb[0].mxu0
        %2299 = vmatprep.mubr.bf16.mxu0 0
        %2300 = vmatmul.mubr.bf16.gmra.mrb[0].mxu0 %v2173
        %v2301 = vpop.f32.mrb[0].mxu0
        %v2302 = vadd.f32 0.0, %v2301
        %v2303 = vpop.f32.mrb[0].mxu0
        %v2304 = vpop.f32.mrb[0].mxu0
        %v2305 = vadd.f32 0.0, %v2304
        %v2306 = vpop.f32.mrb[0].mxu0
        %2307 = vmatprep.mubr.bf16.mxu0 0
        %2308 = vmatmul.mubr.bf16.gmra.mrb[0].mxu0 %v2174
        %v2309 = vpop.f32.mrb[0].mxu0
        %v2310 = vadd.f32 0.0, %v2309
        %v2311 = vpop.f32.mrb[0].mxu0
        %v2312 = vpop.f32.mrb[0].mxu0
        %v2313 = vadd.f32 0.0, %v2312
        %v2314 = vpop.f32.mrb[0].mxu0
        %2315 = vmatprep.mubr.bf16.mxu0 0
        %2316 = vmatmul.mubr.bf16.gmra.mrb[0].mxu0 %v2175
        %v2317 = vpop.f32.mrb[0].mxu0
        %v2318 = vadd.f32 0.0, %v2317
        %v2319 = vpop.f32.mrb[0].mxu0
        %v2320 = vpop.f32.mrb[0].mxu0
        %v2321 = vadd.f32 0.0, %v2320
        %v2322 = vpop.f32.mrb[0].mxu0
        %2323 = vmatprep.mubr.bf16.mxu0 0
        %2324 = vmatmul.mubr.bf16.gmra.mrb[0].mxu0 %v2176
        %v2325 = vpop.f32.mrb[0].mxu0
        %v2326 = vadd.f32 0.0, %v2325
        %v2327 = vpop.f32.mrb[0].mxu0
        %v2328 = vpop.f32.mrb[0].mxu0
        %v2329 = vadd.f32 0.0, %v2328
        %v2330 = vpop.f32.mrb[0].mxu0
        %2331 = vmatprep.mubr.bf16.mxu0 0
        %2332 = vmatmul.mubr.bf16.gmra.mrb[0].mxu0 %v2177
        %v2333 = vpop.f32.mrb[0].mxu0
        %v2334 = vadd.f32 0.0, %v2333
        %v2335 = vpop.f32.mrb[0].mxu0
        %v2336 = vpop.f32.mrb[0].mxu0
        %v2337 = vadd.f32 0.0, %v2336
        %v2338 = vpop.f32.mrb[0].mxu0
        %2339 = vdwg.mxu0
        %v2340 = vadd.f32 %v2138, %v2278
        %v2341 = vadd.f32 %v2139, %v2281
        %v2342 = vadd.f32 %v2140, %v2286
        %v2343 = vadd.f32 %v2141, %v2289
        %v2344 = vadd.f32 %v2142, %v2294
        %v2345 = vadd.f32 %v2143, %v2297
        %v2346 = vadd.f32 %v2144, %v2302
        %v2347 = vadd.f32 %v2145, %v2305
        %v2348 = vadd.f32 %v2146, %v2310
        %v2349 = vadd.f32 %v2147, %v2313
        %v2350 = vadd.f32 %v2148, %v2318
        %v2351 = vadd.f32 %v2149, %v2321
        %v2352 = vadd.f32 %v2150, %v2326
        %v2353 = vadd.f32 %v2151, %v2329
        %v2354 = vadd.f32 %v2152, %v2334
        %v2355 = vadd.f32 %v2153, %v2337
        %v2356 = vld [vmem:[%s2] sm:$0x1]
        %v2358 = vlaneseq
        %v2359 = vshrl.u32 %v2358, 7
        %v2360 = vsub.s32 0, %v2359
        %v2361 = vrot.slane %v2356, %v2360
        %v2363 = vadd.f32 %v2340, %v2361
        %v2364 = vadd.f32 %v2341, %v2361
        %v2365 = vadd.f32 %v2342, %v2361
        %v2366 = vadd.f32 %v2343, %v2361
        %v2367 = vadd.f32 %v2344, %v2361
        %v2368 = vadd.f32 %v2345, %v2361
        %v2369 = vadd.f32 %v2346, %v2361
        %v2370 = vadd.f32 %v2347, %v2361
        %v2371 = vadd.f32 %v2348, %v2361
        %v2372 = vadd.f32 %v2349, %v2361
        %v2373 = vadd.f32 %v2350, %v2361
        %v2374 = vadd.f32 %v2351, %v2361
        %v2375 = vadd.f32 %v2352, %v2361
        %v2376 = vadd.f32 %v2353, %v2361
        %v2377 = vadd.f32 %v2354, %v2361
        %v2378 = vadd.f32 %v2355, %v2361
        %v2379 = vmul.f32 %v2363, 0.1
        %v2380 = vmul.f32 %v2364, 0.1
        %v2381 = vmul.f32 %v2365, 0.1
        %v2382 = vmul.f32 %v2366, 0.1
        %v2383 = vmul.f32 %v2367, 0.1
        %v2384 = vmul.f32 %v2368, 0.1
        %v2385 = vmul.f32 %v2369, 0.1
        %v2386 = vmul.f32 %v2370, 0.1
        %v2387 = vmul.f32 %v2371, 0.1
        %v2388 = vmul.f32 %v2372, 0.1
        %v2389 = vmul.f32 %v2373, 0.1
        %v2390 = vmul.f32 %v2374, 0.1
        %v2391 = vmul.f32 %v2375, 0.1
        %v2392 = vmul.f32 %v2376, 0.1
        %v2393 = vmul.f32 %v2377, 0.1
        %v2394 = vmul.f32 %v2378, 0.1
        %v2395 = vmax.f32 %v2363, %v2379
        %v2396 = vmax.f32 %v2364, %v2380
        %v2397 = vmax.f32 %v2365, %v2381
        %v2398 = vmax.f32 %v2366, %v2382
        %v2399 = vmax.f32 %v2367, %v2383
        %v2400 = vmax.f32 %v2368, %v2384
        %v2401 = vmax.f32 %v2369, %v2385
        %v2402 = vmax.f32 %v2370, %v2386
        %v2403 = vmax.f32 %v2371, %v2387
        %v2404 = vmax.f32 %v2372, %v2388
        %v2405 = vmax.f32 %v2373, %v2389
        %v2406 = vmax.f32 %v2374, %v2390
        %v2407 = vmax.f32 %v2375, %v2391
        %v2408 = vmax.f32 %v2376, %v2392
        %v2409 = vmax.f32 %v2377, %v2393
        %v2410 = vmax.f32 %v2378, %v2394
        %v2411 = vld [vmem:[%s3] sm:$0x1]
        %v2413 = vlaneseq
        %v2414 = vshrl.u32 %v2413, 7
        %v2415 = vsub.s32 0, %v2414
        %v2416 = vrot.slane %v2411, %v2415
        %v2418 = vmul.f32 %v2395, %v2416
        %v2419 = vmul.f32 %v2396, %v2416
        %v2420 = vmul.f32 %v2397, %v2416
        %v2421 = vmul.f32 %v2398, %v2416
        %v2422 = vmul.f32 %v2399, %v2416
        %v2423 = vmul.f32 %v2400, %v2416
        %v2424 = vmul.f32 %v2401, %v2416
        %v2425 = vmul.f32 %v2402, %v2416
        %v2426 = vmul.f32 %v2403, %v2416
        %v2427 = vmul.f32 %v2404, %v2416
        %v2428 = vmul.f32 %v2405, %v2416
        %v2429 = vmul.f32 %v2406, %v2416
        %v2430 = vmul.f32 %v2407, %v2416
        %v2431 = vmul.f32 %v2408, %v2416
        %v2432 = vmul.f32 %v2409, %v2416
        %v2433 = vmul.f32 %v2410, %v2416
        %v2434 = vld [vmem:[%s4] sm:$0x1]
        %v2436 = vlaneseq
        %v2437 = vshrl.u32 %v2436, 7
        %v2438 = vsub.s32 0, %v2437
        %v2439 = vrot.slane %v2434, %v2438
        %v2441 = vadd.f32 %v2418, %v2439
        %v2442 = vadd.f32 %v2419, %v2439
        %v2443 = vadd.f32 %v2420, %v2439
        %v2444 = vadd.f32 %v2421, %v2439
        %v2445 = vadd.f32 %v2422, %v2439
        %v2446 = vadd.f32 %v2423, %v2439
        %v2447 = vadd.f32 %v2424, %v2439
        %v2448 = vadd.f32 %v2425, %v2439
        %v2449 = vadd.f32 %v2426, %v2439
        %v2450 = vadd.f32 %v2427, %v2439
        %v2451 = vadd.f32 %v2428, %v2439
        %v2452 = vadd.f32 %v2429, %v2439
        %v2453 = vadd.f32 %v2430, %v2439
        %v2454 = vadd.f32 %v2431, %v2439
        %v2455 = vadd.f32 %v2432, %v2439
        %v2456 = vadd.f32 %v2433, %v2439
        %2457 = vst [vmem:[%s438 + $0x1] sm:$0xff] %v2441
        %2458 = vst [vmem:[%s438 + $0x11] sm:$0xff] %v2442
        %2459 = vst [vmem:[%s438 + $0x21] sm:$0xff] %v2443
        %2460 = vst [vmem:[%s438 + $0x31] sm:$0xff] %v2444
        %2461 = vst [vmem:[%s438 + $0x41] sm:$0xff] %v2445
        %2462 = vst [vmem:[%s438 + $0x51] sm:$0xff] %v2446
        %2463 = vst [vmem:[%s438 + $0x61] sm:$0xff] %v2447
        %2464 = vst [vmem:[%s438 + $0x71] sm:$0xff] %v2448
        %2465 = vst [vmem:[%s438 + $0xa1] sm:$0xff] %v2449
        %2466 = vst [vmem:[%s438 + $0xb1] sm:$0xff] %v2450
        %2467 = vst [vmem:[%s438 + $0xc1] sm:$0xff] %v2451
        %2468 = vst [vmem:[%s438 + $0xd1] sm:$0xff] %v2452
        %2469 = vst [vmem:[%s438 + $0xe1] sm:$0xff] %v2453
        %2470 = vst [vmem:[%s438 + $0xf1] sm:$0xff] %v2454
        %2471 = vst [vmem:[%s438 + $0x101] sm:$0xff] %v2455
        %2472 = vst [vmem:[%s438 + $0x111] sm:$0xff] %v2456
        %s2473 = scalar_lea.vmem [#allocation2], 320
        %v2474 = vld [vmem:[%s2473] sm:$0xff]
        %v2475 = vld [vmem:[%s2473 + $0x10] sm:$0xff]
        %v2476 = vld [vmem:[%s2473 + $0x20] sm:$0xff]
        %v2477 = vld [vmem:[%s2473 + $0x30] sm:$0xff]
        %v2478 = vld [vmem:[%s2473 + $0x40] sm:$0xff]
        %v2479 = vld [vmem:[%s2473 + $0x50] sm:$0xff]
        %v2480 = vld [vmem:[%s2473 + $0x60] sm:$0xff]
        %v2481 = vld [vmem:[%s2473 + $0x70] sm:$0xff]
        %v2482 = vld [vmem:[%s2473 + $0xa0] sm:$0xff]
        %v2483 = vld [vmem:[%s2473 + $0xb0] sm:$0xff]
        %v2484 = vld [vmem:[%s2473 + $0xc0] sm:$0xff]
        %v2485 = vld [vmem:[%s2473 + $0xd0] sm:$0xff]
        %v2486 = vld [vmem:[%s2473 + $0xe0] sm:$0xff]
        %v2487 = vld [vmem:[%s2473 + $0xf0] sm:$0xff]
        %v2488 = vld [vmem:[%s2473 + $0x100] sm:$0xff]
        %v2489 = vld [vmem:[%s2473 + $0x110] sm:$0xff]
        %v2490 = vpack.c.bf16 %v2475, %v2474
        %v2491 = vpack.c.bf16 %v2477, %v2476
        %v2492 = vpack.c.bf16 %v2479, %v2478
        %v2493 = vpack.c.bf16 %v2481, %v2480
        %v2494 = vpack.c.bf16 %v2483, %v2482
        %v2495 = vpack.c.bf16 %v2485, %v2484
        %v2496 = vpack.c.bf16 %v2487, %v2486
        %v2497 = vpack.c.bf16 %v2489, %v2488
        %v2498 = vld [vmem:[%s1] sm:$0xf]
        %v2499 = vld [vmem:[%s1 + $0x4] sm:$0xf]
        %v2500 = vld [vmem:[%s1 + $0x8] sm:$0xf]
        %v2501 = vld [vmem:[%s1 + $0xc] sm:$0xf]
        %v2502 = vld [vmem:[%s1 + $0x10] sm:$0xf]
        %v2503 = vld [vmem:[%s1 + $0x14] sm:$0xf]
        %v2504 = vld [vmem:[%s1 + $0x18] sm:$0xf]
        %v2505 = vld [vmem:[%s1 + $0x1c] sm:$0xf]
        %v2506 = vld [vmem:[%s1 + $0x20] sm:$0xf]
        %v2507 = vld [vmem:[%s1 + $0x24] sm:$0xf]
        %v2508 = vld [vmem:[%s1 + $0x28] sm:$0xf]
        %v2509 = vld [vmem:[%s1 + $0x2c] sm:$0xf]
        %v2510 = vld [vmem:[%s1 + $0x30] sm:$0xf]
        %v2511 = vld [vmem:[%s1 + $0x34] sm:$0xf]
        %v2512 = vld [vmem:[%s1 + $0x38] sm:$0xf]
        %v2513 = vld [vmem:[%s1 + $0x3c] sm:$0xf]
        %v2514 = vld [vmem:[%s2473 + $0x1] sm:$0xff]
        %v2515 = vld [vmem:[%s2473 + $0x11] sm:$0xff]
        %v2516 = vld [vmem:[%s2473 + $0x21] sm:$0xff]
        %v2517 = vld [vmem:[%s2473 + $0x31] sm:$0xff]
        %v2518 = vld [vmem:[%s2473 + $0x41] sm:$0xff]
        %v2519 = vld [vmem:[%s2473 + $0x51] sm:$0xff]
        %v2520 = vld [vmem:[%s2473 + $0x61] sm:$0xff]
        %v2521 = vld [vmem:[%s2473 + $0x71] sm:$0xff]
        %v2522 = vld [vmem:[%s2473 + $0xa1] sm:$0xff]
        %v2523 = vld [vmem:[%s2473 + $0xb1] sm:$0xff]
        %v2524 = vld [vmem:[%s2473 + $0xc1] sm:$0xff]
        %v2525 = vld [vmem:[%s2473 + $0xd1] sm:$0xff]
        %v2526 = vld [vmem:[%s2473 + $0xe1] sm:$0xff]
        %v2527 = vld [vmem:[%s2473 + $0xf1] sm:$0xff]
        %v2528 = vld [vmem:[%s2473 + $0x101] sm:$0xff]
        %v2529 = vld [vmem:[%s2473 + $0x111] sm:$0xff]
        %v2530 = vpack.c.bf16 %v2515, %v2514
        %v2531 = vpack.c.bf16 %v2517, %v2516
        %v2532 = vpack.c.bf16 %v2519, %v2518
        %v2533 = vpack.c.bf16 %v2521, %v2520
        %v2534 = vpack.c.bf16 %v2523, %v2522
        %v2535 = vpack.c.bf16 %v2525, %v2524
        %v2536 = vpack.c.bf16 %v2527, %v2526
        %v2537 = vpack.c.bf16 %v2529, %v2528
        %v2538 = vld [vmem:[%s634] sm:$0xf]
        %v2539 = vld [vmem:[%s634 + $0x4] sm:$0xf]
        %v2540 = vld [vmem:[%s634 + $0x8] sm:$0xf]
        %v2541 = vld [vmem:[%s634 + $0xc] sm:$0xf]
        %v2542 = vld [vmem:[%s634 + $0x10] sm:$0xf]
        %v2543 = vld [vmem:[%s634 + $0x14] sm:$0xf]
        %v2544 = vld [vmem:[%s634 + $0x18] sm:$0xf]
        %v2545 = vld [vmem:[%s634 + $0x1c] sm:$0xf]
        %v2546 = vld [vmem:[%s634 + $0x20] sm:$0xf]
        %v2547 = vld [vmem:[%s634 + $0x24] sm:$0xf]
        %v2548 = vld [vmem:[%s634 + $0x28] sm:$0xf]
        %v2549 = vld [vmem:[%s634 + $0x2c] sm:$0xf]
        %v2550 = vld [vmem:[%s634 + $0x30] sm:$0xf]
        %v2551 = vld [vmem:[%s634 + $0x34] sm:$0xf]
        %v2552 = vld [vmem:[%s634 + $0x38] sm:$0xf]
        %v2553 = vld [vmem:[%s634 + $0x3c] sm:$0xf]
        %v2570 = vunpack.c.l.b16 %v2538
        %v2571 = vunpack.c.l.b16 %v2539
        %v2572 = vunpack.c.l.b16 %v2540
        %v2573 = vunpack.c.l.b16 %v2541
        %v2574 = vunpack.c.l.b16 %v2542
        %v2575 = vunpack.c.l.b16 %v2543
        %v2576 = vunpack.c.l.b16 %v2544
        %v2577 = vunpack.c.l.b16 %v2545
        %v2578 = vunpack.c.l.b16 %v2546
        %v2579 = vunpack.c.l.b16 %v2547
        %v2580 = vunpack.c.l.b16 %v2548
        %v2581 = vunpack.c.l.b16 %v2549
        %v2582 = vunpack.c.l.b16 %v2550
        %v2583 = vunpack.c.l.b16 %v2551
        %v2584 = vunpack.c.l.b16 %v2552
        %v2585 = vunpack.c.l.b16 %v2553
        %v2586 = vpack.c.b16 %v2571, %v2570
        %v2587 = vpack.c.b16 %v2573, %v2572
        %v2588 = vpack.c.b16 %v2575, %v2574
        %v2589 = vpack.c.b16 %v2577, %v2576
        %v2590 = vpack.c.b16 %v2579, %v2578
        %v2591 = vpack.c.b16 %v2581, %v2580
        %v2592 = vpack.c.b16 %v2583, %v2582
        %v2593 = vpack.c.b16 %v2585, %v2584
        %2602 = vmatprep.subr.bf16.mxu0 0
        %2603 = vmatpush1.bf16.msra.mxu0 %v2586
        %2604 = vmatprep.subr.bf16.mxu0 0
        %2605 = vmatpush1.bf16.msra.mxu0 %v2587
        %2606 = vmatprep.subr.bf16.mxu0 0
        %2607 = vmatpush1.bf16.msra.mxu0 %v2588
        %2608 = vmatprep.subr.bf16.mxu0 0
        %2609 = vmatpush1.bf16.msra.mxu0 %v2589
        %2610 = vmatprep.subr.bf16.mxu0 0
        %2611 = vmatpush1.bf16.msra.mxu0 %v2590
        %2612 = vmatprep.subr.bf16.mxu0 0
        %2613 = vmatpush1.bf16.msra.mxu0 %v2591
        %2614 = vmatprep.subr.bf16.mxu0 0
        %2615 = vmatpush1.bf16.msra.mxu0 %v2592
        %2616 = vmatprep.subr.bf16.mxu0 0
        %2617 = vmatpush1.bf16.msra.mxu0 %v2593
        %2618 = vmatprep.subr.bf16.mxu0 0
        %2619 = vmatpush1.bf16.msra.mxu0 0
        %2620 = vmatprep.subr.bf16.mxu0 0
        %2621 = vmatpush1.bf16.msra.mxu0 0
        %2622 = vmatprep.subr.bf16.mxu0 0
        %2623 = vmatpush1.bf16.msra.mxu0 0
        %2624 = vmatprep.subr.bf16.mxu0 0
        %2625 = vmatpush1.bf16.msra.mxu0 0
        %2626 = vmatprep.subr.bf16.mxu0 0
        %2627 = vmatpush1.bf16.msra.mxu0 0
        %2628 = vmatprep.subr.bf16.mxu0 0
        %2629 = vmatpush1.bf16.msra.mxu0 0
        %2630 = vmatprep.subr.bf16.mxu0 0
        %2631 = vmatpush1.bf16.msra.mxu0 0
        %2632 = vmatprep.subr.bf16.mxu0 0
        %2633 = vmatpush1.bf16.msra.mxu0 0
        %2634 = vmatprep.mubr.bf16.mxu0 0
        %2635 = vmatmul.mubr.bf16.gmra.mrb[0].mxu0 %v2530
        %v2636 = vpop.f32.mrb[0].mxu0
        %v2637 = vadd.f32 0.0, %v2636
        %v2638 = vpop.f32.mrb[0].mxu0
        %v2639 = vpop.f32.mrb[0].mxu0
        %v2640 = vadd.f32 0.0, %v2639
        %v2641 = vpop.f32.mrb[0].mxu0
        %2642 = vmatprep.mubr.bf16.mxu0 0
        %2643 = vmatmul.mubr.bf16.gmra.mrb[0].mxu0 %v2531
        %v2644 = vpop.f32.mrb[0].mxu0
        %v2645 = vadd.f32 0.0, %v2644
        %v2646 = vpop.f32.mrb[0].mxu0
        %v2647 = vpop.f32.mrb[0].mxu0
        %v2648 = vadd.f32 0.0, %v2647
        %v2649 = vpop.f32.mrb[0].mxu0
        %2650 = vmatprep.mubr.bf16.mxu0 0
        %2651 = vmatmul.mubr.bf16.gmra.mrb[0].mxu0 %v2532
        %v2652 = vpop.f32.mrb[0].mxu0
        %v2653 = vadd.f32 0.0, %v2652
        %v2654 = vpop.f32.mrb[0].mxu0
        %v2655 = vpop.f32.mrb[0].mxu0
        %v2656 = vadd.f32 0.0, %v2655
        %v2657 = vpop.f32.mrb[0].mxu0
        %2658 = vmatprep.mubr.bf16.mxu0 0
        %2659 = vmatmul.mubr.bf16.gmra.mrb[0].mxu0 %v2533
        %v2660 = vpop.f32.mrb[0].mxu0
        %v2661 = vadd.f32 0.0, %v2660
        %v2662 = vpop.f32.mrb[0].mxu0
        %v2663 = vpop.f32.mrb[0].mxu0
        %v2664 = vadd.f32 0.0, %v2663
        %v2665 = vpop.f32.mrb[0].mxu0
        %2666 = vmatprep.mubr.bf16.mxu0 0
        %2667 = vmatmul.mubr.bf16.gmra.mrb[0].mxu0 %v2534
        %v2668 = vpop.f32.mrb[0].mxu0
        %v2669 = vadd.f32 0.0, %v2668
        %v2670 = vpop.f32.mrb[0].mxu0
        %v2671 = vpop.f32.mrb[0].mxu0
        %v2672 = vadd.f32 0.0, %v2671
        %v2673 = vpop.f32.mrb[0].mxu0
        %2674 = vmatprep.mubr.bf16.mxu0 0
        %2675 = vmatmul.mubr.bf16.gmra.mrb[0].mxu0 %v2535
        %v2676 = vpop.f32.mrb[0].mxu0
        %v2677 = vadd.f32 0.0, %v2676
        %v2678 = vpop.f32.mrb[0].mxu0
        %v2679 = vpop.f32.mrb[0].mxu0
        %v2680 = vadd.f32 0.0, %v2679
        %v2681 = vpop.f32.mrb[0].mxu0
        %2682 = vmatprep.mubr.bf16.mxu0 0
        %2683 = vmatmul.mubr.bf16.gmra.mrb[0].mxu0 %v2536
        %v2684 = vpop.f32.mrb[0].mxu0
        %v2685 = vadd.f32 0.0, %v2684
        %v2686 = vpop.f32.mrb[0].mxu0
        %v2687 = vpop.f32.mrb[0].mxu0
        %v2688 = vadd.f32 0.0, %v2687
        %v2689 = vpop.f32.mrb[0].mxu0
        %2690 = vmatprep.mubr.bf16.mxu0 0
        %2691 = vmatmul.mubr.bf16.gmra.mrb[0].mxu0 %v2537
        %v2692 = vpop.f32.mrb[0].mxu0
        %v2693 = vadd.f32 0.0, %v2692
        %v2694 = vpop.f32.mrb[0].mxu0
        %v2695 = vpop.f32.mrb[0].mxu0
        %v2696 = vadd.f32 0.0, %v2695
        %v2697 = vpop.f32.mrb[0].mxu0
        %2698 = vdwg.mxu0
        %v2715 = vunpack.c.l.b16 %v2498
        %v2716 = vunpack.c.l.b16 %v2499
        %v2717 = vunpack.c.l.b16 %v2500
        %v2718 = vunpack.c.l.b16 %v2501
        %v2719 = vunpack.c.l.b16 %v2502
        %v2720 = vunpack.c.l.b16 %v2503
        %v2721 = vunpack.c.l.b16 %v2504
        %v2722 = vunpack.c.l.b16 %v2505
        %v2723 = vunpack.c.l.b16 %v2506
        %v2724 = vunpack.c.l.b16 %v2507
        %v2725 = vunpack.c.l.b16 %v2508
        %v2726 = vunpack.c.l.b16 %v2509
        %v2727 = vunpack.c.l.b16 %v2510
        %v2728 = vunpack.c.l.b16 %v2511
        %v2729 = vunpack.c.l.b16 %v2512
        %v2730 = vunpack.c.l.b16 %v2513
        %v2731 = vpack.c.b16 %v2716, %v2715
        %v2732 = vpack.c.b16 %v2718, %v2717
        %v2733 = vpack.c.b16 %v2720, %v2719
        %v2734 = vpack.c.b16 %v2722, %v2721
        %v2735 = vpack.c.b16 %v2724, %v2723
        %v2736 = vpack.c.b16 %v2726, %v2725
        %v2737 = vpack.c.b16 %v2728, %v2727
        %v2738 = vpack.c.b16 %v2730, %v2729
        %2747 = vmatprep.subr.bf16.mxu0 0
        %2748 = vmatpush1.bf16.msra.mxu0 %v2731
        %2749 = vmatprep.subr.bf16.mxu0 0
        %2750 = vmatpush1.bf16.msra.mxu0 %v2732
        %2751 = vmatprep.subr.bf16.mxu0 0
        %2752 = vmatpush1.bf16.msra.mxu0 %v2733
        %2753 = vmatprep.subr.bf16.mxu0 0
        %2754 = vmatpush1.bf16.msra.mxu0 %v2734
        %2755 = vmatprep.subr.bf16.mxu0 0
        %2756 = vmatpush1.bf16.msra.mxu0 %v2735
        %2757 = vmatprep.subr.bf16.mxu0 0
        %2758 = vmatpush1.bf16.msra.mxu0 %v2736
        %2759 = vmatprep.subr.bf16.mxu0 0
        %2760 = vmatpush1.bf16.msra.mxu0 %v2737
        %2761 = vmatprep.subr.bf16.mxu0 0
        %2762 = vmatpush1.bf16.msra.mxu0 %v2738
        %2763 = vmatprep.subr.bf16.mxu0 0
        %2764 = vmatpush1.bf16.msra.mxu0 0
        %2765 = vmatprep.subr.bf16.mxu0 0
        %2766 = vmatpush1.bf16.msra.mxu0 0
        %2767 = vmatprep.subr.bf16.mxu0 0
        %2768 = vmatpush1.bf16.msra.mxu0 0
        %2769 = vmatprep.subr.bf16.mxu0 0
        %2770 = vmatpush1.bf16.msra.mxu0 0
        %2771 = vmatprep.subr.bf16.mxu0 0
        %2772 = vmatpush1.bf16.msra.mxu0 0
        %2773 = vmatprep.subr.bf16.mxu0 0
        %2774 = vmatpush1.bf16.msra.mxu0 0
        %2775 = vmatprep.subr.bf16.mxu0 0
        %2776 = vmatpush1.bf16.msra.mxu0 0
        %2777 = vmatprep.subr.bf16.mxu0 0
        %2778 = vmatpush1.bf16.msra.mxu0 0
        %2779 = vmatprep.mubr.bf16.mxu0 0
        %2780 = vmatmul.mubr.bf16.gmra.mrb[0].mxu0 %v2490
        %v2781 = vpop.f32.mrb[0].mxu0
        %v2782 = vadd.f32 %v2637, %v2781
        %v2783 = vpop.f32.mrb[0].mxu0
        %v2784 = vpop.f32.mrb[0].mxu0
        %v2785 = vadd.f32 %v2640, %v2784
        %v2786 = vpop.f32.mrb[0].mxu0
        %2787 = vmatprep.mubr.bf16.mxu0 0
        %2788 = vmatmul.mubr.bf16.gmra.mrb[0].mxu0 %v2491
        %v2789 = vpop.f32.mrb[0].mxu0
        %v2790 = vadd.f32 %v2645, %v2789
        %v2791 = vpop.f32.mrb[0].mxu0
        %v2792 = vpop.f32.mrb[0].mxu0
        %v2793 = vadd.f32 %v2648, %v2792
        %v2794 = vpop.f32.mrb[0].mxu0
        %2795 = vmatprep.mubr.bf16.mxu0 0
        %2796 = vmatmul.mubr.bf16.gmra.mrb[0].mxu0 %v2492
        %v2797 = vpop.f32.mrb[0].mxu0
        %v2798 = vadd.f32 %v2653, %v2797
        %v2799 = vpop.f32.mrb[0].mxu0
        %v2800 = vpop.f32.mrb[0].mxu0
        %v2801 = vadd.f32 %v2656, %v2800
        %v2802 = vpop.f32.mrb[0].mxu0
        %2803 = vmatprep.mubr.bf16.mxu0 0
        %2804 = vmatmul.mubr.bf16.gmra.mrb[0].mxu0 %v2493
        %v2805 = vpop.f32.mrb[0].mxu0
        %v2806 = vadd.f32 %v2661, %v2805
        %v2807 = vpop.f32.mrb[0].mxu0
        %v2808 = vpop.f32.mrb[0].mxu0
        %v2809 = vadd.f32 %v2664, %v2808
        %v2810 = vpop.f32.mrb[0].mxu0
        %2811 = vmatprep.mubr.bf16.mxu0 0
        %2812 = vmatmul.mubr.bf16.gmra.mrb[0].mxu0 %v2494
        %v2813 = vpop.f32.mrb[0].mxu0
        %v2814 = vadd.f32 %v2669, %v2813
        %v2815 = vpop.f32.mrb[0].mxu0
        %v2816 = vpop.f32.mrb[0].mxu0
        %v2817 = vadd.f32 %v2672, %v2816
        %v2818 = vpop.f32.mrb[0].mxu0
        %2819 = vmatprep.mubr.bf16.mxu0 0
        %2820 = vmatmul.mubr.bf16.gmra.mrb[0].mxu0 %v2495
        %v2821 = vpop.f32.mrb[0].mxu0
        %v2822 = vadd.f32 %v2677, %v2821
        %v2823 = vpop.f32.mrb[0].mxu0
        %v2824 = vpop.f32.mrb[0].mxu0
        %v2825 = vadd.f32 %v2680, %v2824
        %v2826 = vpop.f32.mrb[0].mxu0
        %2827 = vmatprep.mubr.bf16.mxu0 0
        %2828 = vmatmul.mubr.bf16.gmra.mrb[0].mxu0 %v2496
        %v2829 = vpop.f32.mrb[0].mxu0
        %v2830 = vadd.f32 %v2685, %v2829
        %v2831 = vpop.f32.mrb[0].mxu0
        %v2832 = vpop.f32.mrb[0].mxu0
        %v2833 = vadd.f32 %v2688, %v2832
        %v2834 = vpop.f32.mrb[0].mxu0
        %2835 = vmatprep.mubr.bf16.mxu0 0
        %2836 = vmatmul.mubr.bf16.gmra.mrb[0].mxu0 %v2497
        %v2837 = vpop.f32.mrb[0].mxu0
        %v2838 = vadd.f32 %v2693, %v2837
        %v2839 = vpop.f32.mrb[0].mxu0
        %v2840 = vpop.f32.mrb[0].mxu0
        %v2841 = vadd.f32 %v2696, %v2840
        %v2842 = vpop.f32.mrb[0].mxu0
        %2843 = vdwg.mxu0
        %v2844 = vld [vmem:[%s2473 + $0x2] sm:$0xff]
        %v2845 = vld [vmem:[%s2473 + $0x12] sm:$0xff]
        %v2846 = vld [vmem:[%s2473 + $0x22] sm:$0xff]
        %v2847 = vld [vmem:[%s2473 + $0x32] sm:$0xff]
        %v2848 = vld [vmem:[%s2473 + $0x42] sm:$0xff]
        %v2849 = vld [vmem:[%s2473 + $0x52] sm:$0xff]
        %v2850 = vld [vmem:[%s2473 + $0x62] sm:$0xff]
        %v2851 = vld [vmem:[%s2473 + $0x72] sm:$0xff]
        %v2852 = vld [vmem:[%s2473 + $0xa2] sm:$0xff]
        %v2853 = vld [vmem:[%s2473 + $0xb2] sm:$0xff]
        %v2854 = vld [vmem:[%s2473 + $0xc2] sm:$0xff]
        %v2855 = vld [vmem:[%s2473 + $0xd2] sm:$0xff]
        %v2856 = vld [vmem:[%s2473 + $0xe2] sm:$0xff]
        %v2857 = vld [vmem:[%s2473 + $0xf2] sm:$0xff]
        %v2858 = vld [vmem:[%s2473 + $0x102] sm:$0xff]
        %v2859 = vld [vmem:[%s2473 + $0x112] sm:$0xff]
        %v2860 = vpack.c.bf16 %v2845, %v2844
        %v2861 = vpack.c.bf16 %v2847, %v2846
        %v2862 = vpack.c.bf16 %v2849, %v2848
        %v2863 = vpack.c.bf16 %v2851, %v2850
        %v2864 = vpack.c.bf16 %v2853, %v2852
        %v2865 = vpack.c.bf16 %v2855, %v2854
        %v2866 = vpack.c.bf16 %v2857, %v2856
        %v2867 = vpack.c.bf16 %v2859, %v2858
        %v2868 = vld [vmem:[%s965] sm:$0xf]
        %v2869 = vld [vmem:[%s965 + $0x4] sm:$0xf]
        %v2870 = vld [vmem:[%s965 + $0x8] sm:$0xf]
        %v2871 = vld [vmem:[%s965 + $0xc] sm:$0xf]
        %v2872 = vld [vmem:[%s965 + $0x10] sm:$0xf]
        %v2873 = vld [vmem:[%s965 + $0x14] sm:$0xf]
        %v2874 = vld [vmem:[%s965 + $0x18] sm:$0xf]
        %v2875 = vld [vmem:[%s965 + $0x1c] sm:$0xf]
        %v2876 = vld [vmem:[%s965 + $0x20] sm:$0xf]
        %v2877 = vld [vmem:[%s965 + $0x24] sm:$0xf]
        %v2878 = vld [vmem:[%s965 + $0x28] sm:$0xf]
        %v2879 = vld [vmem:[%s965 + $0x2c] sm:$0xf]
        %v2880 = vld [vmem:[%s965 + $0x30] sm:$0xf]
        %v2881 = vld [vmem:[%s965 + $0x34] sm:$0xf]
        %v2882 = vld [vmem:[%s965 + $0x38] sm:$0xf]
        %v2883 = vld [vmem:[%s965 + $0x3c] sm:$0xf]
        %v2900 = vunpack.c.l.b16 %v2868
        %v2901 = vunpack.c.l.b16 %v2869
        %v2902 = vunpack.c.l.b16 %v2870
        %v2903 = vunpack.c.l.b16 %v2871
        %v2904 = vunpack.c.l.b16 %v2872
        %v2905 = vunpack.c.l.b16 %v2873
        %v2906 = vunpack.c.l.b16 %v2874
        %v2907 = vunpack.c.l.b16 %v2875
        %v2908 = vunpack.c.l.b16 %v2876
        %v2909 = vunpack.c.l.b16 %v2877
        %v2910 = vunpack.c.l.b16 %v2878
        %v2911 = vunpack.c.l.b16 %v2879
        %v2912 = vunpack.c.l.b16 %v2880
        %v2913 = vunpack.c.l.b16 %v2881
        %v2914 = vunpack.c.l.b16 %v2882
        %v2915 = vunpack.c.l.b16 %v2883
        %v2916 = vpack.c.b16 %v2901, %v2900
        %v2917 = vpack.c.b16 %v2903, %v2902
        %v2918 = vpack.c.b16 %v2905, %v2904
        %v2919 = vpack.c.b16 %v2907, %v2906
        %v2920 = vpack.c.b16 %v2909, %v2908
        %v2921 = vpack.c.b16 %v2911, %v2910
        %v2922 = vpack.c.b16 %v2913, %v2912
        %v2923 = vpack.c.b16 %v2915, %v2914
        %2932 = vmatprep.subr.bf16.mxu0 0
        %2933 = vmatpush1.bf16.msra.mxu0 %v2916
        %2934 = vmatprep.subr.bf16.mxu0 0
        %2935 = vmatpush1.bf16.msra.mxu0 %v2917
        %2936 = vmatprep.subr.bf16.mxu0 0
        %2937 = vmatpush1.bf16.msra.mxu0 %v2918
        %2938 = vmatprep.subr.bf16.mxu0 0
        %2939 = vmatpush1.bf16.msra.mxu0 %v2919
        %2940 = vmatprep.subr.bf16.mxu0 0
        %2941 = vmatpush1.bf16.msra.mxu0 %v2920
        %2942 = vmatprep.subr.bf16.mxu0 0
        %2943 = vmatpush1.bf16.msra.mxu0 %v2921
        %2944 = vmatprep.subr.bf16.mxu0 0
        %2945 = vmatpush1.bf16.msra.mxu0 %v2922
        %2946 = vmatprep.subr.bf16.mxu0 0
        %2947 = vmatpush1.bf16.msra.mxu0 %v2923
        %2948 = vmatprep.subr.bf16.mxu0 0
        %2949 = vmatpush1.bf16.msra.mxu0 0
        %2950 = vmatprep.subr.bf16.mxu0 0
        %2951 = vmatpush1.bf16.msra.mxu0 0
        %2952 = vmatprep.subr.bf16.mxu0 0
        %2953 = vmatpush1.bf16.msra.mxu0 0
        %2954 = vmatprep.subr.bf16.mxu0 0
        %2955 = vmatpush1.bf16.msra.mxu0 0
        %2956 = vmatprep.subr.bf16.mxu0 0
        %2957 = vmatpush1.bf16.msra.mxu0 0
        %2958 = vmatprep.subr.bf16.mxu0 0
        %2959 = vmatpush1.bf16.msra.mxu0 0
        %2960 = vmatprep.subr.bf16.mxu0 0
        %2961 = vmatpush1.bf16.msra.mxu0 0
        %2962 = vmatprep.subr.bf16.mxu0 0
        %2963 = vmatpush1.bf16.msra.mxu0 0
        %2964 = vmatprep.mubr.bf16.mxu0 0
        %2965 = vmatmul.mubr.bf16.gmra.mrb[0].mxu0 %v2860
        %v2966 = vpop.f32.mrb[0].mxu0
        %v2967 = vadd.f32 0.0, %v2966
        %v2968 = vpop.f32.mrb[0].mxu0
        %v2969 = vpop.f32.mrb[0].mxu0
        %v2970 = vadd.f32 0.0, %v2969
        %v2971 = vpop.f32.mrb[0].mxu0
        %2972 = vmatprep.mubr.bf16.mxu0 0
        %2973 = vmatmul.mubr.bf16.gmra.mrb[0].mxu0 %v2861
        %v2974 = vpop.f32.mrb[0].mxu0
        %v2975 = vadd.f32 0.0, %v2974
        %v2976 = vpop.f32.mrb[0].mxu0
        %v2977 = vpop.f32.mrb[0].mxu0
        %v2978 = vadd.f32 0.0, %v2977
        %v2979 = vpop.f32.mrb[0].mxu0
        %2980 = vmatprep.mubr.bf16.mxu0 0
        %2981 = vmatmul.mubr.bf16.gmra.mrb[0].mxu0 %v2862
        %v2982 = vpop.f32.mrb[0].mxu0
        %v2983 = vadd.f32 0.0, %v2982
        %v2984 = vpop.f32.mrb[0].mxu0
        %v2985 = vpop.f32.mrb[0].mxu0
        %v2986 = vadd.f32 0.0, %v2985
        %v2987 = vpop.f32.mrb[0].mxu0
        %2988 = vmatprep.mubr.bf16.mxu0 0
        %2989 = vmatmul.mubr.bf16.gmra.mrb[0].mxu0 %v2863
        %v2990 = vpop.f32.mrb[0].mxu0
        %v2991 = vadd.f32 0.0, %v2990
        %v2992 = vpop.f32.mrb[0].mxu0
        %v2993 = vpop.f32.mrb[0].mxu0
        %v2994 = vadd.f32 0.0, %v2993
        %v2995 = vpop.f32.mrb[0].mxu0
        %2996 = vmatprep.mubr.bf16.mxu0 0
        %2997 = vmatmul.mubr.bf16.gmra.mrb[0].mxu0 %v2864
        %v2998 = vpop.f32.mrb[0].mxu0
        %v2999 = vadd.f32 0.0, %v2998
        %v3000 = vpop.f32.mrb[0].mxu0
        %v3001 = vpop.f32.mrb[0].mxu0
        %v3002 = vadd.f32 0.0, %v3001
        %v3003 = vpop.f32.mrb[0].mxu0
        %3004 = vmatprep.mubr.bf16.mxu0 0
        %3005 = vmatmul.mubr.bf16.gmra.mrb[0].mxu0 %v2865
        %v3006 = vpop.f32.mrb[0].mxu0
        %v3007 = vadd.f32 0.0, %v3006
        %v3008 = vpop.f32.mrb[0].mxu0
        %v3009 = vpop.f32.mrb[0].mxu0
        %v3010 = vadd.f32 0.0, %v3009
        %v3011 = vpop.f32.mrb[0].mxu0
        %3012 = vmatprep.mubr.bf16.mxu0 0
        %3013 = vmatmul.mubr.bf16.gmra.mrb[0].mxu0 %v2866
        %v3014 = vpop.f32.mrb[0].mxu0
        %v3015 = vadd.f32 0.0, %v3014
        %v3016 = vpop.f32.mrb[0].mxu0
        %v3017 = vpop.f32.mrb[0].mxu0
        %v3018 = vadd.f32 0.0, %v3017
        %v3019 = vpop.f32.mrb[0].mxu0
        %3020 = vmatprep.mubr.bf16.mxu0 0
        %3021 = vmatmul.mubr.bf16.gmra.mrb[0].mxu0 %v2867
        %v3022 = vpop.f32.mrb[0].mxu0
        %v3023 = vadd.f32 0.0, %v3022
        %v3024 = vpop.f32.mrb[0].mxu0
        %v3025 = vpop.f32.mrb[0].mxu0
        %v3026 = vadd.f32 0.0, %v3025
        %v3027 = vpop.f32.mrb[0].mxu0
        %3028 = vdwg.mxu0
        %v3029 = vadd.f32 %v2782, %v2967
        %v3030 = vadd.f32 %v2785, %v2970
        %v3031 = vadd.f32 %v2790, %v2975
        %v3032 = vadd.f32 %v2793, %v2978
        %v3033 = vadd.f32 %v2798, %v2983
        %v3034 = vadd.f32 %v2801, %v2986
        %v3035 = vadd.f32 %v2806, %v2991
        %v3036 = vadd.f32 %v2809, %v2994
        %v3037 = vadd.f32 %v2814, %v2999
        %v3038 = vadd.f32 %v2817, %v3002
        %v3039 = vadd.f32 %v2822, %v3007
        %v3040 = vadd.f32 %v2825, %v3010
        %v3041 = vadd.f32 %v2830, %v3015
        %v3042 = vadd.f32 %v2833, %v3018
        %v3043 = vadd.f32 %v2838, %v3023
        %v3044 = vadd.f32 %v2841, %v3026
        %v3045 = vld [vmem:[%s520] sm:$0xff]
        %v3046 = vld [vmem:[%s520 + $0x10] sm:$0xff]
        %v3047 = vld [vmem:[%s520 + $0x20] sm:$0xff]
        %v3048 = vld [vmem:[%s520 + $0x30] sm:$0xff]
        %v3049 = vld [vmem:[%s520 + $0x40] sm:$0xff]
        %v3050 = vld [vmem:[%s520 + $0x50] sm:$0xff]
        %v3051 = vld [vmem:[%s520 + $0x60] sm:$0xff]
        %v3052 = vld [vmem:[%s520 + $0x70] sm:$0xff]
        %v3053 = vld [vmem:[%s520 + $0xa0] sm:$0xff]
        %v3054 = vld [vmem:[%s520 + $0xb0] sm:$0xff]
        %v3055 = vld [vmem:[%s520 + $0xc0] sm:$0xff]
        %v3056 = vld [vmem:[%s520 + $0xd0] sm:$0xff]
        %v3057 = vld [vmem:[%s520 + $0xe0] sm:$0xff]
        %v3058 = vld [vmem:[%s520 + $0xf0] sm:$0xff]
        %v3059 = vld [vmem:[%s520 + $0x100] sm:$0xff]
        %v3060 = vld [vmem:[%s520 + $0x110] sm:$0xff]
        %v3061 = vpack.c.bf16 %v3046, %v3045
        %v3062 = vpack.c.bf16 %v3048, %v3047
        %v3063 = vpack.c.bf16 %v3050, %v3049
        %v3064 = vpack.c.bf16 %v3052, %v3051
        %v3065 = vpack.c.bf16 %v3054, %v3053
        %v3066 = vpack.c.bf16 %v3056, %v3055
        %v3067 = vpack.c.bf16 %v3058, %v3057
        %v3068 = vpack.c.bf16 %v3060, %v3059
        %v3069 = vld [vmem:[%s1167] sm:$0xf]
        %v3070 = vld [vmem:[%s1167 + $0x4] sm:$0xf]
        %v3071 = vld [vmem:[%s1167 + $0x8] sm:$0xf]
        %v3072 = vld [vmem:[%s1167 + $0xc] sm:$0xf]
        %v3073 = vld [vmem:[%s1167 + $0x10] sm:$0xf]
        %v3074 = vld [vmem:[%s1167 + $0x14] sm:$0xf]
        %v3075 = vld [vmem:[%s1167 + $0x18] sm:$0xf]
        %v3076 = vld [vmem:[%s1167 + $0x1c] sm:$0xf]
        %v3077 = vld [vmem:[%s1167 + $0x20] sm:$0xf]
        %v3078 = vld [vmem:[%s1167 + $0x24] sm:$0xf]
        %v3079 = vld [vmem:[%s1167 + $0x28] sm:$0xf]
        %v3080 = vld [vmem:[%s1167 + $0x2c] sm:$0xf]
        %v3081 = vld [vmem:[%s1167 + $0x30] sm:$0xf]
        %v3082 = vld [vmem:[%s1167 + $0x34] sm:$0xf]
        %v3083 = vld [vmem:[%s1167 + $0x38] sm:$0xf]
        %v3084 = vld [vmem:[%s1167 + $0x3c] sm:$0xf]
        %v3101 = vunpack.c.l.b16 %v3069
        %v3102 = vunpack.c.l.b16 %v3070
        %v3103 = vunpack.c.l.b16 %v3071
        %v3104 = vunpack.c.l.b16 %v3072
        %v3105 = vunpack.c.l.b16 %v3073
        %v3106 = vunpack.c.l.b16 %v3074
        %v3107 = vunpack.c.l.b16 %v3075
        %v3108 = vunpack.c.l.b16 %v3076
        %v3109 = vunpack.c.l.b16 %v3077
        %v3110 = vunpack.c.l.b16 %v3078
        %v3111 = vunpack.c.l.b16 %v3079
        %v3112 = vunpack.c.l.b16 %v3080
        %v3113 = vunpack.c.l.b16 %v3081
        %v3114 = vunpack.c.l.b16 %v3082
        %v3115 = vunpack.c.l.b16 %v3083
        %v3116 = vunpack.c.l.b16 %v3084
        %v3117 = vpack.c.b16 %v3102, %v3101
        %v3118 = vpack.c.b16 %v3104, %v3103
        %v3119 = vpack.c.b16 %v3106, %v3105
        %v3120 = vpack.c.b16 %v3108, %v3107
        %v3121 = vpack.c.b16 %v3110, %v3109
        %v3122 = vpack.c.b16 %v3112, %v3111
        %v3123 = vpack.c.b16 %v3114, %v3113
        %v3124 = vpack.c.b16 %v3116, %v3115
        %3133 = vmatprep.subr.bf16.mxu0 0
        %3134 = vmatpush1.bf16.msra.mxu0 %v3117
        %3135 = vmatprep.subr.bf16.mxu0 0
        %3136 = vmatpush1.bf16.msra.mxu0 %v3118
        %3137 = vmatprep.subr.bf16.mxu0 0
        %3138 = vmatpush1.bf16.msra.mxu0 %v3119
        %3139 = vmatprep.subr.bf16.mxu0 0
        %3140 = vmatpush1.bf16.msra.mxu0 %v3120
        %3141 = vmatprep.subr.bf16.mxu0 0
        %3142 = vmatpush1.bf16.msra.mxu0 %v3121
        %3143 = vmatprep.subr.bf16.mxu0 0
        %3144 = vmatpush1.bf16.msra.mxu0 %v3122
        %3145 = vmatprep.subr.bf16.mxu0 0
        %3146 = vmatpush1.bf16.msra.mxu0 %v3123
        %3147 = vmatprep.subr.bf16.mxu0 0
        %3148 = vmatpush1.bf16.msra.mxu0 %v3124
        %3149 = vmatprep.subr.bf16.mxu0 0
        %3150 = vmatpush1.bf16.msra.mxu0 0
        %3151 = vmatprep.subr.bf16.mxu0 0
        %3152 = vmatpush1.bf16.msra.mxu0 0
        %3153 = vmatprep.subr.bf16.mxu0 0
        %3154 = vmatpush1.bf16.msra.mxu0 0
        %3155 = vmatprep.subr.bf16.mxu0 0
        %3156 = vmatpush1.bf16.msra.mxu0 0
        %3157 = vmatprep.subr.bf16.mxu0 0
        %3158 = vmatpush1.bf16.msra.mxu0 0
        %3159 = vmatprep.subr.bf16.mxu0 0
        %3160 = vmatpush1.bf16.msra.mxu0 0
        %3161 = vmatprep.subr.bf16.mxu0 0
        %3162 = vmatpush1.bf16.msra.mxu0 0
        %3163 = vmatprep.subr.bf16.mxu0 0
        %3164 = vmatpush1.bf16.msra.mxu0 0
        %3165 = vmatprep.mubr.bf16.mxu0 0
        %3166 = vmatmul.mubr.bf16.gmra.mrb[0].mxu0 %v3061
        %v3167 = vpop.f32.mrb[0].mxu0
        %v3168 = vadd.f32 0.0, %v3167
        %v3169 = vpop.f32.mrb[0].mxu0
        %v3170 = vpop.f32.mrb[0].mxu0
        %v3171 = vadd.f32 0.0, %v3170
        %v3172 = vpop.f32.mrb[0].mxu0
        %3173 = vmatprep.mubr.bf16.mxu0 0
        %3174 = vmatmul.mubr.bf16.gmra.mrb[0].mxu0 %v3062
        %v3175 = vpop.f32.mrb[0].mxu0
        %v3176 = vadd.f32 0.0, %v3175
        %v3177 = vpop.f32.mrb[0].mxu0
        %v3178 = vpop.f32.mrb[0].mxu0
        %v3179 = vadd.f32 0.0, %v3178
        %v3180 = vpop.f32.mrb[0].mxu0
        %3181 = vmatprep.mubr.bf16.mxu0 0
        %3182 = vmatmul.mubr.bf16.gmra.mrb[0].mxu0 %v3063
        %v3183 = vpop.f32.mrb[0].mxu0
        %v3184 = vadd.f32 0.0, %v3183
        %v3185 = vpop.f32.mrb[0].mxu0
        %v3186 = vpop.f32.mrb[0].mxu0
        %v3187 = vadd.f32 0.0, %v3186
        %v3188 = vpop.f32.mrb[0].mxu0
        %3189 = vmatprep.mubr.bf16.mxu0 0
        %3190 = vmatmul.mubr.bf16.gmra.mrb[0].mxu0 %v3064
        %v3191 = vpop.f32.mrb[0].mxu0
        %v3192 = vadd.f32 0.0, %v3191
        %v3193 = vpop.f32.mrb[0].mxu0
        %v3194 = vpop.f32.mrb[0].mxu0
        %v3195 = vadd.f32 0.0, %v3194
        %v3196 = vpop.f32.mrb[0].mxu0
        %3197 = vmatprep.mubr.bf16.mxu0 0
        %3198 = vmatmul.mubr.bf16.gmra.mrb[0].mxu0 %v3065
        %v3199 = vpop.f32.mrb[0].mxu0
        %v3200 = vadd.f32 0.0, %v3199
        %v3201 = vpop.f32.mrb[0].mxu0
        %v3202 = vpop.f32.mrb[0].mxu0
        %v3203 = vadd.f32 0.0, %v3202
        %v3204 = vpop.f32.mrb[0].mxu0
        %3205 = vmatprep.mubr.bf16.mxu0 0
        %3206 = vmatmul.mubr.bf16.gmra.mrb[0].mxu0 %v3066
        %v3207 = vpop.f32.mrb[0].mxu0
        %v3208 = vadd.f32 0.0, %v3207
        %v3209 = vpop.f32.mrb[0].mxu0
        %v3210 = vpop.f32.mrb[0].mxu0
        %v3211 = vadd.f32 0.0, %v3210
        %v3212 = vpop.f32.mrb[0].mxu0
        %3213 = vmatprep.mubr.bf16.mxu0 0
        %3214 = vmatmul.mubr.bf16.gmra.mrb[0].mxu0 %v3067
        %v3215 = vpop.f32.mrb[0].mxu0
        %v3216 = vadd.f32 0.0, %v3215
        %v3217 = vpop.f32.mrb[0].mxu0
        %v3218 = vpop.f32.mrb[0].mxu0
        %v3219 = vadd.f32 0.0, %v3218
        %v3220 = vpop.f32.mrb[0].mxu0
        %3221 = vmatprep.mubr.bf16.mxu0 0
        %3222 = vmatmul.mubr.bf16.gmra.mrb[0].mxu0 %v3068
        %v3223 = vpop.f32.mrb[0].mxu0
        %v3224 = vadd.f32 0.0, %v3223
        %v3225 = vpop.f32.mrb[0].mxu0
        %v3226 = vpop.f32.mrb[0].mxu0
        %v3227 = vadd.f32 0.0, %v3226
        %v3228 = vpop.f32.mrb[0].mxu0
        %3229 = vdwg.mxu0
        %v3230 = vadd.f32 %v3029, %v3168
        %v3231 = vadd.f32 %v3030, %v3171
        %v3232 = vadd.f32 %v3031, %v3176
        %v3233 = vadd.f32 %v3032, %v3179
        %v3234 = vadd.f32 %v3033, %v3184
        %v3235 = vadd.f32 %v3034, %v3187
        %v3236 = vadd.f32 %v3035, %v3192
        %v3237 = vadd.f32 %v3036, %v3195
        %v3238 = vadd.f32 %v3037, %v3200
        %v3239 = vadd.f32 %v3038, %v3203
        %v3240 = vadd.f32 %v3039, %v3208
        %v3241 = vadd.f32 %v3040, %v3211
        %v3242 = vadd.f32 %v3041, %v3216
        %v3243 = vadd.f32 %v3042, %v3219
        %v3244 = vadd.f32 %v3043, %v3224
        %v3245 = vadd.f32 %v3044, %v3227
        %v3246 = vld [vmem:[%s520 + $0x1] sm:$0xff]
        %v3247 = vld [vmem:[%s520 + $0x11] sm:$0xff]
        %v3248 = vld [vmem:[%s520 + $0x21] sm:$0xff]
        %v3249 = vld [vmem:[%s520 + $0x31] sm:$0xff]
        %v3250 = vld [vmem:[%s520 + $0x41] sm:$0xff]
        %v3251 = vld [vmem:[%s520 + $0x51] sm:$0xff]
        %v3252 = vld [vmem:[%s520 + $0x61] sm:$0xff]
        %v3253 = vld [vmem:[%s520 + $0x71] sm:$0xff]
        %v3254 = vld [vmem:[%s520 + $0xa1] sm:$0xff]
        %v3255 = vld [vmem:[%s520 + $0xb1] sm:$0xff]
        %v3256 = vld [vmem:[%s520 + $0xc1] sm:$0xff]
        %v3257 = vld [vmem:[%s520 + $0xd1] sm:$0xff]
        %v3258 = vld [vmem:[%s520 + $0xe1] sm:$0xff]
        %v3259 = vld [vmem:[%s520 + $0xf1] sm:$0xff]
        %v3260 = vld [vmem:[%s520 + $0x101] sm:$0xff]
        %v3261 = vld [vmem:[%s520 + $0x111] sm:$0xff]
        %v3262 = vpack.c.bf16 %v3247, %v3246
        %v3263 = vpack.c.bf16 %v3249, %v3248
        %v3264 = vpack.c.bf16 %v3251, %v3250
        %v3265 = vpack.c.bf16 %v3253, %v3252
        %v3266 = vpack.c.bf16 %v3255, %v3254
        %v3267 = vpack.c.bf16 %v3257, %v3256
        %v3268 = vpack.c.bf16 %v3259, %v3258
        %v3269 = vpack.c.bf16 %v3261, %v3260
        %v3270 = vld [vmem:[%s1369] sm:$0xf]
        %v3271 = vld [vmem:[%s1369 + $0x4] sm:$0xf]
        %v3272 = vld [vmem:[%s1369 + $0x8] sm:$0xf]
        %v3273 = vld [vmem:[%s1369 + $0xc] sm:$0xf]
        %v3274 = vld [vmem:[%s1369 + $0x10] sm:$0xf]
        %v3275 = vld [vmem:[%s1369 + $0x14] sm:$0xf]
        %v3276 = vld [vmem:[%s1369 + $0x18] sm:$0xf]
        %v3277 = vld [vmem:[%s1369 + $0x1c] sm:$0xf]
        %v3278 = vld [vmem:[%s1369 + $0x20] sm:$0xf]
        %v3279 = vld [vmem:[%s1369 + $0x24] sm:$0xf]
        %v3280 = vld [vmem:[%s1369 + $0x28] sm:$0xf]
        %v3281 = vld [vmem:[%s1369 + $0x2c] sm:$0xf]
        %v3282 = vld [vmem:[%s1369 + $0x30] sm:$0xf]
        %v3283 = vld [vmem:[%s1369 + $0x34] sm:$0xf]
        %v3284 = vld [vmem:[%s1369 + $0x38] sm:$0xf]
        %v3285 = vld [vmem:[%s1369 + $0x3c] sm:$0xf]
        %v3302 = vunpack.c.l.b16 %v3270
        %v3303 = vunpack.c.l.b16 %v3271
        %v3304 = vunpack.c.l.b16 %v3272
        %v3305 = vunpack.c.l.b16 %v3273
        %v3306 = vunpack.c.l.b16 %v3274
        %v3307 = vunpack.c.l.b16 %v3275
        %v3308 = vunpack.c.l.b16 %v3276
        %v3309 = vunpack.c.l.b16 %v3277
        %v3310 = vunpack.c.l.b16 %v3278
        %v3311 = vunpack.c.l.b16 %v3279
        %v3312 = vunpack.c.l.b16 %v3280
        %v3313 = vunpack.c.l.b16 %v3281
        %v3314 = vunpack.c.l.b16 %v3282
        %v3315 = vunpack.c.l.b16 %v3283
        %v3316 = vunpack.c.l.b16 %v3284
        %v3317 = vunpack.c.l.b16 %v3285
        %v3318 = vpack.c.b16 %v3303, %v3302
        %v3319 = vpack.c.b16 %v3305, %v3304
        %v3320 = vpack.c.b16 %v3307, %v3306
        %v3321 = vpack.c.b16 %v3309, %v3308
        %v3322 = vpack.c.b16 %v3311, %v3310
        %v3323 = vpack.c.b16 %v3313, %v3312
        %v3324 = vpack.c.b16 %v3315, %v3314
        %v3325 = vpack.c.b16 %v3317, %v3316
        %3334 = vmatprep.subr.bf16.mxu0 0
        %3335 = vmatpush1.bf16.msra.mxu0 %v3318
        %3336 = vmatprep.subr.bf16.mxu0 0
        %3337 = vmatpush1.bf16.msra.mxu0 %v3319
        %3338 = vmatprep.subr.bf16.mxu0 0
        %3339 = vmatpush1.bf16.msra.mxu0 %v3320
        %3340 = vmatprep.subr.bf16.mxu0 0
        %3341 = vmatpush1.bf16.msra.mxu0 %v3321
        %3342 = vmatprep.subr.bf16.mxu0 0
        %3343 = vmatpush1.bf16.msra.mxu0 %v3322
        %3344 = vmatprep.subr.bf16.mxu0 0
        %3345 = vmatpush1.bf16.msra.mxu0 %v3323
        %3346 = vmatprep.subr.bf16.mxu0 0
        %3347 = vmatpush1.bf16.msra.mxu0 %v3324
        %3348 = vmatprep.subr.bf16.mxu0 0
        %3349 = vmatpush1.bf16.msra.mxu0 %v3325
        %3350 = vmatprep.subr.bf16.mxu0 0
        %3351 = vmatpush1.bf16.msra.mxu0 0
        %3352 = vmatprep.subr.bf16.mxu0 0
        %3353 = vmatpush1.bf16.msra.mxu0 0
        %3354 = vmatprep.subr.bf16.mxu0 0
        %3355 = vmatpush1.bf16.msra.mxu0 0
        %3356 = vmatprep.subr.bf16.mxu0 0
        %3357 = vmatpush1.bf16.msra.mxu0 0
        %3358 = vmatprep.subr.bf16.mxu0 0
        %3359 = vmatpush1.bf16.msra.mxu0 0
        %3360 = vmatprep.subr.bf16.mxu0 0
        %3361 = vmatpush1.bf16.msra.mxu0 0
        %3362 = vmatprep.subr.bf16.mxu0 0
        %3363 = vmatpush1.bf16.msra.mxu0 0
        %3364 = vmatprep.subr.bf16.mxu0 0
        %3365 = vmatpush1.bf16.msra.mxu0 0
        %3366 = vmatprep.mubr.bf16.mxu0 0
        %3367 = vmatmul.mubr.bf16.gmra.mrb[0].mxu0 %v3262
        %v3368 = vpop.f32.mrb[0].mxu0
        %v3369 = vadd.f32 0.0, %v3368
        %v3370 = vpop.f32.mrb[0].mxu0
        %v3371 = vpop.f32.mrb[0].mxu0
        %v3372 = vadd.f32 0.0, %v3371
        %v3373 = vpop.f32.mrb[0].mxu0
        %3374 = vmatprep.mubr.bf16.mxu0 0
        %3375 = vmatmul.mubr.bf16.gmra.mrb[0].mxu0 %v3263
        %v3376 = vpop.f32.mrb[0].mxu0
        %v3377 = vadd.f32 0.0, %v3376
        %v3378 = vpop.f32.mrb[0].mxu0
        %v3379 = vpop.f32.mrb[0].mxu0
        %v3380 = vadd.f32 0.0, %v3379
        %v3381 = vpop.f32.mrb[0].mxu0
        %3382 = vmatprep.mubr.bf16.mxu0 0
        %3383 = vmatmul.mubr.bf16.gmra.mrb[0].mxu0 %v3264
        %v3384 = vpop.f32.mrb[0].mxu0
        %v3385 = vadd.f32 0.0, %v3384
        %v3386 = vpop.f32.mrb[0].mxu0
        %v3387 = vpop.f32.mrb[0].mxu0
        %v3388 = vadd.f32 0.0, %v3387
        %v3389 = vpop.f32.mrb[0].mxu0
        %3390 = vmatprep.mubr.bf16.mxu0 0
        %3391 = vmatmul.mubr.bf16.gmra.mrb[0].mxu0 %v3265
        %v3392 = vpop.f32.mrb[0].mxu0
        %v3393 = vadd.f32 0.0, %v3392
        %v3394 = vpop.f32.mrb[0].mxu0
        %v3395 = vpop.f32.mrb[0].mxu0
        %v3396 = vadd.f32 0.0, %v3395
        %v3397 = vpop.f32.mrb[0].mxu0
        %3398 = vmatprep.mubr.bf16.mxu0 0
        %3399 = vmatmul.mubr.bf16.gmra.mrb[0].mxu0 %v3266
        %v3400 = vpop.f32.mrb[0].mxu0
        %v3401 = vadd.f32 0.0, %v3400
        %v3402 = vpop.f32.mrb[0].mxu0
        %v3403 = vpop.f32.mrb[0].mxu0
        %v3404 = vadd.f32 0.0, %v3403
        %v3405 = vpop.f32.mrb[0].mxu0
        %3406 = vmatprep.mubr.bf16.mxu0 0
        %3407 = vmatmul.mubr.bf16.gmra.mrb[0].mxu0 %v3267
        %v3408 = vpop.f32.mrb[0].mxu0
        %v3409 = vadd.f32 0.0, %v3408
        %v3410 = vpop.f32.mrb[0].mxu0
        %v3411 = vpop.f32.mrb[0].mxu0
        %v3412 = vadd.f32 0.0, %v3411
        %v3413 = vpop.f32.mrb[0].mxu0
        %3414 = vmatprep.mubr.bf16.mxu0 0
        %3415 = vmatmul.mubr.bf16.gmra.mrb[0].mxu0 %v3268
        %v3416 = vpop.f32.mrb[0].mxu0
        %v3417 = vadd.f32 0.0, %v3416
        %v3418 = vpop.f32.mrb[0].mxu0
        %v3419 = vpop.f32.mrb[0].mxu0
        %v3420 = vadd.f32 0.0, %v3419
        %v3421 = vpop.f32.mrb[0].mxu0
        %3422 = vmatprep.mubr.bf16.mxu0 0
        %3423 = vmatmul.mubr.bf16.gmra.mrb[0].mxu0 %v3269
        %v3424 = vpop.f32.mrb[0].mxu0
        %v3425 = vadd.f32 0.0, %v3424
        %v3426 = vpop.f32.mrb[0].mxu0
        %v3427 = vpop.f32.mrb[0].mxu0
        %v3428 = vadd.f32 0.0, %v3427
        %v3429 = vpop.f32.mrb[0].mxu0
        %3430 = vdwg.mxu0
        %v3431 = vadd.f32 %v3230, %v3369
        %v3432 = vadd.f32 %v3231, %v3372
        %v3433 = vadd.f32 %v3232, %v3377
        %v3434 = vadd.f32 %v3233, %v3380
        %v3435 = vadd.f32 %v3234, %v3385
        %v3436 = vadd.f32 %v3235, %v3388
        %v3437 = vadd.f32 %v3236, %v3393
        %v3438 = vadd.f32 %v3237, %v3396
        %v3439 = vadd.f32 %v3238, %v3401
        %v3440 = vadd.f32 %v3239, %v3404
        %v3441 = vadd.f32 %v3240, %v3409
        %v3442 = vadd.f32 %v3241, %v3412
        %v3443 = vadd.f32 %v3242, %v3417
        %v3444 = vadd.f32 %v3243, %v3420
        %v3445 = vadd.f32 %v3244, %v3425
        %v3446 = vadd.f32 %v3245, %v3428
        %v3447 = vld [vmem:[%s520 + $0x2] sm:$0xff]
        %v3448 = vld [vmem:[%s520 + $0x12] sm:$0xff]
        %v3449 = vld [vmem:[%s520 + $0x22] sm:$0xff]
        %v3450 = vld [vmem:[%s520 + $0x32] sm:$0xff]
        %v3451 = vld [vmem:[%s520 + $0x42] sm:$0xff]
        %v3452 = vld [vmem:[%s520 + $0x52] sm:$0xff]
        %v3453 = vld [vmem:[%s520 + $0x62] sm:$0xff]
        %v3454 = vld [vmem:[%s520 + $0x72] sm:$0xff]
        %v3455 = vld [vmem:[%s520 + $0xa2] sm:$0xff]
        %v3456 = vld [vmem:[%s520 + $0xb2] sm:$0xff]
        %v3457 = vld [vmem:[%s520 + $0xc2] sm:$0xff]
        %v3458 = vld [vmem:[%s520 + $0xd2] sm:$0xff]
        %v3459 = vld [vmem:[%s520 + $0xe2] sm:$0xff]
        %v3460 = vld [vmem:[%s520 + $0xf2] sm:$0xff]
        %v3461 = vld [vmem:[%s520 + $0x102] sm:$0xff]
        %v3462 = vld [vmem:[%s520 + $0x112] sm:$0xff]
        %v3463 = vpack.c.bf16 %v3448, %v3447
        %v3464 = vpack.c.bf16 %v3450, %v3449
        %v3465 = vpack.c.bf16 %v3452, %v3451
        %v3466 = vpack.c.bf16 %v3454, %v3453
        %v3467 = vpack.c.bf16 %v3456, %v3455
        %v3468 = vpack.c.bf16 %v3458, %v3457
        %v3469 = vpack.c.bf16 %v3460, %v3459
        %v3470 = vpack.c.bf16 %v3462, %v3461
        %v3471 = vld [vmem:[%s1571] sm:$0xf]
        %v3472 = vld [vmem:[%s1571 + $0x4] sm:$0xf]
        %v3473 = vld [vmem:[%s1571 + $0x8] sm:$0xf]
        %v3474 = vld [vmem:[%s1571 + $0xc] sm:$0xf]
        %v3475 = vld [vmem:[%s1571 + $0x10] sm:$0xf]
        %v3476 = vld [vmem:[%s1571 + $0x14] sm:$0xf]
        %v3477 = vld [vmem:[%s1571 + $0x18] sm:$0xf]
        %v3478 = vld [vmem:[%s1571 + $0x1c] sm:$0xf]
        %v3479 = vld [vmem:[%s1571 + $0x20] sm:$0xf]
        %v3480 = vld [vmem:[%s1571 + $0x24] sm:$0xf]
        %v3481 = vld [vmem:[%s1571 + $0x28] sm:$0xf]
        %v3482 = vld [vmem:[%s1571 + $0x2c] sm:$0xf]
        %v3483 = vld [vmem:[%s1571 + $0x30] sm:$0xf]
        %v3484 = vld [vmem:[%s1571 + $0x34] sm:$0xf]
        %v3485 = vld [vmem:[%s1571 + $0x38] sm:$0xf]
        %v3486 = vld [vmem:[%s1571 + $0x3c] sm:$0xf]
        %v3503 = vunpack.c.l.b16 %v3471
        %v3504 = vunpack.c.l.b16 %v3472
        %v3505 = vunpack.c.l.b16 %v3473
        %v3506 = vunpack.c.l.b16 %v3474
        %v3507 = vunpack.c.l.b16 %v3475
        %v3508 = vunpack.c.l.b16 %v3476
        %v3509 = vunpack.c.l.b16 %v3477
        %v3510 = vunpack.c.l.b16 %v3478
        %v3511 = vunpack.c.l.b16 %v3479
        %v3512 = vunpack.c.l.b16 %v3480
        %v3513 = vunpack.c.l.b16 %v3481
        %v3514 = vunpack.c.l.b16 %v3482
        %v3515 = vunpack.c.l.b16 %v3483
        %v3516 = vunpack.c.l.b16 %v3484
        %v3517 = vunpack.c.l.b16 %v3485
        %v3518 = vunpack.c.l.b16 %v3486
        %v3519 = vpack.c.b16 %v3504, %v3503
        %v3520 = vpack.c.b16 %v3506, %v3505
        %v3521 = vpack.c.b16 %v3508, %v3507
        %v3522 = vpack.c.b16 %v3510, %v3509
        %v3523 = vpack.c.b16 %v3512, %v3511
        %v3524 = vpack.c.b16 %v3514, %v3513
        %v3525 = vpack.c.b16 %v3516, %v3515
        %v3526 = vpack.c.b16 %v3518, %v3517
        %3535 = vmatprep.subr.bf16.mxu0 0
        %3536 = vmatpush1.bf16.msra.mxu0 %v3519
        %3537 = vmatprep.subr.bf16.mxu0 0
        %3538 = vmatpush1.bf16.msra.mxu0 %v3520
        %3539 = vmatprep.subr.bf16.mxu0 0
        %3540 = vmatpush1.bf16.msra.mxu0 %v3521
        %3541 = vmatprep.subr.bf16.mxu0 0
        %3542 = vmatpush1.bf16.msra.mxu0 %v3522
        %3543 = vmatprep.subr.bf16.mxu0 0
        %3544 = vmatpush1.bf16.msra.mxu0 %v3523
        %3545 = vmatprep.subr.bf16.mxu0 0
        %3546 = vmatpush1.bf16.msra.mxu0 %v3524
        %3547 = vmatprep.subr.bf16.mxu0 0
        %3548 = vmatpush1.bf16.msra.mxu0 %v3525
        %3549 = vmatprep.subr.bf16.mxu0 0
        %3550 = vmatpush1.bf16.msra.mxu0 %v3526
        %3551 = vmatprep.subr.bf16.mxu0 0
        %3552 = vmatpush1.bf16.msra.mxu0 0
        %3553 = vmatprep.subr.bf16.mxu0 0
        %3554 = vmatpush1.bf16.msra.mxu0 0
        %3555 = vmatprep.subr.bf16.mxu0 0
        %3556 = vmatpush1.bf16.msra.mxu0 0
        %3557 = vmatprep.subr.bf16.mxu0 0
        %3558 = vmatpush1.bf16.msra.mxu0 0
        %3559 = vmatprep.subr.bf16.mxu0 0
        %3560 = vmatpush1.bf16.msra.mxu0 0
        %3561 = vmatprep.subr.bf16.mxu0 0
        %3562 = vmatpush1.bf16.msra.mxu0 0
        %3563 = vmatprep.subr.bf16.mxu0 0
        %3564 = vmatpush1.bf16.msra.mxu0 0
        %3565 = vmatprep.subr.bf16.mxu0 0
        %3566 = vmatpush1.bf16.msra.mxu0 0
        %3567 = vmatprep.mubr.bf16.mxu0 0
        %3568 = vmatmul.mubr.bf16.gmra.mrb[0].mxu0 %v3463
        %v3569 = vpop.f32.mrb[0].mxu0
        %v3570 = vadd.f32 0.0, %v3569
        %v3571 = vpop.f32.mrb[0].mxu0
        %v3572 = vpop.f32.mrb[0].mxu0
        %v3573 = vadd.f32 0.0, %v3572
        %v3574 = vpop.f32.mrb[0].mxu0
        %3575 = vmatprep.mubr.bf16.mxu0 0
        %3576 = vmatmul.mubr.bf16.gmra.mrb[0].mxu0 %v3464
        %v3577 = vpop.f32.mrb[0].mxu0
        %v3578 = vadd.f32 0.0, %v3577
        %v3579 = vpop.f32.mrb[0].mxu0
        %v3580 = vpop.f32.mrb[0].mxu0
        %v3581 = vadd.f32 0.0, %v3580
        %v3582 = vpop.f32.mrb[0].mxu0
        %3583 = vmatprep.mubr.bf16.mxu0 0
        %3584 = vmatmul.mubr.bf16.gmra.mrb[0].mxu0 %v3465
        %v3585 = vpop.f32.mrb[0].mxu0
        %v3586 = vadd.f32 0.0, %v3585
        %v3587 = vpop.f32.mrb[0].mxu0
        %v3588 = vpop.f32.mrb[0].mxu0
        %v3589 = vadd.f32 0.0, %v3588
        %v3590 = vpop.f32.mrb[0].mxu0
        %3591 = vmatprep.mubr.bf16.mxu0 0
        %3592 = vmatmul.mubr.bf16.gmra.mrb[0].mxu0 %v3466
        %v3593 = vpop.f32.mrb[0].mxu0
        %v3594 = vadd.f32 0.0, %v3593
        %v3595 = vpop.f32.mrb[0].mxu0
        %v3596 = vpop.f32.mrb[0].mxu0
        %v3597 = vadd.f32 0.0, %v3596
        %v3598 = vpop.f32.mrb[0].mxu0
        %3599 = vmatprep.mubr.bf16.mxu0 0
        %3600 = vmatmul.mubr.bf16.gmra.mrb[0].mxu0 %v3467
        %v3601 = vpop.f32.mrb[0].mxu0
        %v3602 = vadd.f32 0.0, %v3601
        %v3603 = vpop.f32.mrb[0].mxu0
        %v3604 = vpop.f32.mrb[0].mxu0
        %v3605 = vadd.f32 0.0, %v3604
        %v3606 = vpop.f32.mrb[0].mxu0
        %3607 = vmatprep.mubr.bf16.mxu0 0
        %3608 = vmatmul.mubr.bf16.gmra.mrb[0].mxu0 %v3468
        %v3609 = vpop.f32.mrb[0].mxu0
        %v3610 = vadd.f32 0.0, %v3609
        %v3611 = vpop.f32.mrb[0].mxu0
        %v3612 = vpop.f32.mrb[0].mxu0
        %v3613 = vadd.f32 0.0, %v3612
        %v3614 = vpop.f32.mrb[0].mxu0
        %3615 = vmatprep.mubr.bf16.mxu0 0
        %3616 = vmatmul.mubr.bf16.gmra.mrb[0].mxu0 %v3469
        %v3617 = vpop.f32.mrb[0].mxu0
        %v3618 = vadd.f32 0.0, %v3617
        %v3619 = vpop.f32.mrb[0].mxu0
        %v3620 = vpop.f32.mrb[0].mxu0
        %v3621 = vadd.f32 0.0, %v3620
        %v3622 = vpop.f32.mrb[0].mxu0
        %3623 = vmatprep.mubr.bf16.mxu0 0
        %3624 = vmatmul.mubr.bf16.gmra.mrb[0].mxu0 %v3470
        %v3625 = vpop.f32.mrb[0].mxu0
        %v3626 = vadd.f32 0.0, %v3625
        %v3627 = vpop.f32.mrb[0].mxu0
        %v3628 = vpop.f32.mrb[0].mxu0
        %v3629 = vadd.f32 0.0, %v3628
        %v3630 = vpop.f32.mrb[0].mxu0
        %3631 = vdwg.mxu0
        %v3632 = vadd.f32 %v3431, %v3570
        %v3633 = vadd.f32 %v3432, %v3573
        %v3634 = vadd.f32 %v3433, %v3578
        %v3635 = vadd.f32 %v3434, %v3581
        %v3636 = vadd.f32 %v3435, %v3586
        %v3637 = vadd.f32 %v3436, %v3589
        %v3638 = vadd.f32 %v3437, %v3594
        %v3639 = vadd.f32 %v3438, %v3597
        %v3640 = vadd.f32 %v3439, %v3602
        %v3641 = vadd.f32 %v3440, %v3605
        %v3642 = vadd.f32 %v3441, %v3610
        %v3643 = vadd.f32 %v3442, %v3613
        %v3644 = vadd.f32 %v3443, %v3618
        %v3645 = vadd.f32 %v3444, %v3621
        %v3646 = vadd.f32 %v3445, %v3626
        %v3647 = vadd.f32 %v3446, %v3629
        %s3648 = scalar_lea.vmem [#allocation2], 352
        %v3649 = vld [vmem:[%s3648] sm:$0xff]
        %v3650 = vld [vmem:[%s3648 + $0x10] sm:$0xff]
        %v3651 = vld [vmem:[%s3648 + $0x20] sm:$0xff]
        %v3652 = vld [vmem:[%s3648 + $0x30] sm:$0xff]
        %v3653 = vld [vmem:[%s3648 + $0x40] sm:$0xff]
        %v3654 = vld [vmem:[%s3648 + $0x50] sm:$0xff]
        %v3655 = vld [vmem:[%s3648 + $0x60] sm:$0xff]
        %v3656 = vld [vmem:[%s3648 + $0x70] sm:$0xff]
        %v3657 = vld [vmem:[%s3648 + $0xa0] sm:$0xff]
        %v3658 = vld [vmem:[%s3648 + $0xb0] sm:$0xff]
        %v3659 = vld [vmem:[%s3648 + $0xc0] sm:$0xff]
        %v3660 = vld [vmem:[%s3648 + $0xd0] sm:$0xff]
        %v3661 = vld [vmem:[%s3648 + $0xe0] sm:$0xff]
        %v3662 = vld [vmem:[%s3648 + $0xf0] sm:$0xff]
        %v3663 = vld [vmem:[%s3648 + $0x100] sm:$0xff]
        %v3664 = vld [vmem:[%s3648 + $0x110] sm:$0xff]
        %v3665 = vpack.c.bf16 %v3650, %v3649
        %v3666 = vpack.c.bf16 %v3652, %v3651
        %v3667 = vpack.c.bf16 %v3654, %v3653
        %v3668 = vpack.c.bf16 %v3656, %v3655
        %v3669 = vpack.c.bf16 %v3658, %v3657
        %v3670 = vpack.c.bf16 %v3660, %v3659
        %v3671 = vpack.c.bf16 %v3662, %v3661
        %v3672 = vpack.c.bf16 %v3664, %v3663
        %v3673 = vld [vmem:[%s1774] sm:$0xf]
        %v3674 = vld [vmem:[%s1774 + $0x4] sm:$0xf]
        %v3675 = vld [vmem:[%s1774 + $0x8] sm:$0xf]
        %v3676 = vld [vmem:[%s1774 + $0xc] sm:$0xf]
        %v3677 = vld [vmem:[%s1774 + $0x10] sm:$0xf]
        %v3678 = vld [vmem:[%s1774 + $0x14] sm:$0xf]
        %v3679 = vld [vmem:[%s1774 + $0x18] sm:$0xf]
        %v3680 = vld [vmem:[%s1774 + $0x1c] sm:$0xf]
        %v3681 = vld [vmem:[%s1774 + $0x20] sm:$0xf]
        %v3682 = vld [vmem:[%s1774 + $0x24] sm:$0xf]
        %v3683 = vld [vmem:[%s1774 + $0x28] sm:$0xf]
        %v3684 = vld [vmem:[%s1774 + $0x2c] sm:$0xf]
        %v3685 = vld [vmem:[%s1774 + $0x30] sm:$0xf]
        %v3686 = vld [vmem:[%s1774 + $0x34] sm:$0xf]
        %v3687 = vld [vmem:[%s1774 + $0x38] sm:$0xf]
        %v3688 = vld [vmem:[%s1774 + $0x3c] sm:$0xf]
        %v3705 = vunpack.c.l.b16 %v3673
        %v3706 = vunpack.c.l.b16 %v3674
        %v3707 = vunpack.c.l.b16 %v3675
        %v3708 = vunpack.c.l.b16 %v3676
        %v3709 = vunpack.c.l.b16 %v3677
        %v3710 = vunpack.c.l.b16 %v3678
        %v3711 = vunpack.c.l.b16 %v3679
        %v3712 = vunpack.c.l.b16 %v3680
        %v3713 = vunpack.c.l.b16 %v3681
        %v3714 = vunpack.c.l.b16 %v3682
        %v3715 = vunpack.c.l.b16 %v3683
        %v3716 = vunpack.c.l.b16 %v3684
        %v3717 = vunpack.c.l.b16 %v3685
        %v3718 = vunpack.c.l.b16 %v3686
        %v3719 = vunpack.c.l.b16 %v3687
        %v3720 = vunpack.c.l.b16 %v3688
        %v3721 = vpack.c.b16 %v3706, %v3705
        %v3722 = vpack.c.b16 %v3708, %v3707
        %v3723 = vpack.c.b16 %v3710, %v3709
        %v3724 = vpack.c.b16 %v3712, %v3711
        %v3725 = vpack.c.b16 %v3714, %v3713
        %v3726 = vpack.c.b16 %v3716, %v3715
        %v3727 = vpack.c.b16 %v3718, %v3717
        %v3728 = vpack.c.b16 %v3720, %v3719
        %3737 = vmatprep.subr.bf16.mxu0 0
        %3738 = vmatpush1.bf16.msra.mxu0 %v3721
        %3739 = vmatprep.subr.bf16.mxu0 0
        %3740 = vmatpush1.bf16.msra.mxu0 %v3722
        %3741 = vmatprep.subr.bf16.mxu0 0
        %3742 = vmatpush1.bf16.msra.mxu0 %v3723
        %3743 = vmatprep.subr.bf16.mxu0 0
        %3744 = vmatpush1.bf16.msra.mxu0 %v3724
        %3745 = vmatprep.subr.bf16.mxu0 0
        %3746 = vmatpush1.bf16.msra.mxu0 %v3725
        %3747 = vmatprep.subr.bf16.mxu0 0
        %3748 = vmatpush1.bf16.msra.mxu0 %v3726
        %3749 = vmatprep.subr.bf16.mxu0 0
        %3750 = vmatpush1.bf16.msra.mxu0 %v3727
        %3751 = vmatprep.subr.bf16.mxu0 0
        %3752 = vmatpush1.bf16.msra.mxu0 %v3728
        %3753 = vmatprep.subr.bf16.mxu0 0
        %3754 = vmatpush1.bf16.msra.mxu0 0
        %3755 = vmatprep.subr.bf16.mxu0 0
        %3756 = vmatpush1.bf16.msra.mxu0 0
        %3757 = vmatprep.subr.bf16.mxu0 0
        %3758 = vmatpush1.bf16.msra.mxu0 0
        %3759 = vmatprep.subr.bf16.mxu0 0
        %3760 = vmatpush1.bf16.msra.mxu0 0
        %3761 = vmatprep.subr.bf16.mxu0 0
        %3762 = vmatpush1.bf16.msra.mxu0 0
        %3763 = vmatprep.subr.bf16.mxu0 0
        %3764 = vmatpush1.bf16.msra.mxu0 0
        %3765 = vmatprep.subr.bf16.mxu0 0
        %3766 = vmatpush1.bf16.msra.mxu0 0
        %3767 = vmatprep.subr.bf16.mxu0 0
        %3768 = vmatpush1.bf16.msra.mxu0 0
        %3769 = vmatprep.mubr.bf16.mxu0 0
        %3770 = vmatmul.mubr.bf16.gmra.mrb[0].mxu0 %v3665
        %v3771 = vpop.f32.mrb[0].mxu0
        %v3772 = vadd.f32 0.0, %v3771
        %v3773 = vpop.f32.mrb[0].mxu0
        %v3774 = vpop.f32.mrb[0].mxu0
        %v3775 = vadd.f32 0.0, %v3774
        %v3776 = vpop.f32.mrb[0].mxu0
        %3777 = vmatprep.mubr.bf16.mxu0 0
        %3778 = vmatmul.mubr.bf16.gmra.mrb[0].mxu0 %v3666
        %v3779 = vpop.f32.mrb[0].mxu0
        %v3780 = vadd.f32 0.0, %v3779
        %v3781 = vpop.f32.mrb[0].mxu0
        %v3782 = vpop.f32.mrb[0].mxu0
        %v3783 = vadd.f32 0.0, %v3782
        %v3784 = vpop.f32.mrb[0].mxu0
        %3785 = vmatprep.mubr.bf16.mxu0 0
        %3786 = vmatmul.mubr.bf16.gmra.mrb[0].mxu0 %v3667
        %v3787 = vpop.f32.mrb[0].mxu0
        %v3788 = vadd.f32 0.0, %v3787
        %v3789 = vpop.f32.mrb[0].mxu0
        %v3790 = vpop.f32.mrb[0].mxu0
        %v3791 = vadd.f32 0.0, %v3790
        %v3792 = vpop.f32.mrb[0].mxu0
        %3793 = vmatprep.mubr.bf16.mxu0 0
        %3794 = vmatmul.mubr.bf16.gmra.mrb[0].mxu0 %v3668
        %v3795 = vpop.f32.mrb[0].mxu0
        %v3796 = vadd.f32 0.0, %v3795
        %v3797 = vpop.f32.mrb[0].mxu0
        %v3798 = vpop.f32.mrb[0].mxu0
        %v3799 = vadd.f32 0.0, %v3798
        %v3800 = vpop.f32.mrb[0].mxu0
        %3801 = vmatprep.mubr.bf16.mxu0 0
        %3802 = vmatmul.mubr.bf16.gmra.mrb[0].mxu0 %v3669
        %v3803 = vpop.f32.mrb[0].mxu0
        %v3804 = vadd.f32 0.0, %v3803
        %v3805 = vpop.f32.mrb[0].mxu0
        %v3806 = vpop.f32.mrb[0].mxu0
        %v3807 = vadd.f32 0.0, %v3806
        %v3808 = vpop.f32.mrb[0].mxu0
        %3809 = vmatprep.mubr.bf16.mxu0 0
        %3810 = vmatmul.mubr.bf16.gmra.mrb[0].mxu0 %v3670
        %v3811 = vpop.f32.mrb[0].mxu0
        %v3812 = vadd.f32 0.0, %v3811
        %v3813 = vpop.f32.mrb[0].mxu0
        %v3814 = vpop.f32.mrb[0].mxu0
        %v3815 = vadd.f32 0.0, %v3814
        %v3816 = vpop.f32.mrb[0].mxu0
        %3817 = vmatprep.mubr.bf16.mxu0 0
        %3818 = vmatmul.mubr.bf16.gmra.mrb[0].mxu0 %v3671
        %v3819 = vpop.f32.mrb[0].mxu0
        %v3820 = vadd.f32 0.0, %v3819
        %v3821 = vpop.f32.mrb[0].mxu0
        %v3822 = vpop.f32.mrb[0].mxu0
        %v3823 = vadd.f32 0.0, %v3822
        %v3824 = vpop.f32.mrb[0].mxu0
        %3825 = vmatprep.mubr.bf16.mxu0 0
        %3826 = vmatmul.mubr.bf16.gmra.mrb[0].mxu0 %v3672
        %v3827 = vpop.f32.mrb[0].mxu0
        %v3828 = vadd.f32 0.0, %v3827
        %v3829 = vpop.f32.mrb[0].mxu0
        %v3830 = vpop.f32.mrb[0].mxu0
        %v3831 = vadd.f32 0.0, %v3830
        %v3832 = vpop.f32.mrb[0].mxu0
        %3833 = vdwg.mxu0
        %v3834 = vadd.f32 %v3632, %v3772
        %v3835 = vadd.f32 %v3633, %v3775
        %v3836 = vadd.f32 %v3634, %v3780
        %v3837 = vadd.f32 %v3635, %v3783
        %v3838 = vadd.f32 %v3636, %v3788
        %v3839 = vadd.f32 %v3637, %v3791
        %v3840 = vadd.f32 %v3638, %v3796
        %v3841 = vadd.f32 %v3639, %v3799
        %v3842 = vadd.f32 %v3640, %v3804
        %v3843 = vadd.f32 %v3641, %v3807
        %v3844 = vadd.f32 %v3642, %v3812
        %v3845 = vadd.f32 %v3643, %v3815
        %v3846 = vadd.f32 %v3644, %v3820
        %v3847 = vadd.f32 %v3645, %v3823
        %v3848 = vadd.f32 %v3646, %v3828
        %v3849 = vadd.f32 %v3647, %v3831
        %v3850 = vld [vmem:[%s3648 + $0x1] sm:$0xff]
        %v3851 = vld [vmem:[%s3648 + $0x11] sm:$0xff]
        %v3852 = vld [vmem:[%s3648 + $0x21] sm:$0xff]
        %v3853 = vld [vmem:[%s3648 + $0x31] sm:$0xff]
        %v3854 = vld [vmem:[%s3648 + $0x41] sm:$0xff]
        %v3855 = vld [vmem:[%s3648 + $0x51] sm:$0xff]
        %v3856 = vld [vmem:[%s3648 + $0x61] sm:$0xff]
        %v3857 = vld [vmem:[%s3648 + $0x71] sm:$0xff]
        %v3858 = vld [vmem:[%s3648 + $0xa1] sm:$0xff]
        %v3859 = vld [vmem:[%s3648 + $0xb1] sm:$0xff]
        %v3860 = vld [vmem:[%s3648 + $0xc1] sm:$0xff]
        %v3861 = vld [vmem:[%s3648 + $0xd1] sm:$0xff]
        %v3862 = vld [vmem:[%s3648 + $0xe1] sm:$0xff]
        %v3863 = vld [vmem:[%s3648 + $0xf1] sm:$0xff]
        %v3864 = vld [vmem:[%s3648 + $0x101] sm:$0xff]
        %v3865 = vld [vmem:[%s3648 + $0x111] sm:$0xff]
        %v3866 = vpack.c.bf16 %v3851, %v3850
        %v3867 = vpack.c.bf16 %v3853, %v3852
        %v3868 = vpack.c.bf16 %v3855, %v3854
        %v3869 = vpack.c.bf16 %v3857, %v3856
        %v3870 = vpack.c.bf16 %v3859, %v3858
        %v3871 = vpack.c.bf16 %v3861, %v3860
        %v3872 = vpack.c.bf16 %v3863, %v3862
        %v3873 = vpack.c.bf16 %v3865, %v3864
        %v3874 = vld [vmem:[%s1976] sm:$0xf]
        %v3875 = vld [vmem:[%s1976 + $0x4] sm:$0xf]
        %v3876 = vld [vmem:[%s1976 + $0x8] sm:$0xf]
        %v3877 = vld [vmem:[%s1976 + $0xc] sm:$0xf]
        %v3878 = vld [vmem:[%s1976 + $0x10] sm:$0xf]
        %v3879 = vld [vmem:[%s1976 + $0x14] sm:$0xf]
        %v3880 = vld [vmem:[%s1976 + $0x18] sm:$0xf]
        %v3881 = vld [vmem:[%s1976 + $0x1c] sm:$0xf]
        %v3882 = vld [vmem:[%s1976 + $0x20] sm:$0xf]
        %v3883 = vld [vmem:[%s1976 + $0x24] sm:$0xf]
        %v3884 = vld [vmem:[%s1976 + $0x28] sm:$0xf]
        %v3885 = vld [vmem:[%s1976 + $0x2c] sm:$0xf]
        %v3886 = vld [vmem:[%s1976 + $0x30] sm:$0xf]
        %v3887 = vld [vmem:[%s1976 + $0x34] sm:$0xf]
        %v3888 = vld [vmem:[%s1976 + $0x38] sm:$0xf]
        %v3889 = vld [vmem:[%s1976 + $0x3c] sm:$0xf]
        %v3906 = vunpack.c.l.b16 %v3874
        %v3907 = vunpack.c.l.b16 %v3875
        %v3908 = vunpack.c.l.b16 %v3876
        %v3909 = vunpack.c.l.b16 %v3877
        %v3910 = vunpack.c.l.b16 %v3878
        %v3911 = vunpack.c.l.b16 %v3879
        %v3912 = vunpack.c.l.b16 %v3880
        %v3913 = vunpack.c.l.b16 %v3881
        %v3914 = vunpack.c.l.b16 %v3882
        %v3915 = vunpack.c.l.b16 %v3883
        %v3916 = vunpack.c.l.b16 %v3884
        %v3917 = vunpack.c.l.b16 %v3885
        %v3918 = vunpack.c.l.b16 %v3886
        %v3919 = vunpack.c.l.b16 %v3887
        %v3920 = vunpack.c.l.b16 %v3888
        %v3921 = vunpack.c.l.b16 %v3889
        %v3922 = vpack.c.b16 %v3907, %v3906
        %v3923 = vpack.c.b16 %v3909, %v3908
        %v3924 = vpack.c.b16 %v3911, %v3910
        %v3925 = vpack.c.b16 %v3913, %v3912
        %v3926 = vpack.c.b16 %v3915, %v3914
        %v3927 = vpack.c.b16 %v3917, %v3916
        %v3928 = vpack.c.b16 %v3919, %v3918
        %v3929 = vpack.c.b16 %v3921, %v3920
        %3938 = vmatprep.subr.bf16.mxu0 0
        %3939 = vmatpush1.bf16.msra.mxu0 %v3922
        %3940 = vmatprep.subr.bf16.mxu0 0
        %3941 = vmatpush1.bf16.msra.mxu0 %v3923
        %3942 = vmatprep.subr.bf16.mxu0 0
        %3943 = vmatpush1.bf16.msra.mxu0 %v3924
        %3944 = vmatprep.subr.bf16.mxu0 0
        %3945 = vmatpush1.bf16.msra.mxu0 %v3925
        %3946 = vmatprep.subr.bf16.mxu0 0
        %3947 = vmatpush1.bf16.msra.mxu0 %v3926
        %3948 = vmatprep.subr.bf16.mxu0 0
        %3949 = vmatpush1.bf16.msra.mxu0 %v3927
        %3950 = vmatprep.subr.bf16.mxu0 0
        %3951 = vmatpush1.bf16.msra.mxu0 %v3928
        %3952 = vmatprep.subr.bf16.mxu0 0
        %3953 = vmatpush1.bf16.msra.mxu0 %v3929
        %3954 = vmatprep.subr.bf16.mxu0 0
        %3955 = vmatpush1.bf16.msra.mxu0 0
        %3956 = vmatprep.subr.bf16.mxu0 0
        %3957 = vmatpush1.bf16.msra.mxu0 0
        %3958 = vmatprep.subr.bf16.mxu0 0
        %3959 = vmatpush1.bf16.msra.mxu0 0
        %3960 = vmatprep.subr.bf16.mxu0 0
        %3961 = vmatpush1.bf16.msra.mxu0 0
        %3962 = vmatprep.subr.bf16.mxu0 0
        %3963 = vmatpush1.bf16.msra.mxu0 0
        %3964 = vmatprep.subr.bf16.mxu0 0
        %3965 = vmatpush1.bf16.msra.mxu0 0
        %3966 = vmatprep.subr.bf16.mxu0 0
        %3967 = vmatpush1.bf16.msra.mxu0 0
        %3968 = vmatprep.subr.bf16.mxu0 0
        %3969 = vmatpush1.bf16.msra.mxu0 0
        %3970 = vmatprep.mubr.bf16.mxu0 0
        %3971 = vmatmul.mubr.bf16.gmra.mrb[0].mxu0 %v3866
        %v3972 = vpop.f32.mrb[0].mxu0
        %v3973 = vadd.f32 0.0, %v3972
        %v3974 = vpop.f32.mrb[0].mxu0
        %v3975 = vpop.f32.mrb[0].mxu0
        %v3976 = vadd.f32 0.0, %v3975
        %v3977 = vpop.f32.mrb[0].mxu0
        %3978 = vmatprep.mubr.bf16.mxu0 0
        %3979 = vmatmul.mubr.bf16.gmra.mrb[0].mxu0 %v3867
        %v3980 = vpop.f32.mrb[0].mxu0
        %v3981 = vadd.f32 0.0, %v3980
        %v3982 = vpop.f32.mrb[0].mxu0
        %v3983 = vpop.f32.mrb[0].mxu0
        %v3984 = vadd.f32 0.0, %v3983
        %v3985 = vpop.f32.mrb[0].mxu0
        %3986 = vmatprep.mubr.bf16.mxu0 0
        %3987 = vmatmul.mubr.bf16.gmra.mrb[0].mxu0 %v3868
        %v3988 = vpop.f32.mrb[0].mxu0
        %v3989 = vadd.f32 0.0, %v3988
        %v3990 = vpop.f32.mrb[0].mxu0
        %v3991 = vpop.f32.mrb[0].mxu0
        %v3992 = vadd.f32 0.0, %v3991
        %v3993 = vpop.f32.mrb[0].mxu0
        %3994 = vmatprep.mubr.bf16.mxu0 0
        %3995 = vmatmul.mubr.bf16.gmra.mrb[0].mxu0 %v3869
        %v3996 = vpop.f32.mrb[0].mxu0
        %v3997 = vadd.f32 0.0, %v3996
        %v3998 = vpop.f32.mrb[0].mxu0
        %v3999 = vpop.f32.mrb[0].mxu0
        %v4000 = vadd.f32 0.0, %v3999
        %v4001 = vpop.f32.mrb[0].mxu0
        %4002 = vmatprep.mubr.bf16.mxu0 0
        %4003 = vmatmul.mubr.bf16.gmra.mrb[0].mxu0 %v3870
        %v4004 = vpop.f32.mrb[0].mxu0
        %v4005 = vadd.f32 0.0, %v4004
        %v4006 = vpop.f32.mrb[0].mxu0
        %v4007 = vpop.f32.mrb[0].mxu0
        %v4008 = vadd.f32 0.0, %v4007
        %v4009 = vpop.f32.mrb[0].mxu0
        %4010 = vmatprep.mubr.bf16.mxu0 0
        %4011 = vmatmul.mubr.bf16.gmra.mrb[0].mxu0 %v3871
        %v4012 = vpop.f32.mrb[0].mxu0
        %v4013 = vadd.f32 0.0, %v4012
        %v4014 = vpop.f32.mrb[0].mxu0
        %v4015 = vpop.f32.mrb[0].mxu0
        %v4016 = vadd.f32 0.0, %v4015
        %v4017 = vpop.f32.mrb[0].mxu0
        %4018 = vmatprep.mubr.bf16.mxu0 0
        %4019 = vmatmul.mubr.bf16.gmra.mrb[0].mxu0 %v3872
        %v4020 = vpop.f32.mrb[0].mxu0
        %v4021 = vadd.f32 0.0, %v4020
        %v4022 = vpop.f32.mrb[0].mxu0
        %v4023 = vpop.f32.mrb[0].mxu0
        %v4024 = vadd.f32 0.0, %v4023
        %v4025 = vpop.f32.mrb[0].mxu0
        %4026 = vmatprep.mubr.bf16.mxu0 0
        %4027 = vmatmul.mubr.bf16.gmra.mrb[0].mxu0 %v3873
        %v4028 = vpop.f32.mrb[0].mxu0
        %v4029 = vadd.f32 0.0, %v4028
        %v4030 = vpop.f32.mrb[0].mxu0
        %v4031 = vpop.f32.mrb[0].mxu0
        %v4032 = vadd.f32 0.0, %v4031
        %v4033 = vpop.f32.mrb[0].mxu0
        %4034 = vdwg.mxu0
        %v4035 = vadd.f32 %v3834, %v3973
        %v4036 = vadd.f32 %v3835, %v3976
        %v4037 = vadd.f32 %v3836, %v3981
        %v4038 = vadd.f32 %v3837, %v3984
        %v4039 = vadd.f32 %v3838, %v3989
        %v4040 = vadd.f32 %v3839, %v3992
        %v4041 = vadd.f32 %v3840, %v3997
        %v4042 = vadd.f32 %v3841, %v4000
        %v4043 = vadd.f32 %v3842, %v4005
        %v4044 = vadd.f32 %v3843, %v4008
        %v4045 = vadd.f32 %v3844, %v4013
        %v4046 = vadd.f32 %v3845, %v4016
        %v4047 = vadd.f32 %v3846, %v4021
        %v4048 = vadd.f32 %v3847, %v4024
        %v4049 = vadd.f32 %v3848, %v4029
        %v4050 = vadd.f32 %v3849, %v4032
        %v4051 = vld [vmem:[%s3648 + $0x2] sm:$0xff]
        %v4052 = vld [vmem:[%s3648 + $0x12] sm:$0xff]
        %v4053 = vld [vmem:[%s3648 + $0x22] sm:$0xff]
        %v4054 = vld [vmem:[%s3648 + $0x32] sm:$0xff]
        %v4055 = vld [vmem:[%s3648 + $0x42] sm:$0xff]
        %v4056 = vld [vmem:[%s3648 + $0x52] sm:$0xff]
        %v4057 = vld [vmem:[%s3648 + $0x62] sm:$0xff]
        %v4058 = vld [vmem:[%s3648 + $0x72] sm:$0xff]
        %v4059 = vld [vmem:[%s3648 + $0xa2] sm:$0xff]
        %v4060 = vld [vmem:[%s3648 + $0xb2] sm:$0xff]
        %v4061 = vld [vmem:[%s3648 + $0xc2] sm:$0xff]
        %v4062 = vld [vmem:[%s3648 + $0xd2] sm:$0xff]
        %v4063 = vld [vmem:[%s3648 + $0xe2] sm:$0xff]
        %v4064 = vld [vmem:[%s3648 + $0xf2] sm:$0xff]
        %v4065 = vld [vmem:[%s3648 + $0x102] sm:$0xff]
        %v4066 = vld [vmem:[%s3648 + $0x112] sm:$0xff]
        %v4067 = vpack.c.bf16 %v4052, %v4051
        %v4068 = vpack.c.bf16 %v4054, %v4053
        %v4069 = vpack.c.bf16 %v4056, %v4055
        %v4070 = vpack.c.bf16 %v4058, %v4057
        %v4071 = vpack.c.bf16 %v4060, %v4059
        %v4072 = vpack.c.bf16 %v4062, %v4061
        %v4073 = vpack.c.bf16 %v4064, %v4063
        %v4074 = vpack.c.bf16 %v4066, %v4065
        %v4075 = vld [vmem:[%s2178] sm:$0xf]
        %v4076 = vld [vmem:[%s2178 + $0x4] sm:$0xf]
        %v4077 = vld [vmem:[%s2178 + $0x8] sm:$0xf]
        %v4078 = vld [vmem:[%s2178 + $0xc] sm:$0xf]
        %v4079 = vld [vmem:[%s2178 + $0x10] sm:$0xf]
        %v4080 = vld [vmem:[%s2178 + $0x14] sm:$0xf]
        %v4081 = vld [vmem:[%s2178 + $0x18] sm:$0xf]
        %v4082 = vld [vmem:[%s2178 + $0x1c] sm:$0xf]
        %v4083 = vld [vmem:[%s2178 + $0x20] sm:$0xf]
        %v4084 = vld [vmem:[%s2178 + $0x24] sm:$0xf]
        %v4085 = vld [vmem:[%s2178 + $0x28] sm:$0xf]
        %v4086 = vld [vmem:[%s2178 + $0x2c] sm:$0xf]
        %v4087 = vld [vmem:[%s2178 + $0x30] sm:$0xf]
        %v4088 = vld [vmem:[%s2178 + $0x34] sm:$0xf]
        %v4089 = vld [vmem:[%s2178 + $0x38] sm:$0xf]
        %v4090 = vld [vmem:[%s2178 + $0x3c] sm:$0xf]
        %v4107 = vunpack.c.l.b16 %v4075
        %v4108 = vunpack.c.l.b16 %v4076
        %v4109 = vunpack.c.l.b16 %v4077
        %v4110 = vunpack.c.l.b16 %v4078
        %v4111 = vunpack.c.l.b16 %v4079
        %v4112 = vunpack.c.l.b16 %v4080
        %v4113 = vunpack.c.l.b16 %v4081
        %v4114 = vunpack.c.l.b16 %v4082
        %v4115 = vunpack.c.l.b16 %v4083
        %v4116 = vunpack.c.l.b16 %v4084
        %v4117 = vunpack.c.l.b16 %v4085
        %v4118 = vunpack.c.l.b16 %v4086
        %v4119 = vunpack.c.l.b16 %v4087
        %v4120 = vunpack.c.l.b16 %v4088
        %v4121 = vunpack.c.l.b16 %v4089
        %v4122 = vunpack.c.l.b16 %v4090
        %v4123 = vpack.c.b16 %v4108, %v4107
        %v4124 = vpack.c.b16 %v4110, %v4109
        %v4125 = vpack.c.b16 %v4112, %v4111
        %v4126 = vpack.c.b16 %v4114, %v4113
        %v4127 = vpack.c.b16 %v4116, %v4115
        %v4128 = vpack.c.b16 %v4118, %v4117
        %v4129 = vpack.c.b16 %v4120, %v4119
        %v4130 = vpack.c.b16 %v4122, %v4121
        %4139 = vmatprep.subr.bf16.mxu0 0
        %4140 = vmatpush1.bf16.msra.mxu0 %v4123
        %4141 = vmatprep.subr.bf16.mxu0 0
        %4142 = vmatpush1.bf16.msra.mxu0 %v4124
        %4143 = vmatprep.subr.bf16.mxu0 0
        %4144 = vmatpush1.bf16.msra.mxu0 %v4125
        %4145 = vmatprep.subr.bf16.mxu0 0
        %4146 = vmatpush1.bf16.msra.mxu0 %v4126
        %4147 = vmatprep.subr.bf16.mxu0 0
        %4148 = vmatpush1.bf16.msra.mxu0 %v4127
        %4149 = vmatprep.subr.bf16.mxu0 0
        %4150 = vmatpush1.bf16.msra.mxu0 %v4128
        %4151 = vmatprep.subr.bf16.mxu0 0
        %4152 = vmatpush1.bf16.msra.mxu0 %v4129
        %4153 = vmatprep.subr.bf16.mxu0 0
        %4154 = vmatpush1.bf16.msra.mxu0 %v4130
        %4155 = vmatprep.subr.bf16.mxu0 0
        %4156 = vmatpush1.bf16.msra.mxu0 0
        %4157 = vmatprep.subr.bf16.mxu0 0
        %4158 = vmatpush1.bf16.msra.mxu0 0
        %4159 = vmatprep.subr.bf16.mxu0 0
        %4160 = vmatpush1.bf16.msra.mxu0 0
        %4161 = vmatprep.subr.bf16.mxu0 0
        %4162 = vmatpush1.bf16.msra.mxu0 0
        %4163 = vmatprep.subr.bf16.mxu0 0
        %4164 = vmatpush1.bf16.msra.mxu0 0
        %4165 = vmatprep.subr.bf16.mxu0 0
        %4166 = vmatpush1.bf16.msra.mxu0 0
        %4167 = vmatprep.subr.bf16.mxu0 0
        %4168 = vmatpush1.bf16.msra.mxu0 0
        %4169 = vmatprep.subr.bf16.mxu0 0
        %4170 = vmatpush1.bf16.msra.mxu0 0
        %4171 = vmatprep.mubr.bf16.mxu0 0
        %4172 = vmatmul.mubr.bf16.gmra.mrb[0].mxu0 %v4067
        %v4173 = vpop.f32.mrb[0].mxu0
        %v4174 = vadd.f32 0.0, %v4173
        %v4175 = vpop.f32.mrb[0].mxu0
        %v4176 = vpop.f32.mrb[0].mxu0
        %v4177 = vadd.f32 0.0, %v4176
        %v4178 = vpop.f32.mrb[0].mxu0
        %4179 = vmatprep.mubr.bf16.mxu0 0
        %4180 = vmatmul.mubr.bf16.gmra.mrb[0].mxu0 %v4068
        %v4181 = vpop.f32.mrb[0].mxu0
        %v4182 = vadd.f32 0.0, %v4181
        %v4183 = vpop.f32.mrb[0].mxu0
        %v4184 = vpop.f32.mrb[0].mxu0
        %v4185 = vadd.f32 0.0, %v4184
        %v4186 = vpop.f32.mrb[0].mxu0
        %4187 = vmatprep.mubr.bf16.mxu0 0
        %4188 = vmatmul.mubr.bf16.gmra.mrb[0].mxu0 %v4069
        %v4189 = vpop.f32.mrb[0].mxu0
        %v4190 = vadd.f32 0.0, %v4189
        %v4191 = vpop.f32.mrb[0].mxu0
        %v4192 = vpop.f32.mrb[0].mxu0
        %v4193 = vadd.f32 0.0, %v4192
        %v4194 = vpop.f32.mrb[0].mxu0
        %4195 = vmatprep.mubr.bf16.mxu0 0
        %4196 = vmatmul.mubr.bf16.gmra.mrb[0].mxu0 %v4070
        %v4197 = vpop.f32.mrb[0].mxu0
        %v4198 = vadd.f32 0.0, %v4197
        %v4199 = vpop.f32.mrb[0].mxu0
        %v4200 = vpop.f32.mrb[0].mxu0
        %v4201 = vadd.f32 0.0, %v4200
        %v4202 = vpop.f32.mrb[0].mxu0
        %4203 = vmatprep.mubr.bf16.mxu0 0
        %4204 = vmatmul.mubr.bf16.gmra.mrb[0].mxu0 %v4071
        %v4205 = vpop.f32.mrb[0].mxu0
        %v4206 = vadd.f32 0.0, %v4205
        %v4207 = vpop.f32.mrb[0].mxu0
        %v4208 = vpop.f32.mrb[0].mxu0
        %v4209 = vadd.f32 0.0, %v4208
        %v4210 = vpop.f32.mrb[0].mxu0
        %4211 = vmatprep.mubr.bf16.mxu0 0
        %4212 = vmatmul.mubr.bf16.gmra.mrb[0].mxu0 %v4072
        %v4213 = vpop.f32.mrb[0].mxu0
        %v4214 = vadd.f32 0.0, %v4213
        %v4215 = vpop.f32.mrb[0].mxu0
        %v4216 = vpop.f32.mrb[0].mxu0
        %v4217 = vadd.f32 0.0, %v4216
        %v4218 = vpop.f32.mrb[0].mxu0
        %4219 = vmatprep.mubr.bf16.mxu0 0
        %4220 = vmatmul.mubr.bf16.gmra.mrb[0].mxu0 %v4073
        %v4221 = vpop.f32.mrb[0].mxu0
        %v4222 = vadd.f32 0.0, %v4221
        %v4223 = vpop.f32.mrb[0].mxu0
        %v4224 = vpop.f32.mrb[0].mxu0
        %v4225 = vadd.f32 0.0, %v4224
        %v4226 = vpop.f32.mrb[0].mxu0
        %4227 = vmatprep.mubr.bf16.mxu0 0
        %4228 = vmatmul.mubr.bf16.gmra.mrb[0].mxu0 %v4074
        %v4229 = vpop.f32.mrb[0].mxu0
        %v4230 = vadd.f32 0.0, %v4229
        %v4231 = vpop.f32.mrb[0].mxu0
        %v4232 = vpop.f32.mrb[0].mxu0
        %v4233 = vadd.f32 0.0, %v4232
        %v4234 = vpop.f32.mrb[0].mxu0
        %4235 = vdwg.mxu0
        %v4236 = vadd.f32 %v4035, %v4174
        %v4237 = vadd.f32 %v4036, %v4177
        %v4238 = vadd.f32 %v4037, %v4182
        %v4239 = vadd.f32 %v4038, %v4185
        %v4240 = vadd.f32 %v4039, %v4190
        %v4241 = vadd.f32 %v4040, %v4193
        %v4242 = vadd.f32 %v4041, %v4198
        %v4243 = vadd.f32 %v4042, %v4201
        %v4244 = vadd.f32 %v4043, %v4206
        %v4245 = vadd.f32 %v4044, %v4209
        %v4246 = vadd.f32 %v4045, %v4214
        %v4247 = vadd.f32 %v4046, %v4217
        %v4248 = vadd.f32 %v4047, %v4222
        %v4249 = vadd.f32 %v4048, %v4225
        %v4250 = vadd.f32 %v4049, %v4230
        %v4251 = vadd.f32 %v4050, %v4233
        %v4252 = vld [vmem:[%s2] sm:$0x1]
        %v4254 = vlaneseq
        %v4255 = vshrl.u32 %v4254, 7
        %v4256 = vsub.s32 0, %v4255
        %v4257 = vrot.slane %v4252, %v4256
        %v4259 = vadd.f32 %v4236, %v4257
        %v4260 = vadd.f32 %v4237, %v4257
        %v4261 = vadd.f32 %v4238, %v4257
        %v4262 = vadd.f32 %v4239, %v4257
        %v4263 = vadd.f32 %v4240, %v4257
        %v4264 = vadd.f32 %v4241, %v4257
        %v4265 = vadd.f32 %v4242, %v4257
        %v4266 = vadd.f32 %v4243, %v4257
        %v4267 = vadd.f32 %v4244, %v4257
        %v4268 = vadd.f32 %v4245, %v4257
        %v4269 = vadd.f32 %v4246, %v4257
        %v4270 = vadd.f32 %v4247, %v4257
        %v4271 = vadd.f32 %v4248, %v4257
        %v4272 = vadd.f32 %v4249, %v4257
        %v4273 = vadd.f32 %v4250, %v4257
        %v4274 = vadd.f32 %v4251, %v4257
        %v4275 = vmul.f32 %v4259, 0.1
        %v4276 = vmul.f32 %v4260, 0.1
        %v4277 = vmul.f32 %v4261, 0.1
        %v4278 = vmul.f32 %v4262, 0.1
        %v4279 = vmul.f32 %v4263, 0.1
        %v4280 = vmul.f32 %v4264, 0.1
        %v4281 = vmul.f32 %v4265, 0.1
        %v4282 = vmul.f32 %v4266, 0.1
        %v4283 = vmul.f32 %v4267, 0.1
        %v4284 = vmul.f32 %v4268, 0.1
        %v4285 = vmul.f32 %v4269, 0.1
        %v4286 = vmul.f32 %v4270, 0.1
        %v4287 = vmul.f32 %v4271, 0.1
        %v4288 = vmul.f32 %v4272, 0.1
        %v4289 = vmul.f32 %v4273, 0.1
        %v4290 = vmul.f32 %v4274, 0.1
        %v4291 = vmax.f32 %v4259, %v4275
        %v4292 = vmax.f32 %v4260, %v4276
        %v4293 = vmax.f32 %v4261, %v4277
        %v4294 = vmax.f32 %v4262, %v4278
        %v4295 = vmax.f32 %v4263, %v4279
        %v4296 = vmax.f32 %v4264, %v4280
        %v4297 = vmax.f32 %v4265, %v4281
        %v4298 = vmax.f32 %v4266, %v4282
        %v4299 = vmax.f32 %v4267, %v4283
        %v4300 = vmax.f32 %v4268, %v4284
        %v4301 = vmax.f32 %v4269, %v4285
        %v4302 = vmax.f32 %v4270, %v4286
        %v4303 = vmax.f32 %v4271, %v4287
        %v4304 = vmax.f32 %v4272, %v4288
        %v4305 = vmax.f32 %v4273, %v4289
        %v4306 = vmax.f32 %v4274, %v4290
        %v4307 = vld [vmem:[%s3] sm:$0x1]
        %v4309 = vlaneseq
        %v4310 = vshrl.u32 %v4309, 7
        %v4311 = vsub.s32 0, %v4310
        %v4312 = vrot.slane %v4307, %v4311
        %v4314 = vmul.f32 %v4291, %v4312
        %v4315 = vmul.f32 %v4292, %v4312
        %v4316 = vmul.f32 %v4293, %v4312
        %v4317 = vmul.f32 %v4294, %v4312
        %v4318 = vmul.f32 %v4295, %v4312
        %v4319 = vmul.f32 %v4296, %v4312
        %v4320 = vmul.f32 %v4297, %v4312
        %v4321 = vmul.f32 %v4298, %v4312
        %v4322 = vmul.f32 %v4299, %v4312
        %v4323 = vmul.f32 %v4300, %v4312
        %v4324 = vmul.f32 %v4301, %v4312
        %v4325 = vmul.f32 %v4302, %v4312
        %v4326 = vmul.f32 %v4303, %v4312
        %v4327 = vmul.f32 %v4304, %v4312
        %v4328 = vmul.f32 %v4305, %v4312
        %v4329 = vmul.f32 %v4306, %v4312
        %v4330 = vld [vmem:[%s4] sm:$0x1]
        %v4332 = vlaneseq
        %v4333 = vshrl.u32 %v4332, 7
        %v4334 = vsub.s32 0, %v4333
        %v4335 = vrot.slane %v4330, %v4334
        %v4337 = vadd.f32 %v4314, %v4335
        %v4338 = vadd.f32 %v4315, %v4335
        %v4339 = vadd.f32 %v4316, %v4335
        %v4340 = vadd.f32 %v4317, %v4335
        %v4341 = vadd.f32 %v4318, %v4335
        %v4342 = vadd.f32 %v4319, %v4335
        %v4343 = vadd.f32 %v4320, %v4335
        %v4344 = vadd.f32 %v4321, %v4335
        %v4345 = vadd.f32 %v4322, %v4335
        %v4346 = vadd.f32 %v4323, %v4335
        %v4347 = vadd.f32 %v4324, %v4335
        %v4348 = vadd.f32 %v4325, %v4335
        %v4349 = vadd.f32 %v4326, %v4335
        %v4350 = vadd.f32 %v4327, %v4335
        %v4351 = vadd.f32 %v4328, %v4335
        %v4352 = vadd.f32 %v4329, %v4335
        %4353 = vst [vmem:[%s520 + $0x1] sm:$0xff] %v4337
        %4354 = vst [vmem:[%s520 + $0x11] sm:$0xff] %v4338
        %4355 = vst [vmem:[%s520 + $0x21] sm:$0xff] %v4339
        %4356 = vst [vmem:[%s520 + $0x31] sm:$0xff] %v4340
        %4357 = vst [vmem:[%s520 + $0x41] sm:$0xff] %v4341
        %4358 = vst [vmem:[%s520 + $0x51] sm:$0xff] %v4342
        %4359 = vst [vmem:[%s520 + $0x61] sm:$0xff] %v4343
        %4360 = vst [vmem:[%s520 + $0x71] sm:$0xff] %v4344
        %4361 = vst [vmem:[%s520 + $0xa1] sm:$0xff] %v4345
        %4362 = vst [vmem:[%s520 + $0xb1] sm:$0xff] %v4346
        %4363 = vst [vmem:[%s520 + $0xc1] sm:$0xff] %v4347
        %4364 = vst [vmem:[%s520 + $0xd1] sm:$0xff] %v4348
        %4365 = vst [vmem:[%s520 + $0xe1] sm:$0xff] %v4349
        %4366 = vst [vmem:[%s520 + $0xf1] sm:$0xff] %v4350
        %4367 = vst [vmem:[%s520 + $0x101] sm:$0xff] %v4351
        %4368 = vst [vmem:[%s520 + $0x111] sm:$0xff] %v4352
        %v4369 = vld [vmem:[#allocation2] sm:$0xff]
        %v4370 = vld [vmem:[#allocation2 + $0x10] sm:$0xff]
        %v4371 = vld [vmem:[#allocation2 + $0x20] sm:$0xff]
        %v4372 = vld [vmem:[#allocation2 + $0x30] sm:$0xff]
        %v4373 = vld [vmem:[#allocation2 + $0x40] sm:$0xff]
        %v4374 = vld [vmem:[#allocation2 + $0x50] sm:$0xff]
        %v4375 = vld [vmem:[#allocation2 + $0x60] sm:$0xff]
        %v4376 = vld [vmem:[#allocation2 + $0x70] sm:$0xff]
        %v4377 = vld [vmem:[#allocation2 + $0xa0] sm:$0xff]
        %v4378 = vld [vmem:[#allocation2 + $0xb0] sm:$0xff]
        %v4379 = vld [vmem:[#allocation2 + $0xc0] sm:$0xff]
        %v4380 = vld [vmem:[#allocation2 + $0xd0] sm:$0xff]
        %v4381 = vld [vmem:[#allocation2 + $0xe0] sm:$0xff]
        %v4382 = vld [vmem:[#allocation2 + $0xf0] sm:$0xff]
        %v4383 = vld [vmem:[#allocation2 + $0x100] sm:$0xff]
        %v4384 = vld [vmem:[#allocation2 + $0x110] sm:$0xff]
        %v4385 = vpack.c.bf16 %v4370, %v4369
        %v4386 = vpack.c.bf16 %v4372, %v4371
        %v4387 = vpack.c.bf16 %v4374, %v4373
        %v4388 = vpack.c.bf16 %v4376, %v4375
        %v4389 = vpack.c.bf16 %v4378, %v4377
        %v4390 = vpack.c.bf16 %v4380, %v4379
        %v4391 = vpack.c.bf16 %v4382, %v4381
        %v4392 = vpack.c.bf16 %v4384, %v4383
        %s4393 = scalar_lea.vmem %s1, 576
        %v4394 = vld [vmem:[%s4393] sm:$0xf]
        %v4395 = vld [vmem:[%s4393 + $0x4] sm:$0xf]
        %v4396 = vld [vmem:[%s4393 + $0x8] sm:$0xf]
        %v4397 = vld [vmem:[%s4393 + $0xc] sm:$0xf]
        %v4398 = vld [vmem:[%s4393 + $0x10] sm:$0xf]
        %v4399 = vld [vmem:[%s4393 + $0x14] sm:$0xf]
        %v4400 = vld [vmem:[%s4393 + $0x18] sm:$0xf]
        %v4401 = vld [vmem:[%s4393 + $0x1c] sm:$0xf]
        %v4402 = vld [vmem:[%s4393 + $0x20] sm:$0xf]
        %v4403 = vld [vmem:[%s4393 + $0x24] sm:$0xf]
        %v4404 = vld [vmem:[%s4393 + $0x28] sm:$0xf]
        %v4405 = vld [vmem:[%s4393 + $0x2c] sm:$0xf]
        %v4406 = vld [vmem:[%s4393 + $0x30] sm:$0xf]
        %v4407 = vld [vmem:[%s4393 + $0x34] sm:$0xf]
        %v4408 = vld [vmem:[%s4393 + $0x38] sm:$0xf]
        %v4409 = vld [vmem:[%s4393 + $0x3c] sm:$0xf]
        %v4410 = vld [vmem:[#allocation2 + $0x1] sm:$0xff]
        %v4411 = vld [vmem:[#allocation2 + $0x11] sm:$0xff]
        %v4412 = vld [vmem:[#allocation2 + $0x21] sm:$0xff]
        %v4413 = vld [vmem:[#allocation2 + $0x31] sm:$0xff]
        %v4414 = vld [vmem:[#allocation2 + $0x41] sm:$0xff]
        %v4415 = vld [vmem:[#allocation2 + $0x51] sm:$0xff]
        %v4416 = vld [vmem:[#allocation2 + $0x61] sm:$0xff]
        %v4417 = vld [vmem:[#allocation2 + $0x71] sm:$0xff]
        %v4418 = vld [vmem:[#allocation2 + $0xa1] sm:$0xff]
        %v4419 = vld [vmem:[#allocation2 + $0xb1] sm:$0xff]
        %v4420 = vld [vmem:[#allocation2 + $0xc1] sm:$0xff]
        %v4421 = vld [vmem:[#allocation2 + $0xd1] sm:$0xff]
        %v4422 = vld [vmem:[#allocation2 + $0xe1] sm:$0xff]
        %v4423 = vld [vmem:[#allocation2 + $0xf1] sm:$0xff]
        %v4424 = vld [vmem:[#allocation2 + $0x101] sm:$0xff]
        %v4425 = vld [vmem:[#allocation2 + $0x111] sm:$0xff]
        %v4426 = vpack.c.bf16 %v4411, %v4410
        %v4427 = vpack.c.bf16 %v4413, %v4412
        %v4428 = vpack.c.bf16 %v4415, %v4414
        %v4429 = vpack.c.bf16 %v4417, %v4416
        %v4430 = vpack.c.bf16 %v4419, %v4418
        %v4431 = vpack.c.bf16 %v4421, %v4420
        %v4432 = vpack.c.bf16 %v4423, %v4422
        %v4433 = vpack.c.bf16 %v4425, %v4424
        %s4434 = scalar_lea.vmem %s1, 640
        %v4435 = vld [vmem:[%s4434] sm:$0xf]
        %v4436 = vld [vmem:[%s4434 + $0x4] sm:$0xf]
        %v4437 = vld [vmem:[%s4434 + $0x8] sm:$0xf]
        %v4438 = vld [vmem:[%s4434 + $0xc] sm:$0xf]
        %v4439 = vld [vmem:[%s4434 + $0x10] sm:$0xf]
        %v4440 = vld [vmem:[%s4434 + $0x14] sm:$0xf]
        %v4441 = vld [vmem:[%s4434 + $0x18] sm:$0xf]
        %v4442 = vld [vmem:[%s4434 + $0x1c] sm:$0xf]
        %v4443 = vld [vmem:[%s4434 + $0x20] sm:$0xf]
        %v4444 = vld [vmem:[%s4434 + $0x24] sm:$0xf]
        %v4445 = vld [vmem:[%s4434 + $0x28] sm:$0xf]
        %v4446 = vld [vmem:[%s4434 + $0x2c] sm:$0xf]
        %v4447 = vld [vmem:[%s4434 + $0x30] sm:$0xf]
        %v4448 = vld [vmem:[%s4434 + $0x34] sm:$0xf]
        %v4449 = vld [vmem:[%s4434 + $0x38] sm:$0xf]
        %v4450 = vld [vmem:[%s4434 + $0x3c] sm:$0xf]
        %v4467 = vunpack.c.l.b16 %v4435
        %v4468 = vunpack.c.l.b16 %v4436
        %v4469 = vunpack.c.l.b16 %v4437
        %v4470 = vunpack.c.l.b16 %v4438
        %v4471 = vunpack.c.l.b16 %v4439
        %v4472 = vunpack.c.l.b16 %v4440
        %v4473 = vunpack.c.l.b16 %v4441
        %v4474 = vunpack.c.l.b16 %v4442
        %v4475 = vunpack.c.l.b16 %v4443
        %v4476 = vunpack.c.l.b16 %v4444
        %v4477 = vunpack.c.l.b16 %v4445
        %v4478 = vunpack.c.l.b16 %v4446
        %v4479 = vunpack.c.l.b16 %v4447
        %v4480 = vunpack.c.l.b16 %v4448
        %v4481 = vunpack.c.l.b16 %v4449
        %v4482 = vunpack.c.l.b16 %v4450
        %v4483 = vpack.c.b16 %v4468, %v4467
        %v4484 = vpack.c.b16 %v4470, %v4469
        %v4485 = vpack.c.b16 %v4472, %v4471
        %v4486 = vpack.c.b16 %v4474, %v4473
        %v4487 = vpack.c.b16 %v4476, %v4475
        %v4488 = vpack.c.b16 %v4478, %v4477
        %v4489 = vpack.c.b16 %v4480, %v4479
        %v4490 = vpack.c.b16 %v4482, %v4481
        %4499 = vmatprep.subr.bf16.mxu0 0
        %4500 = vmatpush1.bf16.msra.mxu0 %v4483
        %4501 = vmatprep.subr.bf16.mxu0 0
        %4502 = vmatpush1.bf16.msra.mxu0 %v4484
        %4503 = vmatprep.subr.bf16.mxu0 0
        %4504 = vmatpush1.bf16.msra.mxu0 %v4485
        %4505 = vmatprep.subr.bf16.mxu0 0
        %4506 = vmatpush1.bf16.msra.mxu0 %v4486
        %4507 = vmatprep.subr.bf16.mxu0 0
        %4508 = vmatpush1.bf16.msra.mxu0 %v4487
        %4509 = vmatprep.subr.bf16.mxu0 0
        %4510 = vmatpush1.bf16.msra.mxu0 %v4488
        %4511 = vmatprep.subr.bf16.mxu0 0
        %4512 = vmatpush1.bf16.msra.mxu0 %v4489
        %4513 = vmatprep.subr.bf16.mxu0 0
        %4514 = vmatpush1.bf16.msra.mxu0 %v4490
        %4515 = vmatprep.subr.bf16.mxu0 0
        %4516 = vmatpush1.bf16.msra.mxu0 0
        %4517 = vmatprep.subr.bf16.mxu0 0
        %4518 = vmatpush1.bf16.msra.mxu0 0
        %4519 = vmatprep.subr.bf16.mxu0 0
        %4520 = vmatpush1.bf16.msra.mxu0 0
        %4521 = vmatprep.subr.bf16.mxu0 0
        %4522 = vmatpush1.bf16.msra.mxu0 0
        %4523 = vmatprep.subr.bf16.mxu0 0
        %4524 = vmatpush1.bf16.msra.mxu0 0
        %4525 = vmatprep.subr.bf16.mxu0 0
        %4526 = vmatpush1.bf16.msra.mxu0 0
        %4527 = vmatprep.subr.bf16.mxu0 0
        %4528 = vmatpush1.bf16.msra.mxu0 0
        %4529 = vmatprep.subr.bf16.mxu0 0
        %4530 = vmatpush1.bf16.msra.mxu0 0
        %4531 = vmatprep.mubr.bf16.mxu0 0
        %4532 = vmatmul.mubr.bf16.gmra.mrb[0].mxu0 %v4426
        %v4533 = vpop.f32.mrb[0].mxu0
        %v4534 = vadd.f32 0.0, %v4533
        %v4535 = vpop.f32.mrb[0].mxu0
        %v4536 = vpop.f32.mrb[0].mxu0
        %v4537 = vadd.f32 0.0, %v4536
        %v4538 = vpop.f32.mrb[0].mxu0
        %4539 = vmatprep.mubr.bf16.mxu0 0
        %4540 = vmatmul.mubr.bf16.gmra.mrb[0].mxu0 %v4427
        %v4541 = vpop.f32.mrb[0].mxu0
        %v4542 = vadd.f32 0.0, %v4541
        %v4543 = vpop.f32.mrb[0].mxu0
        %v4544 = vpop.f32.mrb[0].mxu0
        %v4545 = vadd.f32 0.0, %v4544
        %v4546 = vpop.f32.mrb[0].mxu0
        %4547 = vmatprep.mubr.bf16.mxu0 0
        %4548 = vmatmul.mubr.bf16.gmra.mrb[0].mxu0 %v4428
        %v4549 = vpop.f32.mrb[0].mxu0
        %v4550 = vadd.f32 0.0, %v4549
        %v4551 = vpop.f32.mrb[0].mxu0
        %v4552 = vpop.f32.mrb[0].mxu0
        %v4553 = vadd.f32 0.0, %v4552
        %v4554 = vpop.f32.mrb[0].mxu0
        %4555 = vmatprep.mubr.bf16.mxu0 0
        %4556 = vmatmul.mubr.bf16.gmra.mrb[0].mxu0 %v4429
        %v4557 = vpop.f32.mrb[0].mxu0
        %v4558 = vadd.f32 0.0, %v4557
        %v4559 = vpop.f32.mrb[0].mxu0
        %v4560 = vpop.f32.mrb[0].mxu0
        %v4561 = vadd.f32 0.0, %v4560
        %v4562 = vpop.f32.mrb[0].mxu0
        %4563 = vmatprep.mubr.bf16.mxu0 0
        %4564 = vmatmul.mubr.bf16.gmra.mrb[0].mxu0 %v4430
        %v4565 = vpop.f32.mrb[0].mxu0
        %v4566 = vadd.f32 0.0, %v4565
        %v4567 = vpop.f32.mrb[0].mxu0
        %v4568 = vpop.f32.mrb[0].mxu0
        %v4569 = vadd.f32 0.0, %v4568
        %v4570 = vpop.f32.mrb[0].mxu0
        %4571 = vmatprep.mubr.bf16.mxu0 0
        %4572 = vmatmul.mubr.bf16.gmra.mrb[0].mxu0 %v4431
        %v4573 = vpop.f32.mrb[0].mxu0
        %v4574 = vadd.f32 0.0, %v4573
        %v4575 = vpop.f32.mrb[0].mxu0
        %v4576 = vpop.f32.mrb[0].mxu0
        %v4577 = vadd.f32 0.0, %v4576
        %v4578 = vpop.f32.mrb[0].mxu0
        %4579 = vmatprep.mubr.bf16.mxu0 0
        %4580 = vmatmul.mubr.bf16.gmra.mrb[0].mxu0 %v4432
        %v4581 = vpop.f32.mrb[0].mxu0
        %v4582 = vadd.f32 0.0, %v4581
        %v4583 = vpop.f32.mrb[0].mxu0
        %v4584 = vpop.f32.mrb[0].mxu0
        %v4585 = vadd.f32 0.0, %v4584
        %v4586 = vpop.f32.mrb[0].mxu0
        %4587 = vmatprep.mubr.bf16.mxu0 0
        %4588 = vmatmul.mubr.bf16.gmra.mrb[0].mxu0 %v4433
        %v4589 = vpop.f32.mrb[0].mxu0
        %v4590 = vadd.f32 0.0, %v4589
        %v4591 = vpop.f32.mrb[0].mxu0
        %v4592 = vpop.f32.mrb[0].mxu0
        %v4593 = vadd.f32 0.0, %v4592
        %v4594 = vpop.f32.mrb[0].mxu0
        %4595 = vdwg.mxu0
        %v4612 = vunpack.c.l.b16 %v4394
        %v4613 = vunpack.c.l.b16 %v4395
        %v4614 = vunpack.c.l.b16 %v4396
        %v4615 = vunpack.c.l.b16 %v4397
        %v4616 = vunpack.c.l.b16 %v4398
        %v4617 = vunpack.c.l.b16 %v4399
        %v4618 = vunpack.c.l.b16 %v4400
        %v4619 = vunpack.c.l.b16 %v4401
        %v4620 = vunpack.c.l.b16 %v4402
        %v4621 = vunpack.c.l.b16 %v4403
        %v4622 = vunpack.c.l.b16 %v4404
        %v4623 = vunpack.c.l.b16 %v4405
        %v4624 = vunpack.c.l.b16 %v4406
        %v4625 = vunpack.c.l.b16 %v4407
        %v4626 = vunpack.c.l.b16 %v4408
        %v4627 = vunpack.c.l.b16 %v4409
        %v4628 = vpack.c.b16 %v4613, %v4612
        %v4629 = vpack.c.b16 %v4615, %v4614
        %v4630 = vpack.c.b16 %v4617, %v4616
        %v4631 = vpack.c.b16 %v4619, %v4618
        %v4632 = vpack.c.b16 %v4621, %v4620
        %v4633 = vpack.c.b16 %v4623, %v4622
        %v4634 = vpack.c.b16 %v4625, %v4624
        %v4635 = vpack.c.b16 %v4627, %v4626
        %4644 = vmatprep.subr.bf16.mxu0 0
        %4645 = vmatpush1.bf16.msra.mxu0 %v4628
        %4646 = vmatprep.subr.bf16.mxu0 0
        %4647 = vmatpush1.bf16.msra.mxu0 %v4629
        %4648 = vmatprep.subr.bf16.mxu0 0
        %4649 = vmatpush1.bf16.msra.mxu0 %v4630
        %4650 = vmatprep.subr.bf16.mxu0 0
        %4651 = vmatpush1.bf16.msra.mxu0 %v4631
        %4652 = vmatprep.subr.bf16.mxu0 0
        %4653 = vmatpush1.bf16.msra.mxu0 %v4632
        %4654 = vmatprep.subr.bf16.mxu0 0
        %4655 = vmatpush1.bf16.msra.mxu0 %v4633
        %4656 = vmatprep.subr.bf16.mxu0 0
        %4657 = vmatpush1.bf16.msra.mxu0 %v4634
        %4658 = vmatprep.subr.bf16.mxu0 0
        %4659 = vmatpush1.bf16.msra.mxu0 %v4635
        %4660 = vmatprep.subr.bf16.mxu0 0
        %4661 = vmatpush1.bf16.msra.mxu0 0
        %4662 = vmatprep.subr.bf16.mxu0 0
        %4663 = vmatpush1.bf16.msra.mxu0 0
        %4664 = vmatprep.subr.bf16.mxu0 0
        %4665 = vmatpush1.bf16.msra.mxu0 0
        %4666 = vmatprep.subr.bf16.mxu0 0
        %4667 = vmatpush1.bf16.msra.mxu0 0
        %4668 = vmatprep.subr.bf16.mxu0 0
        %4669 = vmatpush1.bf16.msra.mxu0 0
        %4670 = vmatprep.subr.bf16.mxu0 0
        %4671 = vmatpush1.bf16.msra.mxu0 0
        %4672 = vmatprep.subr.bf16.mxu0 0
        %4673 = vmatpush1.bf16.msra.mxu0 0
        %4674 = vmatprep.subr.bf16.mxu0 0
        %4675 = vmatpush1.bf16.msra.mxu0 0
        %4676 = vmatprep.mubr.bf16.mxu0 0
        %4677 = vmatmul.mubr.bf16.gmra.mrb[0].mxu0 %v4385
        %v4678 = vpop.f32.mrb[0].mxu0
        %v4679 = vadd.f32 %v4534, %v4678
        %v4680 = vpop.f32.mrb[0].mxu0
        %v4681 = vpop.f32.mrb[0].mxu0
        %v4682 = vadd.f32 %v4537, %v4681
        %v4683 = vpop.f32.mrb[0].mxu0
        %4684 = vmatprep.mubr.bf16.mxu0 0
        %4685 = vmatmul.mubr.bf16.gmra.mrb[0].mxu0 %v4386
        %v4686 = vpop.f32.mrb[0].mxu0
        %v4687 = vadd.f32 %v4542, %v4686
        %v4688 = vpop.f32.mrb[0].mxu0
        %v4689 = vpop.f32.mrb[0].mxu0
        %v4690 = vadd.f32 %v4545, %v4689
        %v4691 = vpop.f32.mrb[0].mxu0
        %4692 = vmatprep.mubr.bf16.mxu0 0
        %4693 = vmatmul.mubr.bf16.gmra.mrb[0].mxu0 %v4387
        %v4694 = vpop.f32.mrb[0].mxu0
        %v4695 = vadd.f32 %v4550, %v4694
        %v4696 = vpop.f32.mrb[0].mxu0
        %v4697 = vpop.f32.mrb[0].mxu0
        %v4698 = vadd.f32 %v4553, %v4697
        %v4699 = vpop.f32.mrb[0].mxu0
        %4700 = vmatprep.mubr.bf16.mxu0 0
        %4701 = vmatmul.mubr.bf16.gmra.mrb[0].mxu0 %v4388
        %v4702 = vpop.f32.mrb[0].mxu0
        %v4703 = vadd.f32 %v4558, %v4702
        %v4704 = vpop.f32.mrb[0].mxu0
        %v4705 = vpop.f32.mrb[0].mxu0
        %v4706 = vadd.f32 %v4561, %v4705
        %v4707 = vpop.f32.mrb[0].mxu0
        %4708 = vmatprep.mubr.bf16.mxu0 0
        %4709 = vmatmul.mubr.bf16.gmra.mrb[0].mxu0 %v4389
        %v4710 = vpop.f32.mrb[0].mxu0
        %v4711 = vadd.f32 %v4566, %v4710
        %v4712 = vpop.f32.mrb[0].mxu0
        %v4713 = vpop.f32.mrb[0].mxu0
        %v4714 = vadd.f32 %v4569, %v4713
        %v4715 = vpop.f32.mrb[0].mxu0
        %4716 = vmatprep.mubr.bf16.mxu0 0
        %4717 = vmatmul.mubr.bf16.gmra.mrb[0].mxu0 %v4390
        %v4718 = vpop.f32.mrb[0].mxu0
        %v4719 = vadd.f32 %v4574, %v4718
        %v4720 = vpop.f32.mrb[0].mxu0
        %v4721 = vpop.f32.mrb[0].mxu0
        %v4722 = vadd.f32 %v4577, %v4721
        %v4723 = vpop.f32.mrb[0].mxu0
        %4724 = vmatprep.mubr.bf16.mxu0 0
        %4725 = vmatmul.mubr.bf16.gmra.mrb[0].mxu0 %v4391
        %v4726 = vpop.f32.mrb[0].mxu0
        %v4727 = vadd.f32 %v4582, %v4726
        %v4728 = vpop.f32.mrb[0].mxu0
        %v4729 = vpop.f32.mrb[0].mxu0
        %v4730 = vadd.f32 %v4585, %v4729
        %v4731 = vpop.f32.mrb[0].mxu0
        %4732 = vmatprep.mubr.bf16.mxu0 0
        %4733 = vmatmul.mubr.bf16.gmra.mrb[0].mxu0 %v4392
        %v4734 = vpop.f32.mrb[0].mxu0
        %v4735 = vadd.f32 %v4590, %v4734
        %v4736 = vpop.f32.mrb[0].mxu0
        %v4737 = vpop.f32.mrb[0].mxu0
        %v4738 = vadd.f32 %v4593, %v4737
        %v4739 = vpop.f32.mrb[0].mxu0
        %4740 = vdwg.mxu0
        %v4741 = vld [vmem:[#allocation2 + $0x2] sm:$0xff]
        %v4742 = vld [vmem:[#allocation2 + $0x12] sm:$0xff]
        %v4743 = vld [vmem:[#allocation2 + $0x22] sm:$0xff]
        %v4744 = vld [vmem:[#allocation2 + $0x32] sm:$0xff]
        %v4745 = vld [vmem:[#allocation2 + $0x42] sm:$0xff]
        %v4746 = vld [vmem:[#allocation2 + $0x52] sm:$0xff]
        %v4747 = vld [vmem:[#allocation2 + $0x62] sm:$0xff]
        %v4748 = vld [vmem:[#allocation2 + $0x72] sm:$0xff]
        %v4749 = vld [vmem:[#allocation2 + $0xa2] sm:$0xff]
        %v4750 = vld [vmem:[#allocation2 + $0xb2] sm:$0xff]
        %v4751 = vld [vmem:[#allocation2 + $0xc2] sm:$0xff]
        %v4752 = vld [vmem:[#allocation2 + $0xd2] sm:$0xff]
        %v4753 = vld [vmem:[#allocation2 + $0xe2] sm:$0xff]
        %v4754 = vld [vmem:[#allocation2 + $0xf2] sm:$0xff]
        %v4755 = vld [vmem:[#allocation2 + $0x102] sm:$0xff]
        %v4756 = vld [vmem:[#allocation2 + $0x112] sm:$0xff]
        %v4757 = vpack.c.bf16 %v4742, %v4741
        %v4758 = vpack.c.bf16 %v4744, %v4743
        %v4759 = vpack.c.bf16 %v4746, %v4745
        %v4760 = vpack.c.bf16 %v4748, %v4747
        %v4761 = vpack.c.bf16 %v4750, %v4749
        %v4762 = vpack.c.bf16 %v4752, %v4751
        %v4763 = vpack.c.bf16 %v4754, %v4753
        %v4764 = vpack.c.bf16 %v4756, %v4755
        %s4765 = scalar_lea.vmem %s1, 704
        %v4766 = vld [vmem:[%s4765] sm:$0xf]
        %v4767 = vld [vmem:[%s4765 + $0x4] sm:$0xf]
        %v4768 = vld [vmem:[%s4765 + $0x8] sm:$0xf]
        %v4769 = vld [vmem:[%s4765 + $0xc] sm:$0xf]
        %v4770 = vld [vmem:[%s4765 + $0x10] sm:$0xf]
        %v4771 = vld [vmem:[%s4765 + $0x14] sm:$0xf]
        %v4772 = vld [vmem:[%s4765 + $0x18] sm:$0xf]
        %v4773 = vld [vmem:[%s4765 + $0x1c] sm:$0xf]
        %v4774 = vld [vmem:[%s4765 + $0x20] sm:$0xf]
        %v4775 = vld [vmem:[%s4765 + $0x24] sm:$0xf]
        %v4776 = vld [vmem:[%s4765 + $0x28] sm:$0xf]
        %v4777 = vld [vmem:[%s4765 + $0x2c] sm:$0xf]
        %v4778 = vld [vmem:[%s4765 + $0x30] sm:$0xf]
        %v4779 = vld [vmem:[%s4765 + $0x34] sm:$0xf]
        %v4780 = vld [vmem:[%s4765 + $0x38] sm:$0xf]
        %v4781 = vld [vmem:[%s4765 + $0x3c] sm:$0xf]
        %v4798 = vunpack.c.l.b16 %v4766
        %v4799 = vunpack.c.l.b16 %v4767
        %v4800 = vunpack.c.l.b16 %v4768
        %v4801 = vunpack.c.l.b16 %v4769
        %v4802 = vunpack.c.l.b16 %v4770
        %v4803 = vunpack.c.l.b16 %v4771
        %v4804 = vunpack.c.l.b16 %v4772
        %v4805 = vunpack.c.l.b16 %v4773
        %v4806 = vunpack.c.l.b16 %v4774
        %v4807 = vunpack.c.l.b16 %v4775
        %v4808 = vunpack.c.l.b16 %v4776
        %v4809 = vunpack.c.l.b16 %v4777
        %v4810 = vunpack.c.l.b16 %v4778
        %v4811 = vunpack.c.l.b16 %v4779
        %v4812 = vunpack.c.l.b16 %v4780
        %v4813 = vunpack.c.l.b16 %v4781
        %v4814 = vpack.c.b16 %v4799, %v4798
        %v4815 = vpack.c.b16 %v4801, %v4800
        %v4816 = vpack.c.b16 %v4803, %v4802
        %v4817 = vpack.c.b16 %v4805, %v4804
        %v4818 = vpack.c.b16 %v4807, %v4806
        %v4819 = vpack.c.b16 %v4809, %v4808
        %v4820 = vpack.c.b16 %v4811, %v4810
        %v4821 = vpack.c.b16 %v4813, %v4812
        %4830 = vmatprep.subr.bf16.mxu0 0
        %4831 = vmatpush1.bf16.msra.mxu0 %v4814
        %4832 = vmatprep.subr.bf16.mxu0 0
        %4833 = vmatpush1.bf16.msra.mxu0 %v4815
        %4834 = vmatprep.subr.bf16.mxu0 0
        %4835 = vmatpush1.bf16.msra.mxu0 %v4816
        %4836 = vmatprep.subr.bf16.mxu0 0
        %4837 = vmatpush1.bf16.msra.mxu0 %v4817
        %4838 = vmatprep.subr.bf16.mxu0 0
        %4839 = vmatpush1.bf16.msra.mxu0 %v4818
        %4840 = vmatprep.subr.bf16.mxu0 0
        %4841 = vmatpush1.bf16.msra.mxu0 %v4819
        %4842 = vmatprep.subr.bf16.mxu0 0
        %4843 = vmatpush1.bf16.msra.mxu0 %v4820
        %4844 = vmatprep.subr.bf16.mxu0 0
        %4845 = vmatpush1.bf16.msra.mxu0 %v4821
        %4846 = vmatprep.subr.bf16.mxu0 0
        %4847 = vmatpush1.bf16.msra.mxu0 0
        %4848 = vmatprep.subr.bf16.mxu0 0
        %4849 = vmatpush1.bf16.msra.mxu0 0
        %4850 = vmatprep.subr.bf16.mxu0 0
        %4851 = vmatpush1.bf16.msra.mxu0 0
        %4852 = vmatprep.subr.bf16.mxu0 0
        %4853 = vmatpush1.bf16.msra.mxu0 0
        %4854 = vmatprep.subr.bf16.mxu0 0
        %4855 = vmatpush1.bf16.msra.mxu0 0
        %4856 = vmatprep.subr.bf16.mxu0 0
        %4857 = vmatpush1.bf16.msra.mxu0 0
        %4858 = vmatprep.subr.bf16.mxu0 0
        %4859 = vmatpush1.bf16.msra.mxu0 0
        %4860 = vmatprep.subr.bf16.mxu0 0
        %4861 = vmatpush1.bf16.msra.mxu0 0
        %4862 = vmatprep.mubr.bf16.mxu0 0
        %4863 = vmatmul.mubr.bf16.gmra.mrb[0].mxu0 %v4757
        %v4864 = vpop.f32.mrb[0].mxu0
        %v4865 = vadd.f32 0.0, %v4864
        %v4866 = vpop.f32.mrb[0].mxu0
        %v4867 = vpop.f32.mrb[0].mxu0
        %v4868 = vadd.f32 0.0, %v4867
        %v4869 = vpop.f32.mrb[0].mxu0
        %4870 = vmatprep.mubr.bf16.mxu0 0
        %4871 = vmatmul.mubr.bf16.gmra.mrb[0].mxu0 %v4758
        %v4872 = vpop.f32.mrb[0].mxu0
        %v4873 = vadd.f32 0.0, %v4872
        %v4874 = vpop.f32.mrb[0].mxu0
        %v4875 = vpop.f32.mrb[0].mxu0
        %v4876 = vadd.f32 0.0, %v4875
        %v4877 = vpop.f32.mrb[0].mxu0
        %4878 = vmatprep.mubr.bf16.mxu0 0
        %4879 = vmatmul.mubr.bf16.gmra.mrb[0].mxu0 %v4759
        %v4880 = vpop.f32.mrb[0].mxu0
        %v4881 = vadd.f32 0.0, %v4880
        %v4882 = vpop.f32.mrb[0].mxu0
        %v4883 = vpop.f32.mrb[0].mxu0
        %v4884 = vadd.f32 0.0, %v4883
        %v4885 = vpop.f32.mrb[0].mxu0
        %4886 = vmatprep.mubr.bf16.mxu0 0
        %4887 = vmatmul.mubr.bf16.gmra.mrb[0].mxu0 %v4760
        %v4888 = vpop.f32.mrb[0].mxu0
        %v4889 = vadd.f32 0.0, %v4888
        %v4890 = vpop.f32.mrb[0].mxu0
        %v4891 = vpop.f32.mrb[0].mxu0
        %v4892 = vadd.f32 0.0, %v4891
        %v4893 = vpop.f32.mrb[0].mxu0
        %4894 = vmatprep.mubr.bf16.mxu0 0
        %4895 = vmatmul.mubr.bf16.gmra.mrb[0].mxu0 %v4761
        %v4896 = vpop.f32.mrb[0].mxu0
        %v4897 = vadd.f32 0.0, %v4896
        %v4898 = vpop.f32.mrb[0].mxu0
        %v4899 = vpop.f32.mrb[0].mxu0
        %v4900 = vadd.f32 0.0, %v4899
        %v4901 = vpop.f32.mrb[0].mxu0
        %4902 = vmatprep.mubr.bf16.mxu0 0
        %4903 = vmatmul.mubr.bf16.gmra.mrb[0].mxu0 %v4762
        %v4904 = vpop.f32.mrb[0].mxu0
        %v4905 = vadd.f32 0.0, %v4904
        %v4906 = vpop.f32.mrb[0].mxu0
        %v4907 = vpop.f32.mrb[0].mxu0
        %v4908 = vadd.f32 0.0, %v4907
        %v4909 = vpop.f32.mrb[0].mxu0
        %4910 = vmatprep.mubr.bf16.mxu0 0
        %4911 = vmatmul.mubr.bf16.gmra.mrb[0].mxu0 %v4763
        %v4912 = vpop.f32.mrb[0].mxu0
        %v4913 = vadd.f32 0.0, %v4912
        %v4914 = vpop.f32.mrb[0].mxu0
        %v4915 = vpop.f32.mrb[0].mxu0
        %v4916 = vadd.f32 0.0, %v4915
        %v4917 = vpop.f32.mrb[0].mxu0
        %4918 = vmatprep.mubr.bf16.mxu0 0
        %4919 = vmatmul.mubr.bf16.gmra.mrb[0].mxu0 %v4764
        %v4920 = vpop.f32.mrb[0].mxu0
        %v4921 = vadd.f32 0.0, %v4920
        %v4922 = vpop.f32.mrb[0].mxu0
        %v4923 = vpop.f32.mrb[0].mxu0
        %v4924 = vadd.f32 0.0, %v4923
        %v4925 = vpop.f32.mrb[0].mxu0
        %4926 = vdwg.mxu0
        %v4927 = vadd.f32 %v4679, %v4865
        %v4928 = vadd.f32 %v4682, %v4868
        %v4929 = vadd.f32 %v4687, %v4873
        %v4930 = vadd.f32 %v4690, %v4876
        %v4931 = vadd.f32 %v4695, %v4881
        %v4932 = vadd.f32 %v4698, %v4884
        %v4933 = vadd.f32 %v4703, %v4889
        %v4934 = vadd.f32 %v4706, %v4892
        %v4935 = vadd.f32 %v4711, %v4897
        %v4936 = vadd.f32 %v4714, %v4900
        %v4937 = vadd.f32 %v4719, %v4905
        %v4938 = vadd.f32 %v4722, %v4908
        %v4939 = vadd.f32 %v4727, %v4913
        %v4940 = vadd.f32 %v4730, %v4916
        %v4941 = vadd.f32 %v4735, %v4921
        %v4942 = vadd.f32 %v4738, %v4924
        %v4943 = vld [vmem:[%s438] sm:$0xff]
        %v4944 = vld [vmem:[%s438 + $0x10] sm:$0xff]
        %v4945 = vld [vmem:[%s438 + $0x20] sm:$0xff]
        %v4946 = vld [vmem:[%s438 + $0x30] sm:$0xff]
        %v4947 = vld [vmem:[%s438 + $0x40] sm:$0xff]
        %v4948 = vld [vmem:[%s438 + $0x50] sm:$0xff]
        %v4949 = vld [vmem:[%s438 + $0x60] sm:$0xff]
        %v4950 = vld [vmem:[%s438 + $0x70] sm:$0xff]
        %v4951 = vld [vmem:[%s438 + $0xa0] sm:$0xff]
        %v4952 = vld [vmem:[%s438 + $0xb0] sm:$0xff]
        %v4953 = vld [vmem:[%s438 + $0xc0] sm:$0xff]
        %v4954 = vld [vmem:[%s438 + $0xd0] sm:$0xff]
        %v4955 = vld [vmem:[%s438 + $0xe0] sm:$0xff]
        %v4956 = vld [vmem:[%s438 + $0xf0] sm:$0xff]
        %v4957 = vld [vmem:[%s438 + $0x100] sm:$0xff]
        %v4958 = vld [vmem:[%s438 + $0x110] sm:$0xff]
        %v4959 = vpack.c.bf16 %v4944, %v4943
        %v4960 = vpack.c.bf16 %v4946, %v4945
        %v4961 = vpack.c.bf16 %v4948, %v4947
        %v4962 = vpack.c.bf16 %v4950, %v4949
        %v4963 = vpack.c.bf16 %v4952, %v4951
        %v4964 = vpack.c.bf16 %v4954, %v4953
        %v4965 = vpack.c.bf16 %v4956, %v4955
        %v4966 = vpack.c.bf16 %v4958, %v4957
        %s4967 = scalar_lea.vmem %s1, 768
        %v4968 = vld [vmem:[%s4967] sm:$0xf]
        %v4969 = vld [vmem:[%s4967 + $0x4] sm:$0xf]
        %v4970 = vld [vmem:[%s4967 + $0x8] sm:$0xf]
        %v4971 = vld [vmem:[%s4967 + $0xc] sm:$0xf]
        %v4972 = vld [vmem:[%s4967 + $0x10] sm:$0xf]
        %v4973 = vld [vmem:[%s4967 + $0x14] sm:$0xf]
        %v4974 = vld [vmem:[%s4967 + $0x18] sm:$0xf]
        %v4975 = vld [vmem:[%s4967 + $0x1c] sm:$0xf]
        %v4976 = vld [vmem:[%s4967 + $0x20] sm:$0xf]
        %v4977 = vld [vmem:[%s4967 + $0x24] sm:$0xf]
        %v4978 = vld [vmem:[%s4967 + $0x28] sm:$0xf]
        %v4979 = vld [vmem:[%s4967 + $0x2c] sm:$0xf]
        %v4980 = vld [vmem:[%s4967 + $0x30] sm:$0xf]
        %v4981 = vld [vmem:[%s4967 + $0x34] sm:$0xf]
        %v4982 = vld [vmem:[%s4967 + $0x38] sm:$0xf]
        %v4983 = vld [vmem:[%s4967 + $0x3c] sm:$0xf]
        %v5000 = vunpack.c.l.b16 %v4968
        %v5001 = vunpack.c.l.b16 %v4969
        %v5002 = vunpack.c.l.b16 %v4970
        %v5003 = vunpack.c.l.b16 %v4971
        %v5004 = vunpack.c.l.b16 %v4972
        %v5005 = vunpack.c.l.b16 %v4973
        %v5006 = vunpack.c.l.b16 %v4974
        %v5007 = vunpack.c.l.b16 %v4975
        %v5008 = vunpack.c.l.b16 %v4976
        %v5009 = vunpack.c.l.b16 %v4977
        %v5010 = vunpack.c.l.b16 %v4978
        %v5011 = vunpack.c.l.b16 %v4979
        %v5012 = vunpack.c.l.b16 %v4980
        %v5013 = vunpack.c.l.b16 %v4981
        %v5014 = vunpack.c.l.b16 %v4982
        %v5015 = vunpack.c.l.b16 %v4983
        %v5016 = vpack.c.b16 %v5001, %v5000
        %v5017 = vpack.c.b16 %v5003, %v5002
        %v5018 = vpack.c.b16 %v5005, %v5004
        %v5019 = vpack.c.b16 %v5007, %v5006
        %v5020 = vpack.c.b16 %v5009, %v5008
        %v5021 = vpack.c.b16 %v5011, %v5010
        %v5022 = vpack.c.b16 %v5013, %v5012
        %v5023 = vpack.c.b16 %v5015, %v5014
        %5032 = vmatprep.subr.bf16.mxu0 0
        %5033 = vmatpush1.bf16.msra.mxu0 %v5016
        %5034 = vmatprep.subr.bf16.mxu0 0
        %5035 = vmatpush1.bf16.msra.mxu0 %v5017
        %5036 = vmatprep.subr.bf16.mxu0 0
        %5037 = vmatpush1.bf16.msra.mxu0 %v5018
        %5038 = vmatprep.subr.bf16.mxu0 0
        %5039 = vmatpush1.bf16.msra.mxu0 %v5019
        %5040 = vmatprep.subr.bf16.mxu0 0
        %5041 = vmatpush1.bf16.msra.mxu0 %v5020
        %5042 = vmatprep.subr.bf16.mxu0 0
        %5043 = vmatpush1.bf16.msra.mxu0 %v5021
        %5044 = vmatprep.subr.bf16.mxu0 0
        %5045 = vmatpush1.bf16.msra.mxu0 %v5022
        %5046 = vmatprep.subr.bf16.mxu0 0
        %5047 = vmatpush1.bf16.msra.mxu0 %v5023
        %5048 = vmatprep.subr.bf16.mxu0 0
        %5049 = vmatpush1.bf16.msra.mxu0 0
        %5050 = vmatprep.subr.bf16.mxu0 0
        %5051 = vmatpush1.bf16.msra.mxu0 0
        %5052 = vmatprep.subr.bf16.mxu0 0
        %5053 = vmatpush1.bf16.msra.mxu0 0
        %5054 = vmatprep.subr.bf16.mxu0 0
        %5055 = vmatpush1.bf16.msra.mxu0 0
        %5056 = vmatprep.subr.bf16.mxu0 0
        %5057 = vmatpush1.bf16.msra.mxu0 0
        %5058 = vmatprep.subr.bf16.mxu0 0
        %5059 = vmatpush1.bf16.msra.mxu0 0
        %5060 = vmatprep.subr.bf16.mxu0 0
        %5061 = vmatpush1.bf16.msra.mxu0 0
        %5062 = vmatprep.subr.bf16.mxu0 0
        %5063 = vmatpush1.bf16.msra.mxu0 0
        %5064 = vmatprep.mubr.bf16.mxu0 0
        %5065 = vmatmul.mubr.bf16.gmra.mrb[0].mxu0 %v4959
        %v5066 = vpop.f32.mrb[0].mxu0
        %v5067 = vadd.f32 0.0, %v5066
        %v5068 = vpop.f32.mrb[0].mxu0
        %v5069 = vpop.f32.mrb[0].mxu0
        %v5070 = vadd.f32 0.0, %v5069
        %v5071 = vpop.f32.mrb[0].mxu0
        %5072 = vmatprep.mubr.bf16.mxu0 0
        %5073 = vmatmul.mubr.bf16.gmra.mrb[0].mxu0 %v4960
        %v5074 = vpop.f32.mrb[0].mxu0
        %v5075 = vadd.f32 0.0, %v5074
        %v5076 = vpop.f32.mrb[0].mxu0
        %v5077 = vpop.f32.mrb[0].mxu0
        %v5078 = vadd.f32 0.0, %v5077
        %v5079 = vpop.f32.mrb[0].mxu0
        %5080 = vmatprep.mubr.bf16.mxu0 0
        %5081 = vmatmul.mubr.bf16.gmra.mrb[0].mxu0 %v4961
        %v5082 = vpop.f32.mrb[0].mxu0
        %v5083 = vadd.f32 0.0, %v5082
        %v5084 = vpop.f32.mrb[0].mxu0
        %v5085 = vpop.f32.mrb[0].mxu0
        %v5086 = vadd.f32 0.0, %v5085
        %v5087 = vpop.f32.mrb[0].mxu0
        %5088 = vmatprep.mubr.bf16.mxu0 0
        %5089 = vmatmul.mubr.bf16.gmra.mrb[0].mxu0 %v4962
        %v5090 = vpop.f32.mrb[0].mxu0
        %v5091 = vadd.f32 0.0, %v5090
        %v5092 = vpop.f32.mrb[0].mxu0
        %v5093 = vpop.f32.mrb[0].mxu0
        %v5094 = vadd.f32 0.0, %v5093
        %v5095 = vpop.f32.mrb[0].mxu0
        %5096 = vmatprep.mubr.bf16.mxu0 0
        %5097 = vmatmul.mubr.bf16.gmra.mrb[0].mxu0 %v4963
        %v5098 = vpop.f32.mrb[0].mxu0
        %v5099 = vadd.f32 0.0, %v5098
        %v5100 = vpop.f32.mrb[0].mxu0
        %v5101 = vpop.f32.mrb[0].mxu0
        %v5102 = vadd.f32 0.0, %v5101
        %v5103 = vpop.f32.mrb[0].mxu0
        %5104 = vmatprep.mubr.bf16.mxu0 0
        %5105 = vmatmul.mubr.bf16.gmra.mrb[0].mxu0 %v4964
        %v5106 = vpop.f32.mrb[0].mxu0
        %v5107 = vadd.f32 0.0, %v5106
        %v5108 = vpop.f32.mrb[0].mxu0
        %v5109 = vpop.f32.mrb[0].mxu0
        %v5110 = vadd.f32 0.0, %v5109
        %v5111 = vpop.f32.mrb[0].mxu0
        %5112 = vmatprep.mubr.bf16.mxu0 0
        %5113 = vmatmul.mubr.bf16.gmra.mrb[0].mxu0 %v4965
        %v5114 = vpop.f32.mrb[0].mxu0
        %v5115 = vadd.f32 0.0, %v5114
        %v5116 = vpop.f32.mrb[0].mxu0
        %v5117 = vpop.f32.mrb[0].mxu0
        %v5118 = vadd.f32 0.0, %v5117
        %v5119 = vpop.f32.mrb[0].mxu0
        %5120 = vmatprep.mubr.bf16.mxu0 0
        %5121 = vmatmul.mubr.bf16.gmra.mrb[0].mxu0 %v4966
        %v5122 = vpop.f32.mrb[0].mxu0
        %v5123 = vadd.f32 0.0, %v5122
        %v5124 = vpop.f32.mrb[0].mxu0
        %v5125 = vpop.f32.mrb[0].mxu0
        %v5126 = vadd.f32 0.0, %v5125
        %v5127 = vpop.f32.mrb[0].mxu0
        %5128 = vdwg.mxu0
        %v5129 = vadd.f32 %v4927, %v5067
        %v5130 = vadd.f32 %v4928, %v5070
        %v5131 = vadd.f32 %v4929, %v5075
        %v5132 = vadd.f32 %v4930, %v5078
        %v5133 = vadd.f32 %v4931, %v5083
        %v5134 = vadd.f32 %v4932, %v5086
        %v5135 = vadd.f32 %v4933, %v5091
        %v5136 = vadd.f32 %v4934, %v5094
        %v5137 = vadd.f32 %v4935, %v5099
        %v5138 = vadd.f32 %v4936, %v5102
        %v5139 = vadd.f32 %v4937, %v5107
        %v5140 = vadd.f32 %v4938, %v5110
        %v5141 = vadd.f32 %v4939, %v5115
        %v5142 = vadd.f32 %v4940, %v5118
        %v5143 = vadd.f32 %v4941, %v5123
        %v5144 = vadd.f32 %v4942, %v5126
        %v5145 = vld [vmem:[%s438 + $0x1] sm:$0xff]
        %v5146 = vld [vmem:[%s438 + $0x11] sm:$0xff]
        %v5147 = vld [vmem:[%s438 + $0x21] sm:$0xff]
        %v5148 = vld [vmem:[%s438 + $0x31] sm:$0xff]
        %v5149 = vld [vmem:[%s438 + $0x41] sm:$0xff]
        %v5150 = vld [vmem:[%s438 + $0x51] sm:$0xff]
        %v5151 = vld [vmem:[%s438 + $0x61] sm:$0xff]
        %v5152 = vld [vmem:[%s438 + $0x71] sm:$0xff]
        %v5153 = vld [vmem:[%s438 + $0xa1] sm:$0xff]
        %v5154 = vld [vmem:[%s438 + $0xb1] sm:$0xff]
        %v5155 = vld [vmem:[%s438 + $0xc1] sm:$0xff]
        %v5156 = vld [vmem:[%s438 + $0xd1] sm:$0xff]
        %v5157 = vld [vmem:[%s438 + $0xe1] sm:$0xff]
        %v5158 = vld [vmem:[%s438 + $0xf1] sm:$0xff]
        %v5159 = vld [vmem:[%s438 + $0x101] sm:$0xff]
        %v5160 = vld [vmem:[%s438 + $0x111] sm:$0xff]
        %v5161 = vpack.c.bf16 %v5146, %v5145
        %v5162 = vpack.c.bf16 %v5148, %v5147
        %v5163 = vpack.c.bf16 %v5150, %v5149
        %v5164 = vpack.c.bf16 %v5152, %v5151
        %v5165 = vpack.c.bf16 %v5154, %v5153
        %v5166 = vpack.c.bf16 %v5156, %v5155
        %v5167 = vpack.c.bf16 %v5158, %v5157
        %v5168 = vpack.c.bf16 %v5160, %v5159
        %s5169 = scalar_lea.vmem %s1, 832
        %v5170 = vld [vmem:[%s5169] sm:$0xf]
        %v5171 = vld [vmem:[%s5169 + $0x4] sm:$0xf]
        %v5172 = vld [vmem:[%s5169 + $0x8] sm:$0xf]
        %v5173 = vld [vmem:[%s5169 + $0xc] sm:$0xf]
        %v5174 = vld [vmem:[%s5169 + $0x10] sm:$0xf]
        %v5175 = vld [vmem:[%s5169 + $0x14] sm:$0xf]
        %v5176 = vld [vmem:[%s5169 + $0x18] sm:$0xf]
        %v5177 = vld [vmem:[%s5169 + $0x1c] sm:$0xf]
        %v5178 = vld [vmem:[%s5169 + $0x20] sm:$0xf]
        %v5179 = vld [vmem:[%s5169 + $0x24] sm:$0xf]
        %v5180 = vld [vmem:[%s5169 + $0x28] sm:$0xf]
        %v5181 = vld [vmem:[%s5169 + $0x2c] sm:$0xf]
        %v5182 = vld [vmem:[%s5169 + $0x30] sm:$0xf]
        %v5183 = vld [vmem:[%s5169 + $0x34] sm:$0xf]
        %v5184 = vld [vmem:[%s5169 + $0x38] sm:$0xf]
        %v5185 = vld [vmem:[%s5169 + $0x3c] sm:$0xf]
        %v5202 = vunpack.c.l.b16 %v5170
        %v5203 = vunpack.c.l.b16 %v5171
        %v5204 = vunpack.c.l.b16 %v5172
        %v5205 = vunpack.c.l.b16 %v5173
        %v5206 = vunpack.c.l.b16 %v5174
        %v5207 = vunpack.c.l.b16 %v5175
        %v5208 = vunpack.c.l.b16 %v5176
        %v5209 = vunpack.c.l.b16 %v5177
        %v5210 = vunpack.c.l.b16 %v5178
        %v5211 = vunpack.c.l.b16 %v5179
        %v5212 = vunpack.c.l.b16 %v5180
        %v5213 = vunpack.c.l.b16 %v5181
        %v5214 = vunpack.c.l.b16 %v5182
        %v5215 = vunpack.c.l.b16 %v5183
        %v5216 = vunpack.c.l.b16 %v5184
        %v5217 = vunpack.c.l.b16 %v5185
        %v5218 = vpack.c.b16 %v5203, %v5202
        %v5219 = vpack.c.b16 %v5205, %v5204
        %v5220 = vpack.c.b16 %v5207, %v5206
        %v5221 = vpack.c.b16 %v5209, %v5208
        %v5222 = vpack.c.b16 %v5211, %v5210
        %v5223 = vpack.c.b16 %v5213, %v5212
        %v5224 = vpack.c.b16 %v5215, %v5214
        %v5225 = vpack.c.b16 %v5217, %v5216
        %5234 = vmatprep.subr.bf16.mxu0 0
        %5235 = vmatpush1.bf16.msra.mxu0 %v5218
        %5236 = vmatprep.subr.bf16.mxu0 0
        %5237 = vmatpush1.bf16.msra.mxu0 %v5219
        %5238 = vmatprep.subr.bf16.mxu0 0
        %5239 = vmatpush1.bf16.msra.mxu0 %v5220
        %5240 = vmatprep.subr.bf16.mxu0 0
        %5241 = vmatpush1.bf16.msra.mxu0 %v5221
        %5242 = vmatprep.subr.bf16.mxu0 0
        %5243 = vmatpush1.bf16.msra.mxu0 %v5222
        %5244 = vmatprep.subr.bf16.mxu0 0
        %5245 = vmatpush1.bf16.msra.mxu0 %v5223
        %5246 = vmatprep.subr.bf16.mxu0 0
        %5247 = vmatpush1.bf16.msra.mxu0 %v5224
        %5248 = vmatprep.subr.bf16.mxu0 0
        %5249 = vmatpush1.bf16.msra.mxu0 %v5225
        %5250 = vmatprep.subr.bf16.mxu0 0
        %5251 = vmatpush1.bf16.msra.mxu0 0
        %5252 = vmatprep.subr.bf16.mxu0 0
        %5253 = vmatpush1.bf16.msra.mxu0 0
        %5254 = vmatprep.subr.bf16.mxu0 0
        %5255 = vmatpush1.bf16.msra.mxu0 0
        %5256 = vmatprep.subr.bf16.mxu0 0
        %5257 = vmatpush1.bf16.msra.mxu0 0
        %5258 = vmatprep.subr.bf16.mxu0 0
        %5259 = vmatpush1.bf16.msra.mxu0 0
        %5260 = vmatprep.subr.bf16.mxu0 0
        %5261 = vmatpush1.bf16.msra.mxu0 0
        %5262 = vmatprep.subr.bf16.mxu0 0
        %5263 = vmatpush1.bf16.msra.mxu0 0
        %5264 = vmatprep.subr.bf16.mxu0 0
        %5265 = vmatpush1.bf16.msra.mxu0 0
        %5266 = vmatprep.mubr.bf16.mxu0 0
        %5267 = vmatmul.mubr.bf16.gmra.mrb[0].mxu0 %v5161
        %v5268 = vpop.f32.mrb[0].mxu0
        %v5269 = vadd.f32 0.0, %v5268
        %v5270 = vpop.f32.mrb[0].mxu0
        %v5271 = vpop.f32.mrb[0].mxu0
        %v5272 = vadd.f32 0.0, %v5271
        %v5273 = vpop.f32.mrb[0].mxu0
        %5274 = vmatprep.mubr.bf16.mxu0 0
        %5275 = vmatmul.mubr.bf16.gmra.mrb[0].mxu0 %v5162
        %v5276 = vpop.f32.mrb[0].mxu0
        %v5277 = vadd.f32 0.0, %v5276
        %v5278 = vpop.f32.mrb[0].mxu0
        %v5279 = vpop.f32.mrb[0].mxu0
        %v5280 = vadd.f32 0.0, %v5279
        %v5281 = vpop.f32.mrb[0].mxu0
        %5282 = vmatprep.mubr.bf16.mxu0 0
        %5283 = vmatmul.mubr.bf16.gmra.mrb[0].mxu0 %v5163
        %v5284 = vpop.f32.mrb[0].mxu0
        %v5285 = vadd.f32 0.0, %v5284
        %v5286 = vpop.f32.mrb[0].mxu0
        %v5287 = vpop.f32.mrb[0].mxu0
        %v5288 = vadd.f32 0.0, %v5287
        %v5289 = vpop.f32.mrb[0].mxu0
        %5290 = vmatprep.mubr.bf16.mxu0 0
        %5291 = vmatmul.mubr.bf16.gmra.mrb[0].mxu0 %v5164
        %v5292 = vpop.f32.mrb[0].mxu0
        %v5293 = vadd.f32 0.0, %v5292
        %v5294 = vpop.f32.mrb[0].mxu0
        %v5295 = vpop.f32.mrb[0].mxu0
        %v5296 = vadd.f32 0.0, %v5295
        %v5297 = vpop.f32.mrb[0].mxu0
        %5298 = vmatprep.mubr.bf16.mxu0 0
        %5299 = vmatmul.mubr.bf16.gmra.mrb[0].mxu0 %v5165
        %v5300 = vpop.f32.mrb[0].mxu0
        %v5301 = vadd.f32 0.0, %v5300
        %v5302 = vpop.f32.mrb[0].mxu0
        %v5303 = vpop.f32.mrb[0].mxu0
        %v5304 = vadd.f32 0.0, %v5303
        %v5305 = vpop.f32.mrb[0].mxu0
        %5306 = vmatprep.mubr.bf16.mxu0 0
        %5307 = vmatmul.mubr.bf16.gmra.mrb[0].mxu0 %v5166
        %v5308 = vpop.f32.mrb[0].mxu0
        %v5309 = vadd.f32 0.0, %v5308
        %v5310 = vpop.f32.mrb[0].mxu0
        %v5311 = vpop.f32.mrb[0].mxu0
        %v5312 = vadd.f32 0.0, %v5311
        %v5313 = vpop.f32.mrb[0].mxu0
        %5314 = vmatprep.mubr.bf16.mxu0 0
        %5315 = vmatmul.mubr.bf16.gmra.mrb[0].mxu0 %v5167
        %v5316 = vpop.f32.mrb[0].mxu0
        %v5317 = vadd.f32 0.0, %v5316
        %v5318 = vpop.f32.mrb[0].mxu0
        %v5319 = vpop.f32.mrb[0].mxu0
        %v5320 = vadd.f32 0.0, %v5319
        %v5321 = vpop.f32.mrb[0].mxu0
        %5322 = vmatprep.mubr.bf16.mxu0 0
        %5323 = vmatmul.mubr.bf16.gmra.mrb[0].mxu0 %v5168
        %v5324 = vpop.f32.mrb[0].mxu0
        %v5325 = vadd.f32 0.0, %v5324
        %v5326 = vpop.f32.mrb[0].mxu0
        %v5327 = vpop.f32.mrb[0].mxu0
        %v5328 = vadd.f32 0.0, %v5327
        %v5329 = vpop.f32.mrb[0].mxu0
        %5330 = vdwg.mxu0
        %v5331 = vadd.f32 %v5129, %v5269
        %v5332 = vadd.f32 %v5130, %v5272
        %v5333 = vadd.f32 %v5131, %v5277
        %v5334 = vadd.f32 %v5132, %v5280
        %v5335 = vadd.f32 %v5133, %v5285
        %v5336 = vadd.f32 %v5134, %v5288
        %v5337 = vadd.f32 %v5135, %v5293
        %v5338 = vadd.f32 %v5136, %v5296
        %v5339 = vadd.f32 %v5137, %v5301
        %v5340 = vadd.f32 %v5138, %v5304
        %v5341 = vadd.f32 %v5139, %v5309
        %v5342 = vadd.f32 %v5140, %v5312
        %v5343 = vadd.f32 %v5141, %v5317
        %v5344 = vadd.f32 %v5142, %v5320
        %v5345 = vadd.f32 %v5143, %v5325
        %v5346 = vadd.f32 %v5144, %v5328
        %v5347 = vld [vmem:[%s438 + $0x2] sm:$0xff]
        %v5348 = vld [vmem:[%s438 + $0x12] sm:$0xff]
        %v5349 = vld [vmem:[%s438 + $0x22] sm:$0xff]
        %v5350 = vld [vmem:[%s438 + $0x32] sm:$0xff]
        %v5351 = vld [vmem:[%s438 + $0x42] sm:$0xff]
        %v5352 = vld [vmem:[%s438 + $0x52] sm:$0xff]
        %v5353 = vld [vmem:[%s438 + $0x62] sm:$0xff]
        %v5354 = vld [vmem:[%s438 + $0x72] sm:$0xff]
        %v5355 = vld [vmem:[%s438 + $0xa2] sm:$0xff]
        %v5356 = vld [vmem:[%s438 + $0xb2] sm:$0xff]
        %v5357 = vld [vmem:[%s438 + $0xc2] sm:$0xff]
        %v5358 = vld [vmem:[%s438 + $0xd2] sm:$0xff]
        %v5359 = vld [vmem:[%s438 + $0xe2] sm:$0xff]
        %v5360 = vld [vmem:[%s438 + $0xf2] sm:$0xff]
        %v5361 = vld [vmem:[%s438 + $0x102] sm:$0xff]
        %v5362 = vld [vmem:[%s438 + $0x112] sm:$0xff]
        %v5363 = vpack.c.bf16 %v5348, %v5347
        %v5364 = vpack.c.bf16 %v5350, %v5349
        %v5365 = vpack.c.bf16 %v5352, %v5351
        %v5366 = vpack.c.bf16 %v5354, %v5353
        %v5367 = vpack.c.bf16 %v5356, %v5355
        %v5368 = vpack.c.bf16 %v5358, %v5357
        %v5369 = vpack.c.bf16 %v5360, %v5359
        %v5370 = vpack.c.bf16 %v5362, %v5361
        %s5371 = scalar_lea.vmem %s1, 896
        %v5372 = vld [vmem:[%s5371] sm:$0xf]
        %v5373 = vld [vmem:[%s5371 + $0x4] sm:$0xf]
        %v5374 = vld [vmem:[%s5371 + $0x8] sm:$0xf]
        %v5375 = vld [vmem:[%s5371 + $0xc] sm:$0xf]
        %v5376 = vld [vmem:[%s5371 + $0x10] sm:$0xf]
        %v5377 = vld [vmem:[%s5371 + $0x14] sm:$0xf]
        %v5378 = vld [vmem:[%s5371 + $0x18] sm:$0xf]
        %v5379 = vld [vmem:[%s5371 + $0x1c] sm:$0xf]
        %v5380 = vld [vmem:[%s5371 + $0x20] sm:$0xf]
        %v5381 = vld [vmem:[%s5371 + $0x24] sm:$0xf]
        %v5382 = vld [vmem:[%s5371 + $0x28] sm:$0xf]
        %v5383 = vld [vmem:[%s5371 + $0x2c] sm:$0xf]
        %v5384 = vld [vmem:[%s5371 + $0x30] sm:$0xf]
        %v5385 = vld [vmem:[%s5371 + $0x34] sm:$0xf]
        %v5386 = vld [vmem:[%s5371 + $0x38] sm:$0xf]
        %v5387 = vld [vmem:[%s5371 + $0x3c] sm:$0xf]
        %v5404 = vunpack.c.l.b16 %v5372
        %v5405 = vunpack.c.l.b16 %v5373
        %v5406 = vunpack.c.l.b16 %v5374
        %v5407 = vunpack.c.l.b16 %v5375
        %v5408 = vunpack.c.l.b16 %v5376
        %v5409 = vunpack.c.l.b16 %v5377
        %v5410 = vunpack.c.l.b16 %v5378
        %v5411 = vunpack.c.l.b16 %v5379
        %v5412 = vunpack.c.l.b16 %v5380
        %v5413 = vunpack.c.l.b16 %v5381
        %v5414 = vunpack.c.l.b16 %v5382
        %v5415 = vunpack.c.l.b16 %v5383
        %v5416 = vunpack.c.l.b16 %v5384
        %v5417 = vunpack.c.l.b16 %v5385
        %v5418 = vunpack.c.l.b16 %v5386
        %v5419 = vunpack.c.l.b16 %v5387
        %v5420 = vpack.c.b16 %v5405, %v5404
        %v5421 = vpack.c.b16 %v5407, %v5406
        %v5422 = vpack.c.b16 %v5409, %v5408
        %v5423 = vpack.c.b16 %v5411, %v5410
        %v5424 = vpack.c.b16 %v5413, %v5412
        %v5425 = vpack.c.b16 %v5415, %v5414
        %v5426 = vpack.c.b16 %v5417, %v5416
        %v5427 = vpack.c.b16 %v5419, %v5418
        %5436 = vmatprep.subr.bf16.mxu0 0
        %5437 = vmatpush1.bf16.msra.mxu0 %v5420
        %5438 = vmatprep.subr.bf16.mxu0 0
        %5439 = vmatpush1.bf16.msra.mxu0 %v5421
        %5440 = vmatprep.subr.bf16.mxu0 0
        %5441 = vmatpush1.bf16.msra.mxu0 %v5422
        %5442 = vmatprep.subr.bf16.mxu0 0
        %5443 = vmatpush1.bf16.msra.mxu0 %v5423
        %5444 = vmatprep.subr.bf16.mxu0 0
        %5445 = vmatpush1.bf16.msra.mxu0 %v5424
        %5446 = vmatprep.subr.bf16.mxu0 0
        %5447 = vmatpush1.bf16.msra.mxu0 %v5425
        %5448 = vmatprep.subr.bf16.mxu0 0
        %5449 = vmatpush1.bf16.msra.mxu0 %v5426
        %5450 = vmatprep.subr.bf16.mxu0 0
        %5451 = vmatpush1.bf16.msra.mxu0 %v5427
        %5452 = vmatprep.subr.bf16.mxu0 0
        %5453 = vmatpush1.bf16.msra.mxu0 0
        %5454 = vmatprep.subr.bf16.mxu0 0
        %5455 = vmatpush1.bf16.msra.mxu0 0
        %5456 = vmatprep.subr.bf16.mxu0 0
        %5457 = vmatpush1.bf16.msra.mxu0 0
        %5458 = vmatprep.subr.bf16.mxu0 0
        %5459 = vmatpush1.bf16.msra.mxu0 0
        %5460 = vmatprep.subr.bf16.mxu0 0
        %5461 = vmatpush1.bf16.msra.mxu0 0
        %5462 = vmatprep.subr.bf16.mxu0 0
        %5463 = vmatpush1.bf16.msra.mxu0 0
        %5464 = vmatprep.subr.bf16.mxu0 0
        %5465 = vmatpush1.bf16.msra.mxu0 0
        %5466 = vmatprep.subr.bf16.mxu0 0
        %5467 = vmatpush1.bf16.msra.mxu0 0
        %5468 = vmatprep.mubr.bf16.mxu0 0
        %5469 = vmatmul.mubr.bf16.gmra.mrb[0].mxu0 %v5363
        %v5470 = vpop.f32.mrb[0].mxu0
        %v5471 = vadd.f32 0.0, %v5470
        %v5472 = vpop.f32.mrb[0].mxu0
        %v5473 = vpop.f32.mrb[0].mxu0
        %v5474 = vadd.f32 0.0, %v5473
        %v5475 = vpop.f32.mrb[0].mxu0
        %5476 = vmatprep.mubr.bf16.mxu0 0
        %5477 = vmatmul.mubr.bf16.gmra.mrb[0].mxu0 %v5364
        %v5478 = vpop.f32.mrb[0].mxu0
        %v5479 = vadd.f32 0.0, %v5478
        %v5480 = vpop.f32.mrb[0].mxu0
        %v5481 = vpop.f32.mrb[0].mxu0
        %v5482 = vadd.f32 0.0, %v5481
        %v5483 = vpop.f32.mrb[0].mxu0
        %5484 = vmatprep.mubr.bf16.mxu0 0
        %5485 = vmatmul.mubr.bf16.gmra.mrb[0].mxu0 %v5365
        %v5486 = vpop.f32.mrb[0].mxu0
        %v5487 = vadd.f32 0.0, %v5486
        %v5488 = vpop.f32.mrb[0].mxu0
        %v5489 = vpop.f32.mrb[0].mxu0
        %v5490 = vadd.f32 0.0, %v5489
        %v5491 = vpop.f32.mrb[0].mxu0
        %5492 = vmatprep.mubr.bf16.mxu0 0
        %5493 = vmatmul.mubr.bf16.gmra.mrb[0].mxu0 %v5366
        %v5494 = vpop.f32.mrb[0].mxu0
        %v5495 = vadd.f32 0.0, %v5494
        %v5496 = vpop.f32.mrb[0].mxu0
        %v5497 = vpop.f32.mrb[0].mxu0
        %v5498 = vadd.f32 0.0, %v5497
        %v5499 = vpop.f32.mrb[0].mxu0
        %5500 = vmatprep.mubr.bf16.mxu0 0
        %5501 = vmatmul.mubr.bf16.gmra.mrb[0].mxu0 %v5367
        %v5502 = vpop.f32.mrb[0].mxu0
        %v5503 = vadd.f32 0.0, %v5502
        %v5504 = vpop.f32.mrb[0].mxu0
        %v5505 = vpop.f32.mrb[0].mxu0
        %v5506 = vadd.f32 0.0, %v5505
        %v5507 = vpop.f32.mrb[0].mxu0
        %5508 = vmatprep.mubr.bf16.mxu0 0
        %5509 = vmatmul.mubr.bf16.gmra.mrb[0].mxu0 %v5368
        %v5510 = vpop.f32.mrb[0].mxu0
        %v5511 = vadd.f32 0.0, %v5510
        %v5512 = vpop.f32.mrb[0].mxu0
        %v5513 = vpop.f32.mrb[0].mxu0
        %v5514 = vadd.f32 0.0, %v5513
        %v5515 = vpop.f32.mrb[0].mxu0
        %5516 = vmatprep.mubr.bf16.mxu0 0
        %5517 = vmatmul.mubr.bf16.gmra.mrb[0].mxu0 %v5369
        %v5518 = vpop.f32.mrb[0].mxu0
        %v5519 = vadd.f32 0.0, %v5518
        %v5520 = vpop.f32.mrb[0].mxu0
        %v5521 = vpop.f32.mrb[0].mxu0
        %v5522 = vadd.f32 0.0, %v5521
        %v5523 = vpop.f32.mrb[0].mxu0
        %5524 = vmatprep.mubr.bf16.mxu0 0
        %5525 = vmatmul.mubr.bf16.gmra.mrb[0].mxu0 %v5370
        %v5526 = vpop.f32.mrb[0].mxu0
        %v5527 = vadd.f32 0.0, %v5526
        %v5528 = vpop.f32.mrb[0].mxu0
        %v5529 = vpop.f32.mrb[0].mxu0
        %v5530 = vadd.f32 0.0, %v5529
        %v5531 = vpop.f32.mrb[0].mxu0
        %5532 = vdwg.mxu0
        %v5533 = vadd.f32 %v5331, %v5471
        %v5534 = vadd.f32 %v5332, %v5474
        %v5535 = vadd.f32 %v5333, %v5479
        %v5536 = vadd.f32 %v5334, %v5482
        %v5537 = vadd.f32 %v5335, %v5487
        %v5538 = vadd.f32 %v5336, %v5490
        %v5539 = vadd.f32 %v5337, %v5495
        %v5540 = vadd.f32 %v5338, %v5498
        %v5541 = vadd.f32 %v5339, %v5503
        %v5542 = vadd.f32 %v5340, %v5506
        %v5543 = vadd.f32 %v5341, %v5511
        %v5544 = vadd.f32 %v5342, %v5514
        %v5545 = vadd.f32 %v5343, %v5519
        %v5546 = vadd.f32 %v5344, %v5522
        %v5547 = vadd.f32 %v5345, %v5527
        %v5548 = vadd.f32 %v5346, %v5530
        %v5549 = vld [vmem:[%s1749] sm:$0xff]
        %v5550 = vld [vmem:[%s1749 + $0x10] sm:$0xff]
        %v5551 = vld [vmem:[%s1749 + $0x20] sm:$0xff]
        %v5552 = vld [vmem:[%s1749 + $0x30] sm:$0xff]
        %v5553 = vld [vmem:[%s1749 + $0x40] sm:$0xff]
        %v5554 = vld [vmem:[%s1749 + $0x50] sm:$0xff]
        %v5555 = vld [vmem:[%s1749 + $0x60] sm:$0xff]
        %v5556 = vld [vmem:[%s1749 + $0x70] sm:$0xff]
        %v5557 = vld [vmem:[%s1749 + $0xa0] sm:$0xff]
        %v5558 = vld [vmem:[%s1749 + $0xb0] sm:$0xff]
        %v5559 = vld [vmem:[%s1749 + $0xc0] sm:$0xff]
        %v5560 = vld [vmem:[%s1749 + $0xd0] sm:$0xff]
        %v5561 = vld [vmem:[%s1749 + $0xe0] sm:$0xff]
        %v5562 = vld [vmem:[%s1749 + $0xf0] sm:$0xff]
        %v5563 = vld [vmem:[%s1749 + $0x100] sm:$0xff]
        %v5564 = vld [vmem:[%s1749 + $0x110] sm:$0xff]
        %v5565 = vpack.c.bf16 %v5550, %v5549
        %v5566 = vpack.c.bf16 %v5552, %v5551
        %v5567 = vpack.c.bf16 %v5554, %v5553
        %v5568 = vpack.c.bf16 %v5556, %v5555
        %v5569 = vpack.c.bf16 %v5558, %v5557
        %v5570 = vpack.c.bf16 %v5560, %v5559
        %v5571 = vpack.c.bf16 %v5562, %v5561
        %v5572 = vpack.c.bf16 %v5564, %v5563
        %s5573 = scalar_lea.vmem %s1, 960
        %v5574 = vld [vmem:[%s5573] sm:$0xf]
        %v5575 = vld [vmem:[%s5573 + $0x4] sm:$0xf]
        %v5576 = vld [vmem:[%s5573 + $0x8] sm:$0xf]
        %v5577 = vld [vmem:[%s5573 + $0xc] sm:$0xf]
        %v5578 = vld [vmem:[%s5573 + $0x10] sm:$0xf]
        %v5579 = vld [vmem:[%s5573 + $0x14] sm:$0xf]
        %v5580 = vld [vmem:[%s5573 + $0x18] sm:$0xf]
        %v5581 = vld [vmem:[%s5573 + $0x1c] sm:$0xf]
        %v5582 = vld [vmem:[%s5573 + $0x20] sm:$0xf]
        %v5583 = vld [vmem:[%s5573 + $0x24] sm:$0xf]
        %v5584 = vld [vmem:[%s5573 + $0x28] sm:$0xf]
        %v5585 = vld [vmem:[%s5573 + $0x2c] sm:$0xf]
        %v5586 = vld [vmem:[%s5573 + $0x30] sm:$0xf]
        %v5587 = vld [vmem:[%s5573 + $0x34] sm:$0xf]
        %v5588 = vld [vmem:[%s5573 + $0x38] sm:$0xf]
        %v5589 = vld [vmem:[%s5573 + $0x3c] sm:$0xf]
        %v5606 = vunpack.c.l.b16 %v5574
        %v5607 = vunpack.c.l.b16 %v5575
        %v5608 = vunpack.c.l.b16 %v5576
        %v5609 = vunpack.c.l.b16 %v5577
        %v5610 = vunpack.c.l.b16 %v5578
        %v5611 = vunpack.c.l.b16 %v5579
        %v5612 = vunpack.c.l.b16 %v5580
        %v5613 = vunpack.c.l.b16 %v5581
        %v5614 = vunpack.c.l.b16 %v5582
        %v5615 = vunpack.c.l.b16 %v5583
        %v5616 = vunpack.c.l.b16 %v5584
        %v5617 = vunpack.c.l.b16 %v5585
        %v5618 = vunpack.c.l.b16 %v5586
        %v5619 = vunpack.c.l.b16 %v5587
        %v5620 = vunpack.c.l.b16 %v5588
        %v5621 = vunpack.c.l.b16 %v5589
        %v5622 = vpack.c.b16 %v5607, %v5606
        %v5623 = vpack.c.b16 %v5609, %v5608
        %v5624 = vpack.c.b16 %v5611, %v5610
        %v5625 = vpack.c.b16 %v5613, %v5612
        %v5626 = vpack.c.b16 %v5615, %v5614
        %v5627 = vpack.c.b16 %v5617, %v5616
        %v5628 = vpack.c.b16 %v5619, %v5618
        %v5629 = vpack.c.b16 %v5621, %v5620
        %5638 = vmatprep.subr.bf16.mxu0 0
        %5639 = vmatpush1.bf16.msra.mxu0 %v5622
        %5640 = vmatprep.subr.bf16.mxu0 0
        %5641 = vmatpush1.bf16.msra.mxu0 %v5623
        %5642 = vmatprep.subr.bf16.mxu0 0
        %5643 = vmatpush1.bf16.msra.mxu0 %v5624
        %5644 = vmatprep.subr.bf16.mxu0 0
        %5645 = vmatpush1.bf16.msra.mxu0 %v5625
        %5646 = vmatprep.subr.bf16.mxu0 0
        %5647 = vmatpush1.bf16.msra.mxu0 %v5626
        %5648 = vmatprep.subr.bf16.mxu0 0
        %5649 = vmatpush1.bf16.msra.mxu0 %v5627
        %5650 = vmatprep.subr.bf16.mxu0 0
        %5651 = vmatpush1.bf16.msra.mxu0 %v5628
        %5652 = vmatprep.subr.bf16.mxu0 0
        %5653 = vmatpush1.bf16.msra.mxu0 %v5629
        %5654 = vmatprep.subr.bf16.mxu0 0
        %5655 = vmatpush1.bf16.msra.mxu0 0
        %5656 = vmatprep.subr.bf16.mxu0 0
        %5657 = vmatpush1.bf16.msra.mxu0 0
        %5658 = vmatprep.subr.bf16.mxu0 0
        %5659 = vmatpush1.bf16.msra.mxu0 0
        %5660 = vmatprep.subr.bf16.mxu0 0
        %5661 = vmatpush1.bf16.msra.mxu0 0
        %5662 = vmatprep.subr.bf16.mxu0 0
        %5663 = vmatpush1.bf16.msra.mxu0 0
        %5664 = vmatprep.subr.bf16.mxu0 0
        %5665 = vmatpush1.bf16.msra.mxu0 0
        %5666 = vmatprep.subr.bf16.mxu0 0
        %5667 = vmatpush1.bf16.msra.mxu0 0
        %5668 = vmatprep.subr.bf16.mxu0 0
        %5669 = vmatpush1.bf16.msra.mxu0 0
        %5670 = vmatprep.mubr.bf16.mxu0 0
        %5671 = vmatmul.mubr.bf16.gmra.mrb[0].mxu0 %v5565
        %v5672 = vpop.f32.mrb[0].mxu0
        %v5673 = vadd.f32 0.0, %v5672
        %v5674 = vpop.f32.mrb[0].mxu0
        %v5675 = vpop.f32.mrb[0].mxu0
        %v5676 = vadd.f32 0.0, %v5675
        %v5677 = vpop.f32.mrb[0].mxu0
        %5678 = vmatprep.mubr.bf16.mxu0 0
        %5679 = vmatmul.mubr.bf16.gmra.mrb[0].mxu0 %v5566
        %v5680 = vpop.f32.mrb[0].mxu0
        %v5681 = vadd.f32 0.0, %v5680
        %v5682 = vpop.f32.mrb[0].mxu0
        %v5683 = vpop.f32.mrb[0].mxu0
        %v5684 = vadd.f32 0.0, %v5683
        %v5685 = vpop.f32.mrb[0].mxu0
        %5686 = vmatprep.mubr.bf16.mxu0 0
        %5687 = vmatmul.mubr.bf16.gmra.mrb[0].mxu0 %v5567
        %v5688 = vpop.f32.mrb[0].mxu0
        %v5689 = vadd.f32 0.0, %v5688
        %v5690 = vpop.f32.mrb[0].mxu0
        %v5691 = vpop.f32.mrb[0].mxu0
        %v5692 = vadd.f32 0.0, %v5691
        %v5693 = vpop.f32.mrb[0].mxu0
        %5694 = vmatprep.mubr.bf16.mxu0 0
        %5695 = vmatmul.mubr.bf16.gmra.mrb[0].mxu0 %v5568
        %v5696 = vpop.f32.mrb[0].mxu0
        %v5697 = vadd.f32 0.0, %v5696
        %v5698 = vpop.f32.mrb[0].mxu0
        %v5699 = vpop.f32.mrb[0].mxu0
        %v5700 = vadd.f32 0.0, %v5699
        %v5701 = vpop.f32.mrb[0].mxu0
        %5702 = vmatprep.mubr.bf16.mxu0 0
        %5703 = vmatmul.mubr.bf16.gmra.mrb[0].mxu0 %v5569
        %v5704 = vpop.f32.mrb[0].mxu0
        %v5705 = vadd.f32 0.0, %v5704
        %v5706 = vpop.f32.mrb[0].mxu0
        %v5707 = vpop.f32.mrb[0].mxu0
        %v5708 = vadd.f32 0.0, %v5707
        %v5709 = vpop.f32.mrb[0].mxu0
        %5710 = vmatprep.mubr.bf16.mxu0 0
        %5711 = vmatmul.mubr.bf16.gmra.mrb[0].mxu0 %v5570
        %v5712 = vpop.f32.mrb[0].mxu0
        %v5713 = vadd.f32 0.0, %v5712
        %v5714 = vpop.f32.mrb[0].mxu0
        %v5715 = vpop.f32.mrb[0].mxu0
        %v5716 = vadd.f32 0.0, %v5715
        %v5717 = vpop.f32.mrb[0].mxu0
        %5718 = vmatprep.mubr.bf16.mxu0 0
        %5719 = vmatmul.mubr.bf16.gmra.mrb[0].mxu0 %v5571
        %v5720 = vpop.f32.mrb[0].mxu0
        %v5721 = vadd.f32 0.0, %v5720
        %v5722 = vpop.f32.mrb[0].mxu0
        %v5723 = vpop.f32.mrb[0].mxu0
        %v5724 = vadd.f32 0.0, %v5723
        %v5725 = vpop.f32.mrb[0].mxu0
        %5726 = vmatprep.mubr.bf16.mxu0 0
        %5727 = vmatmul.mubr.bf16.gmra.mrb[0].mxu0 %v5572
        %v5728 = vpop.f32.mrb[0].mxu0
        %v5729 = vadd.f32 0.0, %v5728
        %v5730 = vpop.f32.mrb[0].mxu0
        %v5731 = vpop.f32.mrb[0].mxu0
        %v5732 = vadd.f32 0.0, %v5731
        %v5733 = vpop.f32.mrb[0].mxu0
        %5734 = vdwg.mxu0
        %v5735 = vadd.f32 %v5533, %v5673
        %v5736 = vadd.f32 %v5534, %v5676
        %v5737 = vadd.f32 %v5535, %v5681
        %v5738 = vadd.f32 %v5536, %v5684
        %v5739 = vadd.f32 %v5537, %v5689
        %v5740 = vadd.f32 %v5538, %v5692
        %v5741 = vadd.f32 %v5539, %v5697
        %v5742 = vadd.f32 %v5540, %v5700
        %v5743 = vadd.f32 %v5541, %v5705
        %v5744 = vadd.f32 %v5542, %v5708
        %v5745 = vadd.f32 %v5543, %v5713
        %v5746 = vadd.f32 %v5544, %v5716
        %v5747 = vadd.f32 %v5545, %v5721
        %v5748 = vadd.f32 %v5546, %v5724
        %v5749 = vadd.f32 %v5547, %v5729
        %v5750 = vadd.f32 %v5548, %v5732
        %v5751 = vld [vmem:[%s1749 + $0x1] sm:$0xff]
        %v5752 = vld [vmem:[%s1749 + $0x11] sm:$0xff]
        %v5753 = vld [vmem:[%s1749 + $0x21] sm:$0xff]
        %v5754 = vld [vmem:[%s1749 + $0x31] sm:$0xff]
        %v5755 = vld [vmem:[%s1749 + $0x41] sm:$0xff]
        %v5756 = vld [vmem:[%s1749 + $0x51] sm:$0xff]
        %v5757 = vld [vmem:[%s1749 + $0x61] sm:$0xff]
        %v5758 = vld [vmem:[%s1749 + $0x71] sm:$0xff]
        %v5759 = vld [vmem:[%s1749 + $0xa1] sm:$0xff]
        %v5760 = vld [vmem:[%s1749 + $0xb1] sm:$0xff]
        %v5761 = vld [vmem:[%s1749 + $0xc1] sm:$0xff]
        %v5762 = vld [vmem:[%s1749 + $0xd1] sm:$0xff]
        %v5763 = vld [vmem:[%s1749 + $0xe1] sm:$0xff]
        %v5764 = vld [vmem:[%s1749 + $0xf1] sm:$0xff]
        %v5765 = vld [vmem:[%s1749 + $0x101] sm:$0xff]
        %v5766 = vld [vmem:[%s1749 + $0x111] sm:$0xff]
        %v5767 = vpack.c.bf16 %v5752, %v5751
        %v5768 = vpack.c.bf16 %v5754, %v5753
        %v5769 = vpack.c.bf16 %v5756, %v5755
        %v5770 = vpack.c.bf16 %v5758, %v5757
        %v5771 = vpack.c.bf16 %v5760, %v5759
        %v5772 = vpack.c.bf16 %v5762, %v5761
        %v5773 = vpack.c.bf16 %v5764, %v5763
        %v5774 = vpack.c.bf16 %v5766, %v5765
        %s5775 = scalar_lea.vmem %s1, 1024
        %v5776 = vld [vmem:[%s5775] sm:$0xf]
        %v5777 = vld [vmem:[%s5775 + $0x4] sm:$0xf]
        %v5778 = vld [vmem:[%s5775 + $0x8] sm:$0xf]
        %v5779 = vld [vmem:[%s5775 + $0xc] sm:$0xf]
        %v5780 = vld [vmem:[%s5775 + $0x10] sm:$0xf]
        %v5781 = vld [vmem:[%s5775 + $0x14] sm:$0xf]
        %v5782 = vld [vmem:[%s5775 + $0x18] sm:$0xf]
        %v5783 = vld [vmem:[%s5775 + $0x1c] sm:$0xf]
        %v5784 = vld [vmem:[%s5775 + $0x20] sm:$0xf]
        %v5785 = vld [vmem:[%s5775 + $0x24] sm:$0xf]
        %v5786 = vld [vmem:[%s5775 + $0x28] sm:$0xf]
        %v5787 = vld [vmem:[%s5775 + $0x2c] sm:$0xf]
        %v5788 = vld [vmem:[%s5775 + $0x30] sm:$0xf]
        %v5789 = vld [vmem:[%s5775 + $0x34] sm:$0xf]
        %v5790 = vld [vmem:[%s5775 + $0x38] sm:$0xf]
        %v5791 = vld [vmem:[%s5775 + $0x3c] sm:$0xf]
        %v5808 = vunpack.c.l.b16 %v5776
        %v5809 = vunpack.c.l.b16 %v5777
        %v5810 = vunpack.c.l.b16 %v5778
        %v5811 = vunpack.c.l.b16 %v5779
        %v5812 = vunpack.c.l.b16 %v5780
        %v5813 = vunpack.c.l.b16 %v5781
        %v5814 = vunpack.c.l.b16 %v5782
        %v5815 = vunpack.c.l.b16 %v5783
        %v5816 = vunpack.c.l.b16 %v5784
        %v5817 = vunpack.c.l.b16 %v5785
        %v5818 = vunpack.c.l.b16 %v5786
        %v5819 = vunpack.c.l.b16 %v5787
        %v5820 = vunpack.c.l.b16 %v5788
        %v5821 = vunpack.c.l.b16 %v5789
        %v5822 = vunpack.c.l.b16 %v5790
        %v5823 = vunpack.c.l.b16 %v5791
        %v5824 = vpack.c.b16 %v5809, %v5808
        %v5825 = vpack.c.b16 %v5811, %v5810
        %v5826 = vpack.c.b16 %v5813, %v5812
        %v5827 = vpack.c.b16 %v5815, %v5814
        %v5828 = vpack.c.b16 %v5817, %v5816
        %v5829 = vpack.c.b16 %v5819, %v5818
        %v5830 = vpack.c.b16 %v5821, %v5820
        %v5831 = vpack.c.b16 %v5823, %v5822
        %5840 = vmatprep.subr.bf16.mxu0 0
        %5841 = vmatpush1.bf16.msra.mxu0 %v5824
        %5842 = vmatprep.subr.bf16.mxu0 0
        %5843 = vmatpush1.bf16.msra.mxu0 %v5825
        %5844 = vmatprep.subr.bf16.mxu0 0
        %5845 = vmatpush1.bf16.msra.mxu0 %v5826
        %5846 = vmatprep.subr.bf16.mxu0 0
        %5847 = vmatpush1.bf16.msra.mxu0 %v5827
        %5848 = vmatprep.subr.bf16.mxu0 0
        %5849 = vmatpush1.bf16.msra.mxu0 %v5828
        %5850 = vmatprep.subr.bf16.mxu0 0
        %5851 = vmatpush1.bf16.msra.mxu0 %v5829
        %5852 = vmatprep.subr.bf16.mxu0 0
        %5853 = vmatpush1.bf16.msra.mxu0 %v5830
        %5854 = vmatprep.subr.bf16.mxu0 0
        %5855 = vmatpush1.bf16.msra.mxu0 %v5831
        %5856 = vmatprep.subr.bf16.mxu0 0
        %5857 = vmatpush1.bf16.msra.mxu0 0
        %5858 = vmatprep.subr.bf16.mxu0 0
        %5859 = vmatpush1.bf16.msra.mxu0 0
        %5860 = vmatprep.subr.bf16.mxu0 0
        %5861 = vmatpush1.bf16.msra.mxu0 0
        %5862 = vmatprep.subr.bf16.mxu0 0
        %5863 = vmatpush1.bf16.msra.mxu0 0
        %5864 = vmatprep.subr.bf16.mxu0 0
        %5865 = vmatpush1.bf16.msra.mxu0 0
        %5866 = vmatprep.subr.bf16.mxu0 0
        %5867 = vmatpush1.bf16.msra.mxu0 0
        %5868 = vmatprep.subr.bf16.mxu0 0
        %5869 = vmatpush1.bf16.msra.mxu0 0
        %5870 = vmatprep.subr.bf16.mxu0 0
        %5871 = vmatpush1.bf16.msra.mxu0 0
        %5872 = vmatprep.mubr.bf16.mxu0 0
        %5873 = vmatmul.mubr.bf16.gmra.mrb[0].mxu0 %v5767
        %v5874 = vpop.f32.mrb[0].mxu0
        %v5875 = vadd.f32 0.0, %v5874
        %v5876 = vpop.f32.mrb[0].mxu0
        %v5877 = vpop.f32.mrb[0].mxu0
        %v5878 = vadd.f32 0.0, %v5877
        %v5879 = vpop.f32.mrb[0].mxu0
        %5880 = vmatprep.mubr.bf16.mxu0 0
        %5881 = vmatmul.mubr.bf16.gmra.mrb[0].mxu0 %v5768
        %v5882 = vpop.f32.mrb[0].mxu0
        %v5883 = vadd.f32 0.0, %v5882
        %v5884 = vpop.f32.mrb[0].mxu0
        %v5885 = vpop.f32.mrb[0].mxu0
        %v5886 = vadd.f32 0.0, %v5885
        %v5887 = vpop.f32.mrb[0].mxu0
        %5888 = vmatprep.mubr.bf16.mxu0 0
        %5889 = vmatmul.mubr.bf16.gmra.mrb[0].mxu0 %v5769
        %v5890 = vpop.f32.mrb[0].mxu0
        %v5891 = vadd.f32 0.0, %v5890
        %v5892 = vpop.f32.mrb[0].mxu0
        %v5893 = vpop.f32.mrb[0].mxu0
        %v5894 = vadd.f32 0.0, %v5893
        %v5895 = vpop.f32.mrb[0].mxu0
        %5896 = vmatprep.mubr.bf16.mxu0 0
        %5897 = vmatmul.mubr.bf16.gmra.mrb[0].mxu0 %v5770
        %v5898 = vpop.f32.mrb[0].mxu0
        %v5899 = vadd.f32 0.0, %v5898
        %v5900 = vpop.f32.mrb[0].mxu0
        %v5901 = vpop.f32.mrb[0].mxu0
        %v5902 = vadd.f32 0.0, %v5901
        %v5903 = vpop.f32.mrb[0].mxu0
        %5904 = vmatprep.mubr.bf16.mxu0 0
        %5905 = vmatmul.mubr.bf16.gmra.mrb[0].mxu0 %v5771
        %v5906 = vpop.f32.mrb[0].mxu0
        %v5907 = vadd.f32 0.0, %v5906
        %v5908 = vpop.f32.mrb[0].mxu0
        %v5909 = vpop.f32.mrb[0].mxu0
        %v5910 = vadd.f32 0.0, %v5909
        %v5911 = vpop.f32.mrb[0].mxu0
        %5912 = vmatprep.mubr.bf16.mxu0 0
        %5913 = vmatmul.mubr.bf16.gmra.mrb[0].mxu0 %v5772
        %v5914 = vpop.f32.mrb[0].mxu0
        %v5915 = vadd.f32 0.0, %v5914
        %v5916 = vpop.f32.mrb[0].mxu0
        %v5917 = vpop.f32.mrb[0].mxu0
        %v5918 = vadd.f32 0.0, %v5917
        %v5919 = vpop.f32.mrb[0].mxu0
        %5920 = vmatprep.mubr.bf16.mxu0 0
        %5921 = vmatmul.mubr.bf16.gmra.mrb[0].mxu0 %v5773
        %v5922 = vpop.f32.mrb[0].mxu0
        %v5923 = vadd.f32 0.0, %v5922
        %v5924 = vpop.f32.mrb[0].mxu0
        %v5925 = vpop.f32.mrb[0].mxu0
        %v5926 = vadd.f32 0.0, %v5925
        %v5927 = vpop.f32.mrb[0].mxu0
        %5928 = vmatprep.mubr.bf16.mxu0 0
        %5929 = vmatmul.mubr.bf16.gmra.mrb[0].mxu0 %v5774
        %v5930 = vpop.f32.mrb[0].mxu0
        %v5931 = vadd.f32 0.0, %v5930
        %v5932 = vpop.f32.mrb[0].mxu0
        %v5933 = vpop.f32.mrb[0].mxu0
        %v5934 = vadd.f32 0.0, %v5933
        %v5935 = vpop.f32.mrb[0].mxu0
        %5936 = vdwg.mxu0
        %v5937 = vadd.f32 %v5735, %v5875
        %v5938 = vadd.f32 %v5736, %v5878
        %v5939 = vadd.f32 %v5737, %v5883
        %v5940 = vadd.f32 %v5738, %v5886
        %v5941 = vadd.f32 %v5739, %v5891
        %v5942 = vadd.f32 %v5740, %v5894
        %v5943 = vadd.f32 %v5741, %v5899
        %v5944 = vadd.f32 %v5742, %v5902
        %v5945 = vadd.f32 %v5743, %v5907
        %v5946 = vadd.f32 %v5744, %v5910
        %v5947 = vadd.f32 %v5745, %v5915
        %v5948 = vadd.f32 %v5746, %v5918
        %v5949 = vadd.f32 %v5747, %v5923
        %v5950 = vadd.f32 %v5748, %v5926
        %v5951 = vadd.f32 %v5749, %v5931
        %v5952 = vadd.f32 %v5750, %v5934
        %v5953 = vld [vmem:[%s1749 + $0x2] sm:$0xff]
        %v5954 = vld [vmem:[%s1749 + $0x12] sm:$0xff]
        %v5955 = vld [vmem:[%s1749 + $0x22] sm:$0xff]
        %v5956 = vld [vmem:[%s1749 + $0x32] sm:$0xff]
        %v5957 = vld [vmem:[%s1749 + $0x42] sm:$0xff]
        %v5958 = vld [vmem:[%s1749 + $0x52] sm:$0xff]
        %v5959 = vld [vmem:[%s1749 + $0x62] sm:$0xff]
        %v5960 = vld [vmem:[%s1749 + $0x72] sm:$0xff]
        %v5961 = vld [vmem:[%s1749 + $0xa2] sm:$0xff]
        %v5962 = vld [vmem:[%s1749 + $0xb2] sm:$0xff]
        %v5963 = vld [vmem:[%s1749 + $0xc2] sm:$0xff]
        %v5964 = vld [vmem:[%s1749 + $0xd2] sm:$0xff]
        %v5965 = vld [vmem:[%s1749 + $0xe2] sm:$0xff]
        %v5966 = vld [vmem:[%s1749 + $0xf2] sm:$0xff]
        %v5967 = vld [vmem:[%s1749 + $0x102] sm:$0xff]
        %v5968 = vld [vmem:[%s1749 + $0x112] sm:$0xff]
        %v5969 = vpack.c.bf16 %v5954, %v5953
        %v5970 = vpack.c.bf16 %v5956, %v5955
        %v5971 = vpack.c.bf16 %v5958, %v5957
        %v5972 = vpack.c.bf16 %v5960, %v5959
        %v5973 = vpack.c.bf16 %v5962, %v5961
        %v5974 = vpack.c.bf16 %v5964, %v5963
        %v5975 = vpack.c.bf16 %v5966, %v5965
        %v5976 = vpack.c.bf16 %v5968, %v5967
        %s5977 = scalar_lea.vmem %s1, 1088
        %v5978 = vld [vmem:[%s5977] sm:$0xf]
        %v5979 = vld [vmem:[%s5977 + $0x4] sm:$0xf]
        %v5980 = vld [vmem:[%s5977 + $0x8] sm:$0xf]
        %v5981 = vld [vmem:[%s5977 + $0xc] sm:$0xf]
        %v5982 = vld [vmem:[%s5977 + $0x10] sm:$0xf]
        %v5983 = vld [vmem:[%s5977 + $0x14] sm:$0xf]
        %v5984 = vld [vmem:[%s5977 + $0x18] sm:$0xf]
        %v5985 = vld [vmem:[%s5977 + $0x1c] sm:$0xf]
        %v5986 = vld [vmem:[%s5977 + $0x20] sm:$0xf]
        %v5987 = vld [vmem:[%s5977 + $0x24] sm:$0xf]
        %v5988 = vld [vmem:[%s5977 + $0x28] sm:$0xf]
        %v5989 = vld [vmem:[%s5977 + $0x2c] sm:$0xf]
        %v5990 = vld [vmem:[%s5977 + $0x30] sm:$0xf]
        %v5991 = vld [vmem:[%s5977 + $0x34] sm:$0xf]
        %v5992 = vld [vmem:[%s5977 + $0x38] sm:$0xf]
        %v5993 = vld [vmem:[%s5977 + $0x3c] sm:$0xf]
        %v6010 = vunpack.c.l.b16 %v5978
        %v6011 = vunpack.c.l.b16 %v5979
        %v6012 = vunpack.c.l.b16 %v5980
        %v6013 = vunpack.c.l.b16 %v5981
        %v6014 = vunpack.c.l.b16 %v5982
        %v6015 = vunpack.c.l.b16 %v5983
        %v6016 = vunpack.c.l.b16 %v5984
        %v6017 = vunpack.c.l.b16 %v5985
        %v6018 = vunpack.c.l.b16 %v5986
        %v6019 = vunpack.c.l.b16 %v5987
        %v6020 = vunpack.c.l.b16 %v5988
        %v6021 = vunpack.c.l.b16 %v5989
        %v6022 = vunpack.c.l.b16 %v5990
        %v6023 = vunpack.c.l.b16 %v5991
        %v6024 = vunpack.c.l.b16 %v5992
        %v6025 = vunpack.c.l.b16 %v5993
        %v6026 = vpack.c.b16 %v6011, %v6010
        %v6027 = vpack.c.b16 %v6013, %v6012
        %v6028 = vpack.c.b16 %v6015, %v6014
        %v6029 = vpack.c.b16 %v6017, %v6016
        %v6030 = vpack.c.b16 %v6019, %v6018
        %v6031 = vpack.c.b16 %v6021, %v6020
        %v6032 = vpack.c.b16 %v6023, %v6022
        %v6033 = vpack.c.b16 %v6025, %v6024
        %6042 = vmatprep.subr.bf16.mxu0 0
        %6043 = vmatpush1.bf16.msra.mxu0 %v6026
        %6044 = vmatprep.subr.bf16.mxu0 0
        %6045 = vmatpush1.bf16.msra.mxu0 %v6027
        %6046 = vmatprep.subr.bf16.mxu0 0
        %6047 = vmatpush1.bf16.msra.mxu0 %v6028
        %6048 = vmatprep.subr.bf16.mxu0 0
        %6049 = vmatpush1.bf16.msra.mxu0 %v6029
        %6050 = vmatprep.subr.bf16.mxu0 0
        %6051 = vmatpush1.bf16.msra.mxu0 %v6030
        %6052 = vmatprep.subr.bf16.mxu0 0
        %6053 = vmatpush1.bf16.msra.mxu0 %v6031
        %6054 = vmatprep.subr.bf16.mxu0 0
        %6055 = vmatpush1.bf16.msra.mxu0 %v6032
        %6056 = vmatprep.subr.bf16.mxu0 0
        %6057 = vmatpush1.bf16.msra.mxu0 %v6033
        %6058 = vmatprep.subr.bf16.mxu0 0
        %6059 = vmatpush1.bf16.msra.mxu0 0
        %6060 = vmatprep.subr.bf16.mxu0 0
        %6061 = vmatpush1.bf16.msra.mxu0 0
        %6062 = vmatprep.subr.bf16.mxu0 0
        %6063 = vmatpush1.bf16.msra.mxu0 0
        %6064 = vmatprep.subr.bf16.mxu0 0
        %6065 = vmatpush1.bf16.msra.mxu0 0
        %6066 = vmatprep.subr.bf16.mxu0 0
        %6067 = vmatpush1.bf16.msra.mxu0 0
        %6068 = vmatprep.subr.bf16.mxu0 0
        %6069 = vmatpush1.bf16.msra.mxu0 0
        %6070 = vmatprep.subr.bf16.mxu0 0
        %6071 = vmatpush1.bf16.msra.mxu0 0
        %6072 = vmatprep.subr.bf16.mxu0 0
        %6073 = vmatpush1.bf16.msra.mxu0 0
        %6074 = vmatprep.mubr.bf16.mxu0 0
        %6075 = vmatmul.mubr.bf16.gmra.mrb[0].mxu0 %v5969
        %v6076 = vpop.f32.mrb[0].mxu0
        %v6077 = vadd.f32 0.0, %v6076
        %v6078 = vpop.f32.mrb[0].mxu0
        %v6079 = vpop.f32.mrb[0].mxu0
        %v6080 = vadd.f32 0.0, %v6079
        %v6081 = vpop.f32.mrb[0].mxu0
        %6082 = vmatprep.mubr.bf16.mxu0 0
        %6083 = vmatmul.mubr.bf16.gmra.mrb[0].mxu0 %v5970
        %v6084 = vpop.f32.mrb[0].mxu0
        %v6085 = vadd.f32 0.0, %v6084
        %v6086 = vpop.f32.mrb[0].mxu0
        %v6087 = vpop.f32.mrb[0].mxu0
        %v6088 = vadd.f32 0.0, %v6087
        %v6089 = vpop.f32.mrb[0].mxu0
        %6090 = vmatprep.mubr.bf16.mxu0 0
        %6091 = vmatmul.mubr.bf16.gmra.mrb[0].mxu0 %v5971
        %v6092 = vpop.f32.mrb[0].mxu0
        %v6093 = vadd.f32 0.0, %v6092
        %v6094 = vpop.f32.mrb[0].mxu0
        %v6095 = vpop.f32.mrb[0].mxu0
        %v6096 = vadd.f32 0.0, %v6095
        %v6097 = vpop.f32.mrb[0].mxu0
        %6098 = vmatprep.mubr.bf16.mxu0 0
        %6099 = vmatmul.mubr.bf16.gmra.mrb[0].mxu0 %v5972
        %v6100 = vpop.f32.mrb[0].mxu0
        %v6101 = vadd.f32 0.0, %v6100
        %v6102 = vpop.f32.mrb[0].mxu0
        %v6103 = vpop.f32.mrb[0].mxu0
        %v6104 = vadd.f32 0.0, %v6103
        %v6105 = vpop.f32.mrb[0].mxu0
        %6106 = vmatprep.mubr.bf16.mxu0 0
        %6107 = vmatmul.mubr.bf16.gmra.mrb[0].mxu0 %v5973
        %v6108 = vpop.f32.mrb[0].mxu0
        %v6109 = vadd.f32 0.0, %v6108
        %v6110 = vpop.f32.mrb[0].mxu0
        %v6111 = vpop.f32.mrb[0].mxu0
        %v6112 = vadd.f32 0.0, %v6111
        %v6113 = vpop.f32.mrb[0].mxu0
        %6114 = vmatprep.mubr.bf16.mxu0 0
        %6115 = vmatmul.mubr.bf16.gmra.mrb[0].mxu0 %v5974
        %v6116 = vpop.f32.mrb[0].mxu0
        %v6117 = vadd.f32 0.0, %v6116
        %v6118 = vpop.f32.mrb[0].mxu0
        %v6119 = vpop.f32.mrb[0].mxu0
        %v6120 = vadd.f32 0.0, %v6119
        %v6121 = vpop.f32.mrb[0].mxu0
        %6122 = vmatprep.mubr.bf16.mxu0 0
        %6123 = vmatmul.mubr.bf16.gmra.mrb[0].mxu0 %v5975
        %v6124 = vpop.f32.mrb[0].mxu0
        %v6125 = vadd.f32 0.0, %v6124
        %v6126 = vpop.f32.mrb[0].mxu0
        %v6127 = vpop.f32.mrb[0].mxu0
        %v6128 = vadd.f32 0.0, %v6127
        %v6129 = vpop.f32.mrb[0].mxu0
        %6130 = vmatprep.mubr.bf16.mxu0 0
        %6131 = vmatmul.mubr.bf16.gmra.mrb[0].mxu0 %v5976
        %v6132 = vpop.f32.mrb[0].mxu0
        %v6133 = vadd.f32 0.0, %v6132
        %v6134 = vpop.f32.mrb[0].mxu0
        %v6135 = vpop.f32.mrb[0].mxu0
        %v6136 = vadd.f32 0.0, %v6135
        %v6137 = vpop.f32.mrb[0].mxu0
        %6138 = vdwg.mxu0
        %v6139 = vadd.f32 %v5937, %v6077
        %v6140 = vadd.f32 %v5938, %v6080
        %v6141 = vadd.f32 %v5939, %v6085
        %v6142 = vadd.f32 %v5940, %v6088
        %v6143 = vadd.f32 %v5941, %v6093
        %v6144 = vadd.f32 %v5942, %v6096
        %v6145 = vadd.f32 %v5943, %v6101
        %v6146 = vadd.f32 %v5944, %v6104
        %v6147 = vadd.f32 %v5945, %v6109
        %v6148 = vadd.f32 %v5946, %v6112
        %v6149 = vadd.f32 %v5947, %v6117
        %v6150 = vadd.f32 %v5948, %v6120
        %v6151 = vadd.f32 %v5949, %v6125
        %v6152 = vadd.f32 %v5950, %v6128
        %v6153 = vadd.f32 %v5951, %v6133
        %v6154 = vadd.f32 %v5952, %v6136
        %s6155 = scalar_lea.vmem %s2, 1
        %v6156 = vld [vmem:[%s6155] sm:$0x1]
        %v6158 = vlaneseq
        %v6159 = vshrl.u32 %v6158, 7
        %v6160 = vsub.s32 0, %v6159
        %v6161 = vrot.slane %v6156, %v6160
        %v6163 = vadd.f32 %v6139, %v6161
        %v6164 = vadd.f32 %v6140, %v6161
        %v6165 = vadd.f32 %v6141, %v6161
        %v6166 = vadd.f32 %v6142, %v6161
        %v6167 = vadd.f32 %v6143, %v6161
        %v6168 = vadd.f32 %v6144, %v6161
        %v6169 = vadd.f32 %v6145, %v6161
        %v6170 = vadd.f32 %v6146, %v6161
        %v6171 = vadd.f32 %v6147, %v6161
        %v6172 = vadd.f32 %v6148, %v6161
        %v6173 = vadd.f32 %v6149, %v6161
        %v6174 = vadd.f32 %v6150, %v6161
        %v6175 = vadd.f32 %v6151, %v6161
        %v6176 = vadd.f32 %v6152, %v6161
        %v6177 = vadd.f32 %v6153, %v6161
        %v6178 = vadd.f32 %v6154, %v6161
        %v6179 = vmul.f32 %v6163, 0.1
        %v6180 = vmul.f32 %v6164, 0.1
        %v6181 = vmul.f32 %v6165, 0.1
        %v6182 = vmul.f32 %v6166, 0.1
        %v6183 = vmul.f32 %v6167, 0.1
        %v6184 = vmul.f32 %v6168, 0.1
        %v6185 = vmul.f32 %v6169, 0.1
        %v6186 = vmul.f32 %v6170, 0.1
        %v6187 = vmul.f32 %v6171, 0.1
        %v6188 = vmul.f32 %v6172, 0.1
        %v6189 = vmul.f32 %v6173, 0.1
        %v6190 = vmul.f32 %v6174, 0.1
        %v6191 = vmul.f32 %v6175, 0.1
        %v6192 = vmul.f32 %v6176, 0.1
        %v6193 = vmul.f32 %v6177, 0.1
        %v6194 = vmul.f32 %v6178, 0.1
        %v6195 = vmax.f32 %v6163, %v6179
        %v6196 = vmax.f32 %v6164, %v6180
        %v6197 = vmax.f32 %v6165, %v6181
        %v6198 = vmax.f32 %v6166, %v6182
        %v6199 = vmax.f32 %v6167, %v6183
        %v6200 = vmax.f32 %v6168, %v6184
        %v6201 = vmax.f32 %v6169, %v6185
        %v6202 = vmax.f32 %v6170, %v6186
        %v6203 = vmax.f32 %v6171, %v6187
        %v6204 = vmax.f32 %v6172, %v6188
        %v6205 = vmax.f32 %v6173, %v6189
        %v6206 = vmax.f32 %v6174, %v6190
        %v6207 = vmax.f32 %v6175, %v6191
        %v6208 = vmax.f32 %v6176, %v6192
        %v6209 = vmax.f32 %v6177, %v6193
        %v6210 = vmax.f32 %v6178, %v6194
        %6211 = vxpose.xlu0.b32.start [1/16] %v6195, 128
        %6212 = vxpose.xlu0.b32.cont [2/16] %v6196, 128
        %6213 = vxpose.xlu0.b32.cont [3/16] %v6197, 128
        %6214 = vxpose.xlu0.b32.cont [4/16] %v6198, 128
        %6215 = vxpose.xlu0.b32.cont [5/16] %v6199, 128
        %6216 = vxpose.xlu0.b32.cont [6/16] %v6200, 128
        %6217 = vxpose.xlu0.b32.cont [7/16] %v6201, 128
        %6218 = vxpose.xlu0.b32.cont [8/16] %v6202, 128
        %6219 = vxpose.xlu0.b32.cont [9/16] %v6203, 128
        %6220 = vxpose.xlu0.b32.cont [10/16] %v6204, 128
        %6221 = vxpose.xlu0.b32.cont [11/16] %v6205, 128
        %6222 = vxpose.xlu0.b32.cont [12/16] %v6206, 128
        %6223 = vxpose.xlu0.b32.cont [13/16] %v6207, 128
        %6224 = vxpose.xlu0.b32.cont [14/16] %v6208, 128
        %6225 = vxpose.xlu0.b32.cont [15/16] %v6209, 128
        %6226 = vxpose.xlu0.b32.end [16/16] %v6210, 128
        %v6227 = vpop.trf.xlu0
        %v6228 = vpop.trf.xlu0
        %v6229 = vpop.trf.xlu0
        %v6230 = vpop.trf.xlu0
        %v6231 = vpop.trf.xlu0
        %v6232 = vpop.trf.xlu0
        %v6233 = vpop.trf.xlu0
        %v6234 = vpop.trf.xlu0
        %v6235 = vpop.trf.xlu0
        %v6236 = vpop.trf.xlu0
        %v6237 = vpop.trf.xlu0
        %v6238 = vpop.trf.xlu0
        %v6239 = vpop.trf.xlu0
        %v6240 = vpop.trf.xlu0
        %v6241 = vpop.trf.xlu0
        %v6242 = vpop.trf.xlu0
        %v6243 = vpack.c.bf16 %v6227, %v6227
        %vm6244 = vcmask 516096
        %vm6245 = vsmask.f32 256
        %vm6246 = vmand %vm6244, %vm6245
        %v6247 = vld [vmem:[#allocation3] sm:$0x1]
        %v6248 = vsel %vm6246, %v6243, %v6247
        %6249 = vst [vmem:[#allocation3] sm:$0x1] %v6248
        %v6252 = vunpack.c.l.s4 1983009808
        %v6253 = vunpack.c.0.s8 %v6252
        %v6254 = vlaneseq
        %v6255 = vshrl.u32 %v6254, 7
        %v6256 = vsub.s32 %v6253, %v6255
        %v6257 = vrot.slane %v6243, %v6256
        %v6259 = vshrl.u32 %v6257, 16
        %v6261 = vrot.slane %v6259, 6
        %v6262 = vrot.slane %v6261, 2
        %6263 = vrot.lane.b32.xlu0 %v6262, 64
        %v6264 = vpop.permute.xlu0 %6263
        %vm6266 = vcmask 1040896
        %vm6267 = vmand %vm6266, %vm6245
        %v6268 = vld [vmem:[#allocation3] sm:$0x1]
        %v6269 = vsel %vm6267, %v6264, %v6268
        %6270 = vst [vmem:[#allocation3] sm:$0x1] %v6269
        %v6271 = vrot.slane %v6257, 7
        %v6272 = vrot.slane %v6271, 2
        %v6274 = vld [vmem:[#allocation3 + $0x2] sm:$0x1]
        %v6275 = vsel %vm6246, %v6272, %v6274
        %6276 = vst [vmem:[#allocation3 + $0x2] sm:$0x1] %v6275
        %v6277 = vrot.slane %v6259, 7
        %v6278 = vrot.slane %v6277, 2
        %6279 = vrot.lane.b32.xlu0 %v6278, 64
        %v6280 = vpop.permute.xlu0 %6279
        %v6282 = vld [vmem:[#allocation3 + $0x2] sm:$0x1]
        %v6283 = vsel %vm6267, %v6280, %v6282
        %6284 = vst [vmem:[#allocation3 + $0x2] sm:$0x1] %v6283
        %v6285 = vcombine.high %v6257, %v6257
        %v6287 = vld [vmem:[#allocation3 + $0x4] sm:$0x1]
        %v6288 = vsel %vm6246, %v6285, %v6287
        %6289 = vst [vmem:[#allocation3 + $0x4] sm:$0x1] %v6288
        %v6291 = vshrl.u32 %v6285, 16
        %v6293 = vrot.slane %v6291, 6
        %v6294 = vrot.slane %v6293, 2
        %6295 = vrot.lane.b32.xlu0 %v6294, 64
        %v6296 = vpop.permute.xlu0 %6295
        %v6298 = vld [vmem:[#allocation3 + $0x4] sm:$0x1]
        %v6299 = vsel %vm6267, %v6296, %v6298
        %6300 = vst [vmem:[#allocation3 + $0x4] sm:$0x1] %v6299
        %v6301 = vrot.slane %v6285, 7
        %v6302 = vrot.slane %v6301, 2
        %v6304 = vld [vmem:[#allocation3 + $0x6] sm:$0x1]
        %v6305 = vsel %vm6246, %v6302, %v6304
        %6306 = vst [vmem:[#allocation3 + $0x6] sm:$0x1] %v6305
        %v6307 = vrot.slane %v6291, 7
        %v6308 = vrot.slane %v6307, 2
        %6309 = vrot.lane.b32.xlu0 %v6308, 64
        %v6310 = vpop.permute.xlu0 %6309
        %v6312 = vld [vmem:[#allocation3 + $0x6] sm:$0x1]
        %v6313 = vsel %vm6267, %v6310, %v6312
        %6314 = vst [vmem:[#allocation3 + $0x6] sm:$0x1] %v6313
        %v6315 = vshll.u32 %v6257, 16
        %6317 = vrot.lane.b32.xlu0 %v6315, 64
        %v6318 = vpop.permute.xlu0 %6317
        %vm6320 = vsmask.f32 7938
        %vm6321 = vmand %vm6244, %vm6320
        %v6322 = vld [vmem:[#allocation3] sm:$0x1]
        %v6323 = vsel %vm6321, %v6318, %v6322
        %6324 = vst [vmem:[#allocation3] sm:$0x1] %v6323
        %vm6325 = vmand %vm6266, %vm6320
        %v6326 = vld [vmem:[#allocation3] sm:$0x1]
        %v6327 = vsel %vm6325, %v6243, %v6326
        %6328 = vst [vmem:[#allocation3] sm:$0x1] %v6327
        %v6329 = vrot.slane %v6315, 7
        %v6330 = vrot.slane %v6329, 2
        %6331 = vrot.lane.b32.xlu0 %v6330, 64
        %v6332 = vpop.permute.xlu0 %6331
        %v6334 = vld [vmem:[#allocation3 + $0x2] sm:$0x1]
        %v6335 = vsel %vm6321, %v6332, %v6334
        %6336 = vst [vmem:[#allocation3 + $0x2] sm:$0x1] %v6335
        %v6337 = vld [vmem:[#allocation3 + $0x2] sm:$0x1]
        %v6338 = vsel %vm6325, %v6272, %v6337
        %6339 = vst [vmem:[#allocation3 + $0x2] sm:$0x1] %v6338
        %v6340 = vshll.u32 %v6285, 16
        %6342 = vrot.lane.b32.xlu0 %v6340, 64
        %v6343 = vpop.permute.xlu0 %6342
        %v6345 = vld [vmem:[#allocation3 + $0x4] sm:$0x1]
        %v6346 = vsel %vm6321, %v6343, %v6345
        %6347 = vst [vmem:[#allocation3 + $0x4] sm:$0x1] %v6346
        %v6348 = vld [vmem:[#allocation3 + $0x4] sm:$0x1]
        %v6349 = vsel %vm6325, %v6285, %v6348
        %6350 = vst [vmem:[#allocation3 + $0x4] sm:$0x1] %v6349
        %v6351 = vrot.slane %v6340, 7
        %v6352 = vrot.slane %v6351, 2
        %6353 = vrot.lane.b32.xlu0 %v6352, 64
        %v6354 = vpop.permute.xlu0 %6353
        %v6356 = vld [vmem:[#allocation3 + $0x6] sm:$0x1]
        %v6357 = vsel %vm6321, %v6354, %v6356
        %6358 = vst [vmem:[#allocation3 + $0x6] sm:$0x1] %v6357
        %v6359 = vld [vmem:[#allocation3 + $0x6] sm:$0x1]
        %v6360 = vsel %vm6325, %v6302, %v6359
        %6361 = vst [vmem:[#allocation3 + $0x6] sm:$0x1] %v6360
        %v6362 = vld [vmem:[%s2473] sm:$0xff]
        %v6363 = vld [vmem:[%s2473 + $0x10] sm:$0xff]
        %v6364 = vld [vmem:[%s2473 + $0x20] sm:$0xff]
        %v6365 = vld [vmem:[%s2473 + $0x30] sm:$0xff]
        %v6366 = vld [vmem:[%s2473 + $0x40] sm:$0xff]
        %v6367 = vld [vmem:[%s2473 + $0x50] sm:$0xff]
        %v6368 = vld [vmem:[%s2473 + $0x60] sm:$0xff]
        %v6369 = vld [vmem:[%s2473 + $0x70] sm:$0xff]
        %v6370 = vld [vmem:[%s2473 + $0xa0] sm:$0xff]
        %v6371 = vld [vmem:[%s2473 + $0xb0] sm:$0xff]
        %v6372 = vld [vmem:[%s2473 + $0xc0] sm:$0xff]
        %v6373 = vld [vmem:[%s2473 + $0xd0] sm:$0xff]
        %v6374 = vld [vmem:[%s2473 + $0xe0] sm:$0xff]
        %v6375 = vld [vmem:[%s2473 + $0xf0] sm:$0xff]
        %v6376 = vld [vmem:[%s2473 + $0x100] sm:$0xff]
        %v6377 = vld [vmem:[%s2473 + $0x110] sm:$0xff]
        %v6378 = vpack.c.bf16 %v6363, %v6362
        %v6379 = vpack.c.bf16 %v6365, %v6364
        %v6380 = vpack.c.bf16 %v6367, %v6366
        %v6381 = vpack.c.bf16 %v6369, %v6368
        %v6382 = vpack.c.bf16 %v6371, %v6370
        %v6383 = vpack.c.bf16 %v6373, %v6372
        %v6384 = vpack.c.bf16 %v6375, %v6374
        %v6385 = vpack.c.bf16 %v6377, %v6376
        %v6386 = vld [vmem:[%s4393] sm:$0xf]
        %v6387 = vld [vmem:[%s4393 + $0x4] sm:$0xf]
        %v6388 = vld [vmem:[%s4393 + $0x8] sm:$0xf]
        %v6389 = vld [vmem:[%s4393 + $0xc] sm:$0xf]
        %v6390 = vld [vmem:[%s4393 + $0x10] sm:$0xf]
        %v6391 = vld [vmem:[%s4393 + $0x14] sm:$0xf]
        %v6392 = vld [vmem:[%s4393 + $0x18] sm:$0xf]
        %v6393 = vld [vmem:[%s4393 + $0x1c] sm:$0xf]
        %v6394 = vld [vmem:[%s4393 + $0x20] sm:$0xf]
        %v6395 = vld [vmem:[%s4393 + $0x24] sm:$0xf]
        %v6396 = vld [vmem:[%s4393 + $0x28] sm:$0xf]
        %v6397 = vld [vmem:[%s4393 + $0x2c] sm:$0xf]
        %v6398 = vld [vmem:[%s4393 + $0x30] sm:$0xf]
        %v6399 = vld [vmem:[%s4393 + $0x34] sm:$0xf]
        %v6400 = vld [vmem:[%s4393 + $0x38] sm:$0xf]
        %v6401 = vld [vmem:[%s4393 + $0x3c] sm:$0xf]
        %v6402 = vld [vmem:[%s2473 + $0x1] sm:$0xff]
        %v6403 = vld [vmem:[%s2473 + $0x11] sm:$0xff]
        %v6404 = vld [vmem:[%s2473 + $0x21] sm:$0xff]
        %v6405 = vld [vmem:[%s2473 + $0x31] sm:$0xff]
        %v6406 = vld [vmem:[%s2473 + $0x41] sm:$0xff]
        %v6407 = vld [vmem:[%s2473 + $0x51] sm:$0xff]
        %v6408 = vld [vmem:[%s2473 + $0x61] sm:$0xff]
        %v6409 = vld [vmem:[%s2473 + $0x71] sm:$0xff]
        %v6410 = vld [vmem:[%s2473 + $0xa1] sm:$0xff]
        %v6411 = vld [vmem:[%s2473 + $0xb1] sm:$0xff]
        %v6412 = vld [vmem:[%s2473 + $0xc1] sm:$0xff]
        %v6413 = vld [vmem:[%s2473 + $0xd1] sm:$0xff]
        %v6414 = vld [vmem:[%s2473 + $0xe1] sm:$0xff]
        %v6415 = vld [vmem:[%s2473 + $0xf1] sm:$0xff]
        %v6416 = vld [vmem:[%s2473 + $0x101] sm:$0xff]
        %v6417 = vld [vmem:[%s2473 + $0x111] sm:$0xff]
        %v6418 = vpack.c.bf16 %v6403, %v6402
        %v6419 = vpack.c.bf16 %v6405, %v6404
        %v6420 = vpack.c.bf16 %v6407, %v6406
        %v6421 = vpack.c.bf16 %v6409, %v6408
        %v6422 = vpack.c.bf16 %v6411, %v6410
        %v6423 = vpack.c.bf16 %v6413, %v6412
        %v6424 = vpack.c.bf16 %v6415, %v6414
        %v6425 = vpack.c.bf16 %v6417, %v6416
        %v6426 = vld [vmem:[%s4434] sm:$0xf]
        %v6427 = vld [vmem:[%s4434 + $0x4] sm:$0xf]
        %v6428 = vld [vmem:[%s4434 + $0x8] sm:$0xf]
        %v6429 = vld [vmem:[%s4434 + $0xc] sm:$0xf]
        %v6430 = vld [vmem:[%s4434 + $0x10] sm:$0xf]
        %v6431 = vld [vmem:[%s4434 + $0x14] sm:$0xf]
        %v6432 = vld [vmem:[%s4434 + $0x18] sm:$0xf]
        %v6433 = vld [vmem:[%s4434 + $0x1c] sm:$0xf]
        %v6434 = vld [vmem:[%s4434 + $0x20] sm:$0xf]
        %v6435 = vld [vmem:[%s4434 + $0x24] sm:$0xf]
        %v6436 = vld [vmem:[%s4434 + $0x28] sm:$0xf]
        %v6437 = vld [vmem:[%s4434 + $0x2c] sm:$0xf]
        %v6438 = vld [vmem:[%s4434 + $0x30] sm:$0xf]
        %v6439 = vld [vmem:[%s4434 + $0x34] sm:$0xf]
        %v6440 = vld [vmem:[%s4434 + $0x38] sm:$0xf]
        %v6441 = vld [vmem:[%s4434 + $0x3c] sm:$0xf]
        %v6458 = vunpack.c.l.b16 %v6426
        %v6459 = vunpack.c.l.b16 %v6427
        %v6460 = vunpack.c.l.b16 %v6428
        %v6461 = vunpack.c.l.b16 %v6429
        %v6462 = vunpack.c.l.b16 %v6430
        %v6463 = vunpack.c.l.b16 %v6431
        %v6464 = vunpack.c.l.b16 %v6432
        %v6465 = vunpack.c.l.b16 %v6433
        %v6466 = vunpack.c.l.b16 %v6434
        %v6467 = vunpack.c.l.b16 %v6435
        %v6468 = vunpack.c.l.b16 %v6436
        %v6469 = vunpack.c.l.b16 %v6437
        %v6470 = vunpack.c.l.b16 %v6438
        %v6471 = vunpack.c.l.b16 %v6439
        %v6472 = vunpack.c.l.b16 %v6440
        %v6473 = vunpack.c.l.b16 %v6441
        %v6474 = vpack.c.b16 %v6459, %v6458
        %v6475 = vpack.c.b16 %v6461, %v6460
        %v6476 = vpack.c.b16 %v6463, %v6462
        %v6477 = vpack.c.b16 %v6465, %v6464
        %v6478 = vpack.c.b16 %v6467, %v6466
        %v6479 = vpack.c.b16 %v6469, %v6468
        %v6480 = vpack.c.b16 %v6471, %v6470
        %v6481 = vpack.c.b16 %v6473, %v6472
        %6490 = vmatprep.subr.bf16.mxu0 0
        %6491 = vmatpush1.bf16.msra.mxu0 %v6474
        %6492 = vmatprep.subr.bf16.mxu0 0
        %6493 = vmatpush1.bf16.msra.mxu0 %v6475
        %6494 = vmatprep.subr.bf16.mxu0 0
        %6495 = vmatpush1.bf16.msra.mxu0 %v6476
        %6496 = vmatprep.subr.bf16.mxu0 0
        %6497 = vmatpush1.bf16.msra.mxu0 %v6477
        %6498 = vmatprep.subr.bf16.mxu0 0
        %6499 = vmatpush1.bf16.msra.mxu0 %v6478
        %6500 = vmatprep.subr.bf16.mxu0 0
        %6501 = vmatpush1.bf16.msra.mxu0 %v6479
        %6502 = vmatprep.subr.bf16.mxu0 0
        %6503 = vmatpush1.bf16.msra.mxu0 %v6480
        %6504 = vmatprep.subr.bf16.mxu0 0
        %6505 = vmatpush1.bf16.msra.mxu0 %v6481
        %6506 = vmatprep.subr.bf16.mxu0 0
        %6507 = vmatpush1.bf16.msra.mxu0 0
        %6508 = vmatprep.subr.bf16.mxu0 0
        %6509 = vmatpush1.bf16.msra.mxu0 0
        %6510 = vmatprep.subr.bf16.mxu0 0
        %6511 = vmatpush1.bf16.msra.mxu0 0
        %6512 = vmatprep.subr.bf16.mxu0 0
        %6513 = vmatpush1.bf16.msra.mxu0 0
        %6514 = vmatprep.subr.bf16.mxu0 0
        %6515 = vmatpush1.bf16.msra.mxu0 0
        %6516 = vmatprep.subr.bf16.mxu0 0
        %6517 = vmatpush1.bf16.msra.mxu0 0
        %6518 = vmatprep.subr.bf16.mxu0 0
        %6519 = vmatpush1.bf16.msra.mxu0 0
        %6520 = vmatprep.subr.bf16.mxu0 0
        %6521 = vmatpush1.bf16.msra.mxu0 0
        %6522 = vmatprep.mubr.bf16.mxu0 0
        %6523 = vmatmul.mubr.bf16.gmra.mrb[0].mxu0 %v6418
        %v6524 = vpop.f32.mrb[0].mxu0
        %v6525 = vadd.f32 0.0, %v6524
        %v6526 = vpop.f32.mrb[0].mxu0
        %v6527 = vpop.f32.mrb[0].mxu0
        %v6528 = vadd.f32 0.0, %v6527
        %v6529 = vpop.f32.mrb[0].mxu0
        %6530 = vmatprep.mubr.bf16.mxu0 0
        %6531 = vmatmul.mubr.bf16.gmra.mrb[0].mxu0 %v6419
        %v6532 = vpop.f32.mrb[0].mxu0
        %v6533 = vadd.f32 0.0, %v6532
        %v6534 = vpop.f32.mrb[0].mxu0
        %v6535 = vpop.f32.mrb[0].mxu0
        %v6536 = vadd.f32 0.0, %v6535
        %v6537 = vpop.f32.mrb[0].mxu0
        %6538 = vmatprep.mubr.bf16.mxu0 0
        %6539 = vmatmul.mubr.bf16.gmra.mrb[0].mxu0 %v6420
        %v6540 = vpop.f32.mrb[0].mxu0
        %v6541 = vadd.f32 0.0, %v6540
        %v6542 = vpop.f32.mrb[0].mxu0
        %v6543 = vpop.f32.mrb[0].mxu0
        %v6544 = vadd.f32 0.0, %v6543
        %v6545 = vpop.f32.mrb[0].mxu0
        %6546 = vmatprep.mubr.bf16.mxu0 0
        %6547 = vmatmul.mubr.bf16.gmra.mrb[0].mxu0 %v6421
        %v6548 = vpop.f32.mrb[0].mxu0
        %v6549 = vadd.f32 0.0, %v6548
        %v6550 = vpop.f32.mrb[0].mxu0
        %v6551 = vpop.f32.mrb[0].mxu0
        %v6552 = vadd.f32 0.0, %v6551
        %v6553 = vpop.f32.mrb[0].mxu0
        %6554 = vmatprep.mubr.bf16.mxu0 0
        %6555 = vmatmul.mubr.bf16.gmra.mrb[0].mxu0 %v6422
        %v6556 = vpop.f32.mrb[0].mxu0
        %v6557 = vadd.f32 0.0, %v6556
        %v6558 = vpop.f32.mrb[0].mxu0
        %v6559 = vpop.f32.mrb[0].mxu0
        %v6560 = vadd.f32 0.0, %v6559
        %v6561 = vpop.f32.mrb[0].mxu0
        %6562 = vmatprep.mubr.bf16.mxu0 0
        %6563 = vmatmul.mubr.bf16.gmra.mrb[0].mxu0 %v6423
        %v6564 = vpop.f32.mrb[0].mxu0
        %v6565 = vadd.f32 0.0, %v6564
        %v6566 = vpop.f32.mrb[0].mxu0
        %v6567 = vpop.f32.mrb[0].mxu0
        %v6568 = vadd.f32 0.0, %v6567
        %v6569 = vpop.f32.mrb[0].mxu0
        %6570 = vmatprep.mubr.bf16.mxu0 0
        %6571 = vmatmul.mubr.bf16.gmra.mrb[0].mxu0 %v6424
        %v6572 = vpop.f32.mrb[0].mxu0
        %v6573 = vadd.f32 0.0, %v6572
        %v6574 = vpop.f32.mrb[0].mxu0
        %v6575 = vpop.f32.mrb[0].mxu0
        %v6576 = vadd.f32 0.0, %v6575
        %v6577 = vpop.f32.mrb[0].mxu0
        %6578 = vmatprep.mubr.bf16.mxu0 0
        %6579 = vmatmul.mubr.bf16.gmra.mrb[0].mxu0 %v6425
        %v6580 = vpop.f32.mrb[0].mxu0
        %v6581 = vadd.f32 0.0, %v6580
        %v6582 = vpop.f32.mrb[0].mxu0
        %v6583 = vpop.f32.mrb[0].mxu0
        %v6584 = vadd.f32 0.0, %v6583
        %v6585 = vpop.f32.mrb[0].mxu0
        %6586 = vdwg.mxu0
        %v6603 = vunpack.c.l.b16 %v6386
        %v6604 = vunpack.c.l.b16 %v6387
        %v6605 = vunpack.c.l.b16 %v6388
        %v6606 = vunpack.c.l.b16 %v6389
        %v6607 = vunpack.c.l.b16 %v6390
        %v6608 = vunpack.c.l.b16 %v6391
        %v6609 = vunpack.c.l.b16 %v6392
        %v6610 = vunpack.c.l.b16 %v6393
        %v6611 = vunpack.c.l.b16 %v6394
        %v6612 = vunpack.c.l.b16 %v6395
        %v6613 = vunpack.c.l.b16 %v6396
        %v6614 = vunpack.c.l.b16 %v6397
        %v6615 = vunpack.c.l.b16 %v6398
        %v6616 = vunpack.c.l.b16 %v6399
        %v6617 = vunpack.c.l.b16 %v6400
        %v6618 = vunpack.c.l.b16 %v6401
        %v6619 = vpack.c.b16 %v6604, %v6603
        %v6620 = vpack.c.b16 %v6606, %v6605
        %v6621 = vpack.c.b16 %v6608, %v6607
        %v6622 = vpack.c.b16 %v6610, %v6609
        %v6623 = vpack.c.b16 %v6612, %v6611
        %v6624 = vpack.c.b16 %v6614, %v6613
        %v6625 = vpack.c.b16 %v6616, %v6615
        %v6626 = vpack.c.b16 %v6618, %v6617
        %6635 = vmatprep.subr.bf16.mxu0 0
        %6636 = vmatpush1.bf16.msra.mxu0 %v6619
        %6637 = vmatprep.subr.bf16.mxu0 0
        %6638 = vmatpush1.bf16.msra.mxu0 %v6620
        %6639 = vmatprep.subr.bf16.mxu0 0
        %6640 = vmatpush1.bf16.msra.mxu0 %v6621
        %6641 = vmatprep.subr.bf16.mxu0 0
        %6642 = vmatpush1.bf16.msra.mxu0 %v6622
        %6643 = vmatprep.subr.bf16.mxu0 0
        %6644 = vmatpush1.bf16.msra.mxu0 %v6623
        %6645 = vmatprep.subr.bf16.mxu0 0
        %6646 = vmatpush1.bf16.msra.mxu0 %v6624
        %6647 = vmatprep.subr.bf16.mxu0 0
        %6648 = vmatpush1.bf16.msra.mxu0 %v6625
        %6649 = vmatprep.subr.bf16.mxu0 0
        %6650 = vmatpush1.bf16.msra.mxu0 %v6626
        %6651 = vmatprep.subr.bf16.mxu0 0
        %6652 = vmatpush1.bf16.msra.mxu0 0
        %6653 = vmatprep.subr.bf16.mxu0 0
        %6654 = vmatpush1.bf16.msra.mxu0 0
        %6655 = vmatprep.subr.bf16.mxu0 0
        %6656 = vmatpush1.bf16.msra.mxu0 0
        %6657 = vmatprep.subr.bf16.mxu0 0
        %6658 = vmatpush1.bf16.msra.mxu0 0
        %6659 = vmatprep.subr.bf16.mxu0 0
        %6660 = vmatpush1.bf16.msra.mxu0 0
        %6661 = vmatprep.subr.bf16.mxu0 0
        %6662 = vmatpush1.bf16.msra.mxu0 0
        %6663 = vmatprep.subr.bf16.mxu0 0
        %6664 = vmatpush1.bf16.msra.mxu0 0
        %6665 = vmatprep.subr.bf16.mxu0 0
        %6666 = vmatpush1.bf16.msra.mxu0 0
        %6667 = vmatprep.mubr.bf16.mxu0 0
        %6668 = vmatmul.mubr.bf16.gmra.mrb[0].mxu0 %v6378
        %v6669 = vpop.f32.mrb[0].mxu0
        %v6670 = vadd.f32 %v6525, %v6669
        %v6671 = vpop.f32.mrb[0].mxu0
        %v6672 = vpop.f32.mrb[0].mxu0
        %v6673 = vadd.f32 %v6528, %v6672
        %v6674 = vpop.f32.mrb[0].mxu0
        %6675 = vmatprep.mubr.bf16.mxu0 0
        %6676 = vmatmul.mubr.bf16.gmra.mrb[0].mxu0 %v6379
        %v6677 = vpop.f32.mrb[0].mxu0
        %v6678 = vadd.f32 %v6533, %v6677
        %v6679 = vpop.f32.mrb[0].mxu0
        %v6680 = vpop.f32.mrb[0].mxu0
        %v6681 = vadd.f32 %v6536, %v6680
        %v6682 = vpop.f32.mrb[0].mxu0
        %6683 = vmatprep.mubr.bf16.mxu0 0
        %6684 = vmatmul.mubr.bf16.gmra.mrb[0].mxu0 %v6380
        %v6685 = vpop.f32.mrb[0].mxu0
        %v6686 = vadd.f32 %v6541, %v6685
        %v6687 = vpop.f32.mrb[0].mxu0
        %v6688 = vpop.f32.mrb[0].mxu0
        %v6689 = vadd.f32 %v6544, %v6688
        %v6690 = vpop.f32.mrb[0].mxu0
        %6691 = vmatprep.mubr.bf16.mxu0 0
        %6692 = vmatmul.mubr.bf16.gmra.mrb[0].mxu0 %v6381
        %v6693 = vpop.f32.mrb[0].mxu0
        %v6694 = vadd.f32 %v6549, %v6693
        %v6695 = vpop.f32.mrb[0].mxu0
        %v6696 = vpop.f32.mrb[0].mxu0
        %v6697 = vadd.f32 %v6552, %v6696
        %v6698 = vpop.f32.mrb[0].mxu0
        %6699 = vmatprep.mubr.bf16.mxu0 0
        %6700 = vmatmul.mubr.bf16.gmra.mrb[0].mxu0 %v6382
        %v6701 = vpop.f32.mrb[0].mxu0
        %v6702 = vadd.f32 %v6557, %v6701
        %v6703 = vpop.f32.mrb[0].mxu0
        %v6704 = vpop.f32.mrb[0].mxu0
        %v6705 = vadd.f32 %v6560, %v6704
        %v6706 = vpop.f32.mrb[0].mxu0
        %6707 = vmatprep.mubr.bf16.mxu0 0
        %6708 = vmatmul.mubr.bf16.gmra.mrb[0].mxu0 %v6383
        %v6709 = vpop.f32.mrb[0].mxu0
        %v6710 = vadd.f32 %v6565, %v6709
        %v6711 = vpop.f32.mrb[0].mxu0
        %v6712 = vpop.f32.mrb[0].mxu0
        %v6713 = vadd.f32 %v6568, %v6712
        %v6714 = vpop.f32.mrb[0].mxu0
        %6715 = vmatprep.mubr.bf16.mxu0 0
        %6716 = vmatmul.mubr.bf16.gmra.mrb[0].mxu0 %v6384
        %v6717 = vpop.f32.mrb[0].mxu0
        %v6718 = vadd.f32 %v6573, %v6717
        %v6719 = vpop.f32.mrb[0].mxu0
        %v6720 = vpop.f32.mrb[0].mxu0
        %v6721 = vadd.f32 %v6576, %v6720
        %v6722 = vpop.f32.mrb[0].mxu0
        %6723 = vmatprep.mubr.bf16.mxu0 0
        %6724 = vmatmul.mubr.bf16.gmra.mrb[0].mxu0 %v6385
        %v6725 = vpop.f32.mrb[0].mxu0
        %v6726 = vadd.f32 %v6581, %v6725
        %v6727 = vpop.f32.mrb[0].mxu0
        %v6728 = vpop.f32.mrb[0].mxu0
        %v6729 = vadd.f32 %v6584, %v6728
        %v6730 = vpop.f32.mrb[0].mxu0
        %6731 = vdwg.mxu0
        %v6732 = vld [vmem:[%s2473 + $0x2] sm:$0xff]
        %v6733 = vld [vmem:[%s2473 + $0x12] sm:$0xff]
        %v6734 = vld [vmem:[%s2473 + $0x22] sm:$0xff]
        %v6735 = vld [vmem:[%s2473 + $0x32] sm:$0xff]
        %v6736 = vld [vmem:[%s2473 + $0x42] sm:$0xff]
        %v6737 = vld [vmem:[%s2473 + $0x52] sm:$0xff]
        %v6738 = vld [vmem:[%s2473 + $0x62] sm:$0xff]
        %v6739 = vld [vmem:[%s2473 + $0x72] sm:$0xff]
        %v6740 = vld [vmem:[%s2473 + $0xa2] sm:$0xff]
        %v6741 = vld [vmem:[%s2473 + $0xb2] sm:$0xff]
        %v6742 = vld [vmem:[%s2473 + $0xc2] sm:$0xff]
        %v6743 = vld [vmem:[%s2473 + $0xd2] sm:$0xff]
        %v6744 = vld [vmem:[%s2473 + $0xe2] sm:$0xff]
        %v6745 = vld [vmem:[%s2473 + $0xf2] sm:$0xff]
        %v6746 = vld [vmem:[%s2473 + $0x102] sm:$0xff]
        %v6747 = vld [vmem:[%s2473 + $0x112] sm:$0xff]
        %v6748 = vpack.c.bf16 %v6733, %v6732
        %v6749 = vpack.c.bf16 %v6735, %v6734
        %v6750 = vpack.c.bf16 %v6737, %v6736
        %v6751 = vpack.c.bf16 %v6739, %v6738
        %v6752 = vpack.c.bf16 %v6741, %v6740
        %v6753 = vpack.c.bf16 %v6743, %v6742
        %v6754 = vpack.c.bf16 %v6745, %v6744
        %v6755 = vpack.c.bf16 %v6747, %v6746
        %v6756 = vld [vmem:[%s4765] sm:$0xf]
        %v6757 = vld [vmem:[%s4765 + $0x4] sm:$0xf]
        %v6758 = vld [vmem:[%s4765 + $0x8] sm:$0xf]
        %v6759 = vld [vmem:[%s4765 + $0xc] sm:$0xf]
        %v6760 = vld [vmem:[%s4765 + $0x10] sm:$0xf]
        %v6761 = vld [vmem:[%s4765 + $0x14] sm:$0xf]
        %v6762 = vld [vmem:[%s4765 + $0x18] sm:$0xf]
        %v6763 = vld [vmem:[%s4765 + $0x1c] sm:$0xf]
        %v6764 = vld [vmem:[%s4765 + $0x20] sm:$0xf]
        %v6765 = vld [vmem:[%s4765 + $0x24] sm:$0xf]
        %v6766 = vld [vmem:[%s4765 + $0x28] sm:$0xf]
        %v6767 = vld [vmem:[%s4765 + $0x2c] sm:$0xf]
        %v6768 = vld [vmem:[%s4765 + $0x30] sm:$0xf]
        %v6769 = vld [vmem:[%s4765 + $0x34] sm:$0xf]
        %v6770 = vld [vmem:[%s4765 + $0x38] sm:$0xf]
        %v6771 = vld [vmem:[%s4765 + $0x3c] sm:$0xf]
        %v6788 = vunpack.c.l.b16 %v6756
        %v6789 = vunpack.c.l.b16 %v6757
        %v6790 = vunpack.c.l.b16 %v6758
        %v6791 = vunpack.c.l.b16 %v6759
        %v6792 = vunpack.c.l.b16 %v6760
        %v6793 = vunpack.c.l.b16 %v6761
        %v6794 = vunpack.c.l.b16 %v6762
        %v6795 = vunpack.c.l.b16 %v6763
        %v6796 = vunpack.c.l.b16 %v6764
        %v6797 = vunpack.c.l.b16 %v6765
        %v6798 = vunpack.c.l.b16 %v6766
        %v6799 = vunpack.c.l.b16 %v6767
        %v6800 = vunpack.c.l.b16 %v6768
        %v6801 = vunpack.c.l.b16 %v6769
        %v6802 = vunpack.c.l.b16 %v6770
        %v6803 = vunpack.c.l.b16 %v6771
        %v6804 = vpack.c.b16 %v6789, %v6788
        %v6805 = vpack.c.b16 %v6791, %v6790
        %v6806 = vpack.c.b16 %v6793, %v6792
        %v6807 = vpack.c.b16 %v6795, %v6794
        %v6808 = vpack.c.b16 %v6797, %v6796
        %v6809 = vpack.c.b16 %v6799, %v6798
        %v6810 = vpack.c.b16 %v6801, %v6800
        %v6811 = vpack.c.b16 %v6803, %v6802
        %6820 = vmatprep.subr.bf16.mxu0 0
        %6821 = vmatpush1.bf16.msra.mxu0 %v6804
        %6822 = vmatprep.subr.bf16.mxu0 0
        %6823 = vmatpush1.bf16.msra.mxu0 %v6805
        %6824 = vmatprep.subr.bf16.mxu0 0
        %6825 = vmatpush1.bf16.msra.mxu0 %v6806
        %6826 = vmatprep.subr.bf16.mxu0 0
        %6827 = vmatpush1.bf16.msra.mxu0 %v6807
        %6828 = vmatprep.subr.bf16.mxu0 0
        %6829 = vmatpush1.bf16.msra.mxu0 %v6808
        %6830 = vmatprep.subr.bf16.mxu0 0
        %6831 = vmatpush1.bf16.msra.mxu0 %v6809
        %6832 = vmatprep.subr.bf16.mxu0 0
        %6833 = vmatpush1.bf16.msra.mxu0 %v6810
        %6834 = vmatprep.subr.bf16.mxu0 0
        %6835 = vmatpush1.bf16.msra.mxu0 %v6811
        %6836 = vmatprep.subr.bf16.mxu0 0
        %6837 = vmatpush1.bf16.msra.mxu0 0
        %6838 = vmatprep.subr.bf16.mxu0 0
        %6839 = vmatpush1.bf16.msra.mxu0 0
        %6840 = vmatprep.subr.bf16.mxu0 0
        %6841 = vmatpush1.bf16.msra.mxu0 0
        %6842 = vmatprep.subr.bf16.mxu0 0
        %6843 = vmatpush1.bf16.msra.mxu0 0
        %6844 = vmatprep.subr.bf16.mxu0 0
        %6845 = vmatpush1.bf16.msra.mxu0 0
        %6846 = vmatprep.subr.bf16.mxu0 0
        %6847 = vmatpush1.bf16.msra.mxu0 0
        %6848 = vmatprep.subr.bf16.mxu0 0
        %6849 = vmatpush1.bf16.msra.mxu0 0
        %6850 = vmatprep.subr.bf16.mxu0 0
        %6851 = vmatpush1.bf16.msra.mxu0 0
        %6852 = vmatprep.mubr.bf16.mxu0 0
        %6853 = vmatmul.mubr.bf16.gmra.mrb[0].mxu0 %v6748
        %v6854 = vpop.f32.mrb[0].mxu0
        %v6855 = vadd.f32 0.0, %v6854
        %v6856 = vpop.f32.mrb[0].mxu0
        %v6857 = vpop.f32.mrb[0].mxu0
        %v6858 = vadd.f32 0.0, %v6857
        %v6859 = vpop.f32.mrb[0].mxu0
        %6860 = vmatprep.mubr.bf16.mxu0 0
        %6861 = vmatmul.mubr.bf16.gmra.mrb[0].mxu0 %v6749
        %v6862 = vpop.f32.mrb[0].mxu0
        %v6863 = vadd.f32 0.0, %v6862
        %v6864 = vpop.f32.mrb[0].mxu0
        %v6865 = vpop.f32.mrb[0].mxu0
        %v6866 = vadd.f32 0.0, %v6865
        %v6867 = vpop.f32.mrb[0].mxu0
        %6868 = vmatprep.mubr.bf16.mxu0 0
        %6869 = vmatmul.mubr.bf16.gmra.mrb[0].mxu0 %v6750
        %v6870 = vpop.f32.mrb[0].mxu0
        %v6871 = vadd.f32 0.0, %v6870
        %v6872 = vpop.f32.mrb[0].mxu0
        %v6873 = vpop.f32.mrb[0].mxu0
        %v6874 = vadd.f32 0.0, %v6873
        %v6875 = vpop.f32.mrb[0].mxu0
        %6876 = vmatprep.mubr.bf16.mxu0 0
        %6877 = vmatmul.mubr.bf16.gmra.mrb[0].mxu0 %v6751
        %v6878 = vpop.f32.mrb[0].mxu0
        %v6879 = vadd.f32 0.0, %v6878
        %v6880 = vpop.f32.mrb[0].mxu0
        %v6881 = vpop.f32.mrb[0].mxu0
        %v6882 = vadd.f32 0.0, %v6881
        %v6883 = vpop.f32.mrb[0].mxu0
        %6884 = vmatprep.mubr.bf16.mxu0 0
        %6885 = vmatmul.mubr.bf16.gmra.mrb[0].mxu0 %v6752
        %v6886 = vpop.f32.mrb[0].mxu0
        %v6887 = vadd.f32 0.0, %v6886
        %v6888 = vpop.f32.mrb[0].mxu0
        %v6889 = vpop.f32.mrb[0].mxu0
        %v6890 = vadd.f32 0.0, %v6889
        %v6891 = vpop.f32.mrb[0].mxu0
        %6892 = vmatprep.mubr.bf16.mxu0 0
        %6893 = vmatmul.mubr.bf16.gmra.mrb[0].mxu0 %v6753
        %v6894 = vpop.f32.mrb[0].mxu0
        %v6895 = vadd.f32 0.0, %v6894
        %v6896 = vpop.f32.mrb[0].mxu0
        %v6897 = vpop.f32.mrb[0].mxu0
        %v6898 = vadd.f32 0.0, %v6897
        %v6899 = vpop.f32.mrb[0].mxu0
        %6900 = vmatprep.mubr.bf16.mxu0 0
        %6901 = vmatmul.mubr.bf16.gmra.mrb[0].mxu0 %v6754
        %v6902 = vpop.f32.mrb[0].mxu0
        %v6903 = vadd.f32 0.0, %v6902
        %v6904 = vpop.f32.mrb[0].mxu0
        %v6905 = vpop.f32.mrb[0].mxu0
        %v6906 = vadd.f32 0.0, %v6905
        %v6907 = vpop.f32.mrb[0].mxu0
        %6908 = vmatprep.mubr.bf16.mxu0 0
        %6909 = vmatmul.mubr.bf16.gmra.mrb[0].mxu0 %v6755
        %v6910 = vpop.f32.mrb[0].mxu0
        %v6911 = vadd.f32 0.0, %v6910
        %v6912 = vpop.f32.mrb[0].mxu0
        %v6913 = vpop.f32.mrb[0].mxu0
        %v6914 = vadd.f32 0.0, %v6913
        %v6915 = vpop.f32.mrb[0].mxu0
        %6916 = vdwg.mxu0
        %v6917 = vadd.f32 %v6670, %v6855
        %v6918 = vadd.f32 %v6673, %v6858
        %v6919 = vadd.f32 %v6678, %v6863
        %v6920 = vadd.f32 %v6681, %v6866
        %v6921 = vadd.f32 %v6686, %v6871
        %v6922 = vadd.f32 %v6689, %v6874
        %v6923 = vadd.f32 %v6694, %v6879
        %v6924 = vadd.f32 %v6697, %v6882
        %v6925 = vadd.f32 %v6702, %v6887
        %v6926 = vadd.f32 %v6705, %v6890
        %v6927 = vadd.f32 %v6710, %v6895
        %v6928 = vadd.f32 %v6713, %v6898
        %v6929 = vadd.f32 %v6718, %v6903
        %v6930 = vadd.f32 %v6721, %v6906
        %v6931 = vadd.f32 %v6726, %v6911
        %v6932 = vadd.f32 %v6729, %v6914
        %v6933 = vld [vmem:[%s520] sm:$0xff]
        %v6934 = vld [vmem:[%s520 + $0x10] sm:$0xff]
        %v6935 = vld [vmem:[%s520 + $0x20] sm:$0xff]
        %v6936 = vld [vmem:[%s520 + $0x30] sm:$0xff]
        %v6937 = vld [vmem:[%s520 + $0x40] sm:$0xff]
        %v6938 = vld [vmem:[%s520 + $0x50] sm:$0xff]
        %v6939 = vld [vmem:[%s520 + $0x60] sm:$0xff]
        %v6940 = vld [vmem:[%s520 + $0x70] sm:$0xff]
        %v6941 = vld [vmem:[%s520 + $0xa0] sm:$0xff]
        %v6942 = vld [vmem:[%s520 + $0xb0] sm:$0xff]
        %v6943 = vld [vmem:[%s520 + $0xc0] sm:$0xff]
        %v6944 = vld [vmem:[%s520 + $0xd0] sm:$0xff]
        %v6945 = vld [vmem:[%s520 + $0xe0] sm:$0xff]
        %v6946 = vld [vmem:[%s520 + $0xf0] sm:$0xff]
        %v6947 = vld [vmem:[%s520 + $0x100] sm:$0xff]
        %v6948 = vld [vmem:[%s520 + $0x110] sm:$0xff]
        %v6949 = vpack.c.bf16 %v6934, %v6933
        %v6950 = vpack.c.bf16 %v6936, %v6935
        %v6951 = vpack.c.bf16 %v6938, %v6937
        %v6952 = vpack.c.bf16 %v6940, %v6939
        %v6953 = vpack.c.bf16 %v6942, %v6941
        %v6954 = vpack.c.bf16 %v6944, %v6943
        %v6955 = vpack.c.bf16 %v6946, %v6945
        %v6956 = vpack.c.bf16 %v6948, %v6947
        %v6957 = vld [vmem:[%s4967] sm:$0xf]
        %v6958 = vld [vmem:[%s4967 + $0x4] sm:$0xf]
        %v6959 = vld [vmem:[%s4967 + $0x8] sm:$0xf]
        %v6960 = vld [vmem:[%s4967 + $0xc] sm:$0xf]
        %v6961 = vld [vmem:[%s4967 + $0x10] sm:$0xf]
        %v6962 = vld [vmem:[%s4967 + $0x14] sm:$0xf]
        %v6963 = vld [vmem:[%s4967 + $0x18] sm:$0xf]
        %v6964 = vld [vmem:[%s4967 + $0x1c] sm:$0xf]
        %v6965 = vld [vmem:[%s4967 + $0x20] sm:$0xf]
        %v6966 = vld [vmem:[%s4967 + $0x24] sm:$0xf]
        %v6967 = vld [vmem:[%s4967 + $0x28] sm:$0xf]
        %v6968 = vld [vmem:[%s4967 + $0x2c] sm:$0xf]
        %v6969 = vld [vmem:[%s4967 + $0x30] sm:$0xf]
        %v6970 = vld [vmem:[%s4967 + $0x34] sm:$0xf]
        %v6971 = vld [vmem:[%s4967 + $0x38] sm:$0xf]
        %v6972 = vld [vmem:[%s4967 + $0x3c] sm:$0xf]
        %v6989 = vunpack.c.l.b16 %v6957
        %v6990 = vunpack.c.l.b16 %v6958
        %v6991 = vunpack.c.l.b16 %v6959
        %v6992 = vunpack.c.l.b16 %v6960
        %v6993 = vunpack.c.l.b16 %v6961
        %v6994 = vunpack.c.l.b16 %v6962
        %v6995 = vunpack.c.l.b16 %v6963
        %v6996 = vunpack.c.l.b16 %v6964
        %v6997 = vunpack.c.l.b16 %v6965
        %v6998 = vunpack.c.l.b16 %v6966
        %v6999 = vunpack.c.l.b16 %v6967
        %v7000 = vunpack.c.l.b16 %v6968
        %v7001 = vunpack.c.l.b16 %v6969
        %v7002 = vunpack.c.l.b16 %v6970
        %v7003 = vunpack.c.l.b16 %v6971
        %v7004 = vunpack.c.l.b16 %v6972
        %v7005 = vpack.c.b16 %v6990, %v6989
        %v7006 = vpack.c.b16 %v6992, %v6991
        %v7007 = vpack.c.b16 %v6994, %v6993
        %v7008 = vpack.c.b16 %v6996, %v6995
        %v7009 = vpack.c.b16 %v6998, %v6997
        %v7010 = vpack.c.b16 %v7000, %v6999
        %v7011 = vpack.c.b16 %v7002, %v7001
        %v7012 = vpack.c.b16 %v7004, %v7003
        %7021 = vmatprep.subr.bf16.mxu0 0
        %7022 = vmatpush1.bf16.msra.mxu0 %v7005
        %7023 = vmatprep.subr.bf16.mxu0 0
        %7024 = vmatpush1.bf16.msra.mxu0 %v7006
        %7025 = vmatprep.subr.bf16.mxu0 0
        %7026 = vmatpush1.bf16.msra.mxu0 %v7007
        %7027 = vmatprep.subr.bf16.mxu0 0
        %7028 = vmatpush1.bf16.msra.mxu0 %v7008
        %7029 = vmatprep.subr.bf16.mxu0 0
        %7030 = vmatpush1.bf16.msra.mxu0 %v7009
        %7031 = vmatprep.subr.bf16.mxu0 0
        %7032 = vmatpush1.bf16.msra.mxu0 %v7010
        %7033 = vmatprep.subr.bf16.mxu0 0
        %7034 = vmatpush1.bf16.msra.mxu0 %v7011
        %7035 = vmatprep.subr.bf16.mxu0 0
        %7036 = vmatpush1.bf16.msra.mxu0 %v7012
        %7037 = vmatprep.subr.bf16.mxu0 0
        %7038 = vmatpush1.bf16.msra.mxu0 0
        %7039 = vmatprep.subr.bf16.mxu0 0
        %7040 = vmatpush1.bf16.msra.mxu0 0
        %7041 = vmatprep.subr.bf16.mxu0 0
        %7042 = vmatpush1.bf16.msra.mxu0 0
        %7043 = vmatprep.subr.bf16.mxu0 0
        %7044 = vmatpush1.bf16.msra.mxu0 0
        %7045 = vmatprep.subr.bf16.mxu0 0
        %7046 = vmatpush1.bf16.msra.mxu0 0
        %7047 = vmatprep.subr.bf16.mxu0 0
        %7048 = vmatpush1.bf16.msra.mxu0 0
        %7049 = vmatprep.subr.bf16.mxu0 0
        %7050 = vmatpush1.bf16.msra.mxu0 0
        %7051 = vmatprep.subr.bf16.mxu0 0
        %7052 = vmatpush1.bf16.msra.mxu0 0
        %7053 = vmatprep.mubr.bf16.mxu0 0
        %7054 = vmatmul.mubr.bf16.gmra.mrb[0].mxu0 %v6949
        %v7055 = vpop.f32.mrb[0].mxu0
        %v7056 = vadd.f32 0.0, %v7055
        %v7057 = vpop.f32.mrb[0].mxu0
        %v7058 = vpop.f32.mrb[0].mxu0
        %v7059 = vadd.f32 0.0, %v7058
        %v7060 = vpop.f32.mrb[0].mxu0
        %7061 = vmatprep.mubr.bf16.mxu0 0
        %7062 = vmatmul.mubr.bf16.gmra.mrb[0].mxu0 %v6950
        %v7063 = vpop.f32.mrb[0].mxu0
        %v7064 = vadd.f32 0.0, %v7063
        %v7065 = vpop.f32.mrb[0].mxu0
        %v7066 = vpop.f32.mrb[0].mxu0
        %v7067 = vadd.f32 0.0, %v7066
        %v7068 = vpop.f32.mrb[0].mxu0
        %7069 = vmatprep.mubr.bf16.mxu0 0
        %7070 = vmatmul.mubr.bf16.gmra.mrb[0].mxu0 %v6951
        %v7071 = vpop.f32.mrb[0].mxu0
        %v7072 = vadd.f32 0.0, %v7071
        %v7073 = vpop.f32.mrb[0].mxu0
        %v7074 = vpop.f32.mrb[0].mxu0
        %v7075 = vadd.f32 0.0, %v7074
        %v7076 = vpop.f32.mrb[0].mxu0
        %7077 = vmatprep.mubr.bf16.mxu0 0
        %7078 = vmatmul.mubr.bf16.gmra.mrb[0].mxu0 %v6952
        %v7079 = vpop.f32.mrb[0].mxu0
        %v7080 = vadd.f32 0.0, %v7079
        %v7081 = vpop.f32.mrb[0].mxu0
        %v7082 = vpop.f32.mrb[0].mxu0
        %v7083 = vadd.f32 0.0, %v7082
        %v7084 = vpop.f32.mrb[0].mxu0
        %7085 = vmatprep.mubr.bf16.mxu0 0
        %7086 = vmatmul.mubr.bf16.gmra.mrb[0].mxu0 %v6953
        %v7087 = vpop.f32.mrb[0].mxu0
        %v7088 = vadd.f32 0.0, %v7087
        %v7089 = vpop.f32.mrb[0].mxu0
        %v7090 = vpop.f32.mrb[0].mxu0
        %v7091 = vadd.f32 0.0, %v7090
        %v7092 = vpop.f32.mrb[0].mxu0
        %7093 = vmatprep.mubr.bf16.mxu0 0
        %7094 = vmatmul.mubr.bf16.gmra.mrb[0].mxu0 %v6954
        %v7095 = vpop.f32.mrb[0].mxu0
        %v7096 = vadd.f32 0.0, %v7095
        %v7097 = vpop.f32.mrb[0].mxu0
        %v7098 = vpop.f32.mrb[0].mxu0
        %v7099 = vadd.f32 0.0, %v7098
        %v7100 = vpop.f32.mrb[0].mxu0
        %7101 = vmatprep.mubr.bf16.mxu0 0
        %7102 = vmatmul.mubr.bf16.gmra.mrb[0].mxu0 %v6955
        %v7103 = vpop.f32.mrb[0].mxu0
        %v7104 = vadd.f32 0.0, %v7103
        %v7105 = vpop.f32.mrb[0].mxu0
        %v7106 = vpop.f32.mrb[0].mxu0
        %v7107 = vadd.f32 0.0, %v7106
        %v7108 = vpop.f32.mrb[0].mxu0
        %7109 = vmatprep.mubr.bf16.mxu0 0
        %7110 = vmatmul.mubr.bf16.gmra.mrb[0].mxu0 %v6956
        %v7111 = vpop.f32.mrb[0].mxu0
        %v7112 = vadd.f32 0.0, %v7111
        %v7113 = vpop.f32.mrb[0].mxu0
        %v7114 = vpop.f32.mrb[0].mxu0
        %v7115 = vadd.f32 0.0, %v7114
        %v7116 = vpop.f32.mrb[0].mxu0
        %7117 = vdwg.mxu0
        %v7118 = vadd.f32 %v6917, %v7056
        %v7119 = vadd.f32 %v6918, %v7059
        %v7120 = vadd.f32 %v6919, %v7064
        %v7121 = vadd.f32 %v6920, %v7067
        %v7122 = vadd.f32 %v6921, %v7072
        %v7123 = vadd.f32 %v6922, %v7075
        %v7124 = vadd.f32 %v6923, %v7080
        %v7125 = vadd.f32 %v6924, %v7083
        %v7126 = vadd.f32 %v6925, %v7088
        %v7127 = vadd.f32 %v6926, %v7091
        %v7128 = vadd.f32 %v6927, %v7096
        %v7129 = vadd.f32 %v6928, %v7099
        %v7130 = vadd.f32 %v6929, %v7104
        %v7131 = vadd.f32 %v6930, %v7107
        %v7132 = vadd.f32 %v6931, %v7112
        %v7133 = vadd.f32 %v6932, %v7115
        %v7134 = vld [vmem:[%s520 + $0x1] sm:$0xff]
        %v7135 = vld [vmem:[%s520 + $0x11] sm:$0xff]
        %v7136 = vld [vmem:[%s520 + $0x21] sm:$0xff]
        %v7137 = vld [vmem:[%s520 + $0x31] sm:$0xff]
        %v7138 = vld [vmem:[%s520 + $0x41] sm:$0xff]
        %v7139 = vld [vmem:[%s520 + $0x51] sm:$0xff]
        %v7140 = vld [vmem:[%s520 + $0x61] sm:$0xff]
        %v7141 = vld [vmem:[%s520 + $0x71] sm:$0xff]
        %v7142 = vld [vmem:[%s520 + $0xa1] sm:$0xff]
        %v7143 = vld [vmem:[%s520 + $0xb1] sm:$0xff]
        %v7144 = vld [vmem:[%s520 + $0xc1] sm:$0xff]
        %v7145 = vld [vmem:[%s520 + $0xd1] sm:$0xff]
        %v7146 = vld [vmem:[%s520 + $0xe1] sm:$0xff]
        %v7147 = vld [vmem:[%s520 + $0xf1] sm:$0xff]
        %v7148 = vld [vmem:[%s520 + $0x101] sm:$0xff]
        %v7149 = vld [vmem:[%s520 + $0x111] sm:$0xff]
        %v7150 = vpack.c.bf16 %v7135, %v7134
        %v7151 = vpack.c.bf16 %v7137, %v7136
        %v7152 = vpack.c.bf16 %v7139, %v7138
        %v7153 = vpack.c.bf16 %v7141, %v7140
        %v7154 = vpack.c.bf16 %v7143, %v7142
        %v7155 = vpack.c.bf16 %v7145, %v7144
        %v7156 = vpack.c.bf16 %v7147, %v7146
        %v7157 = vpack.c.bf16 %v7149, %v7148
        %v7158 = vld [vmem:[%s5169] sm:$0xf]
        %v7159 = vld [vmem:[%s5169 + $0x4] sm:$0xf]
        %v7160 = vld [vmem:[%s5169 + $0x8] sm:$0xf]
        %v7161 = vld [vmem:[%s5169 + $0xc] sm:$0xf]
        %v7162 = vld [vmem:[%s5169 + $0x10] sm:$0xf]
        %v7163 = vld [vmem:[%s5169 + $0x14] sm:$0xf]
        %v7164 = vld [vmem:[%s5169 + $0x18] sm:$0xf]
        %v7165 = vld [vmem:[%s5169 + $0x1c] sm:$0xf]
        %v7166 = vld [vmem:[%s5169 + $0x20] sm:$0xf]
        %v7167 = vld [vmem:[%s5169 + $0x24] sm:$0xf]
        %v7168 = vld [vmem:[%s5169 + $0x28] sm:$0xf]
        %v7169 = vld [vmem:[%s5169 + $0x2c] sm:$0xf]
        %v7170 = vld [vmem:[%s5169 + $0x30] sm:$0xf]
        %v7171 = vld [vmem:[%s5169 + $0x34] sm:$0xf]
        %v7172 = vld [vmem:[%s5169 + $0x38] sm:$0xf]
        %v7173 = vld [vmem:[%s5169 + $0x3c] sm:$0xf]
        %v7190 = vunpack.c.l.b16 %v7158
        %v7191 = vunpack.c.l.b16 %v7159
        %v7192 = vunpack.c.l.b16 %v7160
        %v7193 = vunpack.c.l.b16 %v7161
        %v7194 = vunpack.c.l.b16 %v7162
        %v7195 = vunpack.c.l.b16 %v7163
        %v7196 = vunpack.c.l.b16 %v7164
        %v7197 = vunpack.c.l.b16 %v7165
        %v7198 = vunpack.c.l.b16 %v7166
        %v7199 = vunpack.c.l.b16 %v7167
        %v7200 = vunpack.c.l.b16 %v7168
        %v7201 = vunpack.c.l.b16 %v7169
        %v7202 = vunpack.c.l.b16 %v7170
        %v7203 = vunpack.c.l.b16 %v7171
        %v7204 = vunpack.c.l.b16 %v7172
        %v7205 = vunpack.c.l.b16 %v7173
        %v7206 = vpack.c.b16 %v7191, %v7190
        %v7207 = vpack.c.b16 %v7193, %v7192
        %v7208 = vpack.c.b16 %v7195, %v7194
        %v7209 = vpack.c.b16 %v7197, %v7196
        %v7210 = vpack.c.b16 %v7199, %v7198
        %v7211 = vpack.c.b16 %v7201, %v7200
        %v7212 = vpack.c.b16 %v7203, %v7202
        %v7213 = vpack.c.b16 %v7205, %v7204
        %7222 = vmatprep.subr.bf16.mxu0 0
        %7223 = vmatpush1.bf16.msra.mxu0 %v7206
        %7224 = vmatprep.subr.bf16.mxu0 0
        %7225 = vmatpush1.bf16.msra.mxu0 %v7207
        %7226 = vmatprep.subr.bf16.mxu0 0
        %7227 = vmatpush1.bf16.msra.mxu0 %v7208
        %7228 = vmatprep.subr.bf16.mxu0 0
        %7229 = vmatpush1.bf16.msra.mxu0 %v7209
        %7230 = vmatprep.subr.bf16.mxu0 0
        %7231 = vmatpush1.bf16.msra.mxu0 %v7210
        %7232 = vmatprep.subr.bf16.mxu0 0
        %7233 = vmatpush1.bf16.msra.mxu0 %v7211
        %7234 = vmatprep.subr.bf16.mxu0 0
        %7235 = vmatpush1.bf16.msra.mxu0 %v7212
        %7236 = vmatprep.subr.bf16.mxu0 0
        %7237 = vmatpush1.bf16.msra.mxu0 %v7213
        %7238 = vmatprep.subr.bf16.mxu0 0
        %7239 = vmatpush1.bf16.msra.mxu0 0
        %7240 = vmatprep.subr.bf16.mxu0 0
        %7241 = vmatpush1.bf16.msra.mxu0 0
        %7242 = vmatprep.subr.bf16.mxu0 0
        %7243 = vmatpush1.bf16.msra.mxu0 0
        %7244 = vmatprep.subr.bf16.mxu0 0
        %7245 = vmatpush1.bf16.msra.mxu0 0
        %7246 = vmatprep.subr.bf16.mxu0 0
        %7247 = vmatpush1.bf16.msra.mxu0 0
        %7248 = vmatprep.subr.bf16.mxu0 0
        %7249 = vmatpush1.bf16.msra.mxu0 0
        %7250 = vmatprep.subr.bf16.mxu0 0
        %7251 = vmatpush1.bf16.msra.mxu0 0
        %7252 = vmatprep.subr.bf16.mxu0 0
        %7253 = vmatpush1.bf16.msra.mxu0 0
        %7254 = vmatprep.mubr.bf16.mxu0 0
        %7255 = vmatmul.mubr.bf16.gmra.mrb[0].mxu0 %v7150
        %v7256 = vpop.f32.mrb[0].mxu0
        %v7257 = vadd.f32 0.0, %v7256
        %v7258 = vpop.f32.mrb[0].mxu0
        %v7259 = vpop.f32.mrb[0].mxu0
        %v7260 = vadd.f32 0.0, %v7259
        %v7261 = vpop.f32.mrb[0].mxu0
        %7262 = vmatprep.mubr.bf16.mxu0 0
        %7263 = vmatmul.mubr.bf16.gmra.mrb[0].mxu0 %v7151
        %v7264 = vpop.f32.mrb[0].mxu0
        %v7265 = vadd.f32 0.0, %v7264
        %v7266 = vpop.f32.mrb[0].mxu0
        %v7267 = vpop.f32.mrb[0].mxu0
        %v7268 = vadd.f32 0.0, %v7267
        %v7269 = vpop.f32.mrb[0].mxu0
        %7270 = vmatprep.mubr.bf16.mxu0 0
        %7271 = vmatmul.mubr.bf16.gmra.mrb[0].mxu0 %v7152
        %v7272 = vpop.f32.mrb[0].mxu0
        %v7273 = vadd.f32 0.0, %v7272
        %v7274 = vpop.f32.mrb[0].mxu0
        %v7275 = vpop.f32.mrb[0].mxu0
        %v7276 = vadd.f32 0.0, %v7275
        %v7277 = vpop.f32.mrb[0].mxu0
        %7278 = vmatprep.mubr.bf16.mxu0 0
        %7279 = vmatmul.mubr.bf16.gmra.mrb[0].mxu0 %v7153
        %v7280 = vpop.f32.mrb[0].mxu0
        %v7281 = vadd.f32 0.0, %v7280
        %v7282 = vpop.f32.mrb[0].mxu0
        %v7283 = vpop.f32.mrb[0].mxu0
        %v7284 = vadd.f32 0.0, %v7283
        %v7285 = vpop.f32.mrb[0].mxu0
        %7286 = vmatprep.mubr.bf16.mxu0 0
        %7287 = vmatmul.mubr.bf16.gmra.mrb[0].mxu0 %v7154
        %v7288 = vpop.f32.mrb[0].mxu0
        %v7289 = vadd.f32 0.0, %v7288
        %v7290 = vpop.f32.mrb[0].mxu0
        %v7291 = vpop.f32.mrb[0].mxu0
        %v7292 = vadd.f32 0.0, %v7291
        %v7293 = vpop.f32.mrb[0].mxu0
        %7294 = vmatprep.mubr.bf16.mxu0 0
        %7295 = vmatmul.mubr.bf16.gmra.mrb[0].mxu0 %v7155
        %v7296 = vpop.f32.mrb[0].mxu0
        %v7297 = vadd.f32 0.0, %v7296
        %v7298 = vpop.f32.mrb[0].mxu0
        %v7299 = vpop.f32.mrb[0].mxu0
        %v7300 = vadd.f32 0.0, %v7299
        %v7301 = vpop.f32.mrb[0].mxu0
        %7302 = vmatprep.mubr.bf16.mxu0 0
        %7303 = vmatmul.mubr.bf16.gmra.mrb[0].mxu0 %v7156
        %v7304 = vpop.f32.mrb[0].mxu0
        %v7305 = vadd.f32 0.0, %v7304
        %v7306 = vpop.f32.mrb[0].mxu0
        %v7307 = vpop.f32.mrb[0].mxu0
        %v7308 = vadd.f32 0.0, %v7307
        %v7309 = vpop.f32.mrb[0].mxu0
        %7310 = vmatprep.mubr.bf16.mxu0 0
        %7311 = vmatmul.mubr.bf16.gmra.mrb[0].mxu0 %v7157
        %v7312 = vpop.f32.mrb[0].mxu0
        %v7313 = vadd.f32 0.0, %v7312
        %v7314 = vpop.f32.mrb[0].mxu0
        %v7315 = vpop.f32.mrb[0].mxu0
        %v7316 = vadd.f32 0.0, %v7315
        %v7317 = vpop.f32.mrb[0].mxu0
        %7318 = vdwg.mxu0
        %v7319 = vadd.f32 %v7118, %v7257
        %v7320 = vadd.f32 %v7119, %v7260
        %v7321 = vadd.f32 %v7120, %v7265
        %v7322 = vadd.f32 %v7121, %v7268
        %v7323 = vadd.f32 %v7122, %v7273
        %v7324 = vadd.f32 %v7123, %v7276
        %v7325 = vadd.f32 %v7124, %v7281
        %v7326 = vadd.f32 %v7125, %v7284
        %v7327 = vadd.f32 %v7126, %v7289
        %v7328 = vadd.f32 %v7127, %v7292
        %v7329 = vadd.f32 %v7128, %v7297
        %v7330 = vadd.f32 %v7129, %v7300
        %v7331 = vadd.f32 %v7130, %v7305
        %v7332 = vadd.f32 %v7131, %v7308
        %v7333 = vadd.f32 %v7132, %v7313
        %v7334 = vadd.f32 %v7133, %v7316
        %v7335 = vld [vmem:[%s520 + $0x2] sm:$0xff]
        %v7336 = vld [vmem:[%s520 + $0x12] sm:$0xff]
        %v7337 = vld [vmem:[%s520 + $0x22] sm:$0xff]
        %v7338 = vld [vmem:[%s520 + $0x32] sm:$0xff]
        %v7339 = vld [vmem:[%s520 + $0x42] sm:$0xff]
        %v7340 = vld [vmem:[%s520 + $0x52] sm:$0xff]
        %v7341 = vld [vmem:[%s520 + $0x62] sm:$0xff]
        %v7342 = vld [vmem:[%s520 + $0x72] sm:$0xff]
        %v7343 = vld [vmem:[%s520 + $0xa2] sm:$0xff]
        %v7344 = vld [vmem:[%s520 + $0xb2] sm:$0xff]
        %v7345 = vld [vmem:[%s520 + $0xc2] sm:$0xff]
        %v7346 = vld [vmem:[%s520 + $0xd2] sm:$0xff]
        %v7347 = vld [vmem:[%s520 + $0xe2] sm:$0xff]
        %v7348 = vld [vmem:[%s520 + $0xf2] sm:$0xff]
        %v7349 = vld [vmem:[%s520 + $0x102] sm:$0xff]
        %v7350 = vld [vmem:[%s520 + $0x112] sm:$0xff]
        %v7351 = vpack.c.bf16 %v7336, %v7335
        %v7352 = vpack.c.bf16 %v7338, %v7337
        %v7353 = vpack.c.bf16 %v7340, %v7339
        %v7354 = vpack.c.bf16 %v7342, %v7341
        %v7355 = vpack.c.bf16 %v7344, %v7343
        %v7356 = vpack.c.bf16 %v7346, %v7345
        %v7357 = vpack.c.bf16 %v7348, %v7347
        %v7358 = vpack.c.bf16 %v7350, %v7349
        %v7359 = vld [vmem:[%s5371] sm:$0xf]
        %v7360 = vld [vmem:[%s5371 + $0x4] sm:$0xf]
        %v7361 = vld [vmem:[%s5371 + $0x8] sm:$0xf]
        %v7362 = vld [vmem:[%s5371 + $0xc] sm:$0xf]
        %v7363 = vld [vmem:[%s5371 + $0x10] sm:$0xf]
        %v7364 = vld [vmem:[%s5371 + $0x14] sm:$0xf]
        %v7365 = vld [vmem:[%s5371 + $0x18] sm:$0xf]
        %v7366 = vld [vmem:[%s5371 + $0x1c] sm:$0xf]
        %v7367 = vld [vmem:[%s5371 + $0x20] sm:$0xf]
        %v7368 = vld [vmem:[%s5371 + $0x24] sm:$0xf]
        %v7369 = vld [vmem:[%s5371 + $0x28] sm:$0xf]
        %v7370 = vld [vmem:[%s5371 + $0x2c] sm:$0xf]
        %v7371 = vld [vmem:[%s5371 + $0x30] sm:$0xf]
        %v7372 = vld [vmem:[%s5371 + $0x34] sm:$0xf]
        %v7373 = vld [vmem:[%s5371 + $0x38] sm:$0xf]
        %v7374 = vld [vmem:[%s5371 + $0x3c] sm:$0xf]
        %v7391 = vunpack.c.l.b16 %v7359
        %v7392 = vunpack.c.l.b16 %v7360
        %v7393 = vunpack.c.l.b16 %v7361
        %v7394 = vunpack.c.l.b16 %v7362
        %v7395 = vunpack.c.l.b16 %v7363
        %v7396 = vunpack.c.l.b16 %v7364
        %v7397 = vunpack.c.l.b16 %v7365
        %v7398 = vunpack.c.l.b16 %v7366
        %v7399 = vunpack.c.l.b16 %v7367
        %v7400 = vunpack.c.l.b16 %v7368
        %v7401 = vunpack.c.l.b16 %v7369
        %v7402 = vunpack.c.l.b16 %v7370
        %v7403 = vunpack.c.l.b16 %v7371
        %v7404 = vunpack.c.l.b16 %v7372
        %v7405 = vunpack.c.l.b16 %v7373
        %v7406 = vunpack.c.l.b16 %v7374
        %v7407 = vpack.c.b16 %v7392, %v7391
        %v7408 = vpack.c.b16 %v7394, %v7393
        %v7409 = vpack.c.b16 %v7396, %v7395
        %v7410 = vpack.c.b16 %v7398, %v7397
        %v7411 = vpack.c.b16 %v7400, %v7399
        %v7412 = vpack.c.b16 %v7402, %v7401
        %v7413 = vpack.c.b16 %v7404, %v7403
        %v7414 = vpack.c.b16 %v7406, %v7405
        %7423 = vmatprep.subr.bf16.mxu0 0
        %7424 = vmatpush1.bf16.msra.mxu0 %v7407
        %7425 = vmatprep.subr.bf16.mxu0 0
        %7426 = vmatpush1.bf16.msra.mxu0 %v7408
        %7427 = vmatprep.subr.bf16.mxu0 0
        %7428 = vmatpush1.bf16.msra.mxu0 %v7409
        %7429 = vmatprep.subr.bf16.mxu0 0
        %7430 = vmatpush1.bf16.msra.mxu0 %v7410
        %7431 = vmatprep.subr.bf16.mxu0 0
        %7432 = vmatpush1.bf16.msra.mxu0 %v7411
        %7433 = vmatprep.subr.bf16.mxu0 0
        %7434 = vmatpush1.bf16.msra.mxu0 %v7412
        %7435 = vmatprep.subr.bf16.mxu0 0
        %7436 = vmatpush1.bf16.msra.mxu0 %v7413
        %7437 = vmatprep.subr.bf16.mxu0 0
        %7438 = vmatpush1.bf16.msra.mxu0 %v7414
        %7439 = vmatprep.subr.bf16.mxu0 0
        %7440 = vmatpush1.bf16.msra.mxu0 0
        %7441 = vmatprep.subr.bf16.mxu0 0
        %7442 = vmatpush1.bf16.msra.mxu0 0
        %7443 = vmatprep.subr.bf16.mxu0 0
        %7444 = vmatpush1.bf16.msra.mxu0 0
        %7445 = vmatprep.subr.bf16.mxu0 0
        %7446 = vmatpush1.bf16.msra.mxu0 0
        %7447 = vmatprep.subr.bf16.mxu0 0
        %7448 = vmatpush1.bf16.msra.mxu0 0
        %7449 = vmatprep.subr.bf16.mxu0 0
        %7450 = vmatpush1.bf16.msra.mxu0 0
        %7451 = vmatprep.subr.bf16.mxu0 0
        %7452 = vmatpush1.bf16.msra.mxu0 0
        %7453 = vmatprep.subr.bf16.mxu0 0
        %7454 = vmatpush1.bf16.msra.mxu0 0
        %7455 = vmatprep.mubr.bf16.mxu0 0
        %7456 = vmatmul.mubr.bf16.gmra.mrb[0].mxu0 %v7351
        %v7457 = vpop.f32.mrb[0].mxu0
        %v7458 = vadd.f32 0.0, %v7457
        %v7459 = vpop.f32.mrb[0].mxu0
        %v7460 = vpop.f32.mrb[0].mxu0
        %v7461 = vadd.f32 0.0, %v7460
        %v7462 = vpop.f32.mrb[0].mxu0
        %7463 = vmatprep.mubr.bf16.mxu0 0
        %7464 = vmatmul.mubr.bf16.gmra.mrb[0].mxu0 %v7352
        %v7465 = vpop.f32.mrb[0].mxu0
        %v7466 = vadd.f32 0.0, %v7465
        %v7467 = vpop.f32.mrb[0].mxu0
        %v7468 = vpop.f32.mrb[0].mxu0
        %v7469 = vadd.f32 0.0, %v7468
        %v7470 = vpop.f32.mrb[0].mxu0
        %7471 = vmatprep.mubr.bf16.mxu0 0
        %7472 = vmatmul.mubr.bf16.gmra.mrb[0].mxu0 %v7353
        %v7473 = vpop.f32.mrb[0].mxu0
        %v7474 = vadd.f32 0.0, %v7473
        %v7475 = vpop.f32.mrb[0].mxu0
        %v7476 = vpop.f32.mrb[0].mxu0
        %v7477 = vadd.f32 0.0, %v7476
        %v7478 = vpop.f32.mrb[0].mxu0
        %7479 = vmatprep.mubr.bf16.mxu0 0
        %7480 = vmatmul.mubr.bf16.gmra.mrb[0].mxu0 %v7354
        %v7481 = vpop.f32.mrb[0].mxu0
        %v7482 = vadd.f32 0.0, %v7481
        %v7483 = vpop.f32.mrb[0].mxu0
        %v7484 = vpop.f32.mrb[0].mxu0
        %v7485 = vadd.f32 0.0, %v7484
        %v7486 = vpop.f32.mrb[0].mxu0
        %7487 = vmatprep.mubr.bf16.mxu0 0
        %7488 = vmatmul.mubr.bf16.gmra.mrb[0].mxu0 %v7355
        %v7489 = vpop.f32.mrb[0].mxu0
        %v7490 = vadd.f32 0.0, %v7489
        %v7491 = vpop.f32.mrb[0].mxu0
        %v7492 = vpop.f32.mrb[0].mxu0
        %v7493 = vadd.f32 0.0, %v7492
        %v7494 = vpop.f32.mrb[0].mxu0
        %7495 = vmatprep.mubr.bf16.mxu0 0
        %7496 = vmatmul.mubr.bf16.gmra.mrb[0].mxu0 %v7356
        %v7497 = vpop.f32.mrb[0].mxu0
        %v7498 = vadd.f32 0.0, %v7497
        %v7499 = vpop.f32.mrb[0].mxu0
        %v7500 = vpop.f32.mrb[0].mxu0
        %v7501 = vadd.f32 0.0, %v7500
        %v7502 = vpop.f32.mrb[0].mxu0
        %7503 = vmatprep.mubr.bf16.mxu0 0
        %7504 = vmatmul.mubr.bf16.gmra.mrb[0].mxu0 %v7357
        %v7505 = vpop.f32.mrb[0].mxu0
        %v7506 = vadd.f32 0.0, %v7505
        %v7507 = vpop.f32.mrb[0].mxu0
        %v7508 = vpop.f32.mrb[0].mxu0
        %v7509 = vadd.f32 0.0, %v7508
        %v7510 = vpop.f32.mrb[0].mxu0
        %7511 = vmatprep.mubr.bf16.mxu0 0
        %7512 = vmatmul.mubr.bf16.gmra.mrb[0].mxu0 %v7358
        %v7513 = vpop.f32.mrb[0].mxu0
        %v7514 = vadd.f32 0.0, %v7513
        %v7515 = vpop.f32.mrb[0].mxu0
        %v7516 = vpop.f32.mrb[0].mxu0
        %v7517 = vadd.f32 0.0, %v7516
        %v7518 = vpop.f32.mrb[0].mxu0
        %7519 = vdwg.mxu0
        %v7520 = vadd.f32 %v7319, %v7458
        %v7521 = vadd.f32 %v7320, %v7461
        %v7522 = vadd.f32 %v7321, %v7466
        %v7523 = vadd.f32 %v7322, %v7469
        %v7524 = vadd.f32 %v7323, %v7474
        %v7525 = vadd.f32 %v7324, %v7477
        %v7526 = vadd.f32 %v7325, %v7482
        %v7527 = vadd.f32 %v7326, %v7485
        %v7528 = vadd.f32 %v7327, %v7490
        %v7529 = vadd.f32 %v7328, %v7493
        %v7530 = vadd.f32 %v7329, %v7498
        %v7531 = vadd.f32 %v7330, %v7501
        %v7532 = vadd.f32 %v7331, %v7506
        %v7533 = vadd.f32 %v7332, %v7509
        %v7534 = vadd.f32 %v7333, %v7514
        %v7535 = vadd.f32 %v7334, %v7517
        %v7536 = vld [vmem:[%s3648] sm:$0xff]
        %v7537 = vld [vmem:[%s3648 + $0x10] sm:$0xff]
        %v7538 = vld [vmem:[%s3648 + $0x20] sm:$0xff]
        %v7539 = vld [vmem:[%s3648 + $0x30] sm:$0xff]
        %v7540 = vld [vmem:[%s3648 + $0x40] sm:$0xff]
        %v7541 = vld [vmem:[%s3648 + $0x50] sm:$0xff]
        %v7542 = vld [vmem:[%s3648 + $0x60] sm:$0xff]
        %v7543 = vld [vmem:[%s3648 + $0x70] sm:$0xff]
        %v7544 = vld [vmem:[%s3648 + $0xa0] sm:$0xff]
        %v7545 = vld [vmem:[%s3648 + $0xb0] sm:$0xff]
        %v7546 = vld [vmem:[%s3648 + $0xc0] sm:$0xff]
        %v7547 = vld [vmem:[%s3648 + $0xd0] sm:$0xff]
        %v7548 = vld [vmem:[%s3648 + $0xe0] sm:$0xff]
        %v7549 = vld [vmem:[%s3648 + $0xf0] sm:$0xff]
        %v7550 = vld [vmem:[%s3648 + $0x100] sm:$0xff]
        %v7551 = vld [vmem:[%s3648 + $0x110] sm:$0xff]
        %v7552 = vpack.c.bf16 %v7537, %v7536
        %v7553 = vpack.c.bf16 %v7539, %v7538
        %v7554 = vpack.c.bf16 %v7541, %v7540
        %v7555 = vpack.c.bf16 %v7543, %v7542
        %v7556 = vpack.c.bf16 %v7545, %v7544
        %v7557 = vpack.c.bf16 %v7547, %v7546
        %v7558 = vpack.c.bf16 %v7549, %v7548
        %v7559 = vpack.c.bf16 %v7551, %v7550
        %v7560 = vld [vmem:[%s5573] sm:$0xf]
        %v7561 = vld [vmem:[%s5573 + $0x4] sm:$0xf]
        %v7562 = vld [vmem:[%s5573 + $0x8] sm:$0xf]
        %v7563 = vld [vmem:[%s5573 + $0xc] sm:$0xf]
        %v7564 = vld [vmem:[%s5573 + $0x10] sm:$0xf]
        %v7565 = vld [vmem:[%s5573 + $0x14] sm:$0xf]
        %v7566 = vld [vmem:[%s5573 + $0x18] sm:$0xf]
        %v7567 = vld [vmem:[%s5573 + $0x1c] sm:$0xf]
        %v7568 = vld [vmem:[%s5573 + $0x20] sm:$0xf]
        %v7569 = vld [vmem:[%s5573 + $0x24] sm:$0xf]
        %v7570 = vld [vmem:[%s5573 + $0x28] sm:$0xf]
        %v7571 = vld [vmem:[%s5573 + $0x2c] sm:$0xf]
        %v7572 = vld [vmem:[%s5573 + $0x30] sm:$0xf]
        %v7573 = vld [vmem:[%s5573 + $0x34] sm:$0xf]
        %v7574 = vld [vmem:[%s5573 + $0x38] sm:$0xf]
        %v7575 = vld [vmem:[%s5573 + $0x3c] sm:$0xf]
        %v7592 = vunpack.c.l.b16 %v7560
        %v7593 = vunpack.c.l.b16 %v7561
        %v7594 = vunpack.c.l.b16 %v7562
        %v7595 = vunpack.c.l.b16 %v7563
        %v7596 = vunpack.c.l.b16 %v7564
        %v7597 = vunpack.c.l.b16 %v7565
        %v7598 = vunpack.c.l.b16 %v7566
        %v7599 = vunpack.c.l.b16 %v7567
        %v7600 = vunpack.c.l.b16 %v7568
        %v7601 = vunpack.c.l.b16 %v7569
        %v7602 = vunpack.c.l.b16 %v7570
        %v7603 = vunpack.c.l.b16 %v7571
        %v7604 = vunpack.c.l.b16 %v7572
        %v7605 = vunpack.c.l.b16 %v7573
        %v7606 = vunpack.c.l.b16 %v7574
        %v7607 = vunpack.c.l.b16 %v7575
        %v7608 = vpack.c.b16 %v7593, %v7592
        %v7609 = vpack.c.b16 %v7595, %v7594
        %v7610 = vpack.c.b16 %v7597, %v7596
        %v7611 = vpack.c.b16 %v7599, %v7598
        %v7612 = vpack.c.b16 %v7601, %v7600
        %v7613 = vpack.c.b16 %v7603, %v7602
        %v7614 = vpack.c.b16 %v7605, %v7604
        %v7615 = vpack.c.b16 %v7607, %v7606
        %7624 = vmatprep.subr.bf16.mxu0 0
        %7625 = vmatpush1.bf16.msra.mxu0 %v7608
        %7626 = vmatprep.subr.bf16.mxu0 0
        %7627 = vmatpush1.bf16.msra.mxu0 %v7609
        %7628 = vmatprep.subr.bf16.mxu0 0
        %7629 = vmatpush1.bf16.msra.mxu0 %v7610
        %7630 = vmatprep.subr.bf16.mxu0 0
        %7631 = vmatpush1.bf16.msra.mxu0 %v7611
        %7632 = vmatprep.subr.bf16.mxu0 0
        %7633 = vmatpush1.bf16.msra.mxu0 %v7612
        %7634 = vmatprep.subr.bf16.mxu0 0
        %7635 = vmatpush1.bf16.msra.mxu0 %v7613
        %7636 = vmatprep.subr.bf16.mxu0 0
        %7637 = vmatpush1.bf16.msra.mxu0 %v7614
        %7638 = vmatprep.subr.bf16.mxu0 0
        %7639 = vmatpush1.bf16.msra.mxu0 %v7615
        %7640 = vmatprep.subr.bf16.mxu0 0
        %7641 = vmatpush1.bf16.msra.mxu0 0
        %7642 = vmatprep.subr.bf16.mxu0 0
        %7643 = vmatpush1.bf16.msra.mxu0 0
        %7644 = vmatprep.subr.bf16.mxu0 0
        %7645 = vmatpush1.bf16.msra.mxu0 0
        %7646 = vmatprep.subr.bf16.mxu0 0
        %7647 = vmatpush1.bf16.msra.mxu0 0
        %7648 = vmatprep.subr.bf16.mxu0 0
        %7649 = vmatpush1.bf16.msra.mxu0 0
        %7650 = vmatprep.subr.bf16.mxu0 0
        %7651 = vmatpush1.bf16.msra.mxu0 0
        %7652 = vmatprep.subr.bf16.mxu0 0
        %7653 = vmatpush1.bf16.msra.mxu0 0
        %7654 = vmatprep.subr.bf16.mxu0 0
        %7655 = vmatpush1.bf16.msra.mxu0 0
        %7656 = vmatprep.mubr.bf16.mxu0 0
        %7657 = vmatmul.mubr.bf16.gmra.mrb[0].mxu0 %v7552
        %v7658 = vpop.f32.mrb[0].mxu0
        %v7659 = vadd.f32 0.0, %v7658
        %v7660 = vpop.f32.mrb[0].mxu0
        %v7661 = vpop.f32.mrb[0].mxu0
        %v7662 = vadd.f32 0.0, %v7661
        %v7663 = vpop.f32.mrb[0].mxu0
        %7664 = vmatprep.mubr.bf16.mxu0 0
        %7665 = vmatmul.mubr.bf16.gmra.mrb[0].mxu0 %v7553
        %v7666 = vpop.f32.mrb[0].mxu0
        %v7667 = vadd.f32 0.0, %v7666
        %v7668 = vpop.f32.mrb[0].mxu0
        %v7669 = vpop.f32.mrb[0].mxu0
        %v7670 = vadd.f32 0.0, %v7669
        %v7671 = vpop.f32.mrb[0].mxu0
        %7672 = vmatprep.mubr.bf16.mxu0 0
        %7673 = vmatmul.mubr.bf16.gmra.mrb[0].mxu0 %v7554
        %v7674 = vpop.f32.mrb[0].mxu0
        %v7675 = vadd.f32 0.0, %v7674
        %v7676 = vpop.f32.mrb[0].mxu0
        %v7677 = vpop.f32.mrb[0].mxu0
        %v7678 = vadd.f32 0.0, %v7677
        %v7679 = vpop.f32.mrb[0].mxu0
        %7680 = vmatprep.mubr.bf16.mxu0 0
        %7681 = vmatmul.mubr.bf16.gmra.mrb[0].mxu0 %v7555
        %v7682 = vpop.f32.mrb[0].mxu0
        %v7683 = vadd.f32 0.0, %v7682
        %v7684 = vpop.f32.mrb[0].mxu0
        %v7685 = vpop.f32.mrb[0].mxu0
        %v7686 = vadd.f32 0.0, %v7685
        %v7687 = vpop.f32.mrb[0].mxu0
        %7688 = vmatprep.mubr.bf16.mxu0 0
        %7689 = vmatmul.mubr.bf16.gmra.mrb[0].mxu0 %v7556
        %v7690 = vpop.f32.mrb[0].mxu0
        %v7691 = vadd.f32 0.0, %v7690
        %v7692 = vpop.f32.mrb[0].mxu0
        %v7693 = vpop.f32.mrb[0].mxu0
        %v7694 = vadd.f32 0.0, %v7693
        %v7695 = vpop.f32.mrb[0].mxu0
        %7696 = vmatprep.mubr.bf16.mxu0 0
        %7697 = vmatmul.mubr.bf16.gmra.mrb[0].mxu0 %v7557
        %v7698 = vpop.f32.mrb[0].mxu0
        %v7699 = vadd.f32 0.0, %v7698
        %v7700 = vpop.f32.mrb[0].mxu0
        %v7701 = vpop.f32.mrb[0].mxu0
        %v7702 = vadd.f32 0.0, %v7701
        %v7703 = vpop.f32.mrb[0].mxu0
        %7704 = vmatprep.mubr.bf16.mxu0 0
        %7705 = vmatmul.mubr.bf16.gmra.mrb[0].mxu0 %v7558
        %v7706 = vpop.f32.mrb[0].mxu0
        %v7707 = vadd.f32 0.0, %v7706
        %v7708 = vpop.f32.mrb[0].mxu0
        %v7709 = vpop.f32.mrb[0].mxu0
        %v7710 = vadd.f32 0.0, %v7709
        %v7711 = vpop.f32.mrb[0].mxu0
        %7712 = vmatprep.mubr.bf16.mxu0 0
        %7713 = vmatmul.mubr.bf16.gmra.mrb[0].mxu0 %v7559
        %v7714 = vpop.f32.mrb[0].mxu0
        %v7715 = vadd.f32 0.0, %v7714
        %v7716 = vpop.f32.mrb[0].mxu0
        %v7717 = vpop.f32.mrb[0].mxu0
        %v7718 = vadd.f32 0.0, %v7717
        %v7719 = vpop.f32.mrb[0].mxu0
        %7720 = vdwg.mxu0
        %v7721 = vadd.f32 %v7520, %v7659
        %v7722 = vadd.f32 %v7521, %v7662
        %v7723 = vadd.f32 %v7522, %v7667
        %v7724 = vadd.f32 %v7523, %v7670
        %v7725 = vadd.f32 %v7524, %v7675
        %v7726 = vadd.f32 %v7525, %v7678
        %v7727 = vadd.f32 %v7526, %v7683
        %v7728 = vadd.f32 %v7527, %v7686
        %v7729 = vadd.f32 %v7528, %v7691
        %v7730 = vadd.f32 %v7529, %v7694
        %v7731 = vadd.f32 %v7530, %v7699
        %v7732 = vadd.f32 %v7531, %v7702
        %v7733 = vadd.f32 %v7532, %v7707
        %v7734 = vadd.f32 %v7533, %v7710
        %v7735 = vadd.f32 %v7534, %v7715
        %v7736 = vadd.f32 %v7535, %v7718
        %v7737 = vld [vmem:[%s3648 + $0x1] sm:$0xff]
        %v7738 = vld [vmem:[%s3648 + $0x11] sm:$0xff]
        %v7739 = vld [vmem:[%s3648 + $0x21] sm:$0xff]
        %v7740 = vld [vmem:[%s3648 + $0x31] sm:$0xff]
        %v7741 = vld [vmem:[%s3648 + $0x41] sm:$0xff]
        %v7742 = vld [vmem:[%s3648 + $0x51] sm:$0xff]
        %v7743 = vld [vmem:[%s3648 + $0x61] sm:$0xff]
        %v7744 = vld [vmem:[%s3648 + $0x71] sm:$0xff]
        %v7745 = vld [vmem:[%s3648 + $0xa1] sm:$0xff]
        %v7746 = vld [vmem:[%s3648 + $0xb1] sm:$0xff]
        %v7747 = vld [vmem:[%s3648 + $0xc1] sm:$0xff]
        %v7748 = vld [vmem:[%s3648 + $0xd1] sm:$0xff]
        %v7749 = vld [vmem:[%s3648 + $0xe1] sm:$0xff]
        %v7750 = vld [vmem:[%s3648 + $0xf1] sm:$0xff]
        %v7751 = vld [vmem:[%s3648 + $0x101] sm:$0xff]
        %v7752 = vld [vmem:[%s3648 + $0x111] sm:$0xff]
        %v7753 = vpack.c.bf16 %v7738, %v7737
        %v7754 = vpack.c.bf16 %v7740, %v7739
        %v7755 = vpack.c.bf16 %v7742, %v7741
        %v7756 = vpack.c.bf16 %v7744, %v7743
        %v7757 = vpack.c.bf16 %v7746, %v7745
        %v7758 = vpack.c.bf16 %v7748, %v7747
        %v7759 = vpack.c.bf16 %v7750, %v7749
        %v7760 = vpack.c.bf16 %v7752, %v7751
        %v7761 = vld [vmem:[%s5775] sm:$0xf]
        %v7762 = vld [vmem:[%s5775 + $0x4] sm:$0xf]
        %v7763 = vld [vmem:[%s5775 + $0x8] sm:$0xf]
        %v7764 = vld [vmem:[%s5775 + $0xc] sm:$0xf]
        %v7765 = vld [vmem:[%s5775 + $0x10] sm:$0xf]
        %v7766 = vld [vmem:[%s5775 + $0x14] sm:$0xf]
        %v7767 = vld [vmem:[%s5775 + $0x18] sm:$0xf]
        %v7768 = vld [vmem:[%s5775 + $0x1c] sm:$0xf]
        %v7769 = vld [vmem:[%s5775 + $0x20] sm:$0xf]
        %v7770 = vld [vmem:[%s5775 + $0x24] sm:$0xf]
        %v7771 = vld [vmem:[%s5775 + $0x28] sm:$0xf]
        %v7772 = vld [vmem:[%s5775 + $0x2c] sm:$0xf]
        %v7773 = vld [vmem:[%s5775 + $0x30] sm:$0xf]
        %v7774 = vld [vmem:[%s5775 + $0x34] sm:$0xf]
        %v7775 = vld [vmem:[%s5775 + $0x38] sm:$0xf]
        %v7776 = vld [vmem:[%s5775 + $0x3c] sm:$0xf]
        %v7793 = vunpack.c.l.b16 %v7761
        %v7794 = vunpack.c.l.b16 %v7762
        %v7795 = vunpack.c.l.b16 %v7763
        %v7796 = vunpack.c.l.b16 %v7764
        %v7797 = vunpack.c.l.b16 %v7765
        %v7798 = vunpack.c.l.b16 %v7766
        %v7799 = vunpack.c.l.b16 %v7767
        %v7800 = vunpack.c.l.b16 %v7768
        %v7801 = vunpack.c.l.b16 %v7769
        %v7802 = vunpack.c.l.b16 %v7770
        %v7803 = vunpack.c.l.b16 %v7771
        %v7804 = vunpack.c.l.b16 %v7772
        %v7805 = vunpack.c.l.b16 %v7773
        %v7806 = vunpack.c.l.b16 %v7774
        %v7807 = vunpack.c.l.b16 %v7775
        %v7808 = vunpack.c.l.b16 %v7776
        %v7809 = vpack.c.b16 %v7794, %v7793
        %v7810 = vpack.c.b16 %v7796, %v7795
        %v7811 = vpack.c.b16 %v7798, %v7797
        %v7812 = vpack.c.b16 %v7800, %v7799
        %v7813 = vpack.c.b16 %v7802, %v7801
        %v7814 = vpack.c.b16 %v7804, %v7803
        %v7815 = vpack.c.b16 %v7806, %v7805
        %v7816 = vpack.c.b16 %v7808, %v7807
        %7825 = vmatprep.subr.bf16.mxu0 0
        %7826 = vmatpush1.bf16.msra.mxu0 %v7809
        %7827 = vmatprep.subr.bf16.mxu0 0
        %7828 = vmatpush1.bf16.msra.mxu0 %v7810
        %7829 = vmatprep.subr.bf16.mxu0 0
        %7830 = vmatpush1.bf16.msra.mxu0 %v7811
        %7831 = vmatprep.subr.bf16.mxu0 0
        %7832 = vmatpush1.bf16.msra.mxu0 %v7812
        %7833 = vmatprep.subr.bf16.mxu0 0
        %7834 = vmatpush1.bf16.msra.mxu0 %v7813
        %7835 = vmatprep.subr.bf16.mxu0 0
        %7836 = vmatpush1.bf16.msra.mxu0 %v7814
        %7837 = vmatprep.subr.bf16.mxu0 0
        %7838 = vmatpush1.bf16.msra.mxu0 %v7815
        %7839 = vmatprep.subr.bf16.mxu0 0
        %7840 = vmatpush1.bf16.msra.mxu0 %v7816
        %7841 = vmatprep.subr.bf16.mxu0 0
        %7842 = vmatpush1.bf16.msra.mxu0 0
        %7843 = vmatprep.subr.bf16.mxu0 0
        %7844 = vmatpush1.bf16.msra.mxu0 0
        %7845 = vmatprep.subr.bf16.mxu0 0
        %7846 = vmatpush1.bf16.msra.mxu0 0
        %7847 = vmatprep.subr.bf16.mxu0 0
        %7848 = vmatpush1.bf16.msra.mxu0 0
        %7849 = vmatprep.subr.bf16.mxu0 0
        %7850 = vmatpush1.bf16.msra.mxu0 0
        %7851 = vmatprep.subr.bf16.mxu0 0
        %7852 = vmatpush1.bf16.msra.mxu0 0
        %7853 = vmatprep.subr.bf16.mxu0 0
        %7854 = vmatpush1.bf16.msra.mxu0 0
        %7855 = vmatprep.subr.bf16.mxu0 0
        %7856 = vmatpush1.bf16.msra.mxu0 0
        %7857 = vmatprep.mubr.bf16.mxu0 0
        %7858 = vmatmul.mubr.bf16.gmra.mrb[0].mxu0 %v7753
        %v7859 = vpop.f32.mrb[0].mxu0
        %v7860 = vadd.f32 0.0, %v7859
        %v7861 = vpop.f32.mrb[0].mxu0
        %v7862 = vpop.f32.mrb[0].mxu0
        %v7863 = vadd.f32 0.0, %v7862
        %v7864 = vpop.f32.mrb[0].mxu0
        %7865 = vmatprep.mubr.bf16.mxu0 0
        %7866 = vmatmul.mubr.bf16.gmra.mrb[0].mxu0 %v7754
        %v7867 = vpop.f32.mrb[0].mxu0
        %v7868 = vadd.f32 0.0, %v7867
        %v7869 = vpop.f32.mrb[0].mxu0
        %v7870 = vpop.f32.mrb[0].mxu0
        %v7871 = vadd.f32 0.0, %v7870
        %v7872 = vpop.f32.mrb[0].mxu0
        %7873 = vmatprep.mubr.bf16.mxu0 0
        %7874 = vmatmul.mubr.bf16.gmra.mrb[0].mxu0 %v7755
        %v7875 = vpop.f32.mrb[0].mxu0
        %v7876 = vadd.f32 0.0, %v7875
        %v7877 = vpop.f32.mrb[0].mxu0
        %v7878 = vpop.f32.mrb[0].mxu0
        %v7879 = vadd.f32 0.0, %v7878
        %v7880 = vpop.f32.mrb[0].mxu0
        %7881 = vmatprep.mubr.bf16.mxu0 0
        %7882 = vmatmul.mubr.bf16.gmra.mrb[0].mxu0 %v7756
        %v7883 = vpop.f32.mrb[0].mxu0
        %v7884 = vadd.f32 0.0, %v7883
        %v7885 = vpop.f32.mrb[0].mxu0
        %v7886 = vpop.f32.mrb[0].mxu0
        %v7887 = vadd.f32 0.0, %v7886
        %v7888 = vpop.f32.mrb[0].mxu0
        %7889 = vmatprep.mubr.bf16.mxu0 0
        %7890 = vmatmul.mubr.bf16.gmra.mrb[0].mxu0 %v7757
        %v7891 = vpop.f32.mrb[0].mxu0
        %v7892 = vadd.f32 0.0, %v7891
        %v7893 = vpop.f32.mrb[0].mxu0
        %v7894 = vpop.f32.mrb[0].mxu0
        %v7895 = vadd.f32 0.0, %v7894
        %v7896 = vpop.f32.mrb[0].mxu0
        %7897 = vmatprep.mubr.bf16.mxu0 0
        %7898 = vmatmul.mubr.bf16.gmra.mrb[0].mxu0 %v7758
        %v7899 = vpop.f32.mrb[0].mxu0
        %v7900 = vadd.f32 0.0, %v7899
        %v7901 = vpop.f32.mrb[0].mxu0
        %v7902 = vpop.f32.mrb[0].mxu0
        %v7903 = vadd.f32 0.0, %v7902
        %v7904 = vpop.f32.mrb[0].mxu0
        %7905 = vmatprep.mubr.bf16.mxu0 0
        %7906 = vmatmul.mubr.bf16.gmra.mrb[0].mxu0 %v7759
        %v7907 = vpop.f32.mrb[0].mxu0
        %v7908 = vadd.f32 0.0, %v7907
        %v7909 = vpop.f32.mrb[0].mxu0
        %v7910 = vpop.f32.mrb[0].mxu0
        %v7911 = vadd.f32 0.0, %v7910
        %v7912 = vpop.f32.mrb[0].mxu0
        %7913 = vmatprep.mubr.bf16.mxu0 0
        %7914 = vmatmul.mubr.bf16.gmra.mrb[0].mxu0 %v7760
        %v7915 = vpop.f32.mrb[0].mxu0
        %v7916 = vadd.f32 0.0, %v7915
        %v7917 = vpop.f32.mrb[0].mxu0
        %v7918 = vpop.f32.mrb[0].mxu0
        %v7919 = vadd.f32 0.0, %v7918
        %v7920 = vpop.f32.mrb[0].mxu0
        %7921 = vdwg.mxu0
        %v7922 = vadd.f32 %v7721, %v7860
        %v7923 = vadd.f32 %v7722, %v7863
        %v7924 = vadd.f32 %v7723, %v7868
        %v7925 = vadd.f32 %v7724, %v7871
        %v7926 = vadd.f32 %v7725, %v7876
        %v7927 = vadd.f32 %v7726, %v7879
        %v7928 = vadd.f32 %v7727, %v7884
        %v7929 = vadd.f32 %v7728, %v7887
        %v7930 = vadd.f32 %v7729, %v7892
        %v7931 = vadd.f32 %v7730, %v7895
        %v7932 = vadd.f32 %v7731, %v7900
        %v7933 = vadd.f32 %v7732, %v7903
        %v7934 = vadd.f32 %v7733, %v7908
        %v7935 = vadd.f32 %v7734, %v7911
        %v7936 = vadd.f32 %v7735, %v7916
        %v7937 = vadd.f32 %v7736, %v7919
        %v7938 = vld [vmem:[%s3648 + $0x2] sm:$0xff]
        %v7939 = vld [vmem:[%s3648 + $0x12] sm:$0xff]
        %v7940 = vld [vmem:[%s3648 + $0x22] sm:$0xff]
        %v7941 = vld [vmem:[%s3648 + $0x32] sm:$0xff]
        %v7942 = vld [vmem:[%s3648 + $0x42] sm:$0xff]
        %v7943 = vld [vmem:[%s3648 + $0x52] sm:$0xff]
        %v7944 = vld [vmem:[%s3648 + $0x62] sm:$0xff]
        %v7945 = vld [vmem:[%s3648 + $0x72] sm:$0xff]
        %v7946 = vld [vmem:[%s3648 + $0xa2] sm:$0xff]
        %v7947 = vld [vmem:[%s3648 + $0xb2] sm:$0xff]
        %v7948 = vld [vmem:[%s3648 + $0xc2] sm:$0xff]
        %v7949 = vld [vmem:[%s3648 + $0xd2] sm:$0xff]
        %v7950 = vld [vmem:[%s3648 + $0xe2] sm:$0xff]
        %v7951 = vld [vmem:[%s3648 + $0xf2] sm:$0xff]
        %v7952 = vld [vmem:[%s3648 + $0x102] sm:$0xff]
        %v7953 = vld [vmem:[%s3648 + $0x112] sm:$0xff]
        %v7954 = vpack.c.bf16 %v7939, %v7938
        %v7955 = vpack.c.bf16 %v7941, %v7940
        %v7956 = vpack.c.bf16 %v7943, %v7942
        %v7957 = vpack.c.bf16 %v7945, %v7944
        %v7958 = vpack.c.bf16 %v7947, %v7946
        %v7959 = vpack.c.bf16 %v7949, %v7948
        %v7960 = vpack.c.bf16 %v7951, %v7950
        %v7961 = vpack.c.bf16 %v7953, %v7952
        %v7962 = vld [vmem:[%s5977] sm:$0xf]
        %v7963 = vld [vmem:[%s5977 + $0x4] sm:$0xf]
        %v7964 = vld [vmem:[%s5977 + $0x8] sm:$0xf]
        %v7965 = vld [vmem:[%s5977 + $0xc] sm:$0xf]
        %v7966 = vld [vmem:[%s5977 + $0x10] sm:$0xf]
        %v7967 = vld [vmem:[%s5977 + $0x14] sm:$0xf]
        %v7968 = vld [vmem:[%s5977 + $0x18] sm:$0xf]
        %v7969 = vld [vmem:[%s5977 + $0x1c] sm:$0xf]
        %v7970 = vld [vmem:[%s5977 + $0x20] sm:$0xf]
        %v7971 = vld [vmem:[%s5977 + $0x24] sm:$0xf]
        %v7972 = vld [vmem:[%s5977 + $0x28] sm:$0xf]
        %v7973 = vld [vmem:[%s5977 + $0x2c] sm:$0xf]
        %v7974 = vld [vmem:[%s5977 + $0x30] sm:$0xf]
        %v7975 = vld [vmem:[%s5977 + $0x34] sm:$0xf]
        %v7976 = vld [vmem:[%s5977 + $0x38] sm:$0xf]
        %v7977 = vld [vmem:[%s5977 + $0x3c] sm:$0xf]
        %v7994 = vunpack.c.l.b16 %v7962
        %v7995 = vunpack.c.l.b16 %v7963
        %v7996 = vunpack.c.l.b16 %v7964
        %v7997 = vunpack.c.l.b16 %v7965
        %v7998 = vunpack.c.l.b16 %v7966
        %v7999 = vunpack.c.l.b16 %v7967
        %v8000 = vunpack.c.l.b16 %v7968
        %v8001 = vunpack.c.l.b16 %v7969
        %v8002 = vunpack.c.l.b16 %v7970
        %v8003 = vunpack.c.l.b16 %v7971
        %v8004 = vunpack.c.l.b16 %v7972
        %v8005 = vunpack.c.l.b16 %v7973
        %v8006 = vunpack.c.l.b16 %v7974
        %v8007 = vunpack.c.l.b16 %v7975
        %v8008 = vunpack.c.l.b16 %v7976
        %v8009 = vunpack.c.l.b16 %v7977
        %v8010 = vpack.c.b16 %v7995, %v7994
        %v8011 = vpack.c.b16 %v7997, %v7996
        %v8012 = vpack.c.b16 %v7999, %v7998
        %v8013 = vpack.c.b16 %v8001, %v8000
        %v8014 = vpack.c.b16 %v8003, %v8002
        %v8015 = vpack.c.b16 %v8005, %v8004
        %v8016 = vpack.c.b16 %v8007, %v8006
        %v8017 = vpack.c.b16 %v8009, %v8008
        %8026 = vmatprep.subr.bf16.mxu0 0
        %8027 = vmatpush1.bf16.msra.mxu0 %v8010
        %8028 = vmatprep.subr.bf16.mxu0 0
        %8029 = vmatpush1.bf16.msra.mxu0 %v8011
        %8030 = vmatprep.subr.bf16.mxu0 0
        %8031 = vmatpush1.bf16.msra.mxu0 %v8012
        %8032 = vmatprep.subr.bf16.mxu0 0
        %8033 = vmatpush1.bf16.msra.mxu0 %v8013
        %8034 = vmatprep.subr.bf16.mxu0 0
        %8035 = vmatpush1.bf16.msra.mxu0 %v8014
        %8036 = vmatprep.subr.bf16.mxu0 0
        %8037 = vmatpush1.bf16.msra.mxu0 %v8015
        %8038 = vmatprep.subr.bf16.mxu0 0
        %8039 = vmatpush1.bf16.msra.mxu0 %v8016
        %8040 = vmatprep.subr.bf16.mxu0 0
        %8041 = vmatpush1.bf16.msra.mxu0 %v8017
        %8042 = vmatprep.subr.bf16.mxu0 0
        %8043 = vmatpush1.bf16.msra.mxu0 0
        %8044 = vmatprep.subr.bf16.mxu0 0
        %8045 = vmatpush1.bf16.msra.mxu0 0
        %8046 = vmatprep.subr.bf16.mxu0 0
        %8047 = vmatpush1.bf16.msra.mxu0 0
        %8048 = vmatprep.subr.bf16.mxu0 0
        %8049 = vmatpush1.bf16.msra.mxu0 0
        %8050 = vmatprep.subr.bf16.mxu0 0
        %8051 = vmatpush1.bf16.msra.mxu0 0
        %8052 = vmatprep.subr.bf16.mxu0 0
        %8053 = vmatpush1.bf16.msra.mxu0 0
        %8054 = vmatprep.subr.bf16.mxu0 0
        %8055 = vmatpush1.bf16.msra.mxu0 0
        %8056 = vmatprep.subr.bf16.mxu0 0
        %8057 = vmatpush1.bf16.msra.mxu0 0
        %8058 = vmatprep.mubr.bf16.mxu0 0
        %8059 = vmatmul.mubr.bf16.gmra.mrb[0].mxu0 %v7954
        %v8060 = vpop.f32.mrb[0].mxu0
        %v8061 = vadd.f32 0.0, %v8060
        %v8062 = vpop.f32.mrb[0].mxu0
        %v8063 = vpop.f32.mrb[0].mxu0
        %v8064 = vadd.f32 0.0, %v8063
        %v8065 = vpop.f32.mrb[0].mxu0
        %8066 = vmatprep.mubr.bf16.mxu0 0
        %8067 = vmatmul.mubr.bf16.gmra.mrb[0].mxu0 %v7955
        %v8068 = vpop.f32.mrb[0].mxu0
        %v8069 = vadd.f32 0.0, %v8068
        %v8070 = vpop.f32.mrb[0].mxu0
        %v8071 = vpop.f32.mrb[0].mxu0
        %v8072 = vadd.f32 0.0, %v8071
        %v8073 = vpop.f32.mrb[0].mxu0
        %8074 = vmatprep.mubr.bf16.mxu0 0
        %8075 = vmatmul.mubr.bf16.gmra.mrb[0].mxu0 %v7956
        %v8076 = vpop.f32.mrb[0].mxu0
        %v8077 = vadd.f32 0.0, %v8076
        %v8078 = vpop.f32.mrb[0].mxu0
        %v8079 = vpop.f32.mrb[0].mxu0
        %v8080 = vadd.f32 0.0, %v8079
        %v8081 = vpop.f32.mrb[0].mxu0
        %8082 = vmatprep.mubr.bf16.mxu0 0
        %8083 = vmatmul.mubr.bf16.gmra.mrb[0].mxu0 %v7957
        %v8084 = vpop.f32.mrb[0].mxu0
        %v8085 = vadd.f32 0.0, %v8084
        %v8086 = vpop.f32.mrb[0].mxu0
        %v8087 = vpop.f32.mrb[0].mxu0
        %v8088 = vadd.f32 0.0, %v8087
        %v8089 = vpop.f32.mrb[0].mxu0
        %8090 = vmatprep.mubr.bf16.mxu0 0
        %8091 = vmatmul.mubr.bf16.gmra.mrb[0].mxu0 %v7958
        %v8092 = vpop.f32.mrb[0].mxu0
        %v8093 = vadd.f32 0.0, %v8092
        %v8094 = vpop.f32.mrb[0].mxu0
        %v8095 = vpop.f32.mrb[0].mxu0
        %v8096 = vadd.f32 0.0, %v8095
        %v8097 = vpop.f32.mrb[0].mxu0
        %8098 = vmatprep.mubr.bf16.mxu0 0
        %8099 = vmatmul.mubr.bf16.gmra.mrb[0].mxu0 %v7959
        %v8100 = vpop.f32.mrb[0].mxu0
        %v8101 = vadd.f32 0.0, %v8100
        %v8102 = vpop.f32.mrb[0].mxu0
        %v8103 = vpop.f32.mrb[0].mxu0
        %v8104 = vadd.f32 0.0, %v8103
        %v8105 = vpop.f32.mrb[0].mxu0
        %8106 = vmatprep.mubr.bf16.mxu0 0
        %8107 = vmatmul.mubr.bf16.gmra.mrb[0].mxu0 %v7960
        %v8108 = vpop.f32.mrb[0].mxu0
        %v8109 = vadd.f32 0.0, %v8108
        %v8110 = vpop.f32.mrb[0].mxu0
        %v8111 = vpop.f32.mrb[0].mxu0
        %v8112 = vadd.f32 0.0, %v8111
        %v8113 = vpop.f32.mrb[0].mxu0
        %8114 = vmatprep.mubr.bf16.mxu0 0
        %8115 = vmatmul.mubr.bf16.gmra.mrb[0].mxu0 %v7961
        %v8116 = vpop.f32.mrb[0].mxu0
        %v8117 = vadd.f32 0.0, %v8116
        %v8118 = vpop.f32.mrb[0].mxu0
        %v8119 = vpop.f32.mrb[0].mxu0
        %v8120 = vadd.f32 0.0, %v8119
        %v8121 = vpop.f32.mrb[0].mxu0
        %8122 = vdwg.mxu0
        %v8123 = vadd.f32 %v7922, %v8061
        %v8124 = vadd.f32 %v7923, %v8064
        %v8125 = vadd.f32 %v7924, %v8069
        %v8126 = vadd.f32 %v7925, %v8072
        %v8127 = vadd.f32 %v7926, %v8077
        %v8128 = vadd.f32 %v7927, %v8080
        %v8129 = vadd.f32 %v7928, %v8085
        %v8130 = vadd.f32 %v7929, %v8088
        %v8131 = vadd.f32 %v7930, %v8093
        %v8132 = vadd.f32 %v7931, %v8096
        %v8133 = vadd.f32 %v7932, %v8101
        %v8134 = vadd.f32 %v7933, %v8104
        %v8135 = vadd.f32 %v7934, %v8109
        %v8136 = vadd.f32 %v7935, %v8112
        %v8137 = vadd.f32 %v7936, %v8117
        %v8138 = vadd.f32 %v7937, %v8120
        %v8139 = vld [vmem:[%s6155] sm:$0x1]
        %v8141 = vlaneseq
        %v8142 = vshrl.u32 %v8141, 7
        %v8143 = vsub.s32 0, %v8142
        %v8144 = vrot.slane %v8139, %v8143
        %v8146 = vadd.f32 %v8123, %v8144
        %v8147 = vadd.f32 %v8124, %v8144
        %v8148 = vadd.f32 %v8125, %v8144
        %v8149 = vadd.f32 %v8126, %v8144
        %v8150 = vadd.f32 %v8127, %v8144
        %v8151 = vadd.f32 %v8128, %v8144
        %v8152 = vadd.f32 %v8129, %v8144
        %v8153 = vadd.f32 %v8130, %v8144
        %v8154 = vadd.f32 %v8131, %v8144
        %v8155 = vadd.f32 %v8132, %v8144
        %v8156 = vadd.f32 %v8133, %v8144
        %v8157 = vadd.f32 %v8134, %v8144
        %v8158 = vadd.f32 %v8135, %v8144
        %v8159 = vadd.f32 %v8136, %v8144
        %v8160 = vadd.f32 %v8137, %v8144
        %v8161 = vadd.f32 %v8138, %v8144
        %v8162 = vmul.f32 %v8146, 0.1
        %v8163 = vmul.f32 %v8147, 0.1
        %v8164 = vmul.f32 %v8148, 0.1
        %v8165 = vmul.f32 %v8149, 0.1
        %v8166 = vmul.f32 %v8150, 0.1
        %v8167 = vmul.f32 %v8151, 0.1
        %v8168 = vmul.f32 %v8152, 0.1
        %v8169 = vmul.f32 %v8153, 0.1
        %v8170 = vmul.f32 %v8154, 0.1
        %v8171 = vmul.f32 %v8155, 0.1
        %v8172 = vmul.f32 %v8156, 0.1
        %v8173 = vmul.f32 %v8157, 0.1
        %v8174 = vmul.f32 %v8158, 0.1
        %v8175 = vmul.f32 %v8159, 0.1
        %v8176 = vmul.f32 %v8160, 0.1
        %v8177 = vmul.f32 %v8161, 0.1
        %v8178 = vmax.f32 %v8146, %v8162
        %v8179 = vmax.f32 %v8147, %v8163
        %v8180 = vmax.f32 %v8148, %v8164
        %v8181 = vmax.f32 %v8149, %v8165
        %v8182 = vmax.f32 %v8150, %v8166
        %v8183 = vmax.f32 %v8151, %v8167
        %v8184 = vmax.f32 %v8152, %v8168
        %v8185 = vmax.f32 %v8153, %v8169
        %v8186 = vmax.f32 %v8154, %v8170
        %v8187 = vmax.f32 %v8155, %v8171
        %v8188 = vmax.f32 %v8156, %v8172
        %v8189 = vmax.f32 %v8157, %v8173
        %v8190 = vmax.f32 %v8158, %v8174
        %v8191 = vmax.f32 %v8159, %v8175
        %v8192 = vmax.f32 %v8160, %v8176
        %v8193 = vmax.f32 %v8161, %v8177
        %8194 = vxpose.xlu0.b32.start [1/16] %v8178, 128
        %8195 = vxpose.xlu0.b32.cont [2/16] %v8179, 128
        %8196 = vxpose.xlu0.b32.cont [3/16] %v8180, 128
        %8197 = vxpose.xlu0.b32.cont [4/16] %v8181, 128
        %8198 = vxpose.xlu0.b32.cont [5/16] %v8182, 128
        %8199 = vxpose.xlu0.b32.cont [6/16] %v8183, 128
        %8200 = vxpose.xlu0.b32.cont [7/16] %v8184, 128
        %8201 = vxpose.xlu0.b32.cont [8/16] %v8185, 128
        %8202 = vxpose.xlu0.b32.cont [9/16] %v8186, 128
        %8203 = vxpose.xlu0.b32.cont [10/16] %v8187, 128
        %8204 = vxpose.xlu0.b32.cont [11/16] %v8188, 128
        %8205 = vxpose.xlu0.b32.cont [12/16] %v8189, 128
        %8206 = vxpose.xlu0.b32.cont [13/16] %v8190, 128
        %8207 = vxpose.xlu0.b32.cont [14/16] %v8191, 128
        %8208 = vxpose.xlu0.b32.cont [15/16] %v8192, 128
        %8209 = vxpose.xlu0.b32.end [16/16] %v8193, 128
        %v8210 = vpop.trf.xlu0
        %v8211 = vpop.trf.xlu0
        %v8212 = vpop.trf.xlu0
        %v8213 = vpop.trf.xlu0
        %v8214 = vpop.trf.xlu0
        %v8215 = vpop.trf.xlu0
        %v8216 = vpop.trf.xlu0
        %v8217 = vpop.trf.xlu0
        %v8218 = vpop.trf.xlu0
        %v8219 = vpop.trf.xlu0
        %v8220 = vpop.trf.xlu0
        %v8221 = vpop.trf.xlu0
        %v8222 = vpop.trf.xlu0
        %v8223 = vpop.trf.xlu0
        %v8224 = vpop.trf.xlu0
        %v8225 = vpop.trf.xlu0
        %v8226 = vpack.c.bf16 %v8210, %v8210
        %v8229 = vunpack.c.l.s4 1983009808
        %v8230 = vunpack.c.0.s8 %v8229
        %v8231 = vlaneseq
        %v8232 = vshrl.u32 %v8231, 7
        %v8233 = vsub.s32 %v8230, %v8232
        %v8234 = vrot.slane %v8226, %v8233
        %v8235 = vrot.slane %v8234, 7
        %vm8237 = vcmask 517121
        %vm8238 = vsmask.f32 1280
        %vm8239 = vmand %vm8237, %vm8238
        %v8240 = vld [vmem:[#allocation3] sm:$0x2]
        %v8241 = vsel %vm8239, %v8235, %v8240
        %8242 = vst [vmem:[#allocation3] sm:$0x2] %v8241
        %v8244 = vshrl.u32 %v8234, 16
        %v8246 = vrot.slane %v8244, 7
        %8247 = vrot.lane.b32.xlu0 %v8246, 64
        %v8248 = vpop.permute.xlu0 %8247
        %vm8250 = vcmask 1041921
        %vm8251 = vmand %vm8250, %vm8238
        %v8252 = vld [vmem:[#allocation3] sm:$0x2]
        %v8253 = vsel %vm8251, %v8248, %v8252
        %8254 = vst [vmem:[#allocation3] sm:$0x2] %v8253
        %v8255 = vld [vmem:[#allocation3 + $0x2] sm:$0x2]
        %v8256 = vsel %vm8239, %v8226, %v8255
        %8257 = vst [vmem:[#allocation3 + $0x2] sm:$0x2] %v8256
        %v8258 = vrot.slane %v8244, 6
        %v8259 = vrot.slane %v8258, 2
        %8260 = vrot.lane.b32.xlu0 %v8259, 64
        %v8261 = vpop.permute.xlu0 %8260
        %v8263 = vld [vmem:[#allocation3 + $0x2] sm:$0x2]
        %v8264 = vsel %vm8251, %v8261, %v8263
        %8265 = vst [vmem:[#allocation3 + $0x2] sm:$0x2] %v8264
        %v8266 = vcombine.high %v8234, %v8234
        %v8267 = vrot.slane %v8266, 7
        %v8269 = vld [vmem:[#allocation3 + $0x4] sm:$0x2]
        %v8270 = vsel %vm8239, %v8267, %v8269
        %8271 = vst [vmem:[#allocation3 + $0x4] sm:$0x2] %v8270
        %v8273 = vshrl.u32 %v8266, 16
        %v8275 = vrot.slane %v8273, 7
        %8276 = vrot.lane.b32.xlu0 %v8275, 64
        %v8277 = vpop.permute.xlu0 %8276
        %v8279 = vld [vmem:[#allocation3 + $0x4] sm:$0x2]
        %v8280 = vsel %vm8251, %v8277, %v8279
        %8281 = vst [vmem:[#allocation3 + $0x4] sm:$0x2] %v8280
        %v8283 = vld [vmem:[#allocation3 + $0x6] sm:$0x2]
        %v8284 = vsel %vm8239, %v8266, %v8283
        %8285 = vst [vmem:[#allocation3 + $0x6] sm:$0x2] %v8284
        %v8286 = vrot.slane %v8273, 6
        %v8287 = vrot.slane %v8286, 2
        %8288 = vrot.lane.b32.xlu0 %v8287, 64
        %v8289 = vpop.permute.xlu0 %8288
        %v8291 = vld [vmem:[#allocation3 + $0x6] sm:$0x2]
        %v8292 = vsel %vm8251, %v8289, %v8291
        %8293 = vst [vmem:[#allocation3 + $0x6] sm:$0x2] %v8292
        %v8294 = vshll.u32 %v8234, 16
        %v8296 = vrot.slane %v8294, 7
        %8297 = vrot.lane.b32.xlu0 %v8296, 64
        %v8298 = vpop.permute.xlu0 %8297
        %vm8300 = vsmask.f32 7942
        %vm8301 = vmand %vm8237, %vm8300
        %v8302 = vld [vmem:[#allocation3] sm:$0x2]
        %v8303 = vsel %vm8301, %v8298, %v8302
        %8304 = vst [vmem:[#allocation3] sm:$0x2] %v8303
        %vm8305 = vmand %vm8250, %vm8300
        %v8306 = vld [vmem:[#allocation3] sm:$0x2]
        %v8307 = vsel %vm8305, %v8235, %v8306
        %8308 = vst [vmem:[#allocation3] sm:$0x2] %v8307
        %8309 = vrot.lane.b32.xlu0 %v8294, 64
        %v8310 = vpop.permute.xlu0 %8309
        %v8312 = vld [vmem:[#allocation3 + $0x2] sm:$0x2]
        %v8313 = vsel %vm8301, %v8310, %v8312
        %8314 = vst [vmem:[#allocation3 + $0x2] sm:$0x2] %v8313
        %v8315 = vld [vmem:[#allocation3 + $0x2] sm:$0x2]
        %v8316 = vsel %vm8305, %v8226, %v8315
        %8317 = vst [vmem:[#allocation3 + $0x2] sm:$0x2] %v8316
        %v8318 = vshll.u32 %v8266, 16
        %v8320 = vrot.slane %v8318, 7
        %8321 = vrot.lane.b32.xlu0 %v8320, 64
        %v8322 = vpop.permute.xlu0 %8321
        %v8324 = vld [vmem:[#allocation3 + $0x4] sm:$0x2]
        %v8325 = vsel %vm8301, %v8322, %v8324
        %8326 = vst [vmem:[#allocation3 + $0x4] sm:$0x2] %v8325
        %v8327 = vld [vmem:[#allocation3 + $0x4] sm:$0x2]
        %v8328 = vsel %vm8305, %v8267, %v8327
        %8329 = vst [vmem:[#allocation3 + $0x4] sm:$0x2] %v8328
        %8330 = vrot.lane.b32.xlu0 %v8318, 64
        %v8331 = vpop.permute.xlu0 %8330
        %v8333 = vld [vmem:[#allocation3 + $0x6] sm:$0x2]
        %v8334 = vsel %vm8301, %v8331, %v8333
        %8335 = vst [vmem:[#allocation3 + $0x6] sm:$0x2] %v8334
        %v8336 = vld [vmem:[#allocation3 + $0x6] sm:$0x2]
        %v8337 = vsel %vm8305, %v8266, %v8336
        %8338 = vst [vmem:[#allocation3 + $0x6] sm:$0x2] %v8337
        %v8339 = vld [vmem:[#allocation3] sm:$0xff]
        %v8340 = vld [vmem:[#allocation4] sm:$0xf]
        %v8341 = vld [vmem:[#allocation4 + $0x4] sm:$0xf]
        %v8342 = vld [vmem:[#allocation4 + $0x8] sm:$0xf]
        %v8343 = vld [vmem:[#allocation4 + $0xc] sm:$0xf]
        %v8344 = vld [vmem:[#allocation4 + $0x10] sm:$0xf]
        %v8345 = vld [vmem:[#allocation4 + $0x14] sm:$0xf]
        %v8346 = vld [vmem:[#allocation4 + $0x18] sm:$0xf]
        %v8347 = vld [vmem:[#allocation4 + $0x1c] sm:$0xf]
        %v8348 = vld [vmem:[#allocation4 + $0x20] sm:$0xf]
        %v8349 = vld [vmem:[#allocation4 + $0x24] sm:$0xf]
        %v8350 = vld [vmem:[#allocation4 + $0x28] sm:$0xf]
        %v8351 = vld [vmem:[#allocation4 + $0x2c] sm:$0xf]
        %v8352 = vld [vmem:[#allocation4 + $0x30] sm:$0xf]
        %v8353 = vld [vmem:[#allocation4 + $0x34] sm:$0xf]
        %v8354 = vld [vmem:[#allocation4 + $0x38] sm:$0xf]
        %v8355 = vld [vmem:[#allocation4 + $0x3c] sm:$0xf]
        %v8356 = vld [vmem:[#allocation4 + $0x40] sm:$0xf]
        %v8357 = vld [vmem:[#allocation4 + $0x44] sm:$0xf]
        %v8358 = vld [vmem:[#allocation4 + $0x48] sm:$0xf]
        %v8359 = vld [vmem:[#allocation4 + $0x4c] sm:$0xf]
        %v8360 = vld [vmem:[#allocation4 + $0x50] sm:$0xf]
        %v8361 = vld [vmem:[#allocation4 + $0x54] sm:$0xf]
        %v8362 = vld [vmem:[#allocation4 + $0x58] sm:$0xf]
        %v8363 = vld [vmem:[#allocation4 + $0x5c] sm:$0xf]
        %v8364 = vld [vmem:[#allocation4 + $0x60] sm:$0xf]
        %v8365 = vld [vmem:[#allocation4 + $0x64] sm:$0xf]
        %v8366 = vld [vmem:[#allocation4 + $0x68] sm:$0xf]
        %v8367 = vld [vmem:[#allocation4 + $0x6c] sm:$0xf]
        %v8368 = vld [vmem:[#allocation4 + $0x70] sm:$0xf]
        %v8369 = vld [vmem:[#allocation4 + $0x74] sm:$0xf]
        %v8370 = vld [vmem:[#allocation4 + $0x78] sm:$0xf]
        %v8371 = vld [vmem:[#allocation4 + $0x7c] sm:$0xf]
        %v8372 = vld [vmem:[#allocation4 + $0x80] sm:$0xf]
        %v8373 = vld [vmem:[#allocation4 + $0x84] sm:$0xf]
        %v8374 = vld [vmem:[#allocation4 + $0x88] sm:$0xf]
        %v8375 = vld [vmem:[#allocation4 + $0x8c] sm:$0xf]
        %v8376 = vld [vmem:[#allocation4 + $0x90] sm:$0xf]
        %v8377 = vld [vmem:[#allocation4 + $0x94] sm:$0xf]
        %v8378 = vld [vmem:[#allocation4 + $0x98] sm:$0xf]
        %v8379 = vld [vmem:[#allocation4 + $0x9c] sm:$0xf]
        %v8380 = vld [vmem:[#allocation4 + $0xa0] sm:$0xf]
        %v8381 = vld [vmem:[#allocation4 + $0xa4] sm:$0xf]
        %v8382 = vld [vmem:[#allocation4 + $0xa8] sm:$0xf]
        %v8383 = vld [vmem:[#allocation4 + $0xac] sm:$0xf]
        %v8384 = vld [vmem:[#allocation4 + $0xb0] sm:$0xf]
        %v8385 = vld [vmem:[#allocation4 + $0xb4] sm:$0xf]
        %v8386 = vld [vmem:[#allocation4 + $0xb8] sm:$0xf]
        %v8387 = vld [vmem:[#allocation4 + $0xbc] sm:$0xf]
        %v8388 = vld [vmem:[#allocation4 + $0xc0] sm:$0xf]
        %v8389 = vld [vmem:[#allocation4 + $0xc4] sm:$0xf]
        %v8390 = vld [vmem:[#allocation4 + $0xc8] sm:$0xf]
        %v8391 = vld [vmem:[#allocation4 + $0xcc] sm:$0xf]
        %v8392 = vld [vmem:[#allocation4 + $0xd0] sm:$0xf]
        %v8393 = vld [vmem:[#allocation4 + $0xd4] sm:$0xf]
        %v8394 = vld [vmem:[#allocation4 + $0xd8] sm:$0xf]
        %v8395 = vld [vmem:[#allocation4 + $0xdc] sm:$0xf]
        %v8396 = vld [vmem:[#allocation4 + $0xe0] sm:$0xf]
        %v8397 = vld [vmem:[#allocation4 + $0xe4] sm:$0xf]
        %v8398 = vld [vmem:[#allocation4 + $0xe8] sm:$0xf]
        %v8399 = vld [vmem:[#allocation4 + $0xec] sm:$0xf]
        %v8400 = vld [vmem:[#allocation4 + $0xf0] sm:$0xf]
        %v8401 = vld [vmem:[#allocation4 + $0xf4] sm:$0xf]
        %v8402 = vld [vmem:[#allocation4 + $0xf8] sm:$0xf]
        %v8403 = vld [vmem:[#allocation4 + $0xfc] sm:$0xf]
        %v8404 = vld [vmem:[%s6] sm:$0x1]
        %v8406 = vlaneseq
        %v8407 = vshrl.u32 %v8406, 7
        %v8408 = vsub.s32 0, %v8407
        %v8409 = vrot.slane %v8404, %v8408
        %v8412 = vcombine.high %v8339, %v8339
        %v8414 = vunpack.c.l.s4 1983009808
        %v8415 = vunpack.c.0.s8 %v8414
        %v8416 = vlaneseq
        %v8417 = vshrl.u32 %v8416, 7
        %v8418 = vsub.s32 %v8415, %v8417
        %v8419 = vrot.slane %v8339, %v8418
        %v8421 = vunpack.c.l.s4 1983009808
        %v8422 = vunpack.c.0.s8 %v8421
        %v8423 = vlaneseq
        %v8424 = vshrl.u32 %v8423, 7
        %v8425 = vsub.s32 %v8422, %v8424
        %v8426 = vrot.slane %v8412, %v8425
        %v8427 = vcombine.high %v8419, %v8419
        %v8428 = vcombine.high %v8426, %v8426
        %v8497 = vunpack.c.l.b16 %v8340
        %v8498 = vunpack.c.l.b16 %v8341
        %v8499 = vunpack.c.l.b16 %v8342
        %v8500 = vunpack.c.l.b16 %v8343
        %v8501 = vunpack.c.l.b16 %v8344
        %v8502 = vunpack.c.l.b16 %v8345
        %v8503 = vunpack.c.l.b16 %v8346
        %v8504 = vunpack.c.l.b16 %v8347
        %v8505 = vunpack.c.l.b16 %v8348
        %v8506 = vunpack.c.l.b16 %v8349
        %v8507 = vunpack.c.l.b16 %v8350
        %v8508 = vunpack.c.l.b16 %v8351
        %v8509 = vunpack.c.l.b16 %v8352
        %v8510 = vunpack.c.l.b16 %v8353
        %v8511 = vunpack.c.l.b16 %v8354
        %v8512 = vunpack.c.l.b16 %v8355
        %v8513 = vunpack.c.l.b16 %v8356
        %v8514 = vunpack.c.l.b16 %v8357
        %v8515 = vunpack.c.l.b16 %v8358
        %v8516 = vunpack.c.l.b16 %v8359
        %v8517 = vunpack.c.l.b16 %v8360
        %v8518 = vunpack.c.l.b16 %v8361
        %v8519 = vunpack.c.l.b16 %v8362
        %v8520 = vunpack.c.l.b16 %v8363
        %v8521 = vunpack.c.l.b16 %v8364
        %v8522 = vunpack.c.l.b16 %v8365
        %v8523 = vunpack.c.l.b16 %v8366
        %v8524 = vunpack.c.l.b16 %v8367
        %v8525 = vunpack.c.l.b16 %v8368
        %v8526 = vunpack.c.l.b16 %v8369
        %v8527 = vunpack.c.l.b16 %v8370
        %v8528 = vunpack.c.l.b16 %v8371
        %v8529 = vunpack.c.l.b16 %v8372
        %v8530 = vunpack.c.l.b16 %v8373
        %v8531 = vunpack.c.l.b16 %v8374
        %v8532 = vunpack.c.l.b16 %v8375
        %v8533 = vunpack.c.l.b16 %v8376
        %v8534 = vunpack.c.l.b16 %v8377
        %v8535 = vunpack.c.l.b16 %v8378
        %v8536 = vunpack.c.l.b16 %v8379
        %v8537 = vunpack.c.l.b16 %v8380
        %v8538 = vunpack.c.l.b16 %v8381
        %v8539 = vunpack.c.l.b16 %v8382
        %v8540 = vunpack.c.l.b16 %v8383
        %v8541 = vunpack.c.l.b16 %v8384
        %v8542 = vunpack.c.l.b16 %v8385
        %v8543 = vunpack.c.l.b16 %v8386
        %v8544 = vunpack.c.l.b16 %v8387
        %v8545 = vunpack.c.l.b16 %v8388
        %v8546 = vunpack.c.l.b16 %v8389
        %v8547 = vunpack.c.l.b16 %v8390
        %v8548 = vunpack.c.l.b16 %v8391
        %v8549 = vunpack.c.l.b16 %v8392
        %v8550 = vunpack.c.l.b16 %v8393
        %v8551 = vunpack.c.l.b16 %v8394
        %v8552 = vunpack.c.l.b16 %v8395
        %v8553 = vunpack.c.l.b16 %v8396
        %v8554 = vunpack.c.l.b16 %v8397
        %v8555 = vunpack.c.l.b16 %v8398
        %v8556 = vunpack.c.l.b16 %v8399
        %v8557 = vunpack.c.l.b16 %v8400
        %v8558 = vunpack.c.l.b16 %v8401
        %v8559 = vunpack.c.l.b16 %v8402
        %v8560 = vunpack.c.l.b16 %v8403
        %v8561 = vpack.c.b16 %v8498, %v8497
        %v8562 = vpack.c.b16 %v8500, %v8499
        %v8563 = vpack.c.b16 %v8502, %v8501
        %v8564 = vpack.c.b16 %v8504, %v8503
        %v8565 = vpack.c.b16 %v8506, %v8505
        %v8566 = vpack.c.b16 %v8508, %v8507
        %v8567 = vpack.c.b16 %v8510, %v8509
        %v8568 = vpack.c.b16 %v8512, %v8511
        %v8569 = vpack.c.b16 %v8514, %v8513
        %v8570 = vpack.c.b16 %v8516, %v8515
        %v8571 = vpack.c.b16 %v8518, %v8517
        %v8572 = vpack.c.b16 %v8520, %v8519
        %v8573 = vpack.c.b16 %v8522, %v8521
        %v8574 = vpack.c.b16 %v8524, %v8523
        %v8575 = vpack.c.b16 %v8526, %v8525
        %v8576 = vpack.c.b16 %v8528, %v8527
        %v8577 = vpack.c.b16 %v8530, %v8529
        %v8578 = vpack.c.b16 %v8532, %v8531
        %v8579 = vpack.c.b16 %v8534, %v8533
        %v8580 = vpack.c.b16 %v8536, %v8535
        %v8581 = vpack.c.b16 %v8538, %v8537
        %v8582 = vpack.c.b16 %v8540, %v8539
        %v8583 = vpack.c.b16 %v8542, %v8541
        %v8584 = vpack.c.b16 %v8544, %v8543
        %v8585 = vpack.c.b16 %v8546, %v8545
        %v8586 = vpack.c.b16 %v8548, %v8547
        %v8587 = vpack.c.b16 %v8550, %v8549
        %v8588 = vpack.c.b16 %v8552, %v8551
        %v8589 = vpack.c.b16 %v8554, %v8553
        %v8590 = vpack.c.b16 %v8556, %v8555
        %v8591 = vpack.c.b16 %v8558, %v8557
        %v8592 = vpack.c.b16 %v8560, %v8559
        %8625 = vmatprep.subr.bf16.mxu0 0
        %8626 = vmatpush1.bf16.msra.mxu0 %v8561
        %8627 = vmatprep.subr.bf16.mxu0 0
        %8628 = vmatpush1.bf16.msra.mxu0 %v8562
        %8629 = vmatprep.subr.bf16.mxu0 0
        %8630 = vmatpush1.bf16.msra.mxu0 %v8563
        %8631 = vmatprep.subr.bf16.mxu0 0
        %8632 = vmatpush1.bf16.msra.mxu0 %v8564
        %8633 = vmatprep.subr.bf16.mxu0 0
        %8634 = vmatpush1.bf16.msra.mxu0 %v8565
        %8635 = vmatprep.subr.bf16.mxu0 0
        %8636 = vmatpush1.bf16.msra.mxu0 %v8566
        %8637 = vmatprep.subr.bf16.mxu0 0
        %8638 = vmatpush1.bf16.msra.mxu0 %v8567
        %8639 = vmatprep.subr.bf16.mxu0 0
        %8640 = vmatpush1.bf16.msra.mxu0 %v8568
        %8641 = vmatprep.subr.bf16.mxu0 0
        %8642 = vmatpush1.bf16.msra.mxu0 %v8569
        %8643 = vmatprep.subr.bf16.mxu0 0
        %8644 = vmatpush1.bf16.msra.mxu0 %v8570
        %8645 = vmatprep.subr.bf16.mxu0 0
        %8646 = vmatpush1.bf16.msra.mxu0 %v8571
        %8647 = vmatprep.subr.bf16.mxu0 0
        %8648 = vmatpush1.bf16.msra.mxu0 %v8572
        %8649 = vmatprep.subr.bf16.mxu0 0
        %8650 = vmatpush1.bf16.msra.mxu0 %v8573
        %8651 = vmatprep.subr.bf16.mxu0 0
        %8652 = vmatpush1.bf16.msra.mxu0 %v8574
        %8653 = vmatprep.subr.bf16.mxu0 0
        %8654 = vmatpush1.bf16.msra.mxu0 %v8575
        %8655 = vmatprep.subr.bf16.mxu0 0
        %8656 = vmatpush1.bf16.msra.mxu0 %v8576
        %8657 = vmatprep.mubr.bf16.mxu0 %v8427
        %8658 = vmatmul.mubr.bf16.gmra.mrb[0].mxu0 %v8419
        %v8659 = vpop.f32.mrb[0].mxu0
        %v8660 = vadd.f32 %v8409, %v8659
        %v8661 = vpop.f32.mrb[0].mxu0
        %v8662 = vpop.f32.mrb[0].mxu0
        %v8663 = vpop.f32.mrb[0].mxu0
        %8664 = vdwg.mxu0
        %8665 = vmatprep.subr.bf16.mxu0 0
        %8666 = vmatpush1.bf16.msra.mxu0 %v8577
        %8667 = vmatprep.subr.bf16.mxu0 0
        %8668 = vmatpush1.bf16.msra.mxu0 %v8578
        %8669 = vmatprep.subr.bf16.mxu0 0
        %8670 = vmatpush1.bf16.msra.mxu0 %v8579
        %8671 = vmatprep.subr.bf16.mxu0 0
        %8672 = vmatpush1.bf16.msra.mxu0 %v8580
        %8673 = vmatprep.subr.bf16.mxu0 0
        %8674 = vmatpush1.bf16.msra.mxu0 %v8581
        %8675 = vmatprep.subr.bf16.mxu0 0
        %8676 = vmatpush1.bf16.msra.mxu0 %v8582
        %8677 = vmatprep.subr.bf16.mxu0 0
        %8678 = vmatpush1.bf16.msra.mxu0 %v8583
        %8679 = vmatprep.subr.bf16.mxu0 0
        %8680 = vmatpush1.bf16.msra.mxu0 %v8584
        %8681 = vmatprep.subr.bf16.mxu0 0
        %8682 = vmatpush1.bf16.msra.mxu0 %v8585
        %8683 = vmatprep.subr.bf16.mxu0 0
        %8684 = vmatpush1.bf16.msra.mxu0 %v8586
        %8685 = vmatprep.subr.bf16.mxu0 0
        %8686 = vmatpush1.bf16.msra.mxu0 %v8587
        %8687 = vmatprep.subr.bf16.mxu0 0
        %8688 = vmatpush1.bf16.msra.mxu0 %v8588
        %8689 = vmatprep.subr.bf16.mxu0 0
        %8690 = vmatpush1.bf16.msra.mxu0 %v8589
        %8691 = vmatprep.subr.bf16.mxu0 0
        %8692 = vmatpush1.bf16.msra.mxu0 %v8590
        %8693 = vmatprep.subr.bf16.mxu0 0
        %8694 = vmatpush1.bf16.msra.mxu0 %v8591
        %8695 = vmatprep.subr.bf16.mxu0 0
        %8696 = vmatpush1.bf16.msra.mxu0 %v8592
        %8697 = vmatprep.mubr.bf16.mxu0 %v8428
        %8698 = vmatmul.mubr.bf16.gmra.mrb[0].mxu0 %v8426
        %v8699 = vpop.f32.mrb[0].mxu0
        %v8700 = vadd.f32 %v8660, %v8699
        %v8701 = vpop.f32.mrb[0].mxu0
        %v8702 = vpop.f32.mrb[0].mxu0
        %v8703 = vpop.f32.mrb[0].mxu0
        %8704 = vdwg.mxu0
        %8705 = vst [vmem:[%s286] sm:$0xf] %v8700
        %s8706 = sand.u32 %s182, 1
        %s8707 = scalar_lea.sflag [#allocation6], %s8706
        %s8708 = sand.u32 %s182, 1
        %s8709 = smul.addr %s8708, 4
        %s8710 = scalar_lea.vmem [#allocation7], %s8709
        // Predicated region
        $region53: #{signal_encoder_forward.1} parent=47 // pred_check
          %p8711 = pneg %p192
        $region54: #{signal_encoder_forward.1} parent=47 // pred_check_branch
          %8713 = sbr.rel (%p8711) target = $region56
        $region55: #{signal_encoder_forward.1} parent=47 // pred_region
          %s8715 = ssub.s32 64, 64
          %8716 = vsyncadd %s8707, %s8715
          %s8717 = smul.addr %s22, 64
          %s8718 = scalar_lea.hbm %s7, %s8717
          %s8720 = sshll.u32 %s8710, 4
          %s8721 = int_to_ptr.vmem [resolvable:$true] %s8720
          %8723 = dma.vmem_to_hbm [thread:$0]  %s8721, 64, %s8718, %s8707
        $region56: #{signal_encoder_forward.1} parent=47 // pred_fallthru
          _
      $region48: #{signal_encoder_forward.1} parent=5 // pred_fallthru
        _
      %p8724 = scmp.le.s32.totalorder 2, %s17
      // Predicated region
      $region57: #{signal_encoder_forward.1} parent=5 // pred_check
        %p8725 = pneg %p8724
      $region58: #{signal_encoder_forward.1} parent=5 // pred_check_branch
        %8727 = sbr.rel (%p8725) target = $region60
      $region59: #{signal_encoder_forward.1} parent=5 // pred_region
        %s8728 = ssub.s32 %s17, 2
        // Predicated region
        $region61: #{signal_encoder_forward.1} parent=59 // pred_check
          %p8729 = pneg %p198
        $region62: #{signal_encoder_forward.1} parent=59 // pred_check_branch
          %8731 = sbr.rel (%p8729) target = $region64
        $region63: #{signal_encoder_forward.1} parent=59 // pred_region
          %s8732 = sand.u32 %s183, 1
          %s8733 = scalar_lea.sflag [#allocation6], %s8732
          %s8734 = sand.u32 %s183, 1
          %s8735 = smul.addr %s8734, 4
          %s8736 = scalar_lea.vmem [#allocation7], %s8735
          %8737 = dma.done %s8733, 64
        $region64: #{signal_encoder_forward.1} parent=59 // pred_fallthru
          _
      $region60: #{signal_encoder_forward.1} parent=5 // pred_fallthru
        _
    $region6: #{signal_encoder_forward.1} parent=1 // loop_footer
      %s21 = sadd.s32 1, %s17
    $region7: #{signal_encoder_forward.1} parent=1 // loop_footer_branch
      %16 = sbr.rel target = $region3
    $region8: #{signal_encoder_forward.1} parent=1 // loop_exit
      _
    %8738 = vsyncpa [#allocation5], 1
    %s8739 = scalar_lea.sflag [#allocation5], 1
    %8740 = vsyncpa %s8739, 1
    %8741 = vsyncpa [#allocation6], 1
    %s8742 = scalar_lea.sflag [#allocation6], 1
    %8743 = vsyncpa %s8742, 1

</llo_original>
